<compile_context>
chip_gen: v7x
topology: tpu7x:2x2x1
jax: 0.10.0
libtpu: 0.0.40
codegen_flags: <defaults>
</compile_context>

<pallas_src>
import functools

import jax
import jax.numpy as jnp
from jax.experimental import pallas as pl
from jax.experimental.pallas import tpu as pltpu

LANE = 128


# ---------------------------------------------------------------------------
# In-kernel helpers
# ---------------------------------------------------------------------------
def _fold_kx_reflect(src_ref, xk_ref, *, H, W, Cp):
    """Reflection-pad (pad=1) + kx-fold the image into the conv operand scratch.

    src_ref: (H, W, Cp) f32 image
    xk_ref:  (H+2, W, 3*Cp) f32;  xk[yp, x, kx*Cp + c] = reflect_pad1(src)[yp, x+kx, c]
    """
    # kx = 1 : centered copy (fully aligned store)
    xk_ref[1:H + 1, :, Cp:2 * Cp] = src_ref[:, :, :]
    # kx = 0 : dst col x <- src col x-1 ; left edge reflects src col 1
    xk_ref[1:H + 1, 1:W, 0:Cp] = src_ref[:, 0:W - 1, :]
    xk_ref[1:H + 1, 0:1, 0:Cp] = src_ref[:, 1:2, :]
    # kx = 2 : dst col x <- src col x+1 ; right edge reflects src col W-2
    xk_ref[1:H + 1, 0:W - 1, 2 * Cp:3 * Cp] = src_ref[:, 1:W, :]
    xk_ref[1:H + 1, W - 1:W, 2 * Cp:3 * Cp] = src_ref[:, W - 2:W - 1, :]
    # Row reflection on whole folded rows (so the corners compose correctly):
    # padded row 0 <- padded row 2 (= src row 1), padded row H+1 <- padded row H-1.
    xk_ref[0:1, :, :] = xk_ref[2:3, :, :]
    xk_ref[H + 1:H + 2, :, :] = xk_ref[H - 1:H, :, :]


def _conv_kx_folded(xk_ref, w_ref, acc_ref, *, H, W, Cp, K):
    """acc_ref <- sum_ky  xk[ky:ky+H] @ w[ky]  with f32 accumulation on the MXU.

    xk_ref: (H+2, W, K*Cp) f32, w_ref: (K, K*Cp, Cp) compute dtype,
    acc_ref: (H*W, Cp) f32 scratch.
    """
    mm_dtype = w_ref.dtype
    for ky in range(K):
        a = xk_ref[ky:ky + H, :, :].reshape(H * W, K * Cp).astype(mm_dtype)
        d = jnp.dot(a, w_ref[ky], preferred_element_type=jnp.float32)
        if ky == 0:
            acc_ref[...] = d
        else:
            acc_ref[...] += d


def _in_scale_shift(acc_ref, gamma, beta, *, M, eps, chunk=512):
    """Per-channel InstanceNorm scale & shift from the f32 conv accumulator.

    Single streamed pass (per-channel sum / sum-of-squares, row-chunked so the live
    values stay small); gamma is folded into the rsqrt scale.  Returns (1, Cp) f32
    (scale, shift) such that IN(acc) = acc * scale + shift.  Cancellation in
    E[x^2]-E[x]^2 is benign here (conv outputs are near zero-mean) and var is clamped.
    """
    Cp = gamma.shape[-1]
    csum = jnp.zeros((1, Cp), jnp.float32)
    csqs = jnp.zeros((1, Cp), jnp.float32)
    for r in range(0, M, chunk):
        c = min(chunk, M - r)
        a = acc_ref[r:r + c, :]
        csum = csum + jnp.sum(a, axis=0, keepdims=True)
        csqs = csqs + jnp.sum(a * a, axis=0, keepdims=True)
    mean = csum * (1.0 / M)
    var = jnp.maximum(csqs * (1.0 / M) - mean * mean, 0.0)
    scale = jax.lax.rsqrt(var + eps) * gamma
    return scale, beta - mean * scale


# ---------------------------------------------------------------------------
# Fused kernel: conv1 + IN1 + ReLU + conv2 + IN2 + residual  (one image per step)
# ---------------------------------------------------------------------------
def _residual_block_kernel(x_ref, w1_ref, g1_ref, bt1_ref, w2_ref, g2_ref, bt2_ref,
                           o_ref, xk_ref, acc_ref, y_ref, *, H, W, Cp, K, eps):
    HW = H * W
    # Working image <- input (bf16 inputs only ever touch aligned full-block ops).
    y_ref[...] = x_ref[0].astype(jnp.float32)

    # ---- conv1 (in-kernel reflection pad, 3 deep MXU dots, f32 accumulation) -------
    _fold_kx_reflect(y_ref, xk_ref, H=H, W=W, Cp=Cp)
    _conv_kx_folded(xk_ref, w1_ref, acc_ref, H=H, W=W, Cp=Cp, K=K)
    # ---- IN1 + ReLU (conv bias dropped: it cancels exactly in IN's mean) -----------
    s1, t1 = _in_scale_shift(acc_ref, g1_ref[...], bt1_ref[...], M=HW, eps=eps)
    y_ref[...] = jnp.maximum(acc_ref[...] * s1 + t1, 0.0).reshape(H, W, Cp)

    # ---- conv2 ----------------------------------------------------------------------
    _fold_kx_reflect(y_ref, xk_ref, H=H, W=W, Cp=Cp)
    _conv_kx_folded(xk_ref, w2_ref, acc_ref, H=H, W=W, Cp=Cp, K=K)
    # ---- IN2 + residual add ---------------------------------------------------------
    s2, t2 = _in_scale_shift(acc_ref, g2_ref[...], bt2_ref[...], M=HW, eps=eps)
    res = x_ref[0].reshape(HW, Cp).astype(jnp.float32)
    o_ref[0] = (acc_ref[...] * s2 + t2 + res).astype(o_ref.dtype)


# ---------------------------------------------------------------------------
# Wrapper
# ---------------------------------------------------------------------------
def _prep_weight(w, Cp, dtype):
    # PyTorch (Cout, Cin, K, K) -> (K, K*Cp, Cp): w_fold[ky, kx*Cp+ci, co] = w[co,ci,ky,kx]
    Cout, Cin, K, _ = w.shape
    wt = jnp.transpose(w, (2, 3, 1, 0))                         # (ky, kx, ci, co)
    wt = jnp.pad(wt, ((0, 0), (0, 0), (0, Cp - Cin), (0, Cp - Cout)))
    return wt.reshape(K, K * Cp, Cp).astype(dtype)


def _prep_vec(v, Cp):
    return jnp.pad(v.reshape(1, -1), ((0, 0), (0, Cp - v.shape[0]))).astype(jnp.float32)


def residual_block_forward(x_nchw, w1, b1, g1, beta1, w2, b2, g2, beta2,
                           *, eps=1e-5, compute_dtype=jnp.float32):
    """ResidualBlock forward: x -> conv1 -> IN1 -> ReLU -> conv2 -> IN2 -> (+x)."""
    del b1, b2  # Conv biases cancel exactly under InstanceNorm's mean subtraction.
    N, C, H, W = x_nchw.shape
    K = w1.shape[-1]
    assert K == 3 and H >= 2 and W >= 2
    Cp = ((C + LANE - 1) // LANE) * LANE                        # lane-dense channels

    # NCHW -> NHWC (channels on the lane axis), zero-pad channels to Cp.  Padded
    # channels provably stay exactly zero through conv -> IN -> ReLU -> residual.
    x = jnp.transpose(x_nchw, (0, 2, 3, 1))
    x = jnp.pad(x, ((0, 0), (0, 0), (0, 0), (0, Cp - C))).astype(compute_dtype)

    w1f = _prep_weight(w1, Cp, compute_dtype)
    w2f = _prep_weight(w2, Cp, compute_dtype)
    g1p, bt1p = _prep_vec(g1, Cp), _prep_vec(beta1, Cp)
    g2p, bt2p = _prep_vec(g2, Cp), _prep_vec(beta2, Cp)

    kernel = functools.partial(_residual_block_kernel, H=H, W=W, Cp=Cp, K=K, eps=eps)

    itemsize = jnp.dtype(compute_dtype).itemsize
    cost = pl.CostEstimate(
        flops=4 * N * H * W * K * K * Cp * Cp,                  # two 3x3 convs
        transcendentals=2 * N * Cp,                             # rsqrt per (image, ch, conv)
        bytes_accessed=(x.size + w1f.size + w2f.size) * itemsize
                       + 4 * Cp * 4 + N * H * W * Cp * 4)

    out = pl.pallas_call(
        kernel,
        out_shape=jax.ShapeDtypeStruct((N, H * W, Cp), jnp.float32),
        grid=(N,),
        in_specs=[
            pl.BlockSpec((1, H, W, Cp), lambda n: (n, 0, 0, 0)),     # image
            pl.BlockSpec((K, K * Cp, Cp), lambda n: (0, 0, 0)),      # conv1 weights
            pl.BlockSpec((1, Cp), lambda n: (0, 0)),                 # gamma1
            pl.BlockSpec((1, Cp), lambda n: (0, 0)),                 # beta1
            pl.BlockSpec((K, K * Cp, Cp), lambda n: (0, 0, 0)),      # conv2 weights
            pl.BlockSpec((1, Cp), lambda n: (0, 0)),                 # gamma2
            pl.BlockSpec((1, Cp), lambda n: (0, 0)),                 # beta2
        ],
        out_specs=pl.BlockSpec((1, H * W, Cp), lambda n: (n, 0, 0)),
        scratch_shapes=[
            pltpu.VMEM((H + 2, W, K * Cp), jnp.float32),   # reflection-padded, kx-folded
            pltpu.VMEM((H * W, Cp), jnp.float32),          # conv accumulator
            pltpu.VMEM((H, W, Cp), jnp.float32),           # working image / intermediate y
        ],
        compiler_params=pltpu.CompilerParams(dimension_semantics=("parallel",)),
        cost_estimate=cost,
    )(x, w1f, g1p, bt1p, w2f, g2p, bt2p)

    out = out.reshape(N, H, W, Cp)[..., :C]
    return jnp.transpose(out, (0, 3, 1, 2)).astype(x_nchw.dtype)


# ---------------------------------------------------------------------------
# Pure-JAX reference (for correctness checking)
# ---------------------------------------------------------------------------
def _ref_conv_layer(x, w, b):
    K = w.shape[-1]
    pad = K // 2
    xp = jnp.pad(x, ((0, 0), (0, 0), (pad, pad), (pad, pad)), mode="reflect")
    out = jax.lax.conv_general_dilated(
        xp, w, window_strides=(1, 1), padding="VALID",
        dimension_numbers=("NCHW", "OIHW", "NCHW"),
        precision=jax.lax.Precision.HIGHEST)
    return out + b.reshape(1, -1, 1, 1)


def _ref_instance_norm(x, gamma, beta, eps=1e-5):
    mean = jnp.mean(x, axis=(2, 3), keepdims=True)
    var = jnp.mean((x - mean) ** 2, axis=(2, 3), keepdims=True)
    return (x - mean) * jax.lax.rsqrt(var + eps) * gamma.reshape(1, -1, 1, 1) \
        + beta.reshape(1, -1, 1, 1)


def _ref_residual_block(x, w1, b1, g1, beta1, w2, b2, g2, beta2, eps=1e-5):
    out = jax.nn.relu(_ref_instance_norm(_ref_conv_layer(x, w1, b1), g1, beta1, eps))
    out = _ref_instance_norm(_ref_conv_layer(out, w2, b2), g2, beta2, eps)
    return out + x


# ---------------------------------------------------------------------------
if __name__ == "__main__":
    N, C, H, W = 2, 4, 16, 16     # ResidualBlock(channels=4) on a (2,4,16,16) input

    key = jax.random.PRNGKey(0)
    ks = jax.random.split(key, 9)
    x = jax.random.normal(ks[0], (N, C, H, W), dtype=jnp.float32)
    w1 = 0.1 * jax.random.normal(ks[1], (C, C, 3, 3), dtype=jnp.float32)
    b1 = 0.1 * jax.random.normal(ks[2], (C,), dtype=jnp.float32)
    g1 = 1.0 + 0.1 * jax.random.normal(ks[3], (C,), dtype=jnp.float32)
    beta1 = 0.1 * jax.random.normal(ks[4], (C,), dtype=jnp.float32)
    w2 = 0.1 * jax.random.normal(ks[5], (C, C, 3, 3), dtype=jnp.float32)
    b2 = 0.1 * jax.random.normal(ks[6], (C,), dtype=jnp.float32)
    g2 = 1.0 + 0.1 * jax.random.normal(ks[7], (C,), dtype=jnp.float32)
    beta2 = 0.1 * jax.random.normal(ks[8], (C,), dtype=jnp.float32)

    ref = _ref_residual_block(x, w1, b1, g1, beta1, w2, b2, g2, beta2)

    # f32 data-movement path: tight numerical check.
    out = residual_block_forward(x, w1, b1, g1, beta1, w2, b2, g2, beta2)
    out = jax.block_until_ready(out)
    assert out.shape == ref.shape, (out.shape, ref.shape)
    assert jnp.allclose(out, ref, atol=1e-3, rtol=1e-3), \
        float(jnp.max(jnp.abs(out - ref)))

    # bf16 data-movement / bf16-MXU path (f32 accumulation + f32 IN epilogue in-kernel).
    out_bf16 = residual_block_forward(x, w1, b1, g1, beta1, w2, b2, g2, beta2,
                                      compute_dtype=jnp.bfloat16)
    out_bf16 = jax.block_until_ready(out_bf16)
    assert jnp.allclose(out_bf16, ref, atol=1e-1, rtol=1e-1), \
        float(jnp.max(jnp.abs(out_bf16 - ref)))

    print("KERNEL_OK")
</pallas_src>

<mosaic_0001>
module attributes {stable_mosaic.version = 11 : i64} {
  func.func @_residual_block_kernel(%arg0: i32, %arg1: memref<1x16x16x128xf32, #tpu.memory_space<vmem>>, %arg2: memref<3x384x128xf32, #tpu.memory_space<vmem>>, %arg3: memref<1x128xf32, #tpu.memory_space<vmem>>, %arg4: memref<1x128xf32, #tpu.memory_space<vmem>>, %arg5: memref<3x384x128xf32, #tpu.memory_space<vmem>>, %arg6: memref<1x128xf32, #tpu.memory_space<vmem>>, %arg7: memref<1x128xf32, #tpu.memory_space<vmem>>, %arg8: memref<1x256x128xf32, #tpu.memory_space<vmem>>, %arg9: memref<18x16x384xf32, #tpu.memory_space<vmem>>, %arg10: memref<256x128xf32, #tpu.memory_space<vmem>>, %arg11: memref<16x16x128xf32, #tpu.memory_space<vmem>>) attributes {dimension_semantics = [#tpu.dimension_semantics<parallel>], iteration_bounds = array<i64: 2>, scalar_prefetch = 0 : i64, scratch_operands = 3 : i64, tpu.core_type = #tpu.core_type<tc>, window_params = [{transform_indices = @transform_0, window_bounds = array<i64: 1, 16, 16, 128>}, {pipeline_mode = #tpu.pipeline_mode<synchronous>, transform_indices = @transform_1, window_bounds = array<i64: 3, 384, 128>}, {pipeline_mode = #tpu.pipeline_mode<synchronous>, transform_indices = @transform_2, window_bounds = array<i64: 1, 128>}, {pipeline_mode = #tpu.pipeline_mode<synchronous>, transform_indices = @transform_3, window_bounds = array<i64: 1, 128>}, {pipeline_mode = #tpu.pipeline_mode<synchronous>, transform_indices = @transform_4, window_bounds = array<i64: 3, 384, 128>}, {pipeline_mode = #tpu.pipeline_mode<synchronous>, transform_indices = @transform_5, window_bounds = array<i64: 1, 128>}, {pipeline_mode = #tpu.pipeline_mode<synchronous>, transform_indices = @transform_6, window_bounds = array<i64: 1, 128>}, {transform_indices = @transform_7, window_bounds = array<i64: 1, 256, 128>}]} {
    %c0 = arith.constant 0 : index
    %c0_0 = arith.constant 0 : index
    %c0_1 = arith.constant 0 : index
    %c0_2 = arith.constant 0 : index
    %0 = vector.load %arg1[%c0, %c0_0, %c0_1, %c0_2] : memref<1x16x16x128xf32, #tpu.memory_space<vmem>>, vector<1x16x16x128xf32>
    %1 = vector.shape_cast %0 : vector<1x16x16x128xf32> to vector<16x16x128xf32>
    %c0_3 = arith.constant 0 : index
    %c0_4 = arith.constant 0 : index
    %c0_5 = arith.constant 0 : index
    %2 = vector.load %arg11[%c0_3, %c0_4, %c0_5] : memref<16x16x128xf32, #tpu.memory_space<vmem>>, vector<16x16x128xf32>
    tpu.vector_store %arg11[%c0_3, %c0_4, %c0_5], %1 {strides = array<i32>} : memref<16x16x128xf32, #tpu.memory_space<vmem>>, vector<16x16x128xf32>,
    %c0_6 = arith.constant 0 : index
    %c0_7 = arith.constant 0 : index
    %c0_8 = arith.constant 0 : index
    %3 = vector.load %arg11[%c0_6, %c0_7, %c0_8] : memref<16x16x128xf32, #tpu.memory_space<vmem>>, vector<16x16x128xf32>
    %c1 = arith.constant 1 : index
    %c0_9 = arith.constant 0 : index
    %c128 = arith.constant 128 : index
    %4 = vector.load %arg9[%c1, %c0_9, %c128] : memref<18x16x384xf32, #tpu.memory_space<vmem>>, vector<16x16x128xf32>
    tpu.vector_store %arg9[%c1, %c0_9, %c128], %3 {strides = array<i32>} : memref<18x16x384xf32, #tpu.memory_space<vmem>>, vector<16x16x128xf32>,
    %c0_10 = arith.constant 0 : index
    %c0_11 = arith.constant 0 : index
    %c0_12 = arith.constant 0 : index
    %5 = vector.load %arg11[%c0_10, %c0_11, %c0_12] : memref<16x16x128xf32, #tpu.memory_space<vmem>>, vector<16x15x128xf32>
    %c1_13 = arith.constant 1 : index
    %c1_14 = arith.constant 1 : index
    %c0_15 = arith.constant 0 : index
    %6 = vector.load %arg9[%c1_13, %c1_14, %c0_15] : memref<18x16x384xf32, #tpu.memory_space<vmem>>, vector<16x15x128xf32>
    tpu.vector_store %arg9[%c1_13, %c1_14, %c0_15], %5 {strides = array<i32>} : memref<18x16x384xf32, #tpu.memory_space<vmem>>, vector<16x15x128xf32>,
    %c0_16 = arith.constant 0 : index
    %c1_17 = arith.constant 1 : index
    %c0_18 = arith.constant 0 : index
    %7 = vector.load %arg11[%c0_16, %c1_17, %c0_18] : memref<16x16x128xf32, #tpu.memory_space<vmem>>, vector<16x1x128xf32>
    %c1_19 = arith.constant 1 : index
    %c0_20 = arith.constant 0 : index
    %c0_21 = arith.constant 0 : index
    %8 = vector.load %arg9[%c1_19, %c0_20, %c0_21] : memref<18x16x384xf32, #tpu.memory_space<vmem>>, vector<16x1x128xf32>
    tpu.vector_store %arg9[%c1_19, %c0_20, %c0_21], %7 {strides = array<i32>} : memref<18x16x384xf32, #tpu.memory_space<vmem>>, vector<16x1x128xf32>,
    %c0_22 = arith.constant 0 : index
    %c1_23 = arith.constant 1 : index
    %c0_24 = arith.constant 0 : index
    %9 = vector.load %arg11[%c0_22, %c1_23, %c0_24] : memref<16x16x128xf32, #tpu.memory_space<vmem>>, vector<16x15x128xf32>
    %c1_25 = arith.constant 1 : index
    %c0_26 = arith.constant 0 : index
    %c256 = arith.constant 256 : index
    %10 = vector.load %arg9[%c1_25, %c0_26, %c256] : memref<18x16x384xf32, #tpu.memory_space<vmem>>, vector<16x15x128xf32>
    tpu.vector_store %arg9[%c1_25, %c0_26, %c256], %9 {strides = array<i32>} : memref<18x16x384xf32, #tpu.memory_space<vmem>>, vector<16x15x128xf32>,
    %c0_27 = arith.constant 0 : index
    %c14 = arith.constant 14 : index
    %c0_28 = arith.constant 0 : index
    %11 = vector.load %arg11[%c0_27, %c14, %c0_28] : memref<16x16x128xf32, #tpu.memory_space<vmem>>, vector<16x1x128xf32>
    %c1_29 = arith.constant 1 : index
    %c15 = arith.constant 15 : index
    %c256_30 = arith.constant 256 : index
    %12 = vector.load %arg9[%c1_29, %c15, %c256_30] : memref<18x16x384xf32, #tpu.memory_space<vmem>>, vector<16x1x128xf32>
    tpu.vector_store %arg9[%c1_29, %c15, %c256_30], %11 {strides = array<i32>} : memref<18x16x384xf32, #tpu.memory_space<vmem>>, vector<16x1x128xf32>,
    %c2 = arith.constant 2 : index
    %c0_31 = arith.constant 0 : index
    %c0_32 = arith.constant 0 : index
    %13 = vector.load %arg9[%c2, %c0_31, %c0_32] : memref<18x16x384xf32, #tpu.memory_space<vmem>>, vector<1x16x384xf32>
    %c0_33 = arith.constant 0 : index
    %c0_34 = arith.constant 0 : index
    %c0_35 = arith.constant 0 : index
    %14 = vector.load %arg9[%c0_33, %c0_34, %c0_35] : memref<18x16x384xf32, #tpu.memory_space<vmem>>, vector<1x16x384xf32>
    tpu.vector_store %arg9[%c0_33, %c0_34, %c0_35], %13 {strides = array<i32>} : memref<18x16x384xf32, #tpu.memory_space<vmem>>, vector<1x16x384xf32>,
    %c15_36 = arith.constant 15 : index
    %c0_37 = arith.constant 0 : index
    %c0_38 = arith.constant 0 : index
    %15 = vector.load %arg9[%c15_36, %c0_37, %c0_38] : memref<18x16x384xf32, #tpu.memory_space<vmem>>, vector<1x16x384xf32>
    %c17 = arith.constant 17 : index
    %c0_39 = arith.constant 0 : index
    %c0_40 = arith.constant 0 : index
    %16 = vector.load %arg9[%c17, %c0_39, %c0_40] : memref<18x16x384xf32, #tpu.memory_space<vmem>>, vector<1x16x384xf32>
    tpu.vector_store %arg9[%c17, %c0_39, %c0_40], %15 {strides = array<i32>} : memref<18x16x384xf32, #tpu.memory_space<vmem>>, vector<1x16x384xf32>,
    %c0_41 = arith.constant 0 : index
    %c0_42 = arith.constant 0 : index
    %c0_43 = arith.constant 0 : index
    %17 = vector.load %arg9[%c0_41, %c0_42, %c0_43] : memref<18x16x384xf32, #tpu.memory_space<vmem>>, vector<16x16x384xf32>
    %18 = vector.shape_cast %17 : vector<16x16x384xf32> to vector<256x384xf32>
    %c0_44 = arith.constant 0 : index
    %c0_45 = arith.constant 0 : index
    %c0_46 = arith.constant 0 : index
    %19 = vector.load %arg2[%c0_44, %c0_45, %c0_46] : memref<3x384x128xf32, #tpu.memory_space<vmem>>, vector<1x384x128xf32>
    %20 = vector.shape_cast %19 : vector<1x384x128xf32> to vector<384x128xf32>
    %cst = arith.constant dense<0.000000e+00> : vector<256x128xf32>
    %21 = tpu.matmul %18, %20, %cst {dimension_numbers = #tpu.dot_dimension_numbers<[1], [0], [0], [1], [0, 0, 1, 1], [], []>} : vector<256x384xf32>, vector<384x128xf32>, vector<256x128xf32> -> vector<256x128xf32>
    %c0_47 = arith.constant 0 : index
    %c0_48 = arith.constant 0 : index
    %22 = vector.load %arg10[%c0_47, %c0_48] : memref<256x128xf32, #tpu.memory_space<vmem>>, vector<256x128xf32>
    tpu.vector_store %arg10[%c0_47, %c0_48], %21 {strides = array<i32>} : memref<256x128xf32, #tpu.memory_space<vmem>>, vector<256x128xf32>,
    %c1_49 = arith.constant 1 : index
    %c0_50 = arith.constant 0 : index
    %c0_51 = arith.constant 0 : index
    %23 = vector.load %arg9[%c1_49, %c0_50, %c0_51] : memref<18x16x384xf32, #tpu.memory_space<vmem>>, vector<16x16x384xf32>
    %24 = vector.shape_cast %23 : vector<16x16x384xf32> to vector<256x384xf32>
    %c1_52 = arith.constant 1 : index
    %c0_53 = arith.constant 0 : index
    %c0_54 = arith.constant 0 : index
    %25 = vector.load %arg2[%c1_52, %c0_53, %c0_54] : memref<3x384x128xf32, #tpu.memory_space<vmem>>, vector<1x384x128xf32>
    %26 = vector.shape_cast %25 : vector<1x384x128xf32> to vector<384x128xf32>
    %cst_55 = arith.constant dense<0.000000e+00> : vector<256x128xf32>
    %27 = tpu.matmul %24, %26, %cst_55 {dimension_numbers = #tpu.dot_dimension_numbers<[1], [0], [0], [1], [0, 0, 1, 1], [], []>} : vector<256x384xf32>, vector<384x128xf32>, vector<256x128xf32> -> vector<256x128xf32>
    %c0_56 = arith.constant 0 : index
    %c0_57 = arith.constant 0 : index
    %28 = vector.load %arg10[%c0_56, %c0_57] : memref<256x128xf32, #tpu.memory_space<vmem>>, vector<256x128xf32>
    %29 = arith.addf %28, %27 : vector<256x128xf32>
    %c0_58 = arith.constant 0 : index
    %c0_59 = arith.constant 0 : index
    %30 = vector.load %arg10[%c0_58, %c0_59] : memref<256x128xf32, #tpu.memory_space<vmem>>, vector<256x128xf32>
    tpu.vector_store %arg10[%c0_58, %c0_59], %29 {strides = array<i32>} : memref<256x128xf32, #tpu.memory_space<vmem>>, vector<256x128xf32>,
    %c2_60 = arith.constant 2 : index
    %c0_61 = arith.constant 0 : index
    %c0_62 = arith.constant 0 : index
    %31 = vector.load %arg9[%c2_60, %c0_61, %c0_62] : memref<18x16x384xf32, #tpu.memory_space<vmem>>, vector<16x16x384xf32>
    %32 = vector.shape_cast %31 : vector<16x16x384xf32> to vector<256x384xf32>
    %c2_63 = arith.constant 2 : index
    %c0_64 = arith.constant 0 : index
    %c0_65 = arith.constant 0 : index
    %33 = vector.load %arg2[%c2_63, %c0_64, %c0_65] : memref<3x384x128xf32, #tpu.memory_space<vmem>>, vector<1x384x128xf32>
    %34 = vector.shape_cast %33 : vector<1x384x128xf32> to vector<384x128xf32>
    %cst_66 = arith.constant dense<0.000000e+00> : vector<256x128xf32>
    %35 = tpu.matmul %32, %34, %cst_66 {dimension_numbers = #tpu.dot_dimension_numbers<[1], [0], [0], [1], [0, 0, 1, 1], [], []>} : vector<256x384xf32>, vector<384x128xf32>, vector<256x128xf32> -> vector<256x128xf32>
    %c0_67 = arith.constant 0 : index
    %c0_68 = arith.constant 0 : index
    %36 = vector.load %arg10[%c0_67, %c0_68] : memref<256x128xf32, #tpu.memory_space<vmem>>, vector<256x128xf32>
    %37 = arith.addf %36, %35 : vector<256x128xf32>
    %c0_69 = arith.constant 0 : index
    %c0_70 = arith.constant 0 : index
    %38 = vector.load %arg10[%c0_69, %c0_70] : memref<256x128xf32, #tpu.memory_space<vmem>>, vector<256x128xf32>
    tpu.vector_store %arg10[%c0_69, %c0_70], %37 {strides = array<i32>} : memref<256x128xf32, #tpu.memory_space<vmem>>, vector<256x128xf32>,
    %c0_71 = arith.constant 0 : index
    %c0_72 = arith.constant 0 : index
    %39 = vector.load %arg3[%c0_71, %c0_72] : memref<1x128xf32, #tpu.memory_space<vmem>>, vector<1x128xf32>
    %c0_73 = arith.constant 0 : index
    %c0_74 = arith.constant 0 : index
    %40 = vector.load %arg4[%c0_73, %c0_74] : memref<1x128xf32, #tpu.memory_space<vmem>>, vector<1x128xf32>
    %cst_75 = arith.constant 0.000000e+00 : f32
    %41 = vector.broadcast %cst_75 : f32 to vector<1x128xf32>
    %cst_76 = arith.constant 0.000000e+00 : f32
    %42 = vector.broadcast %cst_76 : f32 to vector<1x128xf32>
    %c0_77 = arith.constant 0 : index
    %c0_78 = arith.constant 0 : index
    %43 = vector.load %arg10[%c0_77, %c0_78] : memref<256x128xf32, #tpu.memory_space<vmem>>, vector<256x128xf32>
    %cst_79 = arith.constant dense<0.000000e+00> : vector<128xf32>
    %44 = vector.multi_reduction <add>, %43, %cst_79 [0] : vector<256x128xf32> to vector<128xf32>
    %45 = vector.shape_cast %44 : vector<128xf32> to vector<1x128xf32>
    %46 = arith.addf %41, %45 : vector<1x128xf32>
    %47 = arith.mulf %43, %43 : vector<256x128xf32>
    %cst_80 = arith.constant dense<0.000000e+00> : vector<128xf32>
    %48 = vector.multi_reduction <add>, %47, %cst_80 [0] : vector<256x128xf32> to vector<128xf32>
    %49 = vector.shape_cast %48 : vector<128xf32> to vector<1x128xf32>
    %50 = arith.addf %42, %49 : vector<1x128xf32>
    %cst_81 = arith.constant 3.906250e-03 : f32
    %51 = vector.broadcast %cst_81 : f32 to vector<1x128xf32>
    %52 = arith.mulf %46, %51 : vector<1x128xf32>
    %cst_82 = arith.constant 3.906250e-03 : f32
    %53 = vector.broadcast %cst_82 : f32 to vector<1x128xf32>
    %54 = arith.mulf %50, %53 : vector<1x128xf32>
    %55 = arith.mulf %52, %52 : vector<1x128xf32>
    %56 = arith.subf %54, %55 : vector<1x128xf32>
    %cst_83 = arith.constant 0.000000e+00 : f32
    %57 = vector.broadcast %cst_83 : f32 to vector<1x128xf32>
    %58 = arith.maximumf %56, %57 : vector<1x128xf32>
    %cst_84 = arith.constant 9.99999974E-6 : f32
    %59 = vector.broadcast %cst_84 : f32 to vector<1x128xf32>
    %60 = arith.addf %58, %59 : vector<1x128xf32>
    %61 = math.rsqrt %60 : vector<1x128xf32>
    %62 = arith.mulf %61, %39 : vector<1x128xf32>
    %63 = arith.mulf %52, %62 : vector<1x128xf32>
    %64 = arith.subf %40, %63 : vector<1x128xf32>
    %c0_85 = arith.constant 0 : index
    %c0_86 = arith.constant 0 : index
    %65 = vector.load %arg10[%c0_85, %c0_86] : memref<256x128xf32, #tpu.memory_space<vmem>>, vector<256x128xf32>
    %66 = vector.broadcast %62 : vector<1x128xf32> to vector<256x128xf32>
    %67 = arith.mulf %65, %66 : vector<256x128xf32>
    %68 = vector.broadcast %64 : vector<1x128xf32> to vector<256x128xf32>
    %69 = arith.addf %67, %68 : vector<256x128xf32>
    %cst_87 = arith.constant 0.000000e+00 : f32
    %70 = vector.broadcast %cst_87 : f32 to vector<256x128xf32>
    %71 = arith.maximumf %69, %70 : vector<256x128xf32>
    %72 = vector.shape_cast %71 : vector<256x128xf32> to vector<16x16x128xf32>
    %c0_88 = arith.constant 0 : index
    %c0_89 = arith.constant 0 : index
    %c0_90 = arith.constant 0 : index
    %73 = vector.load %arg11[%c0_88, %c0_89, %c0_90] : memref<16x16x128xf32, #tpu.memory_space<vmem>>, vector<16x16x128xf32>
    tpu.vector_store %arg11[%c0_88, %c0_89, %c0_90], %72 {strides = array<i32>} : memref<16x16x128xf32, #tpu.memory_space<vmem>>, vector<16x16x128xf32>,
    %c0_91 = arith.constant 0 : index
    %c0_92 = arith.constant 0 : index
    %c0_93 = arith.constant 0 : index
    %74 = vector.load %arg11[%c0_91, %c0_92, %c0_93] : memref<16x16x128xf32, #tpu.memory_space<vmem>>, vector<16x16x128xf32>
    %c1_94 = arith.constant 1 : index
    %c0_95 = arith.constant 0 : index
    %c128_96 = arith.constant 128 : index
    %75 = vector.load %arg9[%c1_94, %c0_95, %c128_96] : memref<18x16x384xf32, #tpu.memory_space<vmem>>, vector<16x16x128xf32>
    tpu.vector_store %arg9[%c1_94, %c0_95, %c128_96], %74 {strides = array<i32>} : memref<18x16x384xf32, #tpu.memory_space<vmem>>, vector<16x16x128xf32>,
    %c0_97 = arith.constant 0 : index
    %c0_98 = arith.constant 0 : index
    %c0_99 = arith.constant 0 : index
    %76 = vector.load %arg11[%c0_97, %c0_98, %c0_99] : memref<16x16x128xf32, #tpu.memory_space<vmem>>, vector<16x15x128xf32>
    %c1_100 = arith.constant 1 : index
    %c1_101 = arith.constant 1 : index
    %c0_102 = arith.constant 0 : index
    %77 = vector.load %arg9[%c1_100, %c1_101, %c0_102] : memref<18x16x384xf32, #tpu.memory_space<vmem>>, vector<16x15x128xf32>
    tpu.vector_store %arg9[%c1_100, %c1_101, %c0_102], %76 {strides = array<i32>} : memref<18x16x384xf32, #tpu.memory_space<vmem>>, vector<16x15x128xf32>,
    %c0_103 = arith.constant 0 : index
    %c1_104 = arith.constant 1 : index
    %c0_105 = arith.constant 0 : index
    %78 = vector.load %arg11[%c0_103, %c1_104, %c0_105] : memref<16x16x128xf32, #tpu.memory_space<vmem>>, vector<16x1x128xf32>
    %c1_106 = arith.constant 1 : index
    %c0_107 = arith.constant 0 : index
    %c0_108 = arith.constant 0 : index
    %79 = vector.load %arg9[%c1_106, %c0_107, %c0_108] : memref<18x16x384xf32, #tpu.memory_space<vmem>>, vector<16x1x128xf32>
    tpu.vector_store %arg9[%c1_106, %c0_107, %c0_108], %78 {strides = array<i32>} : memref<18x16x384xf32, #tpu.memory_space<vmem>>, vector<16x1x128xf32>,
    %c0_109 = arith.constant 0 : index
    %c1_110 = arith.constant 1 : index
    %c0_111 = arith.constant 0 : index
    %80 = vector.load %arg11[%c0_109, %c1_110, %c0_111] : memref<16x16x128xf32, #tpu.memory_space<vmem>>, vector<16x15x128xf32>
    %c1_112 = arith.constant 1 : index
    %c0_113 = arith.constant 0 : index
    %c256_114 = arith.constant 256 : index
    %81 = vector.load %arg9[%c1_112, %c0_113, %c256_114] : memref<18x16x384xf32, #tpu.memory_space<vmem>>, vector<16x15x128xf32>
    tpu.vector_store %arg9[%c1_112, %c0_113, %c256_114], %80 {strides = array<i32>} : memref<18x16x384xf32, #tpu.memory_space<vmem>>, vector<16x15x128xf32>,
    %c0_115 = arith.constant 0 : index
    %c14_116 = arith.constant 14 : index
    %c0_117 = arith.constant 0 : index
    %82 = vector.load %arg11[%c0_115, %c14_116, %c0_117] : memref<16x16x128xf32, #tpu.memory_space<vmem>>, vector<16x1x128xf32>
    %c1_118 = arith.constant 1 : index
    %c15_119 = arith.constant 15 : index
    %c256_120 = arith.constant 256 : index
    %83 = vector.load %arg9[%c1_118, %c15_119, %c256_120] : memref<18x16x384xf32, #tpu.memory_space<vmem>>, vector<16x1x128xf32>
    tpu.vector_store %arg9[%c1_118, %c15_119, %c256_120], %82 {strides = array<i32>} : memref<18x16x384xf32, #tpu.memory_space<vmem>>, vector<16x1x128xf32>,
    %c2_121 = arith.constant 2 : index
    %c0_122 = arith.constant 0 : index
    %c0_123 = arith.constant 0 : index
    %84 = vector.load %arg9[%c2_121, %c0_122, %c0_123] : memref<18x16x384xf32, #tpu.memory_space<vmem>>, vector<1x16x384xf32>
    %c0_124 = arith.constant 0 : index
    %c0_125 = arith.constant 0 : index
    %c0_126 = arith.constant 0 : index
    %85 = vector.load %arg9[%c0_124, %c0_125, %c0_126] : memref<18x16x384xf32, #tpu.memory_space<vmem>>, vector<1x16x384xf32>
    tpu.vector_store %arg9[%c0_124, %c0_125, %c0_126], %84 {strides = array<i32>} : memref<18x16x384xf32, #tpu.memory_space<vmem>>, vector<1x16x384xf32>,
    %c15_127 = arith.constant 15 : index
    %c0_128 = arith.constant 0 : index
    %c0_129 = arith.constant 0 : index
    %86 = vector.load %arg9[%c15_127, %c0_128, %c0_129] : memref<18x16x384xf32, #tpu.memory_space<vmem>>, vector<1x16x384xf32>
    %c17_130 = arith.constant 17 : index
    %c0_131 = arith.constant 0 : index
    %c0_132 = arith.constant 0 : index
    %87 = vector.load %arg9[%c17_130, %c0_131, %c0_132] : memref<18x16x384xf32, #tpu.memory_space<vmem>>, vector<1x16x384xf32>
    tpu.vector_store %arg9[%c17_130, %c0_131, %c0_132], %86 {strides = array<i32>} : memref<18x16x384xf32, #tpu.memory_space<vmem>>, vector<1x16x384xf32>,
    %c0_133 = arith.constant 0 : index
    %c0_134 = arith.constant 0 : index
    %c0_135 = arith.constant 0 : index
    %88 = vector.load %arg9[%c0_133, %c0_134, %c0_135] : memref<18x16x384xf32, #tpu.memory_space<vmem>>, vector<16x16x384xf32>
    %89 = vector.shape_cast %88 : vector<16x16x384xf32> to vector<256x384xf32>
    %c0_136 = arith.constant 0 : index
    %c0_137 = arith.constant 0 : index
    %c0_138 = arith.constant 0 : index
    %90 = vector.load %arg5[%c0_136, %c0_137, %c0_138] : memref<3x384x128xf32, #tpu.memory_space<vmem>>, vector<1x384x128xf32>
    %91 = vector.shape_cast %90 : vector<1x384x128xf32> to vector<384x128xf32>
    %cst_139 = arith.constant dense<0.000000e+00> : vector<256x128xf32>
    %92 = tpu.matmul %89, %91, %cst_139 {dimension_numbers = #tpu.dot_dimension_numbers<[1], [0], [0], [1], [0, 0, 1, 1], [], []>} : vector<256x384xf32>, vector<384x128xf32>, vector<256x128xf32> -> vector<256x128xf32>
    %c0_140 = arith.constant 0 : index
    %c0_141 = arith.constant 0 : index
    %93 = vector.load %arg10[%c0_140, %c0_141] : memref<256x128xf32, #tpu.memory_space<vmem>>, vector<256x128xf32>
    tpu.vector_store %arg10[%c0_140, %c0_141], %92 {strides = array<i32>} : memref<256x128xf32, #tpu.memory_space<vmem>>, vector<256x128xf32>,
    %c1_142 = arith.constant 1 : index
    %c0_143 = arith.constant 0 : index
    %c0_144 = arith.constant 0 : index
    %94 = vector.load %arg9[%c1_142, %c0_143, %c0_144] : memref<18x16x384xf32, #tpu.memory_space<vmem>>, vector<16x16x384xf32>
    %95 = vector.shape_cast %94 : vector<16x16x384xf32> to vector<256x384xf32>
    %c1_145 = arith.constant 1 : index
    %c0_146 = arith.constant 0 : index
    %c0_147 = arith.constant 0 : index
    %96 = vector.load %arg5[%c1_145, %c0_146, %c0_147] : memref<3x384x128xf32, #tpu.memory_space<vmem>>, vector<1x384x128xf32>
    %97 = vector.shape_cast %96 : vector<1x384x128xf32> to vector<384x128xf32>
    %cst_148 = arith.constant dense<0.000000e+00> : vector<256x128xf32>
    %98 = tpu.matmul %95, %97, %cst_148 {dimension_numbers = #tpu.dot_dimension_numbers<[1], [0], [0], [1], [0, 0, 1, 1], [], []>} : vector<256x384xf32>, vector<384x128xf32>, vector<256x128xf32> -> vector<256x128xf32>
    %c0_149 = arith.constant 0 : index
    %c0_150 = arith.constant 0 : index
    %99 = vector.load %arg10[%c0_149, %c0_150] : memref<256x128xf32, #tpu.memory_space<vmem>>, vector<256x128xf32>
    %100 = arith.addf %99, %98 : vector<256x128xf32>
    %c0_151 = arith.constant 0 : index
    %c0_152 = arith.constant 0 : index
    %101 = vector.load %arg10[%c0_151, %c0_152] : memref<256x128xf32, #tpu.memory_space<vmem>>, vector<256x128xf32>
    tpu.vector_store %arg10[%c0_151, %c0_152], %100 {strides = array<i32>} : memref<256x128xf32, #tpu.memory_space<vmem>>, vector<256x128xf32>,
    %c2_153 = arith.constant 2 : index
    %c0_154 = arith.constant 0 : index
    %c0_155 = arith.constant 0 : index
    %102 = vector.load %arg9[%c2_153, %c0_154, %c0_155] : memref<18x16x384xf32, #tpu.memory_space<vmem>>, vector<16x16x384xf32>
    %103 = vector.shape_cast %102 : vector<16x16x384xf32> to vector<256x384xf32>
    %c2_156 = arith.constant 2 : index
    %c0_157 = arith.constant 0 : index
    %c0_158 = arith.constant 0 : index
    %104 = vector.load %arg5[%c2_156, %c0_157, %c0_158] : memref<3x384x128xf32, #tpu.memory_space<vmem>>, vector<1x384x128xf32>
    %105 = vector.shape_cast %104 : vector<1x384x128xf32> to vector<384x128xf32>
    %cst_159 = arith.constant dense<0.000000e+00> : vector<256x128xf32>
    %106 = tpu.matmul %103, %105, %cst_159 {dimension_numbers = #tpu.dot_dimension_numbers<[1], [0], [0], [1], [0, 0, 1, 1], [], []>} : vector<256x384xf32>, vector<384x128xf32>, vector<256x128xf32> -> vector<256x128xf32>
    %c0_160 = arith.constant 0 : index
    %c0_161 = arith.constant 0 : index
    %107 = vector.load %arg10[%c0_160, %c0_161] : memref<256x128xf32, #tpu.memory_space<vmem>>, vector<256x128xf32>
    %108 = arith.addf %107, %106 : vector<256x128xf32>
    %c0_162 = arith.constant 0 : index
    %c0_163 = arith.constant 0 : index
    %109 = vector.load %arg10[%c0_162, %c0_163] : memref<256x128xf32, #tpu.memory_space<vmem>>, vector<256x128xf32>
    tpu.vector_store %arg10[%c0_162, %c0_163], %108 {strides = array<i32>} : memref<256x128xf32, #tpu.memory_space<vmem>>, vector<256x128xf32>,
    %c0_164 = arith.constant 0 : index
    %c0_165 = arith.constant 0 : index
    %110 = vector.load %arg6[%c0_164, %c0_165] : memref<1x128xf32, #tpu.memory_space<vmem>>, vector<1x128xf32>
    %c0_166 = arith.constant 0 : index
    %c0_167 = arith.constant 0 : index
    %111 = vector.load %arg7[%c0_166, %c0_167] : memref<1x128xf32, #tpu.memory_space<vmem>>, vector<1x128xf32>
    %cst_168 = arith.constant 0.000000e+00 : f32
    %112 = vector.broadcast %cst_168 : f32 to vector<1x128xf32>
    %cst_169 = arith.constant 0.000000e+00 : f32
    %113 = vector.broadcast %cst_169 : f32 to vector<1x128xf32>
    %c0_170 = arith.constant 0 : index
    %c0_171 = arith.constant 0 : index
    %114 = vector.load %arg10[%c0_170, %c0_171] : memref<256x128xf32, #tpu.memory_space<vmem>>, vector<256x128xf32>
    %cst_172 = arith.constant dense<0.000000e+00> : vector<128xf32>
    %115 = vector.multi_reduction <add>, %114, %cst_172 [0] : vector<256x128xf32> to vector<128xf32>
    %116 = vector.shape_cast %115 : vector<128xf32> to vector<1x128xf32>
    %117 = arith.addf %112, %116 : vector<1x128xf32>
    %118 = arith.mulf %114, %114 : vector<256x128xf32>
    %cst_173 = arith.constant dense<0.000000e+00> : vector<128xf32>
    %119 = vector.multi_reduction <add>, %118, %cst_173 [0] : vector<256x128xf32> to vector<128xf32>
    %120 = vector.shape_cast %119 : vector<128xf32> to vector<1x128xf32>
    %121 = arith.addf %113, %120 : vector<1x128xf32>
    %cst_174 = arith.constant 3.906250e-03 : f32
    %122 = vector.broadcast %cst_174 : f32 to vector<1x128xf32>
    %123 = arith.mulf %117, %122 : vector<1x128xf32>
    %cst_175 = arith.constant 3.906250e-03 : f32
    %124 = vector.broadcast %cst_175 : f32 to vector<1x128xf32>
    %125 = arith.mulf %121, %124 : vector<1x128xf32>
    %126 = arith.mulf %123, %123 : vector<1x128xf32>
    %127 = arith.subf %125, %126 : vector<1x128xf32>
    %cst_176 = arith.constant 0.000000e+00 : f32
    %128 = vector.broadcast %cst_176 : f32 to vector<1x128xf32>
    %129 = arith.maximumf %127, %128 : vector<1x128xf32>
    %cst_177 = arith.constant 9.99999974E-6 : f32
    %130 = vector.broadcast %cst_177 : f32 to vector<1x128xf32>
    %131 = arith.addf %129, %130 : vector<1x128xf32>
    %132 = math.rsqrt %131 : vector<1x128xf32>
    %133 = arith.mulf %132, %110 : vector<1x128xf32>
    %134 = arith.mulf %123, %133 : vector<1x128xf32>
    %135 = arith.subf %111, %134 : vector<1x128xf32>
    %c0_178 = arith.constant 0 : index
    %c0_179 = arith.constant 0 : index
    %c0_180 = arith.constant 0 : index
    %c0_181 = arith.constant 0 : index
    %136 = vector.load %arg1[%c0_178, %c0_179, %c0_180, %c0_181] : memref<1x16x16x128xf32, #tpu.memory_space<vmem>>, vector<1x16x16x128xf32>
    %137 = vector.shape_cast %136 : vector<1x16x16x128xf32> to vector<16x16x128xf32>
    %138 = vector.shape_cast %137 : vector<16x16x128xf32> to vector<256x128xf32>
    %c0_182 = arith.constant 0 : index
    %c0_183 = arith.constant 0 : index
    %139 = vector.load %arg10[%c0_182, %c0_183] : memref<256x128xf32, #tpu.memory_space<vmem>>, vector<256x128xf32>
    %140 = vector.broadcast %133 : vector<1x128xf32> to vector<256x128xf32>
    %141 = arith.mulf %139, %140 : vector<256x128xf32>
    %142 = vector.broadcast %135 : vector<1x128xf32> to vector<256x128xf32>
    %143 = arith.addf %141, %142 : vector<256x128xf32>
    %144 = arith.addf %143, %138 : vector<256x128xf32>
    %c0_184 = arith.constant 0 : index
    %c0_185 = arith.constant 0 : index
    %c0_186 = arith.constant 0 : index
    %145 = vector.load %arg8[%c0_184, %c0_185, %c0_186] : memref<1x256x128xf32, #tpu.memory_space<vmem>>, vector<1x256x128xf32>
    %146 = vector.shape_cast %145 : vector<1x256x128xf32> to vector<256x128xf32>
    %147 = vector.shape_cast %144 : vector<256x128xf32> to vector<1x256x128xf32>
    tpu.vector_store %arg8[%c0_184, %c0_185, %c0_186], %147 {strides = array<i32>} : memref<1x256x128xf32, #tpu.memory_space<vmem>>, vector<1x256x128xf32>,
    return
  }
  func.func @transform_0(%arg0: i32) -> (i32, i32, i32, i32) {
    %c0_i32 = arith.constant 0 : i32
    %c0_i32_0 = arith.constant 0 : i32
    %c0_i32_1 = arith.constant 0 : i32
    %c0_i32_2 = arith.constant 0 : i32
    return %arg0, %c0_i32, %c0_i32_0, %c0_i32_1 : i32, i32, i32, i32
  }
  func.func @transform_1(%arg0: i32) -> (i32, i32, i32) {
    %c0_i32 = arith.constant 0 : i32
    %c0_i32_0 = arith.constant 0 : i32
    %c0_i32_1 = arith.constant 0 : i32
    %c0_i32_2 = arith.constant 0 : i32
    return %c0_i32, %c0_i32_0, %c0_i32_1 : i32, i32, i32
  }
  func.func @transform_2(%arg0: i32) -> (i32, i32) {
    %c0_i32 = arith.constant 0 : i32
    %c0_i32_0 = arith.constant 0 : i32
    %c0_i32_1 = arith.constant 0 : i32
    return %c0_i32, %c0_i32_0 : i32, i32
  }
  func.func @transform_3(%arg0: i32) -> (i32, i32) {
    %c0_i32 = arith.constant 0 : i32
    %c0_i32_0 = arith.constant 0 : i32
    %c0_i32_1 = arith.constant 0 : i32
    return %c0_i32, %c0_i32_0 : i32, i32
  }
  func.func @transform_4(%arg0: i32) -> (i32, i32, i32) {
    %c0_i32 = arith.constant 0 : i32
    %c0_i32_0 = arith.constant 0 : i32
    %c0_i32_1 = arith.constant 0 : i32
    %c0_i32_2 = arith.constant 0 : i32
    return %c0_i32, %c0_i32_0, %c0_i32_1 : i32, i32, i32
  }
  func.func @transform_5(%arg0: i32) -> (i32, i32) {
    %c0_i32 = arith.constant 0 : i32
    %c0_i32_0 = arith.constant 0 : i32
    %c0_i32_1 = arith.constant 0 : i32
    return %c0_i32, %c0_i32_0 : i32, i32
  }
  func.func @transform_6(%arg0: i32) -> (i32, i32) {
    %c0_i32 = arith.constant 0 : i32
    %c0_i32_0 = arith.constant 0 : i32
    %c0_i32_1 = arith.constant 0 : i32
    return %c0_i32, %c0_i32_0 : i32, i32
  }
  func.func @transform_7(%arg0: i32) -> (i32, i32, i32) {
    %c0_i32 = arith.constant 0 : i32
    %c0_i32_0 = arith.constant 0 : i32
    %c0_i32_1 = arith.constant 0 : i32
    return %arg0, %c0_i32, %c0_i32_0 : i32, i32, i32
  }
}

</mosaic_0001>

<llo_original>
// kernel: tpu_custom_call.1
$region0: #{tpu_custom_call.1}
  #allocation0 [shape = 'u32[]', space=smem, size = 0x4, offset = 0x4, fixed_abs, tag = 'smem constant byte address 0x4 - core index']
  #allocation1 [shape = 'u32[144,128]{1,0:T(1,128)}', space=vmem, size = 0x12000, scoped, tag = 'internal scratch']
  #allocation2 [shape = 'f32[18,16,384]{2,1,0:T(8,128)}', space=vmem, size = 0x6c000, scoped, tag = 'scratch operand']
  #allocation3 [shape = 'f32[256,128]{1,0:T(8,128)}', space=vmem, size = 0x20000, scoped, tag = 'scratch operand']
  #allocation4 [shape = 'f32[16,16,128]{2,1,0:T(8,128)}', space=vmem, size = 0x20000, scoped, tag = 'scratch operand']
  %s0 = inlined_call_operand.hbm [shape: f32[2,16,16,128], index: 0, kind: input, shape index: {}]
  %s1 = inlined_call_operand.hbm [shape: f32[3,384,128], index: 1, kind: input, shape index: {}]
  %s2 = inlined_call_operand.vmem [shape: f32[1,128], index: 2, kind: input, shape index: {}]
  %s3 = inlined_call_operand.vmem [shape: f32[1,128], index: 3, kind: input, shape index: {}]
  %s4 = inlined_call_operand.hbm [shape: f32[3,384,128], index: 4, kind: input, shape index: {}]
  %s5 = inlined_call_operand.vmem [shape: f32[1,128], index: 5, kind: input, shape index: {}]
  %s6 = inlined_call_operand.vmem [shape: f32[1,128], index: 6, kind: input, shape index: {}]
  %s7 = inlined_call_operand.hbm [shape: f32[2,256,128], index: 7, kind: output, shape index: {}]
  %s8 = sld [smem:[#allocation0]]
  $region73: #{tpu_custom_call.1} parent=0
    _
  %s10 = ssub.s32 1, %s8
  %s11 = scalar_select 0, %s10, %s8
  $region1: #{tpu_custom_call.1} parent=0
    #allocation5 [shape = 'u8[262144]{0}', space=vmem, size = 0x40000, scoped, tag = 'input window, operand 0']
    #allocation6 [shape = 's32[2]{0}', space=sflag, size = 0x8, scoped, tag = 'scoped memory for tpu_custom_call.1']
    #allocation7 [shape = 's32[2]{0}', space=sflag, size = 0x8, scoped, tag = 'scoped memory for tpu_custom_call.1']
    #allocation8 [shape = 'u8[589824]{0}', space=vmem, size = 0x90000, scoped, tag = 'input window, operand 1, single buffered']
    #allocation9 [shape = 's32[1]{0}', space=sflag, size = 0x4, scoped, tag = 'scoped memory for tpu_custom_call.1']
    #allocation10 [shape = 'u8[589824]{0}', space=vmem, size = 0x90000, scoped, tag = 'input window, operand 4, single buffered']
    #allocation11 [shape = 'u8[262144]{0}', space=vmem, size = 0x40000, scoped, tag = 'output window, operand 0']
    %12 = vsyncpa [#allocation6], 0
    %s13 = scalar_lea.sflag [#allocation6], 1
    %14 = vsyncpa %s13, 0
    %15 = vsyncpa [#allocation9], 0
    %16 = vsyncpa [#allocation7], 0
    %s17 = scalar_lea.sflag [#allocation7], 1
    %18 = vsyncpa %s17, 0
    loop: start=0, step=1, limit=4
    $region2: #{tpu_custom_call.1} parent=1 // loop_pre_header
      _
    $region3: #{tpu_custom_call.1} parent=1 // loop_header
      %s20 = sphi 0, %s24
      %p21 = scmp.ge.s32.totalorder %s20, 4
      %s30 = sphi 0, %s32
      %s33 = sphi 0, %s30
      %s34 = sphi 0, %s33
      %s50 = sphi 0, %s34
      %s54 = sphi 0, %s54
      %s56 = sphi 0, %s54
      %s57 = sphi 0, %s56
      %s71 = sphi 0, %s57
      %s75 = sphi 0, %s75
      %s77 = sphi 0, %s75
      %s78 = sphi 0, %s77
      %s92 = sphi 0, %s78
      %s96 = sphi 0, %s96
      %s98 = sphi 0, %s96
      %s99 = sphi 0, %s98
      %s113 = sphi 0, %s99
      %s117 = sphi 0, %s117
      %s119 = sphi 0, %s117
      %s120 = sphi 0, %s119
      %s134 = sphi 0, %s120
      %s138 = sphi 0, %s138
      %s140 = sphi 0, %s138
      %s141 = sphi 0, %s140
      %s155 = sphi 0, %s141
      %s159 = sphi 0, %s159
      %s161 = sphi 0, %s159
      %s162 = sphi 0, %s161
      %s176 = sphi 0, %s162
      %s182 = sphi 0, %s184
      %s185 = sphi 0, %s182
      %s186 = sphi 0, %s185
      %s202 = sphi 0, %s186
    $region4: #{tpu_custom_call.1} parent=1 // loop_header_branch
      %23 = sbr.rel (%p21) target = $region8
    $region5: #{tpu_custom_call.1} parent=1 // loop_body
      %s25 = ssub.s32 %s20, 1
      %s26 = ssub.s32 %s20, 2
      %s27 = sadd.s32 %s20, 1
      %s28 = ssub.s32 %s20, %s27
      %p29 = scmp.eq.s32.totalorder %s28, 0
      %s31 = sadd.s32 %s30, 1
      %s32 = scalar_select %p29, %s30, %s31
      %p35 = pneg %p29
      %p36 = scmp.eq.s32.totalorder %s20, 1
      %p37 = por %p35, %p36
      %p38 = scmp.ne.s32.totalorder %s30, %s33
      %p39 = scmp.eq.s32.totalorder %s20, 0
      %p40 = por %p38, %p39
      %p41 = scmp.ne.s32.totalorder %s30, %s33
      %p42 = scmp.eq.s32.totalorder %s25, 1
      %p43 = por %p41, %p42
      %p44 = scmp.ne.s32.totalorder %s33, %s34
      %p45 = scmp.eq.s32.totalorder %s25, 0
      %p46 = por %p44, %p45
      %p47 = scmp.ne.s32.totalorder %s33, %s34
      %p48 = scmp.eq.s32.totalorder %s26, 1
      %p49 = por %p47, %p48
      %p51 = scmp.ne.s32.totalorder %s34, %s50
      %p52 = scmp.eq.s32.totalorder %s26, 0
      %p53 = por %p51, %p52
      %s55 = sadd.s32 %s54, 1
      %p58 = scmp.eq.s32.totalorder %s20, 1
      %p59 = scmp.ne.s32.totalorder %s54, %s56
      %p60 = scmp.eq.s32.totalorder %s20, 0
      %p61 = por %p59, %p60
      %p62 = scmp.ne.s32.totalorder %s54, %s56
      %p63 = scmp.eq.s32.totalorder %s25, 1
      %p64 = por %p62, %p63
      %p65 = scmp.ne.s32.totalorder %s56, %s57
      %p66 = scmp.eq.s32.totalorder %s25, 0
      %p67 = por %p65, %p66
      %p68 = scmp.ne.s32.totalorder %s56, %s57
      %p69 = scmp.eq.s32.totalorder %s26, 1
      %p70 = por %p68, %p69
      %p72 = scmp.ne.s32.totalorder %s57, %s71
      %p73 = scmp.eq.s32.totalorder %s26, 0
      %p74 = por %p72, %p73
      %s76 = sadd.s32 %s75, 1
      %p79 = scmp.eq.s32.totalorder %s20, 1
      %p80 = scmp.ne.s32.totalorder %s75, %s77
      %p81 = scmp.eq.s32.totalorder %s20, 0
      %p82 = por %p80, %p81
      %p83 = scmp.ne.s32.totalorder %s75, %s77
      %p84 = scmp.eq.s32.totalorder %s25, 1
      %p85 = por %p83, %p84
      %p86 = scmp.ne.s32.totalorder %s77, %s78
      %p87 = scmp.eq.s32.totalorder %s25, 0
      %p88 = por %p86, %p87
      %p89 = scmp.ne.s32.totalorder %s77, %s78
      %p90 = scmp.eq.s32.totalorder %s26, 1
      %p91 = por %p89, %p90
      %p93 = scmp.ne.s32.totalorder %s78, %s92
      %p94 = scmp.eq.s32.totalorder %s26, 0
      %p95 = por %p93, %p94
      %s97 = sadd.s32 %s96, 1
      %p100 = scmp.eq.s32.totalorder %s20, 1
      %p101 = scmp.ne.s32.totalorder %s96, %s98
      %p102 = scmp.eq.s32.totalorder %s20, 0
      %p103 = por %p101, %p102
      %p104 = scmp.ne.s32.totalorder %s96, %s98
      %p105 = scmp.eq.s32.totalorder %s25, 1
      %p106 = por %p104, %p105
      %p107 = scmp.ne.s32.totalorder %s98, %s99
      %p108 = scmp.eq.s32.totalorder %s25, 0
      %p109 = por %p107, %p108
      %p110 = scmp.ne.s32.totalorder %s98, %s99
      %p111 = scmp.eq.s32.totalorder %s26, 1
      %p112 = por %p110, %p111
      %p114 = scmp.ne.s32.totalorder %s99, %s113
      %p115 = scmp.eq.s32.totalorder %s26, 0
      %p116 = por %p114, %p115
      %s118 = sadd.s32 %s117, 1
      %p121 = scmp.eq.s32.totalorder %s20, 1
      %p122 = scmp.ne.s32.totalorder %s117, %s119
      %p123 = scmp.eq.s32.totalorder %s20, 0
      %p124 = por %p122, %p123
      %p125 = scmp.ne.s32.totalorder %s117, %s119
      %p126 = scmp.eq.s32.totalorder %s25, 1
      %p127 = por %p125, %p126
      %p128 = scmp.ne.s32.totalorder %s119, %s120
      %p129 = scmp.eq.s32.totalorder %s25, 0
      %p130 = por %p128, %p129
      %p131 = scmp.ne.s32.totalorder %s119, %s120
      %p132 = scmp.eq.s32.totalorder %s26, 1
      %p133 = por %p131, %p132
      %p135 = scmp.ne.s32.totalorder %s120, %s134
      %p136 = scmp.eq.s32.totalorder %s26, 0
      %p137 = por %p135, %p136
      %s139 = sadd.s32 %s138, 1
      %p142 = scmp.eq.s32.totalorder %s20, 1
      %p143 = scmp.ne.s32.totalorder %s138, %s140
      %p144 = scmp.eq.s32.totalorder %s20, 0
      %p145 = por %p143, %p144
      %p146 = scmp.ne.s32.totalorder %s138, %s140
      %p147 = scmp.eq.s32.totalorder %s25, 1
      %p148 = por %p146, %p147
      %p149 = scmp.ne.s32.totalorder %s140, %s141
      %p150 = scmp.eq.s32.totalorder %s25, 0
      %p151 = por %p149, %p150
      %p152 = scmp.ne.s32.totalorder %s140, %s141
      %p153 = scmp.eq.s32.totalorder %s26, 1
      %p154 = por %p152, %p153
      %p156 = scmp.ne.s32.totalorder %s141, %s155
      %p157 = scmp.eq.s32.totalorder %s26, 0
      %p158 = por %p156, %p157
      %s160 = sadd.s32 %s159, 1
      %p163 = scmp.eq.s32.totalorder %s20, 1
      %p164 = scmp.ne.s32.totalorder %s159, %s161
      %p165 = scmp.eq.s32.totalorder %s20, 0
      %p166 = por %p164, %p165
      %p167 = scmp.ne.s32.totalorder %s159, %s161
      %p168 = scmp.eq.s32.totalorder %s25, 1
      %p169 = por %p167, %p168
      %p170 = scmp.ne.s32.totalorder %s161, %s162
      %p171 = scmp.eq.s32.totalorder %s25, 0
      %p172 = por %p170, %p171
      %p173 = scmp.ne.s32.totalorder %s161, %s162
      %p174 = scmp.eq.s32.totalorder %s26, 1
      %p175 = por %p173, %p174
      %p177 = scmp.ne.s32.totalorder %s162, %s176
      %p178 = scmp.eq.s32.totalorder %s26, 0
      %p179 = por %p177, %p178
      %s180 = ssub.s32 %s20, %s27
      %p181 = scmp.eq.s32.totalorder %s180, 0
      %s183 = sadd.s32 %s182, 1
      %s184 = scalar_select %p181, %s182, %s183
      %p187 = pneg %p181
      %p188 = scmp.eq.s32.totalorder %s20, 1
      %p189 = por %p187, %p188
      %p190 = scmp.ne.s32.totalorder %s182, %s185
      %p191 = scmp.eq.s32.totalorder %s20, 0
      %p192 = por %p190, %p191
      %p193 = scmp.ne.s32.totalorder %s182, %s185
      %p194 = scmp.eq.s32.totalorder %s25, 1
      %p195 = por %p193, %p194
      %p196 = scmp.ne.s32.totalorder %s185, %s186
      %p197 = scmp.eq.s32.totalorder %s25, 0
      %p198 = por %p196, %p197
      %p199 = scmp.ne.s32.totalorder %s185, %s186
      %p200 = scmp.eq.s32.totalorder %s26, 1
      %p201 = por %p199, %p200
      %p203 = scmp.ne.s32.totalorder %s186, %s202
      %p204 = scmp.eq.s32.totalorder %s26, 0
      %p205 = por %p203, %p204
      %p206 = scmp.le.s32.totalorder 1, %s20
      %p207 = scmp.lt.s32.totalorder %s20, 3
      %p208 = pnand %p206, %p207
      %p209 = pneg %p208
      // Predicated region
      $region9: #{tpu_custom_call.1} parent=5 // pred_check
        _
      $region10: #{tpu_custom_call.1} parent=5 // pred_check_branch
        %211 = sbr.rel (%p208) target = $region12
      $region11: #{tpu_custom_call.1} parent=5 // pred_region
        %s212 = ssub.s32 %s20, 1
        // Predicated region
        $region13: #{tpu_custom_call.1} parent=11 // pred_check
          %p213 = pneg %p67
        $region14: #{tpu_custom_call.1} parent=11 // pred_check_branch
          %215 = sbr.rel (%p213) target = $region16
        $region15: #{tpu_custom_call.1} parent=11 // pred_region
          %s217 = ssub.s32 18432, 18432
          %218 = vsyncadd [#allocation9], %s217
          %s219 = sshll.u32 [#allocation8], 4
          %s220 = int_to_ptr.vmem [resolvable:$true] %s219
          %225 = dma.hbm_to_vmem [thread:$0]  %s1, 18432, %s220, [#allocation9], 128, 128, 8
        $region16: #{tpu_custom_call.1} parent=11 // pred_fallthru
          _
        // Predicated region
        $region17: #{tpu_custom_call.1} parent=11 // pred_check
          %p226 = pneg %p88
        $region18: #{tpu_custom_call.1} parent=11 // pred_check_branch
          %228 = sbr.rel (%p226) target = $region20
        $region19: #{tpu_custom_call.1} parent=11 // pred_region
          _
        $region20: #{tpu_custom_call.1} parent=11 // pred_fallthru
          _
        // Predicated region
        $region21: #{tpu_custom_call.1} parent=11 // pred_check
          %p229 = pneg %p109
        $region22: #{tpu_custom_call.1} parent=11 // pred_check_branch
          %231 = sbr.rel (%p229) target = $region24
        $region23: #{tpu_custom_call.1} parent=11 // pred_region
          _
        $region24: #{tpu_custom_call.1} parent=11 // pred_fallthru
          _
        // Predicated region
        $region25: #{tpu_custom_call.1} parent=11 // pred_check
          %p232 = pneg %p130
        $region26: #{tpu_custom_call.1} parent=11 // pred_check_branch
          %234 = sbr.rel (%p232) target = $region28
        $region27: #{tpu_custom_call.1} parent=11 // pred_region
          %s236 = ssub.s32 18432, 18432
          %237 = vsyncadd [#allocation9], %s236
          %s238 = sshll.u32 [#allocation10], 4
          %s239 = int_to_ptr.vmem [resolvable:$true] %s238
          %244 = dma.hbm_to_vmem [thread:$0]  %s4, 18432, %s239, [#allocation9], 128, 128, 8
        $region28: #{tpu_custom_call.1} parent=11 // pred_fallthru
          _
        // Predicated region
        $region29: #{tpu_custom_call.1} parent=11 // pred_check
          %p245 = pneg %p151
        $region30: #{tpu_custom_call.1} parent=11 // pred_check_branch
          %247 = sbr.rel (%p245) target = $region32
        $region31: #{tpu_custom_call.1} parent=11 // pred_region
          _
        $region32: #{tpu_custom_call.1} parent=11 // pred_fallthru
          _
        // Predicated region
        $region33: #{tpu_custom_call.1} parent=11 // pred_check
          %p248 = pneg %p172
        $region34: #{tpu_custom_call.1} parent=11 // pred_check_branch
          %250 = sbr.rel (%p248) target = $region36
        $region35: #{tpu_custom_call.1} parent=11 // pred_region
          _
        $region36: #{tpu_custom_call.1} parent=11 // pred_fallthru
          _
      $region12: #{tpu_custom_call.1} parent=5 // pred_fallthru
        _
      %p251 = scmp.lt.s32.totalorder %s20, 2
      // Predicated region
      $region37: #{tpu_custom_call.1} parent=5 // pred_check
        %p252 = pneg %p251
      $region38: #{tpu_custom_call.1} parent=5 // pred_check_branch
        %254 = sbr.rel (%p252) target = $region40
      $region39: #{tpu_custom_call.1} parent=5 // pred_region
        // Predicated region
        $region41: #{tpu_custom_call.1} parent=39 // pred_check
          %p255 = pneg %p40
        $region42: #{tpu_custom_call.1} parent=39 // pred_check_branch
          %257 = sbr.rel (%p255) target = $region44
        $region43: #{tpu_custom_call.1} parent=39 // pred_region
          %s258 = sand.u32 %s30, 1
          %s259 = scalar_lea.sflag [#allocation6], %s258
          %s260 = sand.u32 %s30, 1
          %s261 = smul.addr %s260, 256
          %s262 = scalar_lea.vmem [#allocation5], %s261
          %s264 = ssub.s32 4096, 4096
          %265 = vsyncadd %s259, %s264
          %s266 = smul.addr %s20, 32
          %s267 = smul.addr %s266, 128
          %s268 = scalar_lea.hbm %s0, %s267
          %s269 = sshll.u32 %s262, 4
          %s270 = int_to_ptr.vmem [resolvable:$true] %s269
          %275 = dma.hbm_to_vmem [thread:$0]  %s268, 4096, %s270, %s259, 128, 128, 8
        $region44: #{tpu_custom_call.1} parent=39 // pred_fallthru
          _
      $region40: #{tpu_custom_call.1} parent=5 // pred_fallthru
        _
      %p276 = scmp.le.s32.totalorder 1, %s20
      %p277 = scmp.lt.s32.totalorder %s20, 3
      %p278 = pnand %p276, %p277
      %p279 = pneg %p278
      // Predicated region
      $region45: #{tpu_custom_call.1} parent=5 // pred_check
        _
      $region46: #{tpu_custom_call.1} parent=5 // pred_check_branch
        %281 = sbr.rel (%p278) target = $region48
      $region47: #{tpu_custom_call.1} parent=5 // pred_region
        %s282 = ssub.s32 %s20, 1
        %s283 = sand.u32 %s33, 1
        %s284 = scalar_lea.sflag [#allocation6], %s283
        %s285 = sand.u32 %s33, 1
        %s286 = smul.addr %s285, 256
        %s287 = scalar_lea.vmem [#allocation5], %s286
        // Predicated region
        $region49: #{tpu_custom_call.1} parent=47 // pred_check
          %p288 = pneg %p46
        $region50: #{tpu_custom_call.1} parent=47 // pred_check_branch
          %290 = sbr.rel (%p288) target = $region52
        $region51: #{tpu_custom_call.1} parent=47 // pred_region
          %291 = dma.done %s284, 4096
        $region52: #{tpu_custom_call.1} parent=47 // pred_fallthru
          _
        // Predicated region
        $region53: #{tpu_custom_call.1} parent=47 // pred_check
          %p292 = pneg %p67
        $region54: #{tpu_custom_call.1} parent=47 // pred_check_branch
          %294 = sbr.rel (%p292) target = $region56
        $region55: #{tpu_custom_call.1} parent=47 // pred_region
          %295 = dma.done [#allocation9], 18432
        $region56: #{tpu_custom_call.1} parent=47 // pred_fallthru
          _
        // Predicated region
        $region57: #{tpu_custom_call.1} parent=47 // pred_check
          %p296 = pneg %p130
        $region58: #{tpu_custom_call.1} parent=47 // pred_check_branch
          %298 = sbr.rel (%p296) target = $region60
        $region59: #{tpu_custom_call.1} parent=47 // pred_region
          %299 = dma.done [#allocation9], 18432
        $region60: #{tpu_custom_call.1} parent=47 // pred_fallthru
          _
        %s300 = sand.u32 %s33, 1
        %s301 = scalar_lea.sflag [#allocation6], %s300
        %s302 = sand.u32 %s33, 1
        %s303 = smul.addr %s302, 256
        %s304 = scalar_lea.vmem [#allocation5], %s303
        %p305 = pneg %p46
        %p306 = pneg %p43
        %p307 = pneg %p67
        %p308 = pneg %p64
        %p309 = pneg %p88
        %p310 = pneg %p85
        %p311 = pneg %p109
        %p312 = pneg %p106
        %p313 = pneg %p130
        %p314 = pneg %p127
        %p315 = pneg %p151
        %p316 = pneg %p148
        %p317 = pneg %p172
        %p318 = pneg %p169
        %p319 = pneg %p198
        %p320 = pneg %p195
        %s321 = sand.u32 %s185, 1
        %s322 = scalar_lea.sflag [#allocation7], %s321
        %s323 = sand.u32 %s185, 1
        %s324 = smul.addr %s323, 256
        %s325 = scalar_lea.vmem [#allocation11], %s324
        %v326 = vld [vmem:[%s287] sm:$0xff]
        %v327 = vld [vmem:[%s287 + $0x8] sm:$0xff]
        %v328 = vld [vmem:[%s287 + $0x10] sm:$0xff]
        %v329 = vld [vmem:[%s287 + $0x18] sm:$0xff]
        %v330 = vld [vmem:[%s287 + $0x20] sm:$0xff]
        %v331 = vld [vmem:[%s287 + $0x28] sm:$0xff]
        %v332 = vld [vmem:[%s287 + $0x30] sm:$0xff]
        %v333 = vld [vmem:[%s287 + $0x38] sm:$0xff]
        %v334 = vld [vmem:[%s287 + $0x40] sm:$0xff]
        %v335 = vld [vmem:[%s287 + $0x48] sm:$0xff]
        %v336 = vld [vmem:[%s287 + $0x50] sm:$0xff]
        %v337 = vld [vmem:[%s287 + $0x58] sm:$0xff]
        %v338 = vld [vmem:[%s287 + $0x60] sm:$0xff]
        %v339 = vld [vmem:[%s287 + $0x68] sm:$0xff]
        %v340 = vld [vmem:[%s287 + $0x70] sm:$0xff]
        %v341 = vld [vmem:[%s287 + $0x78] sm:$0xff]
        %v342 = vld [vmem:[%s287 + $0x80] sm:$0xff]
        %v343 = vld [vmem:[%s287 + $0x88] sm:$0xff]
        %v344 = vld [vmem:[%s287 + $0x90] sm:$0xff]
        %v345 = vld [vmem:[%s287 + $0x98] sm:$0xff]
        %v346 = vld [vmem:[%s287 + $0xa0] sm:$0xff]
        %v347 = vld [vmem:[%s287 + $0xa8] sm:$0xff]
        %v348 = vld [vmem:[%s287 + $0xb0] sm:$0xff]
        %v349 = vld [vmem:[%s287 + $0xb8] sm:$0xff]
        %v350 = vld [vmem:[%s287 + $0xc0] sm:$0xff]
        %v351 = vld [vmem:[%s287 + $0xc8] sm:$0xff]
        %v352 = vld [vmem:[%s287 + $0xd0] sm:$0xff]
        %v353 = vld [vmem:[%s287 + $0xd8] sm:$0xff]
        %v354 = vld [vmem:[%s287 + $0xe0] sm:$0xff]
        %v355 = vld [vmem:[%s287 + $0xe8] sm:$0xff]
        %v356 = vld [vmem:[%s287 + $0xf0] sm:$0xff]
        %v357 = vld [vmem:[%s287 + $0xf8] sm:$0xff]
        %358 = vst [vmem:[#allocation4] sm:$0xff] %v326
        %359 = vst [vmem:[#allocation4 + $0x8] sm:$0xff] %v327
        %360 = vst [vmem:[#allocation4 + $0x10] sm:$0xff] %v328
        %361 = vst [vmem:[#allocation4 + $0x18] sm:$0xff] %v329
        %362 = vst [vmem:[#allocation4 + $0x20] sm:$0xff] %v330
        %363 = vst [vmem:[#allocation4 + $0x28] sm:$0xff] %v331
        %364 = vst [vmem:[#allocation4 + $0x30] sm:$0xff] %v332
        %365 = vst [vmem:[#allocation4 + $0x38] sm:$0xff] %v333
        %366 = vst [vmem:[#allocation4 + $0x40] sm:$0xff] %v334
        %367 = vst [vmem:[#allocation4 + $0x48] sm:$0xff] %v335
        %368 = vst [vmem:[#allocation4 + $0x50] sm:$0xff] %v336
        %369 = vst [vmem:[#allocation4 + $0x58] sm:$0xff] %v337
        %370 = vst [vmem:[#allocation4 + $0x60] sm:$0xff] %v338
        %371 = vst [vmem:[#allocation4 + $0x68] sm:$0xff] %v339
        %372 = vst [vmem:[#allocation4 + $0x70] sm:$0xff] %v340
        %373 = vst [vmem:[#allocation4 + $0x78] sm:$0xff] %v341
        %374 = vst [vmem:[#allocation4 + $0x80] sm:$0xff] %v342
        %375 = vst [vmem:[#allocation4 + $0x88] sm:$0xff] %v343
        %376 = vst [vmem:[#allocation4 + $0x90] sm:$0xff] %v344
        %377 = vst [vmem:[#allocation4 + $0x98] sm:$0xff] %v345
        %378 = vst [vmem:[#allocation4 + $0xa0] sm:$0xff] %v346
        %379 = vst [vmem:[#allocation4 + $0xa8] sm:$0xff] %v347
        %380 = vst [vmem:[#allocation4 + $0xb0] sm:$0xff] %v348
        %381 = vst [vmem:[#allocation4 + $0xb8] sm:$0xff] %v349
        %382 = vst [vmem:[#allocation4 + $0xc0] sm:$0xff] %v350
        %383 = vst [vmem:[#allocation4 + $0xc8] sm:$0xff] %v351
        %384 = vst [vmem:[#allocation4 + $0xd0] sm:$0xff] %v352
        %385 = vst [vmem:[#allocation4 + $0xd8] sm:$0xff] %v353
        %386 = vst [vmem:[#allocation4 + $0xe0] sm:$0xff] %v354
        %387 = vst [vmem:[#allocation4 + $0xe8] sm:$0xff] %v355
        %388 = vst [vmem:[#allocation4 + $0xf0] sm:$0xff] %v356
        %389 = vst [vmem:[#allocation4 + $0xf8] sm:$0xff] %v357
        %v390 = vld [vmem:[#allocation4] sm:$0xff]
        %v391 = vld [vmem:[#allocation4 + $0x8] sm:$0xff]
        %v392 = vld [vmem:[#allocation4 + $0x10] sm:$0xff]
        %v393 = vld [vmem:[#allocation4 + $0x18] sm:$0xff]
        %v394 = vld [vmem:[#allocation4 + $0x20] sm:$0xff]
        %v395 = vld [vmem:[#allocation4 + $0x28] sm:$0xff]
        %v396 = vld [vmem:[#allocation4 + $0x30] sm:$0xff]
        %v397 = vld [vmem:[#allocation4 + $0x38] sm:$0xff]
        %v398 = vld [vmem:[#allocation4 + $0x40] sm:$0xff]
        %v399 = vld [vmem:[#allocation4 + $0x48] sm:$0xff]
        %v400 = vld [vmem:[#allocation4 + $0x50] sm:$0xff]
        %v401 = vld [vmem:[#allocation4 + $0x58] sm:$0xff]
        %v402 = vld [vmem:[#allocation4 + $0x60] sm:$0xff]
        %v403 = vld [vmem:[#allocation4 + $0x68] sm:$0xff]
        %v404 = vld [vmem:[#allocation4 + $0x70] sm:$0xff]
        %v405 = vld [vmem:[#allocation4 + $0x78] sm:$0xff]
        %v406 = vld [vmem:[#allocation4 + $0x80] sm:$0xff]
        %v407 = vld [vmem:[#allocation4 + $0x88] sm:$0xff]
        %v408 = vld [vmem:[#allocation4 + $0x90] sm:$0xff]
        %v409 = vld [vmem:[#allocation4 + $0x98] sm:$0xff]
        %v410 = vld [vmem:[#allocation4 + $0xa0] sm:$0xff]
        %v411 = vld [vmem:[#allocation4 + $0xa8] sm:$0xff]
        %v412 = vld [vmem:[#allocation4 + $0xb0] sm:$0xff]
        %v413 = vld [vmem:[#allocation4 + $0xb8] sm:$0xff]
        %v414 = vld [vmem:[#allocation4 + $0xc0] sm:$0xff]
        %v415 = vld [vmem:[#allocation4 + $0xc8] sm:$0xff]
        %v416 = vld [vmem:[#allocation4 + $0xd0] sm:$0xff]
        %v417 = vld [vmem:[#allocation4 + $0xd8] sm:$0xff]
        %v418 = vld [vmem:[#allocation4 + $0xe0] sm:$0xff]
        %v419 = vld [vmem:[#allocation4 + $0xe8] sm:$0xff]
        %v420 = vld [vmem:[#allocation4 + $0xf0] sm:$0xff]
        %v421 = vld [vmem:[#allocation4 + $0xf8] sm:$0xff]
        %s422 = scalar_lea.vmem [#allocation2], 48
        %423 = vst [vmem:[%s422 + $0x8] sm:$0xff] %v390
        %424 = vst [vmem:[%s422 + $0x20] sm:$0xff] %v391
        %425 = vst [vmem:[%s422 + $0x38] sm:$0xff] %v392
        %426 = vst [vmem:[%s422 + $0x50] sm:$0xff] %v393
        %427 = vst [vmem:[%s422 + $0x68] sm:$0xff] %v394
        %428 = vst [vmem:[%s422 + $0x80] sm:$0xff] %v395
        %429 = vst [vmem:[%s422 + $0x98] sm:$0xff] %v396
        %430 = vst [vmem:[%s422 + $0xb0] sm:$0xff] %v397
        %431 = vst [vmem:[%s422 + $0xc8] sm:$0xff] %v398
        %432 = vst [vmem:[%s422 + $0xe0] sm:$0xff] %v399
        %433 = vst [vmem:[%s422 + $0xf8] sm:$0xff] %v400
        %434 = vst [vmem:[%s422 + $0x110] sm:$0xff] %v401
        %435 = vst [vmem:[%s422 + $0x128] sm:$0xff] %v402
        %436 = vst [vmem:[%s422 + $0x140] sm:$0xff] %v403
        %437 = vst [vmem:[%s422 + $0x158] sm:$0xff] %v404
        %438 = vst [vmem:[%s422 + $0x170] sm:$0xff] %v405
        %439 = vst [vmem:[%s422 + $0x188] sm:$0xff] %v406
        %440 = vst [vmem:[%s422 + $0x1a0] sm:$0xff] %v407
        %441 = vst [vmem:[%s422 + $0x1b8] sm:$0xff] %v408
        %442 = vst [vmem:[%s422 + $0x1d0] sm:$0xff] %v409
        %443 = vst [vmem:[%s422 + $0x1e8] sm:$0xff] %v410
        %444 = vst [vmem:[%s422 + $0x200] sm:$0xff] %v411
        %445 = vst [vmem:[%s422 + $0x218] sm:$0xff] %v412
        %446 = vst [vmem:[%s422 + $0x230] sm:$0xff] %v413
        %447 = vst [vmem:[%s422 + $0x248] sm:$0xff] %v414
        %448 = vst [vmem:[%s422 + $0x260] sm:$0xff] %v415
        %449 = vst [vmem:[%s422 + $0x278] sm:$0xff] %v416
        %450 = vst [vmem:[%s422 + $0x290] sm:$0xff] %v417
        %451 = vst [vmem:[%s422 + $0x2a8] sm:$0xff] %v418
        %452 = vst [vmem:[%s422 + $0x2c0] sm:$0xff] %v419
        %453 = vst [vmem:[%s422 + $0x2d8] sm:$0xff] %v420
        %454 = vst [vmem:[%s422 + $0x2f0] sm:$0xff] %v421
        %v455 = vld [vmem:[#allocation4] sm:$0xff]
        %v456 = vld [vmem:[#allocation4 + $0x8] sm:$0x7f]
        %v457 = vld [vmem:[#allocation4 + $0x10] sm:$0xff]
        %v458 = vld [vmem:[#allocation4 + $0x18] sm:$0x7f]
        %v459 = vld [vmem:[#allocation4 + $0x20] sm:$0xff]
        %v460 = vld [vmem:[#allocation4 + $0x28] sm:$0x7f]
        %v461 = vld [vmem:[#allocation4 + $0x30] sm:$0xff]
        %v462 = vld [vmem:[#allocation4 + $0x38] sm:$0x7f]
        %v463 = vld [vmem:[#allocation4 + $0x40] sm:$0xff]
        %v464 = vld [vmem:[#allocation4 + $0x48] sm:$0x7f]
        %v465 = vld [vmem:[#allocation4 + $0x50] sm:$0xff]
        %v466 = vld [vmem:[#allocation4 + $0x58] sm:$0x7f]
        %v467 = vld [vmem:[#allocation4 + $0x60] sm:$0xff]
        %v468 = vld [vmem:[#allocation4 + $0x68] sm:$0x7f]
        %v469 = vld [vmem:[#allocation4 + $0x70] sm:$0xff]
        %v470 = vld [vmem:[#allocation4 + $0x78] sm:$0x7f]
        %v471 = vld [vmem:[#allocation4 + $0x80] sm:$0xff]
        %v472 = vld [vmem:[#allocation4 + $0x88] sm:$0x7f]
        %v473 = vld [vmem:[#allocation4 + $0x90] sm:$0xff]
        %v474 = vld [vmem:[#allocation4 + $0x98] sm:$0x7f]
        %v475 = vld [vmem:[#allocation4 + $0xa0] sm:$0xff]
        %v476 = vld [vmem:[#allocation4 + $0xa8] sm:$0x7f]
        %v477 = vld [vmem:[#allocation4 + $0xb0] sm:$0xff]
        %v478 = vld [vmem:[#allocation4 + $0xb8] sm:$0x7f]
        %v479 = vld [vmem:[#allocation4 + $0xc0] sm:$0xff]
        %v480 = vld [vmem:[#allocation4 + $0xc8] sm:$0x7f]
        %v481 = vld [vmem:[#allocation4 + $0xd0] sm:$0xff]
        %v482 = vld [vmem:[#allocation4 + $0xd8] sm:$0x7f]
        %v483 = vld [vmem:[#allocation4 + $0xe0] sm:$0xff]
        %v484 = vld [vmem:[#allocation4 + $0xe8] sm:$0x7f]
        %v485 = vld [vmem:[#allocation4 + $0xf0] sm:$0xff]
        %v486 = vld [vmem:[#allocation4 + $0xf8] sm:$0x7f]
        %vm519 = vcmask 1040384
        %v520 = vrot.slane %v455, 7
        %v521 = vrot.slane %v456, 7
        %v522 = vsel %vm519, %v520, %v521
        %v523 = vrot.slane %v457, 7
        %v524 = vrot.slane %v458, 7
        %v525 = vsel %vm519, %v523, %v524
        %v526 = vrot.slane %v459, 7
        %v527 = vrot.slane %v460, 7
        %v528 = vsel %vm519, %v526, %v527
        %v529 = vrot.slane %v461, 7
        %v530 = vrot.slane %v462, 7
        %v531 = vsel %vm519, %v529, %v530
        %v532 = vrot.slane %v463, 7
        %v533 = vrot.slane %v464, 7
        %v534 = vsel %vm519, %v532, %v533
        %v535 = vrot.slane %v465, 7
        %v536 = vrot.slane %v466, 7
        %v537 = vsel %vm519, %v535, %v536
        %v538 = vrot.slane %v467, 7
        %v539 = vrot.slane %v468, 7
        %v540 = vsel %vm519, %v538, %v539
        %v541 = vrot.slane %v469, 7
        %v542 = vrot.slane %v470, 7
        %v543 = vsel %vm519, %v541, %v542
        %v544 = vrot.slane %v471, 7
        %v545 = vrot.slane %v472, 7
        %v546 = vsel %vm519, %v544, %v545
        %v547 = vrot.slane %v473, 7
        %v548 = vrot.slane %v474, 7
        %v549 = vsel %vm519, %v547, %v548
        %v550 = vrot.slane %v475, 7
        %v551 = vrot.slane %v476, 7
        %v552 = vsel %vm519, %v550, %v551
        %v553 = vrot.slane %v477, 7
        %v554 = vrot.slane %v478, 7
        %v555 = vsel %vm519, %v553, %v554
        %v556 = vrot.slane %v479, 7
        %v557 = vrot.slane %v480, 7
        %v558 = vsel %vm519, %v556, %v557
        %v559 = vrot.slane %v481, 7
        %v560 = vrot.slane %v482, 7
        %v561 = vsel %vm519, %v559, %v560
        %v562 = vrot.slane %v483, 7
        %v563 = vrot.slane %v484, 7
        %v564 = vsel %vm519, %v562, %v563
        %v565 = vrot.slane %v485, 7
        %v566 = vrot.slane %v486, 7
        %v567 = vsel %vm519, %v565, %v566
        %600 = vst [vmem:[%s422] sm:$0xfe] %v520
        %601 = vst [vmem:[%s422 + $0x18] sm:$0xff] %v522
        %602 = vst [vmem:[%s422 + $0x30] sm:$0xfe] %v523
        %603 = vst [vmem:[%s422 + $0x48] sm:$0xff] %v525
        %604 = vst [vmem:[%s422 + $0x60] sm:$0xfe] %v526
        %605 = vst [vmem:[%s422 + $0x78] sm:$0xff] %v528
        %606 = vst [vmem:[%s422 + $0x90] sm:$0xfe] %v529
        %607 = vst [vmem:[%s422 + $0xa8] sm:$0xff] %v531
        %608 = vst [vmem:[%s422 + $0xc0] sm:$0xfe] %v532
        %609 = vst [vmem:[%s422 + $0xd8] sm:$0xff] %v534
        %610 = vst [vmem:[%s422 + $0xf0] sm:$0xfe] %v535
        %611 = vst [vmem:[%s422 + $0x108] sm:$0xff] %v537
        %612 = vst [vmem:[%s422 + $0x120] sm:$0xfe] %v538
        %613 = vst [vmem:[%s422 + $0x138] sm:$0xff] %v540
        %614 = vst [vmem:[%s422 + $0x150] sm:$0xfe] %v541
        %615 = vst [vmem:[%s422 + $0x168] sm:$0xff] %v543
        %616 = vst [vmem:[%s422 + $0x180] sm:$0xfe] %v544
        %617 = vst [vmem:[%s422 + $0x198] sm:$0xff] %v546
        %618 = vst [vmem:[%s422 + $0x1b0] sm:$0xfe] %v547
        %619 = vst [vmem:[%s422 + $0x1c8] sm:$0xff] %v549
        %620 = vst [vmem:[%s422 + $0x1e0] sm:$0xfe] %v550
        %621 = vst [vmem:[%s422 + $0x1f8] sm:$0xff] %v552
        %622 = vst [vmem:[%s422 + $0x210] sm:$0xfe] %v553
        %623 = vst [vmem:[%s422 + $0x228] sm:$0xff] %v555
        %624 = vst [vmem:[%s422 + $0x240] sm:$0xfe] %v556
        %625 = vst [vmem:[%s422 + $0x258] sm:$0xff] %v558
        %626 = vst [vmem:[%s422 + $0x270] sm:$0xfe] %v559
        %627 = vst [vmem:[%s422 + $0x288] sm:$0xff] %v561
        %628 = vst [vmem:[%s422 + $0x2a0] sm:$0xfe] %v562
        %629 = vst [vmem:[%s422 + $0x2b8] sm:$0xff] %v564
        %630 = vst [vmem:[%s422 + $0x2d0] sm:$0xfe] %v565
        %631 = vst [vmem:[%s422 + $0x2e8] sm:$0xff] %v567
        %v632 = vld [vmem:[#allocation4 + $0x1] sm:$0x1]
        %v633 = vld [vmem:[#allocation4 + $0x11] sm:$0x1]
        %v634 = vld [vmem:[#allocation4 + $0x21] sm:$0x1]
        %v635 = vld [vmem:[#allocation4 + $0x31] sm:$0x1]
        %v636 = vld [vmem:[#allocation4 + $0x41] sm:$0x1]
        %v637 = vld [vmem:[#allocation4 + $0x51] sm:$0x1]
        %v638 = vld [vmem:[#allocation4 + $0x61] sm:$0x1]
        %v639 = vld [vmem:[#allocation4 + $0x71] sm:$0x1]
        %v640 = vld [vmem:[#allocation4 + $0x81] sm:$0x1]
        %v641 = vld [vmem:[#allocation4 + $0x91] sm:$0x1]
        %v642 = vld [vmem:[#allocation4 + $0xa1] sm:$0x1]
        %v643 = vld [vmem:[#allocation4 + $0xb1] sm:$0x1]
        %v644 = vld [vmem:[#allocation4 + $0xc1] sm:$0x1]
        %v645 = vld [vmem:[#allocation4 + $0xd1] sm:$0x1]
        %v646 = vld [vmem:[#allocation4 + $0xe1] sm:$0x1]
        %v647 = vld [vmem:[#allocation4 + $0xf1] sm:$0x1]
        %648 = vst [vmem:[%s422] sm:$0x1] %v632
        %649 = vst [vmem:[%s422 + $0x30] sm:$0x1] %v633
        %650 = vst [vmem:[%s422 + $0x60] sm:$0x1] %v634
        %651 = vst [vmem:[%s422 + $0x90] sm:$0x1] %v635
        %652 = vst [vmem:[%s422 + $0xc0] sm:$0x1] %v636
        %653 = vst [vmem:[%s422 + $0xf0] sm:$0x1] %v637
        %654 = vst [vmem:[%s422 + $0x120] sm:$0x1] %v638
        %655 = vst [vmem:[%s422 + $0x150] sm:$0x1] %v639
        %656 = vst [vmem:[%s422 + $0x180] sm:$0x1] %v640
        %657 = vst [vmem:[%s422 + $0x1b0] sm:$0x1] %v641
        %658 = vst [vmem:[%s422 + $0x1e0] sm:$0x1] %v642
        %659 = vst [vmem:[%s422 + $0x210] sm:$0x1] %v643
        %660 = vst [vmem:[%s422 + $0x240] sm:$0x1] %v644
        %661 = vst [vmem:[%s422 + $0x270] sm:$0x1] %v645
        %662 = vst [vmem:[%s422 + $0x2a0] sm:$0x1] %v646
        %663 = vst [vmem:[%s422 + $0x2d0] sm:$0x1] %v647
        %v664 = vld [vmem:[#allocation4 + $0x1] sm:$0xff]
        %v665 = vld [vmem:[#allocation4 + $0x9] sm:$0x7f]
        %v666 = vld [vmem:[#allocation4 + $0x11] sm:$0xff]
        %v667 = vld [vmem:[#allocation4 + $0x19] sm:$0x7f]
        %v668 = vld [vmem:[#allocation4 + $0x21] sm:$0xff]
        %v669 = vld [vmem:[#allocation4 + $0x29] sm:$0x7f]
        %v670 = vld [vmem:[#allocation4 + $0x31] sm:$0xff]
        %v671 = vld [vmem:[#allocation4 + $0x39] sm:$0x7f]
        %v672 = vld [vmem:[#allocation4 + $0x41] sm:$0xff]
        %v673 = vld [vmem:[#allocation4 + $0x49] sm:$0x7f]
        %v674 = vld [vmem:[#allocation4 + $0x51] sm:$0xff]
        %v675 = vld [vmem:[#allocation4 + $0x59] sm:$0x7f]
        %v676 = vld [vmem:[#allocation4 + $0x61] sm:$0xff]
        %v677 = vld [vmem:[#allocation4 + $0x69] sm:$0x7f]
        %v678 = vld [vmem:[#allocation4 + $0x71] sm:$0xff]
        %v679 = vld [vmem:[#allocation4 + $0x79] sm:$0x7f]
        %v680 = vld [vmem:[#allocation4 + $0x81] sm:$0xff]
        %v681 = vld [vmem:[#allocation4 + $0x89] sm:$0x7f]
        %v682 = vld [vmem:[#allocation4 + $0x91] sm:$0xff]
        %v683 = vld [vmem:[#allocation4 + $0x99] sm:$0x7f]
        %v684 = vld [vmem:[#allocation4 + $0xa1] sm:$0xff]
        %v685 = vld [vmem:[#allocation4 + $0xa9] sm:$0x7f]
        %v686 = vld [vmem:[#allocation4 + $0xb1] sm:$0xff]
        %v687 = vld [vmem:[#allocation4 + $0xb9] sm:$0x7f]
        %v688 = vld [vmem:[#allocation4 + $0xc1] sm:$0xff]
        %v689 = vld [vmem:[#allocation4 + $0xc9] sm:$0x7f]
        %v690 = vld [vmem:[#allocation4 + $0xd1] sm:$0xff]
        %v691 = vld [vmem:[#allocation4 + $0xd9] sm:$0x7f]
        %v692 = vld [vmem:[#allocation4 + $0xe1] sm:$0xff]
        %v693 = vld [vmem:[#allocation4 + $0xe9] sm:$0x7f]
        %v694 = vld [vmem:[#allocation4 + $0xf1] sm:$0xff]
        %v695 = vld [vmem:[#allocation4 + $0xf9] sm:$0x7f]
        %696 = vst [vmem:[%s422 + $0x10] sm:$0xff] %v664
        %697 = vst [vmem:[%s422 + $0x28] sm:$0x7f] %v665
        %698 = vst [vmem:[%s422 + $0x40] sm:$0xff] %v666
        %699 = vst [vmem:[%s422 + $0x58] sm:$0x7f] %v667
        %700 = vst [vmem:[%s422 + $0x70] sm:$0xff] %v668
        %701 = vst [vmem:[%s422 + $0x88] sm:$0x7f] %v669
        %702 = vst [vmem:[%s422 + $0xa0] sm:$0xff] %v670
        %703 = vst [vmem:[%s422 + $0xb8] sm:$0x7f] %v671
        %704 = vst [vmem:[%s422 + $0xd0] sm:$0xff] %v672
        %705 = vst [vmem:[%s422 + $0xe8] sm:$0x7f] %v673
        %706 = vst [vmem:[%s422 + $0x100] sm:$0xff] %v674
        %707 = vst [vmem:[%s422 + $0x118] sm:$0x7f] %v675
        %708 = vst [vmem:[%s422 + $0x130] sm:$0xff] %v676
        %709 = vst [vmem:[%s422 + $0x148] sm:$0x7f] %v677
        %710 = vst [vmem:[%s422 + $0x160] sm:$0xff] %v678
        %711 = vst [vmem:[%s422 + $0x178] sm:$0x7f] %v679
        %712 = vst [vmem:[%s422 + $0x190] sm:$0xff] %v680
        %713 = vst [vmem:[%s422 + $0x1a8] sm:$0x7f] %v681
        %714 = vst [vmem:[%s422 + $0x1c0] sm:$0xff] %v682
        %715 = vst [vmem:[%s422 + $0x1d8] sm:$0x7f] %v683
        %716 = vst [vmem:[%s422 + $0x1f0] sm:$0xff] %v684
        %717 = vst [vmem:[%s422 + $0x208] sm:$0x7f] %v685
        %718 = vst [vmem:[%s422 + $0x220] sm:$0xff] %v686
        %719 = vst [vmem:[%s422 + $0x238] sm:$0x7f] %v687
        %720 = vst [vmem:[%s422 + $0x250] sm:$0xff] %v688
        %721 = vst [vmem:[%s422 + $0x268] sm:$0x7f] %v689
        %722 = vst [vmem:[%s422 + $0x280] sm:$0xff] %v690
        %723 = vst [vmem:[%s422 + $0x298] sm:$0x7f] %v691
        %724 = vst [vmem:[%s422 + $0x2b0] sm:$0xff] %v692
        %725 = vst [vmem:[%s422 + $0x2c8] sm:$0x7f] %v693
        %726 = vst [vmem:[%s422 + $0x2e0] sm:$0xff] %v694
        %727 = vst [vmem:[%s422 + $0x2f8] sm:$0x7f] %v695
        %v728 = vld [vmem:[#allocation4 + $0xe] sm:$0x1]
        %v729 = vld [vmem:[#allocation4 + $0x1e] sm:$0x1]
        %v730 = vld [vmem:[#allocation4 + $0x2e] sm:$0x1]
        %v731 = vld [vmem:[#allocation4 + $0x3e] sm:$0x1]
        %v732 = vld [vmem:[#allocation4 + $0x4e] sm:$0x1]
        %v733 = vld [vmem:[#allocation4 + $0x5e] sm:$0x1]
        %v734 = vld [vmem:[#allocation4 + $0x6e] sm:$0x1]
        %v735 = vld [vmem:[#allocation4 + $0x7e] sm:$0x1]
        %v736 = vld [vmem:[#allocation4 + $0x8e] sm:$0x1]
        %v737 = vld [vmem:[#allocation4 + $0x9e] sm:$0x1]
        %v738 = vld [vmem:[#allocation4 + $0xae] sm:$0x1]
        %v739 = vld [vmem:[#allocation4 + $0xbe] sm:$0x1]
        %v740 = vld [vmem:[#allocation4 + $0xce] sm:$0x1]
        %v741 = vld [vmem:[#allocation4 + $0xde] sm:$0x1]
        %v742 = vld [vmem:[#allocation4 + $0xee] sm:$0x1]
        %v743 = vld [vmem:[#allocation4 + $0xfe] sm:$0x1]
        %744 = vst [vmem:[%s422 + $0x2f] sm:$0x1] %v728
        %745 = vst [vmem:[%s422 + $0x5f] sm:$0x1] %v729
        %746 = vst [vmem:[%s422 + $0x8f] sm:$0x1] %v730
        %747 = vst [vmem:[%s422 + $0xbf] sm:$0x1] %v731
        %748 = vst [vmem:[%s422 + $0xef] sm:$0x1] %v732
        %749 = vst [vmem:[%s422 + $0x11f] sm:$0x1] %v733
        %750 = vst [vmem:[%s422 + $0x14f] sm:$0x1] %v734
        %751 = vst [vmem:[%s422 + $0x17f] sm:$0x1] %v735
        %752 = vst [vmem:[%s422 + $0x1af] sm:$0x1] %v736
        %753 = vst [vmem:[%s422 + $0x1df] sm:$0x1] %v737
        %754 = vst [vmem:[%s422 + $0x20f] sm:$0x1] %v738
        %755 = vst [vmem:[%s422 + $0x23f] sm:$0x1] %v739
        %756 = vst [vmem:[%s422 + $0x26f] sm:$0x1] %v740
        %757 = vst [vmem:[%s422 + $0x29f] sm:$0x1] %v741
        %758 = vst [vmem:[%s422 + $0x2cf] sm:$0x1] %v742
        %759 = vst [vmem:[%s422 + $0x2ff] sm:$0x1] %v743
        %s760 = scalar_lea.vmem [#allocation2], 96
        %v761 = vld [vmem:[%s760] sm:$0xff]
        %v762 = vld [vmem:[%s760 + $0x8] sm:$0xff]
        %v763 = vld [vmem:[%s760 + $0x10] sm:$0xff]
        %v764 = vld [vmem:[%s760 + $0x18] sm:$0xff]
        %v765 = vld [vmem:[%s760 + $0x20] sm:$0xff]
        %v766 = vld [vmem:[%s760 + $0x28] sm:$0xff]
        %767 = vst [vmem:[#allocation2] sm:$0xff] %v761
        %768 = vst [vmem:[#allocation2 + $0x8] sm:$0xff] %v762
        %769 = vst [vmem:[#allocation2 + $0x10] sm:$0xff] %v763
        %770 = vst [vmem:[#allocation2 + $0x18] sm:$0xff] %v764
        %771 = vst [vmem:[#allocation2 + $0x20] sm:$0xff] %v765
        %772 = vst [vmem:[#allocation2 + $0x28] sm:$0xff] %v766
        %s773 = scalar_lea.vmem [#allocation2], 720
        %v774 = vld [vmem:[%s773] sm:$0xff]
        %v775 = vld [vmem:[%s773 + $0x8] sm:$0xff]
        %v776 = vld [vmem:[%s773 + $0x10] sm:$0xff]
        %v777 = vld [vmem:[%s773 + $0x18] sm:$0xff]
        %v778 = vld [vmem:[%s773 + $0x20] sm:$0xff]
        %v779 = vld [vmem:[%s773 + $0x28] sm:$0xff]
        %s780 = scalar_lea.vmem [#allocation2], 816
        %781 = vst [vmem:[%s780] sm:$0xff] %v774
        %782 = vst [vmem:[%s780 + $0x8] sm:$0xff] %v775
        %783 = vst [vmem:[%s780 + $0x10] sm:$0xff] %v776
        %784 = vst [vmem:[%s780 + $0x18] sm:$0xff] %v777
        %785 = vst [vmem:[%s780 + $0x20] sm:$0xff] %v778
        %786 = vst [vmem:[%s780 + $0x28] sm:$0xff] %v779
        %v787 = vld [vmem:[#allocation2] sm:$0xff]
        %v788 = vld [vmem:[#allocation2 + $0x8] sm:$0xff]
        %v789 = vld [vmem:[#allocation2 + $0x10] sm:$0xff]
        %v790 = vld [vmem:[#allocation2 + $0x18] sm:$0xff]
        %v791 = vld [vmem:[#allocation2 + $0x20] sm:$0xff]
        %v792 = vld [vmem:[#allocation2 + $0x28] sm:$0xff]
        %v793 = vld [vmem:[#allocation2 + $0x30] sm:$0xff]
        %v794 = vld [vmem:[#allocation2 + $0x38] sm:$0xff]
        %v795 = vld [vmem:[#allocation2 + $0x40] sm:$0xff]
        %v796 = vld [vmem:[#allocation2 + $0x48] sm:$0xff]
        %v797 = vld [vmem:[#allocation2 + $0x50] sm:$0xff]
        %v798 = vld [vmem:[#allocation2 + $0x58] sm:$0xff]
        %v799 = vld [vmem:[#allocation2 + $0x60] sm:$0xff]
        %v800 = vld [vmem:[#allocation2 + $0x68] sm:$0xff]
        %v801 = vld [vmem:[#allocation2 + $0x70] sm:$0xff]
        %v802 = vld [vmem:[#allocation2 + $0x78] sm:$0xff]
        %v803 = vld [vmem:[#allocation2 + $0x80] sm:$0xff]
        %v804 = vld [vmem:[#allocation2 + $0x88] sm:$0xff]
        %v805 = vld [vmem:[#allocation2 + $0x90] sm:$0xff]
        %v806 = vld [vmem:[#allocation2 + $0x98] sm:$0xff]
        %v807 = vld [vmem:[#allocation2 + $0xa0] sm:$0xff]
        %v808 = vld [vmem:[#allocation2 + $0xa8] sm:$0xff]
        %v809 = vld [vmem:[#allocation2 + $0xb0] sm:$0xff]
        %v810 = vld [vmem:[#allocation2 + $0xb8] sm:$0xff]
        %v811 = vld [vmem:[#allocation2 + $0xc0] sm:$0xff]
        %v812 = vld [vmem:[#allocation2 + $0xc8] sm:$0xff]
        %v813 = vld [vmem:[#allocation2 + $0xd0] sm:$0xff]
        %v814 = vld [vmem:[#allocation2 + $0xd8] sm:$0xff]
        %v815 = vld [vmem:[#allocation2 + $0xe0] sm:$0xff]
        %v816 = vld [vmem:[#allocation2 + $0xe8] sm:$0xff]
        %v817 = vld [vmem:[#allocation2 + $0xf0] sm:$0xff]
        %v818 = vld [vmem:[#allocation2 + $0xf8] sm:$0xff]
        %v819 = vld [vmem:[#allocation2 + $0x100] sm:$0xff]
        %v820 = vld [vmem:[#allocation2 + $0x108] sm:$0xff]
        %v821 = vld [vmem:[#allocation2 + $0x110] sm:$0xff]
        %v822 = vld [vmem:[#allocation2 + $0x118] sm:$0xff]
        %v823 = vld [vmem:[#allocation2 + $0x120] sm:$0xff]
        %v824 = vld [vmem:[#allocation2 + $0x128] sm:$0xff]
        %v825 = vld [vmem:[#allocation2 + $0x130] sm:$0xff]
        %v826 = vld [vmem:[#allocation2 + $0x138] sm:$0xff]
        %v827 = vld [vmem:[#allocation2 + $0x140] sm:$0xff]
        %v828 = vld [vmem:[#allocation2 + $0x148] sm:$0xff]
        %v829 = vld [vmem:[#allocation2 + $0x150] sm:$0xff]
        %v830 = vld [vmem:[#allocation2 + $0x158] sm:$0xff]
        %v831 = vld [vmem:[#allocation2 + $0x160] sm:$0xff]
        %v832 = vld [vmem:[#allocation2 + $0x168] sm:$0xff]
        %v833 = vld [vmem:[#allocation2 + $0x170] sm:$0xff]
        %v834 = vld [vmem:[#allocation2 + $0x178] sm:$0xff]
        %v835 = vld [vmem:[#allocation2 + $0x180] sm:$0xff]
        %v836 = vld [vmem:[#allocation2 + $0x188] sm:$0xff]
        %v837 = vld [vmem:[#allocation2 + $0x190] sm:$0xff]
        %v838 = vld [vmem:[#allocation2 + $0x198] sm:$0xff]
        %v839 = vld [vmem:[#allocation2 + $0x1a0] sm:$0xff]
        %v840 = vld [vmem:[#allocation2 + $0x1a8] sm:$0xff]
        %v841 = vld [vmem:[#allocation2 + $0x1b0] sm:$0xff]
        %v842 = vld [vmem:[#allocation2 + $0x1b8] sm:$0xff]
        %v843 = vld [vmem:[#allocation2 + $0x1c0] sm:$0xff]
        %v844 = vld [vmem:[#allocation2 + $0x1c8] sm:$0xff]
        %v845 = vld [vmem:[#allocation2 + $0x1d0] sm:$0xff]
        %v846 = vld [vmem:[#allocation2 + $0x1d8] sm:$0xff]
        %v847 = vld [vmem:[#allocation2 + $0x1e0] sm:$0xff]
        %v848 = vld [vmem:[#allocation2 + $0x1e8] sm:$0xff]
        %v849 = vld [vmem:[#allocation2 + $0x1f0] sm:$0xff]
        %v850 = vld [vmem:[#allocation2 + $0x1f8] sm:$0xff]
        %v851 = vld [vmem:[#allocation2 + $0x200] sm:$0xff]
        %v852 = vld [vmem:[#allocation2 + $0x208] sm:$0xff]
        %v853 = vld [vmem:[#allocation2 + $0x210] sm:$0xff]
        %v854 = vld [vmem:[#allocation2 + $0x218] sm:$0xff]
        %v855 = vld [vmem:[#allocation2 + $0x220] sm:$0xff]
        %v856 = vld [vmem:[#allocation2 + $0x228] sm:$0xff]
        %v857 = vld [vmem:[#allocation2 + $0x230] sm:$0xff]
        %v858 = vld [vmem:[#allocation2 + $0x238] sm:$0xff]
        %v859 = vld [vmem:[#allocation2 + $0x240] sm:$0xff]
        %v860 = vld [vmem:[#allocation2 + $0x248] sm:$0xff]
        %v861 = vld [vmem:[#allocation2 + $0x250] sm:$0xff]
        %v862 = vld [vmem:[#allocation2 + $0x258] sm:$0xff]
        %v863 = vld [vmem:[#allocation2 + $0x260] sm:$0xff]
        %v864 = vld [vmem:[#allocation2 + $0x268] sm:$0xff]
        %v865 = vld [vmem:[#allocation2 + $0x270] sm:$0xff]
        %v866 = vld [vmem:[#allocation2 + $0x278] sm:$0xff]
        %v867 = vld [vmem:[#allocation2 + $0x280] sm:$0xff]
        %v868 = vld [vmem:[#allocation2 + $0x288] sm:$0xff]
        %v869 = vld [vmem:[#allocation2 + $0x290] sm:$0xff]
        %v870 = vld [vmem:[#allocation2 + $0x298] sm:$0xff]
        %v871 = vld [vmem:[#allocation2 + $0x2a0] sm:$0xff]
        %v872 = vld [vmem:[#allocation2 + $0x2a8] sm:$0xff]
        %v873 = vld [vmem:[#allocation2 + $0x2b0] sm:$0xff]
        %v874 = vld [vmem:[#allocation2 + $0x2b8] sm:$0xff]
        %v875 = vld [vmem:[#allocation2 + $0x2c0] sm:$0xff]
        %v876 = vld [vmem:[#allocation2 + $0x2c8] sm:$0xff]
        %v877 = vld [vmem:[#allocation2 + $0x2d0] sm:$0xff]
        %v878 = vld [vmem:[#allocation2 + $0x2d8] sm:$0xff]
        %v879 = vld [vmem:[#allocation2 + $0x2e0] sm:$0xff]
        %v880 = vld [vmem:[#allocation2 + $0x2e8] sm:$0xff]
        %v881 = vld [vmem:[#allocation2 + $0x2f0] sm:$0xff]
        %v882 = vld [vmem:[#allocation2 + $0x2f8] sm:$0xff]
        %v883 = vld [vmem:[#allocation8] sm:$0xff]
        %v884 = vld [vmem:[#allocation8 + $0x8] sm:$0xff]
        %v885 = vld [vmem:[#allocation8 + $0x10] sm:$0xff]
        %v886 = vld [vmem:[#allocation8 + $0x18] sm:$0xff]
        %v887 = vld [vmem:[#allocation8 + $0x20] sm:$0xff]
        %v888 = vld [vmem:[#allocation8 + $0x28] sm:$0xff]
        %v889 = vld [vmem:[#allocation8 + $0x30] sm:$0xff]
        %v890 = vld [vmem:[#allocation8 + $0x38] sm:$0xff]
        %v891 = vld [vmem:[#allocation8 + $0x40] sm:$0xff]
        %v892 = vld [vmem:[#allocation8 + $0x48] sm:$0xff]
        %v893 = vld [vmem:[#allocation8 + $0x50] sm:$0xff]
        %v894 = vld [vmem:[#allocation8 + $0x58] sm:$0xff]
        %v895 = vld [vmem:[#allocation8 + $0x60] sm:$0xff]
        %v896 = vld [vmem:[#allocation8 + $0x68] sm:$0xff]
        %v897 = vld [vmem:[#allocation8 + $0x70] sm:$0xff]
        %v898 = vld [vmem:[#allocation8 + $0x78] sm:$0xff]
        %v899 = vld [vmem:[#allocation8 + $0x80] sm:$0xff]
        %v900 = vld [vmem:[#allocation8 + $0x88] sm:$0xff]
        %v901 = vld [vmem:[#allocation8 + $0x90] sm:$0xff]
        %v902 = vld [vmem:[#allocation8 + $0x98] sm:$0xff]
        %v903 = vld [vmem:[#allocation8 + $0xa0] sm:$0xff]
        %v904 = vld [vmem:[#allocation8 + $0xa8] sm:$0xff]
        %v905 = vld [vmem:[#allocation8 + $0xb0] sm:$0xff]
        %v906 = vld [vmem:[#allocation8 + $0xb8] sm:$0xff]
        %v907 = vld [vmem:[#allocation8 + $0xc0] sm:$0xff]
        %v908 = vld [vmem:[#allocation8 + $0xc8] sm:$0xff]
        %v909 = vld [vmem:[#allocation8 + $0xd0] sm:$0xff]
        %v910 = vld [vmem:[#allocation8 + $0xd8] sm:$0xff]
        %v911 = vld [vmem:[#allocation8 + $0xe0] sm:$0xff]
        %v912 = vld [vmem:[#allocation8 + $0xe8] sm:$0xff]
        %v913 = vld [vmem:[#allocation8 + $0xf0] sm:$0xff]
        %v914 = vld [vmem:[#allocation8 + $0xf8] sm:$0xff]
        %v915 = vld [vmem:[#allocation8 + $0x100] sm:$0xff]
        %v916 = vld [vmem:[#allocation8 + $0x108] sm:$0xff]
        %v917 = vld [vmem:[#allocation8 + $0x110] sm:$0xff]
        %v918 = vld [vmem:[#allocation8 + $0x118] sm:$0xff]
        %v919 = vld [vmem:[#allocation8 + $0x120] sm:$0xff]
        %v920 = vld [vmem:[#allocation8 + $0x128] sm:$0xff]
        %v921 = vld [vmem:[#allocation8 + $0x130] sm:$0xff]
        %v922 = vld [vmem:[#allocation8 + $0x138] sm:$0xff]
        %v923 = vld [vmem:[#allocation8 + $0x140] sm:$0xff]
        %v924 = vld [vmem:[#allocation8 + $0x148] sm:$0xff]
        %v925 = vld [vmem:[#allocation8 + $0x150] sm:$0xff]
        %v926 = vld [vmem:[#allocation8 + $0x158] sm:$0xff]
        %v927 = vld [vmem:[#allocation8 + $0x160] sm:$0xff]
        %v928 = vld [vmem:[#allocation8 + $0x168] sm:$0xff]
        %v929 = vld [vmem:[#allocation8 + $0x170] sm:$0xff]
        %v930 = vld [vmem:[#allocation8 + $0x178] sm:$0xff]
        %931 = vmatprep.subr.mxu0 0.0
        %932 = vmatpush1.msra.mxu0 %v883
        %933 = vmatprep.subr.mxu0 0.0
        %934 = vmatpush1.msra.mxu0 %v884
        %935 = vmatprep.subr.mxu0 0.0
        %936 = vmatpush1.msra.mxu0 %v885
        %937 = vmatprep.subr.mxu0 0.0
        %938 = vmatpush1.msra.mxu0 %v886
        %939 = vmatprep.subr.mxu0 0.0
        %940 = vmatpush1.msra.mxu0 %v887
        %941 = vmatprep.subr.mxu0 0.0
        %942 = vmatpush1.msra.mxu0 %v888
        %943 = vmatprep.subr.mxu0 0.0
        %944 = vmatpush1.msra.mxu0 %v889
        %945 = vmatprep.subr.mxu0 0.0
        %946 = vmatpush1.msra.mxu0 %v890
        %947 = vmatprep.subr.mxu0 0.0
        %948 = vmatpush1.msra.mxu0 %v891
        %949 = vmatprep.subr.mxu0 0.0
        %950 = vmatpush1.msra.mxu0 %v892
        %951 = vmatprep.subr.mxu0 0.0
        %952 = vmatpush1.msra.mxu0 %v893
        %953 = vmatprep.subr.mxu0 0.0
        %954 = vmatpush1.msra.mxu0 %v894
        %955 = vmatprep.subr.mxu0 0.0
        %956 = vmatpush1.msra.mxu0 %v895
        %957 = vmatprep.subr.mxu0 0.0
        %958 = vmatpush1.msra.mxu0 %v896
        %959 = vmatprep.subr.mxu0 0.0
        %960 = vmatpush1.msra.mxu0 %v897
        %961 = vmatprep.subr.mxu0 0.0
        %962 = vmatpush1.msra.mxu0 %v898
        %963 = vmatprep.subr.mxu0 0.0
        %964 = vmatpush1.msra.mxu0 %v899
        %965 = vmatprep.subr.mxu0 0.0
        %966 = vmatpush1.msra.mxu0 %v900
        %967 = vmatprep.subr.mxu0 0.0
        %968 = vmatpush1.msra.mxu0 %v901
        %969 = vmatprep.subr.mxu0 0.0
        %970 = vmatpush1.msra.mxu0 %v902
        %971 = vmatprep.subr.mxu0 0.0
        %972 = vmatpush1.msra.mxu0 %v903
        %973 = vmatprep.subr.mxu0 0.0
        %974 = vmatpush1.msra.mxu0 %v904
        %975 = vmatprep.subr.mxu0 0.0
        %976 = vmatpush1.msra.mxu0 %v905
        %977 = vmatprep.subr.mxu0 0.0
        %978 = vmatpush1.msra.mxu0 %v906
        %979 = vmatprep.subr.mxu0 0.0
        %980 = vmatpush1.msra.mxu0 %v907
        %981 = vmatprep.subr.mxu0 0.0
        %982 = vmatpush1.msra.mxu0 %v908
        %983 = vmatprep.subr.mxu0 0.0
        %984 = vmatpush1.msra.mxu0 %v909
        %985 = vmatprep.subr.mxu0 0.0
        %986 = vmatpush1.msra.mxu0 %v910
        %987 = vmatprep.subr.mxu0 0.0
        %988 = vmatpush1.msra.mxu0 %v911
        %989 = vmatprep.subr.mxu0 0.0
        %990 = vmatpush1.msra.mxu0 %v912
        %991 = vmatprep.subr.mxu0 0.0
        %992 = vmatpush1.msra.mxu0 %v913
        %993 = vmatprep.subr.mxu0 0.0
        %994 = vmatpush1.msra.mxu0 %v914
        %995 = vmatprep.mubr.f32.mxu0 %v788
        %996 = vmatmul.mubr.f32.gmra.mrb[0].mxu0 %v787
        %v997 = vpop.f32.mrb[0].mxu0
        %v998 = vadd.f32 0.0, %v997
        %v999 = vpop.f32.mrb[0].mxu0
        %1000 = vmatprep.mubr.f32.mxu0 %v791
        %1001 = vmatmul.mubr.f32.gmra.mrb[0].mxu0 %v790
        %v1002 = vpop.f32.mrb[0].mxu0
        %v1003 = vadd.f32 0.0, %v1002
        %v1004 = vpop.f32.mrb[0].mxu0
        %1005 = vmatprep.mubr.f32.mxu0 %v794
        %1006 = vmatmul.mubr.f32.gmra.mrb[0].mxu0 %v793
        %v1007 = vpop.f32.mrb[0].mxu0
        %v1008 = vadd.f32 0.0, %v1007
        %v1009 = vpop.f32.mrb[0].mxu0
        %1010 = vmatprep.mubr.f32.mxu0 %v797
        %1011 = vmatmul.mubr.f32.gmra.mrb[0].mxu0 %v796
        %v1012 = vpop.f32.mrb[0].mxu0
        %v1013 = vadd.f32 0.0, %v1012
        %v1014 = vpop.f32.mrb[0].mxu0
        %1015 = vmatprep.mubr.f32.mxu0 %v800
        %1016 = vmatmul.mubr.f32.gmra.mrb[0].mxu0 %v799
        %v1017 = vpop.f32.mrb[0].mxu0
        %v1018 = vadd.f32 0.0, %v1017
        %v1019 = vpop.f32.mrb[0].mxu0
        %1020 = vmatprep.mubr.f32.mxu0 %v803
        %1021 = vmatmul.mubr.f32.gmra.mrb[0].mxu0 %v802
        %v1022 = vpop.f32.mrb[0].mxu0
        %v1023 = vadd.f32 0.0, %v1022
        %v1024 = vpop.f32.mrb[0].mxu0
        %1025 = vmatprep.mubr.f32.mxu0 %v806
        %1026 = vmatmul.mubr.f32.gmra.mrb[0].mxu0 %v805
        %v1027 = vpop.f32.mrb[0].mxu0
        %v1028 = vadd.f32 0.0, %v1027
        %v1029 = vpop.f32.mrb[0].mxu0
        %1030 = vmatprep.mubr.f32.mxu0 %v809
        %1031 = vmatmul.mubr.f32.gmra.mrb[0].mxu0 %v808
        %v1032 = vpop.f32.mrb[0].mxu0
        %v1033 = vadd.f32 0.0, %v1032
        %v1034 = vpop.f32.mrb[0].mxu0
        %1035 = vmatprep.mubr.f32.mxu0 %v812
        %1036 = vmatmul.mubr.f32.gmra.mrb[0].mxu0 %v811
        %v1037 = vpop.f32.mrb[0].mxu0
        %v1038 = vadd.f32 0.0, %v1037
        %v1039 = vpop.f32.mrb[0].mxu0
        %1040 = vmatprep.mubr.f32.mxu0 %v815
        %1041 = vmatmul.mubr.f32.gmra.mrb[0].mxu0 %v814
        %v1042 = vpop.f32.mrb[0].mxu0
        %v1043 = vadd.f32 0.0, %v1042
        %v1044 = vpop.f32.mrb[0].mxu0
        %1045 = vmatprep.mubr.f32.mxu0 %v818
        %1046 = vmatmul.mubr.f32.gmra.mrb[0].mxu0 %v817
        %v1047 = vpop.f32.mrb[0].mxu0
        %v1048 = vadd.f32 0.0, %v1047
        %v1049 = vpop.f32.mrb[0].mxu0
        %1050 = vmatprep.mubr.f32.mxu0 %v821
        %1051 = vmatmul.mubr.f32.gmra.mrb[0].mxu0 %v820
        %v1052 = vpop.f32.mrb[0].mxu0
        %v1053 = vadd.f32 0.0, %v1052
        %v1054 = vpop.f32.mrb[0].mxu0
        %1055 = vmatprep.mubr.f32.mxu0 %v824
        %1056 = vmatmul.mubr.f32.gmra.mrb[0].mxu0 %v823
        %v1057 = vpop.f32.mrb[0].mxu0
        %v1058 = vadd.f32 0.0, %v1057
        %v1059 = vpop.f32.mrb[0].mxu0
        %1060 = vmatprep.mubr.f32.mxu0 %v827
        %1061 = vmatmul.mubr.f32.gmra.mrb[0].mxu0 %v826
        %v1062 = vpop.f32.mrb[0].mxu0
        %v1063 = vadd.f32 0.0, %v1062
        %v1064 = vpop.f32.mrb[0].mxu0
        %1065 = vmatprep.mubr.f32.mxu0 %v830
        %1066 = vmatmul.mubr.f32.gmra.mrb[0].mxu0 %v829
        %v1067 = vpop.f32.mrb[0].mxu0
        %v1068 = vadd.f32 0.0, %v1067
        %v1069 = vpop.f32.mrb[0].mxu0
        %1070 = vmatprep.mubr.f32.mxu0 %v833
        %1071 = vmatmul.mubr.f32.gmra.mrb[0].mxu0 %v832
        %v1072 = vpop.f32.mrb[0].mxu0
        %v1073 = vadd.f32 0.0, %v1072
        %v1074 = vpop.f32.mrb[0].mxu0
        %1075 = vmatprep.mubr.f32.mxu0 %v836
        %1076 = vmatmul.mubr.f32.gmra.mrb[0].mxu0 %v835
        %v1077 = vpop.f32.mrb[0].mxu0
        %v1078 = vadd.f32 0.0, %v1077
        %v1079 = vpop.f32.mrb[0].mxu0
        %1080 = vmatprep.mubr.f32.mxu0 %v839
        %1081 = vmatmul.mubr.f32.gmra.mrb[0].mxu0 %v838
        %v1082 = vpop.f32.mrb[0].mxu0
        %v1083 = vadd.f32 0.0, %v1082
        %v1084 = vpop.f32.mrb[0].mxu0
        %1085 = vmatprep.mubr.f32.mxu0 %v842
        %1086 = vmatmul.mubr.f32.gmra.mrb[0].mxu0 %v841
        %v1087 = vpop.f32.mrb[0].mxu0
        %v1088 = vadd.f32 0.0, %v1087
        %v1089 = vpop.f32.mrb[0].mxu0
        %1090 = vmatprep.mubr.f32.mxu0 %v845
        %1091 = vmatmul.mubr.f32.gmra.mrb[0].mxu0 %v844
        %v1092 = vpop.f32.mrb[0].mxu0
        %v1093 = vadd.f32 0.0, %v1092
        %v1094 = vpop.f32.mrb[0].mxu0
        %1095 = vmatprep.mubr.f32.mxu0 %v848
        %1096 = vmatmul.mubr.f32.gmra.mrb[0].mxu0 %v847
        %v1097 = vpop.f32.mrb[0].mxu0
        %v1098 = vadd.f32 0.0, %v1097
        %v1099 = vpop.f32.mrb[0].mxu0
        %1100 = vmatprep.mubr.f32.mxu0 %v851
        %1101 = vmatmul.mubr.f32.gmra.mrb[0].mxu0 %v850
        %v1102 = vpop.f32.mrb[0].mxu0
        %v1103 = vadd.f32 0.0, %v1102
        %v1104 = vpop.f32.mrb[0].mxu0
        %1105 = vmatprep.mubr.f32.mxu0 %v854
        %1106 = vmatmul.mubr.f32.gmra.mrb[0].mxu0 %v853
        %v1107 = vpop.f32.mrb[0].mxu0
        %v1108 = vadd.f32 0.0, %v1107
        %v1109 = vpop.f32.mrb[0].mxu0
        %1110 = vmatprep.mubr.f32.mxu0 %v857
        %1111 = vmatmul.mubr.f32.gmra.mrb[0].mxu0 %v856
        %v1112 = vpop.f32.mrb[0].mxu0
        %v1113 = vadd.f32 0.0, %v1112
        %v1114 = vpop.f32.mrb[0].mxu0
        %1115 = vmatprep.mubr.f32.mxu0 %v860
        %1116 = vmatmul.mubr.f32.gmra.mrb[0].mxu0 %v859
        %v1117 = vpop.f32.mrb[0].mxu0
        %v1118 = vadd.f32 0.0, %v1117
        %v1119 = vpop.f32.mrb[0].mxu0
        %1120 = vmatprep.mubr.f32.mxu0 %v863
        %1121 = vmatmul.mubr.f32.gmra.mrb[0].mxu0 %v862
        %v1122 = vpop.f32.mrb[0].mxu0
        %v1123 = vadd.f32 0.0, %v1122
        %v1124 = vpop.f32.mrb[0].mxu0
        %1125 = vmatprep.mubr.f32.mxu0 %v866
        %1126 = vmatmul.mubr.f32.gmra.mrb[0].mxu0 %v865
        %v1127 = vpop.f32.mrb[0].mxu0
        %v1128 = vadd.f32 0.0, %v1127
        %v1129 = vpop.f32.mrb[0].mxu0
        %1130 = vmatprep.mubr.f32.mxu0 %v869
        %1131 = vmatmul.mubr.f32.gmra.mrb[0].mxu0 %v868
        %v1132 = vpop.f32.mrb[0].mxu0
        %v1133 = vadd.f32 0.0, %v1132
        %v1134 = vpop.f32.mrb[0].mxu0
        %1135 = vmatprep.mubr.f32.mxu0 %v872
        %1136 = vmatmul.mubr.f32.gmra.mrb[0].mxu0 %v871
        %v1137 = vpop.f32.mrb[0].mxu0
        %v1138 = vadd.f32 0.0, %v1137
        %v1139 = vpop.f32.mrb[0].mxu0
        %1140 = vmatprep.mubr.f32.mxu0 %v875
        %1141 = vmatmul.mubr.f32.gmra.mrb[0].mxu0 %v874
        %v1142 = vpop.f32.mrb[0].mxu0
        %v1143 = vadd.f32 0.0, %v1142
        %v1144 = vpop.f32.mrb[0].mxu0
        %1145 = vmatprep.mubr.f32.mxu0 %v878
        %1146 = vmatmul.mubr.f32.gmra.mrb[0].mxu0 %v877
        %v1147 = vpop.f32.mrb[0].mxu0
        %v1148 = vadd.f32 0.0, %v1147
        %v1149 = vpop.f32.mrb[0].mxu0
        %1150 = vmatprep.mubr.f32.mxu0 %v881
        %1151 = vmatmul.mubr.f32.gmra.mrb[0].mxu0 %v880
        %v1152 = vpop.f32.mrb[0].mxu0
        %v1153 = vadd.f32 0.0, %v1152
        %v1154 = vpop.f32.mrb[0].mxu0
        %1155 = vdwg.mxu0
        %1156 = vmatprep.subr.mxu0 0.0
        %1157 = vmatpush1.msra.mxu0 %v915
        %1158 = vmatprep.subr.mxu0 0.0
        %1159 = vmatpush1.msra.mxu0 %v916
        %1160 = vmatprep.subr.mxu0 0.0
        %1161 = vmatpush1.msra.mxu0 %v917
        %1162 = vmatprep.subr.mxu0 0.0
        %1163 = vmatpush1.msra.mxu0 %v918
        %1164 = vmatprep.subr.mxu0 0.0
        %1165 = vmatpush1.msra.mxu0 %v919
        %1166 = vmatprep.subr.mxu0 0.0
        %1167 = vmatpush1.msra.mxu0 %v920
        %1168 = vmatprep.subr.mxu0 0.0
        %1169 = vmatpush1.msra.mxu0 %v921
        %1170 = vmatprep.subr.mxu0 0.0
        %1171 = vmatpush1.msra.mxu0 %v922
        %1172 = vmatprep.subr.mxu0 0.0
        %1173 = vmatpush1.msra.mxu0 %v923
        %1174 = vmatprep.subr.mxu0 0.0
        %1175 = vmatpush1.msra.mxu0 %v924
        %1176 = vmatprep.subr.mxu0 0.0
        %1177 = vmatpush1.msra.mxu0 %v925
        %1178 = vmatprep.subr.mxu0 0.0
        %1179 = vmatpush1.msra.mxu0 %v926
        %1180 = vmatprep.subr.mxu0 0.0
        %1181 = vmatpush1.msra.mxu0 %v927
        %1182 = vmatprep.subr.mxu0 0.0
        %1183 = vmatpush1.msra.mxu0 %v928
        %1184 = vmatprep.subr.mxu0 0.0
        %1185 = vmatpush1.msra.mxu0 %v929
        %1186 = vmatprep.subr.mxu0 0.0
        %1187 = vmatpush1.msra.mxu0 %v930
        %1188 = vmatprep.subr.mxu0 0.0
        %1189 = vmatpush1.msra.mxu0 0.0
        %1190 = vmatprep.subr.mxu0 0.0
        %1191 = vmatpush1.msra.mxu0 0.0
        %1192 = vmatprep.subr.mxu0 0.0
        %1193 = vmatpush1.msra.mxu0 0.0
        %1194 = vmatprep.subr.mxu0 0.0
        %1195 = vmatpush1.msra.mxu0 0.0
        %1196 = vmatprep.subr.mxu0 0.0
        %1197 = vmatpush1.msra.mxu0 0.0
        %1198 = vmatprep.subr.mxu0 0.0
        %1199 = vmatpush1.msra.mxu0 0.0
        %1200 = vmatprep.subr.mxu0 0.0
        %1201 = vmatpush1.msra.mxu0 0.0
        %1202 = vmatprep.subr.mxu0 0.0
        %1203 = vmatpush1.msra.mxu0 0.0
        %1204 = vmatprep.subr.mxu0 0.0
        %1205 = vmatpush1.msra.mxu0 0.0
        %1206 = vmatprep.subr.mxu0 0.0
        %1207 = vmatpush1.msra.mxu0 0.0
        %1208 = vmatprep.subr.mxu0 0.0
        %1209 = vmatpush1.msra.mxu0 0.0
        %1210 = vmatprep.subr.mxu0 0.0
        %1211 = vmatpush1.msra.mxu0 0.0
        %1212 = vmatprep.subr.mxu0 0.0
        %1213 = vmatpush1.msra.mxu0 0.0
        %1214 = vmatprep.subr.mxu0 0.0
        %1215 = vmatpush1.msra.mxu0 0.0
        %1216 = vmatprep.subr.mxu0 0.0
        %1217 = vmatpush1.msra.mxu0 0.0
        %1218 = vmatprep.subr.mxu0 0.0
        %1219 = vmatpush1.msra.mxu0 0.0
        %1220 = vmatprep.mubr.f32.mxu0 0.0
        %1221 = vmatmul.mubr.f32.gmra.mrb[0].mxu0 %v789
        %v1222 = vpop.f32.mrb[0].mxu0
        %v1223 = vadd.f32 %v998, %v1222
        %v1224 = vpop.f32.mrb[0].mxu0
        %1225 = vmatprep.mubr.f32.mxu0 0.0
        %1226 = vmatmul.mubr.f32.gmra.mrb[0].mxu0 %v792
        %v1227 = vpop.f32.mrb[0].mxu0
        %v1228 = vadd.f32 %v1003, %v1227
        %v1229 = vpop.f32.mrb[0].mxu0
        %1230 = vmatprep.mubr.f32.mxu0 0.0
        %1231 = vmatmul.mubr.f32.gmra.mrb[0].mxu0 %v795
        %v1232 = vpop.f32.mrb[0].mxu0
        %v1233 = vadd.f32 %v1008, %v1232
        %v1234 = vpop.f32.mrb[0].mxu0
        %1235 = vmatprep.mubr.f32.mxu0 0.0
        %1236 = vmatmul.mubr.f32.gmra.mrb[0].mxu0 %v798
        %v1237 = vpop.f32.mrb[0].mxu0
        %v1238 = vadd.f32 %v1013, %v1237
        %v1239 = vpop.f32.mrb[0].mxu0
        %1240 = vmatprep.mubr.f32.mxu0 0.0
        %1241 = vmatmul.mubr.f32.gmra.mrb[0].mxu0 %v801
        %v1242 = vpop.f32.mrb[0].mxu0
        %v1243 = vadd.f32 %v1018, %v1242
        %v1244 = vpop.f32.mrb[0].mxu0
        %1245 = vmatprep.mubr.f32.mxu0 0.0
        %1246 = vmatmul.mubr.f32.gmra.mrb[0].mxu0 %v804
        %v1247 = vpop.f32.mrb[0].mxu0
        %v1248 = vadd.f32 %v1023, %v1247
        %v1249 = vpop.f32.mrb[0].mxu0
        %1250 = vmatprep.mubr.f32.mxu0 0.0
        %1251 = vmatmul.mubr.f32.gmra.mrb[0].mxu0 %v807
        %v1252 = vpop.f32.mrb[0].mxu0
        %v1253 = vadd.f32 %v1028, %v1252
        %v1254 = vpop.f32.mrb[0].mxu0
        %1255 = vmatprep.mubr.f32.mxu0 0.0
        %1256 = vmatmul.mubr.f32.gmra.mrb[0].mxu0 %v810
        %v1257 = vpop.f32.mrb[0].mxu0
        %v1258 = vadd.f32 %v1033, %v1257
        %v1259 = vpop.f32.mrb[0].mxu0
        %1260 = vmatprep.mubr.f32.mxu0 0.0
        %1261 = vmatmul.mubr.f32.gmra.mrb[0].mxu0 %v813
        %v1262 = vpop.f32.mrb[0].mxu0
        %v1263 = vadd.f32 %v1038, %v1262
        %v1264 = vpop.f32.mrb[0].mxu0
        %1265 = vmatprep.mubr.f32.mxu0 0.0
        %1266 = vmatmul.mubr.f32.gmra.mrb[0].mxu0 %v816
        %v1267 = vpop.f32.mrb[0].mxu0
        %v1268 = vadd.f32 %v1043, %v1267
        %v1269 = vpop.f32.mrb[0].mxu0
        %1270 = vmatprep.mubr.f32.mxu0 0.0
        %1271 = vmatmul.mubr.f32.gmra.mrb[0].mxu0 %v819
        %v1272 = vpop.f32.mrb[0].mxu0
        %v1273 = vadd.f32 %v1048, %v1272
        %v1274 = vpop.f32.mrb[0].mxu0
        %1275 = vmatprep.mubr.f32.mxu0 0.0
        %1276 = vmatmul.mubr.f32.gmra.mrb[0].mxu0 %v822
        %v1277 = vpop.f32.mrb[0].mxu0
        %v1278 = vadd.f32 %v1053, %v1277
        %v1279 = vpop.f32.mrb[0].mxu0
        %1280 = vmatprep.mubr.f32.mxu0 0.0
        %1281 = vmatmul.mubr.f32.gmra.mrb[0].mxu0 %v825
        %v1282 = vpop.f32.mrb[0].mxu0
        %v1283 = vadd.f32 %v1058, %v1282
        %v1284 = vpop.f32.mrb[0].mxu0
        %1285 = vmatprep.mubr.f32.mxu0 0.0
        %1286 = vmatmul.mubr.f32.gmra.mrb[0].mxu0 %v828
        %v1287 = vpop.f32.mrb[0].mxu0
        %v1288 = vadd.f32 %v1063, %v1287
        %v1289 = vpop.f32.mrb[0].mxu0
        %1290 = vmatprep.mubr.f32.mxu0 0.0
        %1291 = vmatmul.mubr.f32.gmra.mrb[0].mxu0 %v831
        %v1292 = vpop.f32.mrb[0].mxu0
        %v1293 = vadd.f32 %v1068, %v1292
        %v1294 = vpop.f32.mrb[0].mxu0
        %1295 = vmatprep.mubr.f32.mxu0 0.0
        %1296 = vmatmul.mubr.f32.gmra.mrb[0].mxu0 %v834
        %v1297 = vpop.f32.mrb[0].mxu0
        %v1298 = vadd.f32 %v1073, %v1297
        %v1299 = vpop.f32.mrb[0].mxu0
        %1300 = vmatprep.mubr.f32.mxu0 0.0
        %1301 = vmatmul.mubr.f32.gmra.mrb[0].mxu0 %v837
        %v1302 = vpop.f32.mrb[0].mxu0
        %v1303 = vadd.f32 %v1078, %v1302
        %v1304 = vpop.f32.mrb[0].mxu0
        %1305 = vmatprep.mubr.f32.mxu0 0.0
        %1306 = vmatmul.mubr.f32.gmra.mrb[0].mxu0 %v840
        %v1307 = vpop.f32.mrb[0].mxu0
        %v1308 = vadd.f32 %v1083, %v1307
        %v1309 = vpop.f32.mrb[0].mxu0
        %1310 = vmatprep.mubr.f32.mxu0 0.0
        %1311 = vmatmul.mubr.f32.gmra.mrb[0].mxu0 %v843
        %v1312 = vpop.f32.mrb[0].mxu0
        %v1313 = vadd.f32 %v1088, %v1312
        %v1314 = vpop.f32.mrb[0].mxu0
        %1315 = vmatprep.mubr.f32.mxu0 0.0
        %1316 = vmatmul.mubr.f32.gmra.mrb[0].mxu0 %v846
        %v1317 = vpop.f32.mrb[0].mxu0
        %v1318 = vadd.f32 %v1093, %v1317
        %v1319 = vpop.f32.mrb[0].mxu0
        %1320 = vmatprep.mubr.f32.mxu0 0.0
        %1321 = vmatmul.mubr.f32.gmra.mrb[0].mxu0 %v849
        %v1322 = vpop.f32.mrb[0].mxu0
        %v1323 = vadd.f32 %v1098, %v1322
        %v1324 = vpop.f32.mrb[0].mxu0
        %1325 = vmatprep.mubr.f32.mxu0 0.0
        %1326 = vmatmul.mubr.f32.gmra.mrb[0].mxu0 %v852
        %v1327 = vpop.f32.mrb[0].mxu0
        %v1328 = vadd.f32 %v1103, %v1327
        %v1329 = vpop.f32.mrb[0].mxu0
        %1330 = vmatprep.mubr.f32.mxu0 0.0
        %1331 = vmatmul.mubr.f32.gmra.mrb[0].mxu0 %v855
        %v1332 = vpop.f32.mrb[0].mxu0
        %v1333 = vadd.f32 %v1108, %v1332
        %v1334 = vpop.f32.mrb[0].mxu0
        %1335 = vmatprep.mubr.f32.mxu0 0.0
        %1336 = vmatmul.mubr.f32.gmra.mrb[0].mxu0 %v858
        %v1337 = vpop.f32.mrb[0].mxu0
        %v1338 = vadd.f32 %v1113, %v1337
        %v1339 = vpop.f32.mrb[0].mxu0
        %1340 = vmatprep.mubr.f32.mxu0 0.0
        %1341 = vmatmul.mubr.f32.gmra.mrb[0].mxu0 %v861
        %v1342 = vpop.f32.mrb[0].mxu0
        %v1343 = vadd.f32 %v1118, %v1342
        %v1344 = vpop.f32.mrb[0].mxu0
        %1345 = vmatprep.mubr.f32.mxu0 0.0
        %1346 = vmatmul.mubr.f32.gmra.mrb[0].mxu0 %v864
        %v1347 = vpop.f32.mrb[0].mxu0
        %v1348 = vadd.f32 %v1123, %v1347
        %v1349 = vpop.f32.mrb[0].mxu0
        %1350 = vmatprep.mubr.f32.mxu0 0.0
        %1351 = vmatmul.mubr.f32.gmra.mrb[0].mxu0 %v867
        %v1352 = vpop.f32.mrb[0].mxu0
        %v1353 = vadd.f32 %v1128, %v1352
        %v1354 = vpop.f32.mrb[0].mxu0
        %1355 = vmatprep.mubr.f32.mxu0 0.0
        %1356 = vmatmul.mubr.f32.gmra.mrb[0].mxu0 %v870
        %v1357 = vpop.f32.mrb[0].mxu0
        %v1358 = vadd.f32 %v1133, %v1357
        %v1359 = vpop.f32.mrb[0].mxu0
        %1360 = vmatprep.mubr.f32.mxu0 0.0
        %1361 = vmatmul.mubr.f32.gmra.mrb[0].mxu0 %v873
        %v1362 = vpop.f32.mrb[0].mxu0
        %v1363 = vadd.f32 %v1138, %v1362
        %v1364 = vpop.f32.mrb[0].mxu0
        %1365 = vmatprep.mubr.f32.mxu0 0.0
        %1366 = vmatmul.mubr.f32.gmra.mrb[0].mxu0 %v876
        %v1367 = vpop.f32.mrb[0].mxu0
        %v1368 = vadd.f32 %v1143, %v1367
        %v1369 = vpop.f32.mrb[0].mxu0
        %1370 = vmatprep.mubr.f32.mxu0 0.0
        %1371 = vmatmul.mubr.f32.gmra.mrb[0].mxu0 %v879
        %v1372 = vpop.f32.mrb[0].mxu0
        %v1373 = vadd.f32 %v1148, %v1372
        %v1374 = vpop.f32.mrb[0].mxu0
        %1375 = vmatprep.mubr.f32.mxu0 0.0
        %1376 = vmatmul.mubr.f32.gmra.mrb[0].mxu0 %v882
        %v1377 = vpop.f32.mrb[0].mxu0
        %v1378 = vadd.f32 %v1153, %v1377
        %v1379 = vpop.f32.mrb[0].mxu0
        %1380 = vdwg.mxu0
        %1381 = vst [vmem:[#allocation3] sm:$0xff] %v1223
        %1382 = vst [vmem:[#allocation3 + $0x8] sm:$0xff] %v1228
        %1383 = vst [vmem:[#allocation3 + $0x10] sm:$0xff] %v1233
        %1384 = vst [vmem:[#allocation3 + $0x18] sm:$0xff] %v1238
        %1385 = vst [vmem:[#allocation3 + $0x20] sm:$0xff] %v1243
        %1386 = vst [vmem:[#allocation3 + $0x28] sm:$0xff] %v1248
        %1387 = vst [vmem:[#allocation3 + $0x30] sm:$0xff] %v1253
        %1388 = vst [vmem:[#allocation3 + $0x38] sm:$0xff] %v1258
        %1389 = vst [vmem:[#allocation3 + $0x40] sm:$0xff] %v1263
        %1390 = vst [vmem:[#allocation3 + $0x48] sm:$0xff] %v1268
        %1391 = vst [vmem:[#allocation3 + $0x50] sm:$0xff] %v1273
        %1392 = vst [vmem:[#allocation3 + $0x58] sm:$0xff] %v1278
        %1393 = vst [vmem:[#allocation3 + $0x60] sm:$0xff] %v1283
        %1394 = vst [vmem:[#allocation3 + $0x68] sm:$0xff] %v1288
        %1395 = vst [vmem:[#allocation3 + $0x70] sm:$0xff] %v1293
        %1396 = vst [vmem:[#allocation3 + $0x78] sm:$0xff] %v1298
        %1397 = vst [vmem:[#allocation3 + $0x80] sm:$0xff] %v1303
        %1398 = vst [vmem:[#allocation3 + $0x88] sm:$0xff] %v1308
        %1399 = vst [vmem:[#allocation3 + $0x90] sm:$0xff] %v1313
        %1400 = vst [vmem:[#allocation3 + $0x98] sm:$0xff] %v1318
        %1401 = vst [vmem:[#allocation3 + $0xa0] sm:$0xff] %v1323
        %1402 = vst [vmem:[#allocation3 + $0xa8] sm:$0xff] %v1328
        %1403 = vst [vmem:[#allocation3 + $0xb0] sm:$0xff] %v1333
        %1404 = vst [vmem:[#allocation3 + $0xb8] sm:$0xff] %v1338
        %1405 = vst [vmem:[#allocation3 + $0xc0] sm:$0xff] %v1343
        %1406 = vst [vmem:[#allocation3 + $0xc8] sm:$0xff] %v1348
        %1407 = vst [vmem:[#allocation3 + $0xd0] sm:$0xff] %v1353
        %1408 = vst [vmem:[#allocation3 + $0xd8] sm:$0xff] %v1358
        %1409 = vst [vmem:[#allocation3 + $0xe0] sm:$0xff] %v1363
        %1410 = vst [vmem:[#allocation3 + $0xe8] sm:$0xff] %v1368
        %1411 = vst [vmem:[#allocation3 + $0xf0] sm:$0xff] %v1373
        %1412 = vst [vmem:[#allocation3 + $0xf8] sm:$0xff] %v1378
        %v1413 = vld [vmem:[%s422] sm:$0xff]
        %v1414 = vld [vmem:[%s422 + $0x8] sm:$0xff]
        %v1415 = vld [vmem:[%s422 + $0x10] sm:$0xff]
        %v1416 = vld [vmem:[%s422 + $0x18] sm:$0xff]
        %v1417 = vld [vmem:[%s422 + $0x20] sm:$0xff]
        %v1418 = vld [vmem:[%s422 + $0x28] sm:$0xff]
        %v1419 = vld [vmem:[%s422 + $0x30] sm:$0xff]
        %v1420 = vld [vmem:[%s422 + $0x38] sm:$0xff]
        %v1421 = vld [vmem:[%s422 + $0x40] sm:$0xff]
        %v1422 = vld [vmem:[%s422 + $0x48] sm:$0xff]
        %v1423 = vld [vmem:[%s422 + $0x50] sm:$0xff]
        %v1424 = vld [vmem:[%s422 + $0x58] sm:$0xff]
        %v1425 = vld [vmem:[%s422 + $0x60] sm:$0xff]
        %v1426 = vld [vmem:[%s422 + $0x68] sm:$0xff]
        %v1427 = vld [vmem:[%s422 + $0x70] sm:$0xff]
        %v1428 = vld [vmem:[%s422 + $0x78] sm:$0xff]
        %v1429 = vld [vmem:[%s422 + $0x80] sm:$0xff]
        %v1430 = vld [vmem:[%s422 + $0x88] sm:$0xff]
        %v1431 = vld [vmem:[%s422 + $0x90] sm:$0xff]
        %v1432 = vld [vmem:[%s422 + $0x98] sm:$0xff]
        %v1433 = vld [vmem:[%s422 + $0xa0] sm:$0xff]
        %v1434 = vld [vmem:[%s422 + $0xa8] sm:$0xff]
        %v1435 = vld [vmem:[%s422 + $0xb0] sm:$0xff]
        %v1436 = vld [vmem:[%s422 + $0xb8] sm:$0xff]
        %v1437 = vld [vmem:[%s422 + $0xc0] sm:$0xff]
        %v1438 = vld [vmem:[%s422 + $0xc8] sm:$0xff]
        %v1439 = vld [vmem:[%s422 + $0xd0] sm:$0xff]
        %v1440 = vld [vmem:[%s422 + $0xd8] sm:$0xff]
        %v1441 = vld [vmem:[%s422 + $0xe0] sm:$0xff]
        %v1442 = vld [vmem:[%s422 + $0xe8] sm:$0xff]
        %v1443 = vld [vmem:[%s422 + $0xf0] sm:$0xff]
        %v1444 = vld [vmem:[%s422 + $0xf8] sm:$0xff]
        %v1445 = vld [vmem:[%s422 + $0x100] sm:$0xff]
        %v1446 = vld [vmem:[%s422 + $0x108] sm:$0xff]
        %v1447 = vld [vmem:[%s422 + $0x110] sm:$0xff]
        %v1448 = vld [vmem:[%s422 + $0x118] sm:$0xff]
        %v1449 = vld [vmem:[%s422 + $0x120] sm:$0xff]
        %v1450 = vld [vmem:[%s422 + $0x128] sm:$0xff]
        %v1451 = vld [vmem:[%s422 + $0x130] sm:$0xff]
        %v1452 = vld [vmem:[%s422 + $0x138] sm:$0xff]
        %v1453 = vld [vmem:[%s422 + $0x140] sm:$0xff]
        %v1454 = vld [vmem:[%s422 + $0x148] sm:$0xff]
        %v1455 = vld [vmem:[%s422 + $0x150] sm:$0xff]
        %v1456 = vld [vmem:[%s422 + $0x158] sm:$0xff]
        %v1457 = vld [vmem:[%s422 + $0x160] sm:$0xff]
        %v1458 = vld [vmem:[%s422 + $0x168] sm:$0xff]
        %v1459 = vld [vmem:[%s422 + $0x170] sm:$0xff]
        %v1460 = vld [vmem:[%s422 + $0x178] sm:$0xff]
        %v1461 = vld [vmem:[%s422 + $0x180] sm:$0xff]
        %v1462 = vld [vmem:[%s422 + $0x188] sm:$0xff]
        %v1463 = vld [vmem:[%s422 + $0x190] sm:$0xff]
        %v1464 = vld [vmem:[%s422 + $0x198] sm:$0xff]
        %v1465 = vld [vmem:[%s422 + $0x1a0] sm:$0xff]
        %v1466 = vld [vmem:[%s422 + $0x1a8] sm:$0xff]
        %v1467 = vld [vmem:[%s422 + $0x1b0] sm:$0xff]
        %v1468 = vld [vmem:[%s422 + $0x1b8] sm:$0xff]
        %v1469 = vld [vmem:[%s422 + $0x1c0] sm:$0xff]
        %v1470 = vld [vmem:[%s422 + $0x1c8] sm:$0xff]
        %v1471 = vld [vmem:[%s422 + $0x1d0] sm:$0xff]
        %v1472 = vld [vmem:[%s422 + $0x1d8] sm:$0xff]
        %v1473 = vld [vmem:[%s422 + $0x1e0] sm:$0xff]
        %v1474 = vld [vmem:[%s422 + $0x1e8] sm:$0xff]
        %v1475 = vld [vmem:[%s422 + $0x1f0] sm:$0xff]
        %v1476 = vld [vmem:[%s422 + $0x1f8] sm:$0xff]
        %v1477 = vld [vmem:[%s422 + $0x200] sm:$0xff]
        %v1478 = vld [vmem:[%s422 + $0x208] sm:$0xff]
        %v1479 = vld [vmem:[%s422 + $0x210] sm:$0xff]
        %v1480 = vld [vmem:[%s422 + $0x218] sm:$0xff]
        %v1481 = vld [vmem:[%s422 + $0x220] sm:$0xff]
        %v1482 = vld [vmem:[%s422 + $0x228] sm:$0xff]
        %v1483 = vld [vmem:[%s422 + $0x230] sm:$0xff]
        %v1484 = vld [vmem:[%s422 + $0x238] sm:$0xff]
        %v1485 = vld [vmem:[%s422 + $0x240] sm:$0xff]
        %v1486 = vld [vmem:[%s422 + $0x248] sm:$0xff]
        %v1487 = vld [vmem:[%s422 + $0x250] sm:$0xff]
        %v1488 = vld [vmem:[%s422 + $0x258] sm:$0xff]
        %v1489 = vld [vmem:[%s422 + $0x260] sm:$0xff]
        %v1490 = vld [vmem:[%s422 + $0x268] sm:$0xff]
        %v1491 = vld [vmem:[%s422 + $0x270] sm:$0xff]
        %v1492 = vld [vmem:[%s422 + $0x278] sm:$0xff]
        %v1493 = vld [vmem:[%s422 + $0x280] sm:$0xff]
        %v1494 = vld [vmem:[%s422 + $0x288] sm:$0xff]
        %v1495 = vld [vmem:[%s422 + $0x290] sm:$0xff]
        %v1496 = vld [vmem:[%s422 + $0x298] sm:$0xff]
        %v1497 = vld [vmem:[%s422 + $0x2a0] sm:$0xff]
        %v1498 = vld [vmem:[%s422 + $0x2a8] sm:$0xff]
        %v1499 = vld [vmem:[%s422 + $0x2b0] sm:$0xff]
        %v1500 = vld [vmem:[%s422 + $0x2b8] sm:$0xff]
        %v1501 = vld [vmem:[%s422 + $0x2c0] sm:$0xff]
        %v1502 = vld [vmem:[%s422 + $0x2c8] sm:$0xff]
        %v1503 = vld [vmem:[%s422 + $0x2d0] sm:$0xff]
        %v1504 = vld [vmem:[%s422 + $0x2d8] sm:$0xff]
        %v1505 = vld [vmem:[%s422 + $0x2e0] sm:$0xff]
        %v1506 = vld [vmem:[%s422 + $0x2e8] sm:$0xff]
        %v1507 = vld [vmem:[%s422 + $0x2f0] sm:$0xff]
        %v1508 = vld [vmem:[%s422 + $0x2f8] sm:$0xff]
        %s1509 = scalar_lea.vmem [#allocation8], 384
        %v1510 = vld [vmem:[%s1509] sm:$0xff]
        %v1511 = vld [vmem:[%s1509 + $0x8] sm:$0xff]
        %v1512 = vld [vmem:[%s1509 + $0x10] sm:$0xff]
        %v1513 = vld [vmem:[%s1509 + $0x18] sm:$0xff]
        %v1514 = vld [vmem:[%s1509 + $0x20] sm:$0xff]
        %v1515 = vld [vmem:[%s1509 + $0x28] sm:$0xff]
        %v1516 = vld [vmem:[%s1509 + $0x30] sm:$0xff]
        %v1517 = vld [vmem:[%s1509 + $0x38] sm:$0xff]
        %v1518 = vld [vmem:[%s1509 + $0x40] sm:$0xff]
        %v1519 = vld [vmem:[%s1509 + $0x48] sm:$0xff]
        %v1520 = vld [vmem:[%s1509 + $0x50] sm:$0xff]
        %v1521 = vld [vmem:[%s1509 + $0x58] sm:$0xff]
        %v1522 = vld [vmem:[%s1509 + $0x60] sm:$0xff]
        %v1523 = vld [vmem:[%s1509 + $0x68] sm:$0xff]
        %v1524 = vld [vmem:[%s1509 + $0x70] sm:$0xff]
        %v1525 = vld [vmem:[%s1509 + $0x78] sm:$0xff]
        %v1526 = vld [vmem:[%s1509 + $0x80] sm:$0xff]
        %v1527 = vld [vmem:[%s1509 + $0x88] sm:$0xff]
        %v1528 = vld [vmem:[%s1509 + $0x90] sm:$0xff]
        %v1529 = vld [vmem:[%s1509 + $0x98] sm:$0xff]
        %v1530 = vld [vmem:[%s1509 + $0xa0] sm:$0xff]
        %v1531 = vld [vmem:[%s1509 + $0xa8] sm:$0xff]
        %v1532 = vld [vmem:[%s1509 + $0xb0] sm:$0xff]
        %v1533 = vld [vmem:[%s1509 + $0xb8] sm:$0xff]
        %v1534 = vld [vmem:[%s1509 + $0xc0] sm:$0xff]
        %v1535 = vld [vmem:[%s1509 + $0xc8] sm:$0xff]
        %v1536 = vld [vmem:[%s1509 + $0xd0] sm:$0xff]
        %v1537 = vld [vmem:[%s1509 + $0xd8] sm:$0xff]
        %v1538 = vld [vmem:[%s1509 + $0xe0] sm:$0xff]
        %v1539 = vld [vmem:[%s1509 + $0xe8] sm:$0xff]
        %v1540 = vld [vmem:[%s1509 + $0xf0] sm:$0xff]
        %v1541 = vld [vmem:[%s1509 + $0xf8] sm:$0xff]
        %v1542 = vld [vmem:[%s1509 + $0x100] sm:$0xff]
        %v1543 = vld [vmem:[%s1509 + $0x108] sm:$0xff]
        %v1544 = vld [vmem:[%s1509 + $0x110] sm:$0xff]
        %v1545 = vld [vmem:[%s1509 + $0x118] sm:$0xff]
        %v1546 = vld [vmem:[%s1509 + $0x120] sm:$0xff]
        %v1547 = vld [vmem:[%s1509 + $0x128] sm:$0xff]
        %v1548 = vld [vmem:[%s1509 + $0x130] sm:$0xff]
        %v1549 = vld [vmem:[%s1509 + $0x138] sm:$0xff]
        %v1550 = vld [vmem:[%s1509 + $0x140] sm:$0xff]
        %v1551 = vld [vmem:[%s1509 + $0x148] sm:$0xff]
        %v1552 = vld [vmem:[%s1509 + $0x150] sm:$0xff]
        %v1553 = vld [vmem:[%s1509 + $0x158] sm:$0xff]
        %v1554 = vld [vmem:[%s1509 + $0x160] sm:$0xff]
        %v1555 = vld [vmem:[%s1509 + $0x168] sm:$0xff]
        %v1556 = vld [vmem:[%s1509 + $0x170] sm:$0xff]
        %v1557 = vld [vmem:[%s1509 + $0x178] sm:$0xff]
        %1558 = vmatprep.subr.mxu0 0.0
        %1559 = vmatpush1.msra.mxu0 %v1510
        %1560 = vmatprep.subr.mxu0 0.0
        %1561 = vmatpush1.msra.mxu0 %v1511
        %1562 = vmatprep.subr.mxu0 0.0
        %1563 = vmatpush1.msra.mxu0 %v1512
        %1564 = vmatprep.subr.mxu0 0.0
        %1565 = vmatpush1.msra.mxu0 %v1513
        %1566 = vmatprep.subr.mxu0 0.0
        %1567 = vmatpush1.msra.mxu0 %v1514
        %1568 = vmatprep.subr.mxu0 0.0
        %1569 = vmatpush1.msra.mxu0 %v1515
        %1570 = vmatprep.subr.mxu0 0.0
        %1571 = vmatpush1.msra.mxu0 %v1516
        %1572 = vmatprep.subr.mxu0 0.0
        %1573 = vmatpush1.msra.mxu0 %v1517
        %1574 = vmatprep.subr.mxu0 0.0
        %1575 = vmatpush1.msra.mxu0 %v1518
        %1576 = vmatprep.subr.mxu0 0.0
        %1577 = vmatpush1.msra.mxu0 %v1519
        %1578 = vmatprep.subr.mxu0 0.0
        %1579 = vmatpush1.msra.mxu0 %v1520
        %1580 = vmatprep.subr.mxu0 0.0
        %1581 = vmatpush1.msra.mxu0 %v1521
        %1582 = vmatprep.subr.mxu0 0.0
        %1583 = vmatpush1.msra.mxu0 %v1522
        %1584 = vmatprep.subr.mxu0 0.0
        %1585 = vmatpush1.msra.mxu0 %v1523
        %1586 = vmatprep.subr.mxu0 0.0
        %1587 = vmatpush1.msra.mxu0 %v1524
        %1588 = vmatprep.subr.mxu0 0.0
        %1589 = vmatpush1.msra.mxu0 %v1525
        %1590 = vmatprep.subr.mxu0 0.0
        %1591 = vmatpush1.msra.mxu0 %v1526
        %1592 = vmatprep.subr.mxu0 0.0
        %1593 = vmatpush1.msra.mxu0 %v1527
        %1594 = vmatprep.subr.mxu0 0.0
        %1595 = vmatpush1.msra.mxu0 %v1528
        %1596 = vmatprep.subr.mxu0 0.0
        %1597 = vmatpush1.msra.mxu0 %v1529
        %1598 = vmatprep.subr.mxu0 0.0
        %1599 = vmatpush1.msra.mxu0 %v1530
        %1600 = vmatprep.subr.mxu0 0.0
        %1601 = vmatpush1.msra.mxu0 %v1531
        %1602 = vmatprep.subr.mxu0 0.0
        %1603 = vmatpush1.msra.mxu0 %v1532
        %1604 = vmatprep.subr.mxu0 0.0
        %1605 = vmatpush1.msra.mxu0 %v1533
        %1606 = vmatprep.subr.mxu0 0.0
        %1607 = vmatpush1.msra.mxu0 %v1534
        %1608 = vmatprep.subr.mxu0 0.0
        %1609 = vmatpush1.msra.mxu0 %v1535
        %1610 = vmatprep.subr.mxu0 0.0
        %1611 = vmatpush1.msra.mxu0 %v1536
        %1612 = vmatprep.subr.mxu0 0.0
        %1613 = vmatpush1.msra.mxu0 %v1537
        %1614 = vmatprep.subr.mxu0 0.0
        %1615 = vmatpush1.msra.mxu0 %v1538
        %1616 = vmatprep.subr.mxu0 0.0
        %1617 = vmatpush1.msra.mxu0 %v1539
        %1618 = vmatprep.subr.mxu0 0.0
        %1619 = vmatpush1.msra.mxu0 %v1540
        %1620 = vmatprep.subr.mxu0 0.0
        %1621 = vmatpush1.msra.mxu0 %v1541
        %1622 = vmatprep.mubr.f32.mxu0 %v1414
        %1623 = vmatmul.mubr.f32.gmra.mrb[0].mxu0 %v1413
        %v1624 = vpop.f32.mrb[0].mxu0
        %v1625 = vadd.f32 0.0, %v1624
        %v1626 = vpop.f32.mrb[0].mxu0
        %1627 = vmatprep.mubr.f32.mxu0 %v1417
        %1628 = vmatmul.mubr.f32.gmra.mrb[0].mxu0 %v1416
        %v1629 = vpop.f32.mrb[0].mxu0
        %v1630 = vadd.f32 0.0, %v1629
        %v1631 = vpop.f32.mrb[0].mxu0
        %1632 = vmatprep.mubr.f32.mxu0 %v1420
        %1633 = vmatmul.mubr.f32.gmra.mrb[0].mxu0 %v1419
        %v1634 = vpop.f32.mrb[0].mxu0
        %v1635 = vadd.f32 0.0, %v1634
        %v1636 = vpop.f32.mrb[0].mxu0
        %1637 = vmatprep.mubr.f32.mxu0 %v1423
        %1638 = vmatmul.mubr.f32.gmra.mrb[0].mxu0 %v1422
        %v1639 = vpop.f32.mrb[0].mxu0
        %v1640 = vadd.f32 0.0, %v1639
        %v1641 = vpop.f32.mrb[0].mxu0
        %1642 = vmatprep.mubr.f32.mxu0 %v1426
        %1643 = vmatmul.mubr.f32.gmra.mrb[0].mxu0 %v1425
        %v1644 = vpop.f32.mrb[0].mxu0
        %v1645 = vadd.f32 0.0, %v1644
        %v1646 = vpop.f32.mrb[0].mxu0
        %1647 = vmatprep.mubr.f32.mxu0 %v1429
        %1648 = vmatmul.mubr.f32.gmra.mrb[0].mxu0 %v1428
        %v1649 = vpop.f32.mrb[0].mxu0
        %v1650 = vadd.f32 0.0, %v1649
        %v1651 = vpop.f32.mrb[0].mxu0
        %1652 = vmatprep.mubr.f32.mxu0 %v1432
        %1653 = vmatmul.mubr.f32.gmra.mrb[0].mxu0 %v1431
        %v1654 = vpop.f32.mrb[0].mxu0
        %v1655 = vadd.f32 0.0, %v1654
        %v1656 = vpop.f32.mrb[0].mxu0
        %1657 = vmatprep.mubr.f32.mxu0 %v1435
        %1658 = vmatmul.mubr.f32.gmra.mrb[0].mxu0 %v1434
        %v1659 = vpop.f32.mrb[0].mxu0
        %v1660 = vadd.f32 0.0, %v1659
        %v1661 = vpop.f32.mrb[0].mxu0
        %1662 = vmatprep.mubr.f32.mxu0 %v1438
        %1663 = vmatmul.mubr.f32.gmra.mrb[0].mxu0 %v1437
        %v1664 = vpop.f32.mrb[0].mxu0
        %v1665 = vadd.f32 0.0, %v1664
        %v1666 = vpop.f32.mrb[0].mxu0
        %1667 = vmatprep.mubr.f32.mxu0 %v1441
        %1668 = vmatmul.mubr.f32.gmra.mrb[0].mxu0 %v1440
        %v1669 = vpop.f32.mrb[0].mxu0
        %v1670 = vadd.f32 0.0, %v1669
        %v1671 = vpop.f32.mrb[0].mxu0
        %1672 = vmatprep.mubr.f32.mxu0 %v1444
        %1673 = vmatmul.mubr.f32.gmra.mrb[0].mxu0 %v1443
        %v1674 = vpop.f32.mrb[0].mxu0
        %v1675 = vadd.f32 0.0, %v1674
        %v1676 = vpop.f32.mrb[0].mxu0
        %1677 = vmatprep.mubr.f32.mxu0 %v1447
        %1678 = vmatmul.mubr.f32.gmra.mrb[0].mxu0 %v1446
        %v1679 = vpop.f32.mrb[0].mxu0
        %v1680 = vadd.f32 0.0, %v1679
        %v1681 = vpop.f32.mrb[0].mxu0
        %1682 = vmatprep.mubr.f32.mxu0 %v1450
        %1683 = vmatmul.mubr.f32.gmra.mrb[0].mxu0 %v1449
        %v1684 = vpop.f32.mrb[0].mxu0
        %v1685 = vadd.f32 0.0, %v1684
        %v1686 = vpop.f32.mrb[0].mxu0
        %1687 = vmatprep.mubr.f32.mxu0 %v1453
        %1688 = vmatmul.mubr.f32.gmra.mrb[0].mxu0 %v1452
        %v1689 = vpop.f32.mrb[0].mxu0
        %v1690 = vadd.f32 0.0, %v1689
        %v1691 = vpop.f32.mrb[0].mxu0
        %1692 = vmatprep.mubr.f32.mxu0 %v1456
        %1693 = vmatmul.mubr.f32.gmra.mrb[0].mxu0 %v1455
        %v1694 = vpop.f32.mrb[0].mxu0
        %v1695 = vadd.f32 0.0, %v1694
        %v1696 = vpop.f32.mrb[0].mxu0
        %1697 = vmatprep.mubr.f32.mxu0 %v1459
        %1698 = vmatmul.mubr.f32.gmra.mrb[0].mxu0 %v1458
        %v1699 = vpop.f32.mrb[0].mxu0
        %v1700 = vadd.f32 0.0, %v1699
        %v1701 = vpop.f32.mrb[0].mxu0
        %1702 = vmatprep.mubr.f32.mxu0 %v1462
        %1703 = vmatmul.mubr.f32.gmra.mrb[0].mxu0 %v1461
        %v1704 = vpop.f32.mrb[0].mxu0
        %v1705 = vadd.f32 0.0, %v1704
        %v1706 = vpop.f32.mrb[0].mxu0
        %1707 = vmatprep.mubr.f32.mxu0 %v1465
        %1708 = vmatmul.mubr.f32.gmra.mrb[0].mxu0 %v1464
        %v1709 = vpop.f32.mrb[0].mxu0
        %v1710 = vadd.f32 0.0, %v1709
        %v1711 = vpop.f32.mrb[0].mxu0
        %1712 = vmatprep.mubr.f32.mxu0 %v1468
        %1713 = vmatmul.mubr.f32.gmra.mrb[0].mxu0 %v1467
        %v1714 = vpop.f32.mrb[0].mxu0
        %v1715 = vadd.f32 0.0, %v1714
        %v1716 = vpop.f32.mrb[0].mxu0
        %1717 = vmatprep.mubr.f32.mxu0 %v1471
        %1718 = vmatmul.mubr.f32.gmra.mrb[0].mxu0 %v1470
        %v1719 = vpop.f32.mrb[0].mxu0
        %v1720 = vadd.f32 0.0, %v1719
        %v1721 = vpop.f32.mrb[0].mxu0
        %1722 = vmatprep.mubr.f32.mxu0 %v1474
        %1723 = vmatmul.mubr.f32.gmra.mrb[0].mxu0 %v1473
        %v1724 = vpop.f32.mrb[0].mxu0
        %v1725 = vadd.f32 0.0, %v1724
        %v1726 = vpop.f32.mrb[0].mxu0
        %1727 = vmatprep.mubr.f32.mxu0 %v1477
        %1728 = vmatmul.mubr.f32.gmra.mrb[0].mxu0 %v1476
        %v1729 = vpop.f32.mrb[0].mxu0
        %v1730 = vadd.f32 0.0, %v1729
        %v1731 = vpop.f32.mrb[0].mxu0
        %1732 = vmatprep.mubr.f32.mxu0 %v1480
        %1733 = vmatmul.mubr.f32.gmra.mrb[0].mxu0 %v1479
        %v1734 = vpop.f32.mrb[0].mxu0
        %v1735 = vadd.f32 0.0, %v1734
        %v1736 = vpop.f32.mrb[0].mxu0
        %1737 = vmatprep.mubr.f32.mxu0 %v1483
        %1738 = vmatmul.mubr.f32.gmra.mrb[0].mxu0 %v1482
        %v1739 = vpop.f32.mrb[0].mxu0
        %v1740 = vadd.f32 0.0, %v1739
        %v1741 = vpop.f32.mrb[0].mxu0
        %1742 = vmatprep.mubr.f32.mxu0 %v1486
        %1743 = vmatmul.mubr.f32.gmra.mrb[0].mxu0 %v1485
        %v1744 = vpop.f32.mrb[0].mxu0
        %v1745 = vadd.f32 0.0, %v1744
        %v1746 = vpop.f32.mrb[0].mxu0
        %1747 = vmatprep.mubr.f32.mxu0 %v1489
        %1748 = vmatmul.mubr.f32.gmra.mrb[0].mxu0 %v1488
        %v1749 = vpop.f32.mrb[0].mxu0
        %v1750 = vadd.f32 0.0, %v1749
        %v1751 = vpop.f32.mrb[0].mxu0
        %1752 = vmatprep.mubr.f32.mxu0 %v1492
        %1753 = vmatmul.mubr.f32.gmra.mrb[0].mxu0 %v1491
        %v1754 = vpop.f32.mrb[0].mxu0
        %v1755 = vadd.f32 0.0, %v1754
        %v1756 = vpop.f32.mrb[0].mxu0
        %1757 = vmatprep.mubr.f32.mxu0 %v1495
        %1758 = vmatmul.mubr.f32.gmra.mrb[0].mxu0 %v1494
        %v1759 = vpop.f32.mrb[0].mxu0
        %v1760 = vadd.f32 0.0, %v1759
        %v1761 = vpop.f32.mrb[0].mxu0
        %1762 = vmatprep.mubr.f32.mxu0 %v1498
        %1763 = vmatmul.mubr.f32.gmra.mrb[0].mxu0 %v1497
        %v1764 = vpop.f32.mrb[0].mxu0
        %v1765 = vadd.f32 0.0, %v1764
        %v1766 = vpop.f32.mrb[0].mxu0
        %1767 = vmatprep.mubr.f32.mxu0 %v1501
        %1768 = vmatmul.mubr.f32.gmra.mrb[0].mxu0 %v1500
        %v1769 = vpop.f32.mrb[0].mxu0
        %v1770 = vadd.f32 0.0, %v1769
        %v1771 = vpop.f32.mrb[0].mxu0
        %1772 = vmatprep.mubr.f32.mxu0 %v1504
        %1773 = vmatmul.mubr.f32.gmra.mrb[0].mxu0 %v1503
        %v1774 = vpop.f32.mrb[0].mxu0
        %v1775 = vadd.f32 0.0, %v1774
        %v1776 = vpop.f32.mrb[0].mxu0
        %1777 = vmatprep.mubr.f32.mxu0 %v1507
        %1778 = vmatmul.mubr.f32.gmra.mrb[0].mxu0 %v1506
        %v1779 = vpop.f32.mrb[0].mxu0
        %v1780 = vadd.f32 0.0, %v1779
        %v1781 = vpop.f32.mrb[0].mxu0
        %1782 = vdwg.mxu0
        %1783 = vmatprep.subr.mxu0 0.0
        %1784 = vmatpush1.msra.mxu0 %v1542
        %1785 = vmatprep.subr.mxu0 0.0
        %1786 = vmatpush1.msra.mxu0 %v1543
        %1787 = vmatprep.subr.mxu0 0.0
        %1788 = vmatpush1.msra.mxu0 %v1544
        %1789 = vmatprep.subr.mxu0 0.0
        %1790 = vmatpush1.msra.mxu0 %v1545
        %1791 = vmatprep.subr.mxu0 0.0
        %1792 = vmatpush1.msra.mxu0 %v1546
        %1793 = vmatprep.subr.mxu0 0.0
        %1794 = vmatpush1.msra.mxu0 %v1547
        %1795 = vmatprep.subr.mxu0 0.0
        %1796 = vmatpush1.msra.mxu0 %v1548
        %1797 = vmatprep.subr.mxu0 0.0
        %1798 = vmatpush1.msra.mxu0 %v1549
        %1799 = vmatprep.subr.mxu0 0.0
        %1800 = vmatpush1.msra.mxu0 %v1550
        %1801 = vmatprep.subr.mxu0 0.0
        %1802 = vmatpush1.msra.mxu0 %v1551
        %1803 = vmatprep.subr.mxu0 0.0
        %1804 = vmatpush1.msra.mxu0 %v1552
        %1805 = vmatprep.subr.mxu0 0.0
        %1806 = vmatpush1.msra.mxu0 %v1553
        %1807 = vmatprep.subr.mxu0 0.0
        %1808 = vmatpush1.msra.mxu0 %v1554
        %1809 = vmatprep.subr.mxu0 0.0
        %1810 = vmatpush1.msra.mxu0 %v1555
        %1811 = vmatprep.subr.mxu0 0.0
        %1812 = vmatpush1.msra.mxu0 %v1556
        %1813 = vmatprep.subr.mxu0 0.0
        %1814 = vmatpush1.msra.mxu0 %v1557
        %1815 = vmatprep.subr.mxu0 0.0
        %1816 = vmatpush1.msra.mxu0 0.0
        %1817 = vmatprep.subr.mxu0 0.0
        %1818 = vmatpush1.msra.mxu0 0.0
        %1819 = vmatprep.subr.mxu0 0.0
        %1820 = vmatpush1.msra.mxu0 0.0
        %1821 = vmatprep.subr.mxu0 0.0
        %1822 = vmatpush1.msra.mxu0 0.0
        %1823 = vmatprep.subr.mxu0 0.0
        %1824 = vmatpush1.msra.mxu0 0.0
        %1825 = vmatprep.subr.mxu0 0.0
        %1826 = vmatpush1.msra.mxu0 0.0
        %1827 = vmatprep.subr.mxu0 0.0
        %1828 = vmatpush1.msra.mxu0 0.0
        %1829 = vmatprep.subr.mxu0 0.0
        %1830 = vmatpush1.msra.mxu0 0.0
        %1831 = vmatprep.subr.mxu0 0.0
        %1832 = vmatpush1.msra.mxu0 0.0
        %1833 = vmatprep.subr.mxu0 0.0
        %1834 = vmatpush1.msra.mxu0 0.0
        %1835 = vmatprep.subr.mxu0 0.0
        %1836 = vmatpush1.msra.mxu0 0.0
        %1837 = vmatprep.subr.mxu0 0.0
        %1838 = vmatpush1.msra.mxu0 0.0
        %1839 = vmatprep.subr.mxu0 0.0
        %1840 = vmatpush1.msra.mxu0 0.0
        %1841 = vmatprep.subr.mxu0 0.0
        %1842 = vmatpush1.msra.mxu0 0.0
        %1843 = vmatprep.subr.mxu0 0.0
        %1844 = vmatpush1.msra.mxu0 0.0
        %1845 = vmatprep.subr.mxu0 0.0
        %1846 = vmatpush1.msra.mxu0 0.0
        %1847 = vmatprep.mubr.f32.mxu0 0.0
        %1848 = vmatmul.mubr.f32.gmra.mrb[0].mxu0 %v1415
        %v1849 = vpop.f32.mrb[0].mxu0
        %v1850 = vadd.f32 %v1625, %v1849
        %v1851 = vpop.f32.mrb[0].mxu0
        %1852 = vmatprep.mubr.f32.mxu0 0.0
        %1853 = vmatmul.mubr.f32.gmra.mrb[0].mxu0 %v1418
        %v1854 = vpop.f32.mrb[0].mxu0
        %v1855 = vadd.f32 %v1630, %v1854
        %v1856 = vpop.f32.mrb[0].mxu0
        %1857 = vmatprep.mubr.f32.mxu0 0.0
        %1858 = vmatmul.mubr.f32.gmra.mrb[0].mxu0 %v1421
        %v1859 = vpop.f32.mrb[0].mxu0
        %v1860 = vadd.f32 %v1635, %v1859
        %v1861 = vpop.f32.mrb[0].mxu0
        %1862 = vmatprep.mubr.f32.mxu0 0.0
        %1863 = vmatmul.mubr.f32.gmra.mrb[0].mxu0 %v1424
        %v1864 = vpop.f32.mrb[0].mxu0
        %v1865 = vadd.f32 %v1640, %v1864
        %v1866 = vpop.f32.mrb[0].mxu0
        %1867 = vmatprep.mubr.f32.mxu0 0.0
        %1868 = vmatmul.mubr.f32.gmra.mrb[0].mxu0 %v1427
        %v1869 = vpop.f32.mrb[0].mxu0
        %v1870 = vadd.f32 %v1645, %v1869
        %v1871 = vpop.f32.mrb[0].mxu0
        %1872 = vmatprep.mubr.f32.mxu0 0.0
        %1873 = vmatmul.mubr.f32.gmra.mrb[0].mxu0 %v1430
        %v1874 = vpop.f32.mrb[0].mxu0
        %v1875 = vadd.f32 %v1650, %v1874
        %v1876 = vpop.f32.mrb[0].mxu0
        %1877 = vmatprep.mubr.f32.mxu0 0.0
        %1878 = vmatmul.mubr.f32.gmra.mrb[0].mxu0 %v1433
        %v1879 = vpop.f32.mrb[0].mxu0
        %v1880 = vadd.f32 %v1655, %v1879
        %v1881 = vpop.f32.mrb[0].mxu0
        %1882 = vmatprep.mubr.f32.mxu0 0.0
        %1883 = vmatmul.mubr.f32.gmra.mrb[0].mxu0 %v1436
        %v1884 = vpop.f32.mrb[0].mxu0
        %v1885 = vadd.f32 %v1660, %v1884
        %v1886 = vpop.f32.mrb[0].mxu0
        %1887 = vmatprep.mubr.f32.mxu0 0.0
        %1888 = vmatmul.mubr.f32.gmra.mrb[0].mxu0 %v1439
        %v1889 = vpop.f32.mrb[0].mxu0
        %v1890 = vadd.f32 %v1665, %v1889
        %v1891 = vpop.f32.mrb[0].mxu0
        %1892 = vmatprep.mubr.f32.mxu0 0.0
        %1893 = vmatmul.mubr.f32.gmra.mrb[0].mxu0 %v1442
        %v1894 = vpop.f32.mrb[0].mxu0
        %v1895 = vadd.f32 %v1670, %v1894
        %v1896 = vpop.f32.mrb[0].mxu0
        %1897 = vmatprep.mubr.f32.mxu0 0.0
        %1898 = vmatmul.mubr.f32.gmra.mrb[0].mxu0 %v1445
        %v1899 = vpop.f32.mrb[0].mxu0
        %v1900 = vadd.f32 %v1675, %v1899
        %v1901 = vpop.f32.mrb[0].mxu0
        %1902 = vmatprep.mubr.f32.mxu0 0.0
        %1903 = vmatmul.mubr.f32.gmra.mrb[0].mxu0 %v1448
        %v1904 = vpop.f32.mrb[0].mxu0
        %v1905 = vadd.f32 %v1680, %v1904
        %v1906 = vpop.f32.mrb[0].mxu0
        %1907 = vmatprep.mubr.f32.mxu0 0.0
        %1908 = vmatmul.mubr.f32.gmra.mrb[0].mxu0 %v1451
        %v1909 = vpop.f32.mrb[0].mxu0
        %v1910 = vadd.f32 %v1685, %v1909
        %v1911 = vpop.f32.mrb[0].mxu0
        %1912 = vmatprep.mubr.f32.mxu0 0.0
        %1913 = vmatmul.mubr.f32.gmra.mrb[0].mxu0 %v1454
        %v1914 = vpop.f32.mrb[0].mxu0
        %v1915 = vadd.f32 %v1690, %v1914
        %v1916 = vpop.f32.mrb[0].mxu0
        %1917 = vmatprep.mubr.f32.mxu0 0.0
        %1918 = vmatmul.mubr.f32.gmra.mrb[0].mxu0 %v1457
        %v1919 = vpop.f32.mrb[0].mxu0
        %v1920 = vadd.f32 %v1695, %v1919
        %v1921 = vpop.f32.mrb[0].mxu0
        %1922 = vmatprep.mubr.f32.mxu0 0.0
        %1923 = vmatmul.mubr.f32.gmra.mrb[0].mxu0 %v1460
        %v1924 = vpop.f32.mrb[0].mxu0
        %v1925 = vadd.f32 %v1700, %v1924
        %v1926 = vpop.f32.mrb[0].mxu0
        %1927 = vmatprep.mubr.f32.mxu0 0.0
        %1928 = vmatmul.mubr.f32.gmra.mrb[0].mxu0 %v1463
        %v1929 = vpop.f32.mrb[0].mxu0
        %v1930 = vadd.f32 %v1705, %v1929
        %v1931 = vpop.f32.mrb[0].mxu0
        %1932 = vmatprep.mubr.f32.mxu0 0.0
        %1933 = vmatmul.mubr.f32.gmra.mrb[0].mxu0 %v1466
        %v1934 = vpop.f32.mrb[0].mxu0
        %v1935 = vadd.f32 %v1710, %v1934
        %v1936 = vpop.f32.mrb[0].mxu0
        %1937 = vmatprep.mubr.f32.mxu0 0.0
        %1938 = vmatmul.mubr.f32.gmra.mrb[0].mxu0 %v1469
        %v1939 = vpop.f32.mrb[0].mxu0
        %v1940 = vadd.f32 %v1715, %v1939
        %v1941 = vpop.f32.mrb[0].mxu0
        %1942 = vmatprep.mubr.f32.mxu0 0.0
        %1943 = vmatmul.mubr.f32.gmra.mrb[0].mxu0 %v1472
        %v1944 = vpop.f32.mrb[0].mxu0
        %v1945 = vadd.f32 %v1720, %v1944
        %v1946 = vpop.f32.mrb[0].mxu0
        %1947 = vmatprep.mubr.f32.mxu0 0.0
        %1948 = vmatmul.mubr.f32.gmra.mrb[0].mxu0 %v1475
        %v1949 = vpop.f32.mrb[0].mxu0
        %v1950 = vadd.f32 %v1725, %v1949
        %v1951 = vpop.f32.mrb[0].mxu0
        %1952 = vmatprep.mubr.f32.mxu0 0.0
        %1953 = vmatmul.mubr.f32.gmra.mrb[0].mxu0 %v1478
        %v1954 = vpop.f32.mrb[0].mxu0
        %v1955 = vadd.f32 %v1730, %v1954
        %v1956 = vpop.f32.mrb[0].mxu0
        %1957 = vmatprep.mubr.f32.mxu0 0.0
        %1958 = vmatmul.mubr.f32.gmra.mrb[0].mxu0 %v1481
        %v1959 = vpop.f32.mrb[0].mxu0
        %v1960 = vadd.f32 %v1735, %v1959
        %v1961 = vpop.f32.mrb[0].mxu0
        %1962 = vmatprep.mubr.f32.mxu0 0.0
        %1963 = vmatmul.mubr.f32.gmra.mrb[0].mxu0 %v1484
        %v1964 = vpop.f32.mrb[0].mxu0
        %v1965 = vadd.f32 %v1740, %v1964
        %v1966 = vpop.f32.mrb[0].mxu0
        %1967 = vmatprep.mubr.f32.mxu0 0.0
        %1968 = vmatmul.mubr.f32.gmra.mrb[0].mxu0 %v1487
        %v1969 = vpop.f32.mrb[0].mxu0
        %v1970 = vadd.f32 %v1745, %v1969
        %v1971 = vpop.f32.mrb[0].mxu0
        %1972 = vmatprep.mubr.f32.mxu0 0.0
        %1973 = vmatmul.mubr.f32.gmra.mrb[0].mxu0 %v1490
        %v1974 = vpop.f32.mrb[0].mxu0
        %v1975 = vadd.f32 %v1750, %v1974
        %v1976 = vpop.f32.mrb[0].mxu0
        %1977 = vmatprep.mubr.f32.mxu0 0.0
        %1978 = vmatmul.mubr.f32.gmra.mrb[0].mxu0 %v1493
        %v1979 = vpop.f32.mrb[0].mxu0
        %v1980 = vadd.f32 %v1755, %v1979
        %v1981 = vpop.f32.mrb[0].mxu0
        %1982 = vmatprep.mubr.f32.mxu0 0.0
        %1983 = vmatmul.mubr.f32.gmra.mrb[0].mxu0 %v1496
        %v1984 = vpop.f32.mrb[0].mxu0
        %v1985 = vadd.f32 %v1760, %v1984
        %v1986 = vpop.f32.mrb[0].mxu0
        %1987 = vmatprep.mubr.f32.mxu0 0.0
        %1988 = vmatmul.mubr.f32.gmra.mrb[0].mxu0 %v1499
        %v1989 = vpop.f32.mrb[0].mxu0
        %v1990 = vadd.f32 %v1765, %v1989
        %v1991 = vpop.f32.mrb[0].mxu0
        %1992 = vmatprep.mubr.f32.mxu0 0.0
        %1993 = vmatmul.mubr.f32.gmra.mrb[0].mxu0 %v1502
        %v1994 = vpop.f32.mrb[0].mxu0
        %v1995 = vadd.f32 %v1770, %v1994
        %v1996 = vpop.f32.mrb[0].mxu0
        %1997 = vmatprep.mubr.f32.mxu0 0.0
        %1998 = vmatmul.mubr.f32.gmra.mrb[0].mxu0 %v1505
        %v1999 = vpop.f32.mrb[0].mxu0
        %v2000 = vadd.f32 %v1775, %v1999
        %v2001 = vpop.f32.mrb[0].mxu0
        %2002 = vmatprep.mubr.f32.mxu0 0.0
        %2003 = vmatmul.mubr.f32.gmra.mrb[0].mxu0 %v1508
        %v2004 = vpop.f32.mrb[0].mxu0
        %v2005 = vadd.f32 %v1780, %v2004
        %v2006 = vpop.f32.mrb[0].mxu0
        %2007 = vdwg.mxu0
        %v2008 = vld [vmem:[#allocation3] sm:$0xff]
        %v2009 = vld [vmem:[#allocation3 + $0x8] sm:$0xff]
        %v2010 = vld [vmem:[#allocation3 + $0x10] sm:$0xff]
        %v2011 = vld [vmem:[#allocation3 + $0x18] sm:$0xff]
        %v2012 = vld [vmem:[#allocation3 + $0x20] sm:$0xff]
        %v2013 = vld [vmem:[#allocation3 + $0x28] sm:$0xff]
        %v2014 = vld [vmem:[#allocation3 + $0x30] sm:$0xff]
        %v2015 = vld [vmem:[#allocation3 + $0x38] sm:$0xff]
        %v2016 = vld [vmem:[#allocation3 + $0x40] sm:$0xff]
        %v2017 = vld [vmem:[#allocation3 + $0x48] sm:$0xff]
        %v2018 = vld [vmem:[#allocation3 + $0x50] sm:$0xff]
        %v2019 = vld [vmem:[#allocation3 + $0x58] sm:$0xff]
        %v2020 = vld [vmem:[#allocation3 + $0x60] sm:$0xff]
        %v2021 = vld [vmem:[#allocation3 + $0x68] sm:$0xff]
        %v2022 = vld [vmem:[#allocation3 + $0x70] sm:$0xff]
        %v2023 = vld [vmem:[#allocation3 + $0x78] sm:$0xff]
        %v2024 = vld [vmem:[#allocation3 + $0x80] sm:$0xff]
        %v2025 = vld [vmem:[#allocation3 + $0x88] sm:$0xff]
        %v2026 = vld [vmem:[#allocation3 + $0x90] sm:$0xff]
        %v2027 = vld [vmem:[#allocation3 + $0x98] sm:$0xff]
        %v2028 = vld [vmem:[#allocation3 + $0xa0] sm:$0xff]
        %v2029 = vld [vmem:[#allocation3 + $0xa8] sm:$0xff]
        %v2030 = vld [vmem:[#allocation3 + $0xb0] sm:$0xff]
        %v2031 = vld [vmem:[#allocation3 + $0xb8] sm:$0xff]
        %v2032 = vld [vmem:[#allocation3 + $0xc0] sm:$0xff]
        %v2033 = vld [vmem:[#allocation3 + $0xc8] sm:$0xff]
        %v2034 = vld [vmem:[#allocation3 + $0xd0] sm:$0xff]
        %v2035 = vld [vmem:[#allocation3 + $0xd8] sm:$0xff]
        %v2036 = vld [vmem:[#allocation3 + $0xe0] sm:$0xff]
        %v2037 = vld [vmem:[#allocation3 + $0xe8] sm:$0xff]
        %v2038 = vld [vmem:[#allocation3 + $0xf0] sm:$0xff]
        %v2039 = vld [vmem:[#allocation3 + $0xf8] sm:$0xff]
        %v2040 = vadd.f32 %v2008, %v1850
        %v2041 = vadd.f32 %v2009, %v1855
        %v2042 = vadd.f32 %v2010, %v1860
        %v2043 = vadd.f32 %v2011, %v1865
        %v2044 = vadd.f32 %v2012, %v1870
        %v2045 = vadd.f32 %v2013, %v1875
        %v2046 = vadd.f32 %v2014, %v1880
        %v2047 = vadd.f32 %v2015, %v1885
        %v2048 = vadd.f32 %v2016, %v1890
        %v2049 = vadd.f32 %v2017, %v1895
        %v2050 = vadd.f32 %v2018, %v1900
        %v2051 = vadd.f32 %v2019, %v1905
        %v2052 = vadd.f32 %v2020, %v1910
        %v2053 = vadd.f32 %v2021, %v1915
        %v2054 = vadd.f32 %v2022, %v1920
        %v2055 = vadd.f32 %v2023, %v1925
        %v2056 = vadd.f32 %v2024, %v1930
        %v2057 = vadd.f32 %v2025, %v1935
        %v2058 = vadd.f32 %v2026, %v1940
        %v2059 = vadd.f32 %v2027, %v1945
        %v2060 = vadd.f32 %v2028, %v1950
        %v2061 = vadd.f32 %v2029, %v1955
        %v2062 = vadd.f32 %v2030, %v1960
        %v2063 = vadd.f32 %v2031, %v1965
        %v2064 = vadd.f32 %v2032, %v1970
        %v2065 = vadd.f32 %v2033, %v1975
        %v2066 = vadd.f32 %v2034, %v1980
        %v2067 = vadd.f32 %v2035, %v1985
        %v2068 = vadd.f32 %v2036, %v1990
        %v2069 = vadd.f32 %v2037, %v1995
        %v2070 = vadd.f32 %v2038, %v2000
        %v2071 = vadd.f32 %v2039, %v2005
        %2072 = vst [vmem:[#allocation3] sm:$0xff] %v2040
        %2073 = vst [vmem:[#allocation3 + $0x8] sm:$0xff] %v2041
        %2074 = vst [vmem:[#allocation3 + $0x10] sm:$0xff] %v2042
        %2075 = vst [vmem:[#allocation3 + $0x18] sm:$0xff] %v2043
        %2076 = vst [vmem:[#allocation3 + $0x20] sm:$0xff] %v2044
        %2077 = vst [vmem:[#allocation3 + $0x28] sm:$0xff] %v2045
        %2078 = vst [vmem:[#allocation3 + $0x30] sm:$0xff] %v2046
        %2079 = vst [vmem:[#allocation3 + $0x38] sm:$0xff] %v2047
        %2080 = vst [vmem:[#allocation3 + $0x40] sm:$0xff] %v2048
        %2081 = vst [vmem:[#allocation3 + $0x48] sm:$0xff] %v2049
        %2082 = vst [vmem:[#allocation3 + $0x50] sm:$0xff] %v2050
        %2083 = vst [vmem:[#allocation3 + $0x58] sm:$0xff] %v2051
        %2084 = vst [vmem:[#allocation3 + $0x60] sm:$0xff] %v2052
        %2085 = vst [vmem:[#allocation3 + $0x68] sm:$0xff] %v2053
        %2086 = vst [vmem:[#allocation3 + $0x70] sm:$0xff] %v2054
        %2087 = vst [vmem:[#allocation3 + $0x78] sm:$0xff] %v2055
        %2088 = vst [vmem:[#allocation3 + $0x80] sm:$0xff] %v2056
        %2089 = vst [vmem:[#allocation3 + $0x88] sm:$0xff] %v2057
        %2090 = vst [vmem:[#allocation3 + $0x90] sm:$0xff] %v2058
        %2091 = vst [vmem:[#allocation3 + $0x98] sm:$0xff] %v2059
        %2092 = vst [vmem:[#allocation3 + $0xa0] sm:$0xff] %v2060
        %2093 = vst [vmem:[#allocation3 + $0xa8] sm:$0xff] %v2061
        %2094 = vst [vmem:[#allocation3 + $0xb0] sm:$0xff] %v2062
        %2095 = vst [vmem:[#allocation3 + $0xb8] sm:$0xff] %v2063
        %2096 = vst [vmem:[#allocation3 + $0xc0] sm:$0xff] %v2064
        %2097 = vst [vmem:[#allocation3 + $0xc8] sm:$0xff] %v2065
        %2098 = vst [vmem:[#allocation3 + $0xd0] sm:$0xff] %v2066
        %2099 = vst [vmem:[#allocation3 + $0xd8] sm:$0xff] %v2067
        %2100 = vst [vmem:[#allocation3 + $0xe0] sm:$0xff] %v2068
        %2101 = vst [vmem:[#allocation3 + $0xe8] sm:$0xff] %v2069
        %2102 = vst [vmem:[#allocation3 + $0xf0] sm:$0xff] %v2070
        %2103 = vst [vmem:[#allocation3 + $0xf8] sm:$0xff] %v2071
        %v2104 = vld [vmem:[%s760] sm:$0xff]
        %v2105 = vld [vmem:[%s760 + $0x8] sm:$0xff]
        %v2106 = vld [vmem:[%s760 + $0x10] sm:$0xff]
        %v2107 = vld [vmem:[%s760 + $0x18] sm:$0xff]
        %v2108 = vld [vmem:[%s760 + $0x20] sm:$0xff]
        %v2109 = vld [vmem:[%s760 + $0x28] sm:$0xff]
        %v2110 = vld [vmem:[%s760 + $0x30] sm:$0xff]
        %v2111 = vld [vmem:[%s760 + $0x38] sm:$0xff]
        %v2112 = vld [vmem:[%s760 + $0x40] sm:$0xff]
        %v2113 = vld [vmem:[%s760 + $0x48] sm:$0xff]
        %v2114 = vld [vmem:[%s760 + $0x50] sm:$0xff]
        %v2115 = vld [vmem:[%s760 + $0x58] sm:$0xff]
        %v2116 = vld [vmem:[%s760 + $0x60] sm:$0xff]
        %v2117 = vld [vmem:[%s760 + $0x68] sm:$0xff]
        %v2118 = vld [vmem:[%s760 + $0x70] sm:$0xff]
        %v2119 = vld [vmem:[%s760 + $0x78] sm:$0xff]
        %v2120 = vld [vmem:[%s760 + $0x80] sm:$0xff]
        %v2121 = vld [vmem:[%s760 + $0x88] sm:$0xff]
        %v2122 = vld [vmem:[%s760 + $0x90] sm:$0xff]
        %v2123 = vld [vmem:[%s760 + $0x98] sm:$0xff]
        %v2124 = vld [vmem:[%s760 + $0xa0] sm:$0xff]
        %v2125 = vld [vmem:[%s760 + $0xa8] sm:$0xff]
        %v2126 = vld [vmem:[%s760 + $0xb0] sm:$0xff]
        %v2127 = vld [vmem:[%s760 + $0xb8] sm:$0xff]
        %v2128 = vld [vmem:[%s760 + $0xc0] sm:$0xff]
        %v2129 = vld [vmem:[%s760 + $0xc8] sm:$0xff]
        %v2130 = vld [vmem:[%s760 + $0xd0] sm:$0xff]
        %v2131 = vld [vmem:[%s760 + $0xd8] sm:$0xff]
        %v2132 = vld [vmem:[%s760 + $0xe0] sm:$0xff]
        %v2133 = vld [vmem:[%s760 + $0xe8] sm:$0xff]
        %v2134 = vld [vmem:[%s760 + $0xf0] sm:$0xff]
        %v2135 = vld [vmem:[%s760 + $0xf8] sm:$0xff]
        %v2136 = vld [vmem:[%s760 + $0x100] sm:$0xff]
        %v2137 = vld [vmem:[%s760 + $0x108] sm:$0xff]
        %v2138 = vld [vmem:[%s760 + $0x110] sm:$0xff]
        %v2139 = vld [vmem:[%s760 + $0x118] sm:$0xff]
        %v2140 = vld [vmem:[%s760 + $0x120] sm:$0xff]
        %v2141 = vld [vmem:[%s760 + $0x128] sm:$0xff]
        %v2142 = vld [vmem:[%s760 + $0x130] sm:$0xff]
        %v2143 = vld [vmem:[%s760 + $0x138] sm:$0xff]
        %v2144 = vld [vmem:[%s760 + $0x140] sm:$0xff]
        %v2145 = vld [vmem:[%s760 + $0x148] sm:$0xff]
        %v2146 = vld [vmem:[%s760 + $0x150] sm:$0xff]
        %v2147 = vld [vmem:[%s760 + $0x158] sm:$0xff]
        %v2148 = vld [vmem:[%s760 + $0x160] sm:$0xff]
        %v2149 = vld [vmem:[%s760 + $0x168] sm:$0xff]
        %v2150 = vld [vmem:[%s760 + $0x170] sm:$0xff]
        %v2151 = vld [vmem:[%s760 + $0x178] sm:$0xff]
        %v2152 = vld [vmem:[%s760 + $0x180] sm:$0xff]
        %v2153 = vld [vmem:[%s760 + $0x188] sm:$0xff]
        %v2154 = vld [vmem:[%s760 + $0x190] sm:$0xff]
        %v2155 = vld [vmem:[%s760 + $0x198] sm:$0xff]
        %v2156 = vld [vmem:[%s760 + $0x1a0] sm:$0xff]
        %v2157 = vld [vmem:[%s760 + $0x1a8] sm:$0xff]
        %v2158 = vld [vmem:[%s760 + $0x1b0] sm:$0xff]
        %v2159 = vld [vmem:[%s760 + $0x1b8] sm:$0xff]
        %v2160 = vld [vmem:[%s760 + $0x1c0] sm:$0xff]
        %v2161 = vld [vmem:[%s760 + $0x1c8] sm:$0xff]
        %v2162 = vld [vmem:[%s760 + $0x1d0] sm:$0xff]
        %v2163 = vld [vmem:[%s760 + $0x1d8] sm:$0xff]
        %v2164 = vld [vmem:[%s760 + $0x1e0] sm:$0xff]
        %v2165 = vld [vmem:[%s760 + $0x1e8] sm:$0xff]
        %v2166 = vld [vmem:[%s760 + $0x1f0] sm:$0xff]
        %v2167 = vld [vmem:[%s760 + $0x1f8] sm:$0xff]
        %v2168 = vld [vmem:[%s760 + $0x200] sm:$0xff]
        %v2169 = vld [vmem:[%s760 + $0x208] sm:$0xff]
        %v2170 = vld [vmem:[%s760 + $0x210] sm:$0xff]
        %v2171 = vld [vmem:[%s760 + $0x218] sm:$0xff]
        %v2172 = vld [vmem:[%s760 + $0x220] sm:$0xff]
        %v2173 = vld [vmem:[%s760 + $0x228] sm:$0xff]
        %v2174 = vld [vmem:[%s760 + $0x230] sm:$0xff]
        %v2175 = vld [vmem:[%s760 + $0x238] sm:$0xff]
        %v2176 = vld [vmem:[%s760 + $0x240] sm:$0xff]
        %v2177 = vld [vmem:[%s760 + $0x248] sm:$0xff]
        %v2178 = vld [vmem:[%s760 + $0x250] sm:$0xff]
        %v2179 = vld [vmem:[%s760 + $0x258] sm:$0xff]
        %v2180 = vld [vmem:[%s760 + $0x260] sm:$0xff]
        %v2181 = vld [vmem:[%s760 + $0x268] sm:$0xff]
        %v2182 = vld [vmem:[%s760 + $0x270] sm:$0xff]
        %v2183 = vld [vmem:[%s760 + $0x278] sm:$0xff]
        %v2184 = vld [vmem:[%s760 + $0x280] sm:$0xff]
        %v2185 = vld [vmem:[%s760 + $0x288] sm:$0xff]
        %v2186 = vld [vmem:[%s760 + $0x290] sm:$0xff]
        %v2187 = vld [vmem:[%s760 + $0x298] sm:$0xff]
        %v2188 = vld [vmem:[%s760 + $0x2a0] sm:$0xff]
        %v2189 = vld [vmem:[%s760 + $0x2a8] sm:$0xff]
        %v2190 = vld [vmem:[%s760 + $0x2b0] sm:$0xff]
        %v2191 = vld [vmem:[%s760 + $0x2b8] sm:$0xff]
        %v2192 = vld [vmem:[%s760 + $0x2c0] sm:$0xff]
        %v2193 = vld [vmem:[%s760 + $0x2c8] sm:$0xff]
        %v2194 = vld [vmem:[%s760 + $0x2d0] sm:$0xff]
        %v2195 = vld [vmem:[%s760 + $0x2d8] sm:$0xff]
        %v2196 = vld [vmem:[%s760 + $0x2e0] sm:$0xff]
        %v2197 = vld [vmem:[%s760 + $0x2e8] sm:$0xff]
        %v2198 = vld [vmem:[%s760 + $0x2f0] sm:$0xff]
        %v2199 = vld [vmem:[%s760 + $0x2f8] sm:$0xff]
        %s2200 = scalar_lea.vmem [#allocation8], 768
        %v2201 = vld [vmem:[%s2200] sm:$0xff]
        %v2202 = vld [vmem:[%s2200 + $0x8] sm:$0xff]
        %v2203 = vld [vmem:[%s2200 + $0x10] sm:$0xff]
        %v2204 = vld [vmem:[%s2200 + $0x18] sm:$0xff]
        %v2205 = vld [vmem:[%s2200 + $0x20] sm:$0xff]
        %v2206 = vld [vmem:[%s2200 + $0x28] sm:$0xff]
        %v2207 = vld [vmem:[%s2200 + $0x30] sm:$0xff]
        %v2208 = vld [vmem:[%s2200 + $0x38] sm:$0xff]
        %v2209 = vld [vmem:[%s2200 + $0x40] sm:$0xff]
        %v2210 = vld [vmem:[%s2200 + $0x48] sm:$0xff]
        %v2211 = vld [vmem:[%s2200 + $0x50] sm:$0xff]
        %v2212 = vld [vmem:[%s2200 + $0x58] sm:$0xff]
        %v2213 = vld [vmem:[%s2200 + $0x60] sm:$0xff]
        %v2214 = vld [vmem:[%s2200 + $0x68] sm:$0xff]
        %v2215 = vld [vmem:[%s2200 + $0x70] sm:$0xff]
        %v2216 = vld [vmem:[%s2200 + $0x78] sm:$0xff]
        %v2217 = vld [vmem:[%s2200 + $0x80] sm:$0xff]
        %v2218 = vld [vmem:[%s2200 + $0x88] sm:$0xff]
        %v2219 = vld [vmem:[%s2200 + $0x90] sm:$0xff]
        %v2220 = vld [vmem:[%s2200 + $0x98] sm:$0xff]
        %v2221 = vld [vmem:[%s2200 + $0xa0] sm:$0xff]
        %v2222 = vld [vmem:[%s2200 + $0xa8] sm:$0xff]
        %v2223 = vld [vmem:[%s2200 + $0xb0] sm:$0xff]
        %v2224 = vld [vmem:[%s2200 + $0xb8] sm:$0xff]
        %v2225 = vld [vmem:[%s2200 + $0xc0] sm:$0xff]
        %v2226 = vld [vmem:[%s2200 + $0xc8] sm:$0xff]
        %v2227 = vld [vmem:[%s2200 + $0xd0] sm:$0xff]
        %v2228 = vld [vmem:[%s2200 + $0xd8] sm:$0xff]
        %v2229 = vld [vmem:[%s2200 + $0xe0] sm:$0xff]
        %v2230 = vld [vmem:[%s2200 + $0xe8] sm:$0xff]
        %v2231 = vld [vmem:[%s2200 + $0xf0] sm:$0xff]
        %v2232 = vld [vmem:[%s2200 + $0xf8] sm:$0xff]
        %v2233 = vld [vmem:[%s2200 + $0x100] sm:$0xff]
        %v2234 = vld [vmem:[%s2200 + $0x108] sm:$0xff]
        %v2235 = vld [vmem:[%s2200 + $0x110] sm:$0xff]
        %v2236 = vld [vmem:[%s2200 + $0x118] sm:$0xff]
        %v2237 = vld [vmem:[%s2200 + $0x120] sm:$0xff]
        %v2238 = vld [vmem:[%s2200 + $0x128] sm:$0xff]
        %v2239 = vld [vmem:[%s2200 + $0x130] sm:$0xff]
        %v2240 = vld [vmem:[%s2200 + $0x138] sm:$0xff]
        %v2241 = vld [vmem:[%s2200 + $0x140] sm:$0xff]
        %v2242 = vld [vmem:[%s2200 + $0x148] sm:$0xff]
        %v2243 = vld [vmem:[%s2200 + $0x150] sm:$0xff]
        %v2244 = vld [vmem:[%s2200 + $0x158] sm:$0xff]
        %v2245 = vld [vmem:[%s2200 + $0x160] sm:$0xff]
        %v2246 = vld [vmem:[%s2200 + $0x168] sm:$0xff]
        %v2247 = vld [vmem:[%s2200 + $0x170] sm:$0xff]
        %v2248 = vld [vmem:[%s2200 + $0x178] sm:$0xff]
        %2249 = vmatprep.subr.mxu0 0.0
        %2250 = vmatpush1.msra.mxu0 %v2201
        %2251 = vmatprep.subr.mxu0 0.0
        %2252 = vmatpush1.msra.mxu0 %v2202
        %2253 = vmatprep.subr.mxu0 0.0
        %2254 = vmatpush1.msra.mxu0 %v2203
        %2255 = vmatprep.subr.mxu0 0.0
        %2256 = vmatpush1.msra.mxu0 %v2204
        %2257 = vmatprep.subr.mxu0 0.0
        %2258 = vmatpush1.msra.mxu0 %v2205
        %2259 = vmatprep.subr.mxu0 0.0
        %2260 = vmatpush1.msra.mxu0 %v2206
        %2261 = vmatprep.subr.mxu0 0.0
        %2262 = vmatpush1.msra.mxu0 %v2207
        %2263 = vmatprep.subr.mxu0 0.0
        %2264 = vmatpush1.msra.mxu0 %v2208
        %2265 = vmatprep.subr.mxu0 0.0
        %2266 = vmatpush1.msra.mxu0 %v2209
        %2267 = vmatprep.subr.mxu0 0.0
        %2268 = vmatpush1.msra.mxu0 %v2210
        %2269 = vmatprep.subr.mxu0 0.0
        %2270 = vmatpush1.msra.mxu0 %v2211
        %2271 = vmatprep.subr.mxu0 0.0
        %2272 = vmatpush1.msra.mxu0 %v2212
        %2273 = vmatprep.subr.mxu0 0.0
        %2274 = vmatpush1.msra.mxu0 %v2213
        %2275 = vmatprep.subr.mxu0 0.0
        %2276 = vmatpush1.msra.mxu0 %v2214
        %2277 = vmatprep.subr.mxu0 0.0
        %2278 = vmatpush1.msra.mxu0 %v2215
        %2279 = vmatprep.subr.mxu0 0.0
        %2280 = vmatpush1.msra.mxu0 %v2216
        %2281 = vmatprep.subr.mxu0 0.0
        %2282 = vmatpush1.msra.mxu0 %v2217
        %2283 = vmatprep.subr.mxu0 0.0
        %2284 = vmatpush1.msra.mxu0 %v2218
        %2285 = vmatprep.subr.mxu0 0.0
        %2286 = vmatpush1.msra.mxu0 %v2219
        %2287 = vmatprep.subr.mxu0 0.0
        %2288 = vmatpush1.msra.mxu0 %v2220
        %2289 = vmatprep.subr.mxu0 0.0
        %2290 = vmatpush1.msra.mxu0 %v2221
        %2291 = vmatprep.subr.mxu0 0.0
        %2292 = vmatpush1.msra.mxu0 %v2222
        %2293 = vmatprep.subr.mxu0 0.0
        %2294 = vmatpush1.msra.mxu0 %v2223
        %2295 = vmatprep.subr.mxu0 0.0
        %2296 = vmatpush1.msra.mxu0 %v2224
        %2297 = vmatprep.subr.mxu0 0.0
        %2298 = vmatpush1.msra.mxu0 %v2225
        %2299 = vmatprep.subr.mxu0 0.0
        %2300 = vmatpush1.msra.mxu0 %v2226
        %2301 = vmatprep.subr.mxu0 0.0
        %2302 = vmatpush1.msra.mxu0 %v2227
        %2303 = vmatprep.subr.mxu0 0.0
        %2304 = vmatpush1.msra.mxu0 %v2228
        %2305 = vmatprep.subr.mxu0 0.0
        %2306 = vmatpush1.msra.mxu0 %v2229
        %2307 = vmatprep.subr.mxu0 0.0
        %2308 = vmatpush1.msra.mxu0 %v2230
        %2309 = vmatprep.subr.mxu0 0.0
        %2310 = vmatpush1.msra.mxu0 %v2231
        %2311 = vmatprep.subr.mxu0 0.0
        %2312 = vmatpush1.msra.mxu0 %v2232
        %2313 = vmatprep.mubr.f32.mxu0 %v2105
        %2314 = vmatmul.mubr.f32.gmra.mrb[0].mxu0 %v2104
        %v2315 = vpop.f32.mrb[0].mxu0
        %v2316 = vadd.f32 0.0, %v2315
        %v2317 = vpop.f32.mrb[0].mxu0
        %2318 = vmatprep.mubr.f32.mxu0 %v2108
        %2319 = vmatmul.mubr.f32.gmra.mrb[0].mxu0 %v2107
        %v2320 = vpop.f32.mrb[0].mxu0
        %v2321 = vadd.f32 0.0, %v2320
        %v2322 = vpop.f32.mrb[0].mxu0
        %2323 = vmatprep.mubr.f32.mxu0 %v2111
        %2324 = vmatmul.mubr.f32.gmra.mrb[0].mxu0 %v2110
        %v2325 = vpop.f32.mrb[0].mxu0
        %v2326 = vadd.f32 0.0, %v2325
        %v2327 = vpop.f32.mrb[0].mxu0
        %2328 = vmatprep.mubr.f32.mxu0 %v2114
        %2329 = vmatmul.mubr.f32.gmra.mrb[0].mxu0 %v2113
        %v2330 = vpop.f32.mrb[0].mxu0
        %v2331 = vadd.f32 0.0, %v2330
        %v2332 = vpop.f32.mrb[0].mxu0
        %2333 = vmatprep.mubr.f32.mxu0 %v2117
        %2334 = vmatmul.mubr.f32.gmra.mrb[0].mxu0 %v2116
        %v2335 = vpop.f32.mrb[0].mxu0
        %v2336 = vadd.f32 0.0, %v2335
        %v2337 = vpop.f32.mrb[0].mxu0
        %2338 = vmatprep.mubr.f32.mxu0 %v2120
        %2339 = vmatmul.mubr.f32.gmra.mrb[0].mxu0 %v2119
        %v2340 = vpop.f32.mrb[0].mxu0
        %v2341 = vadd.f32 0.0, %v2340
        %v2342 = vpop.f32.mrb[0].mxu0
        %2343 = vmatprep.mubr.f32.mxu0 %v2123
        %2344 = vmatmul.mubr.f32.gmra.mrb[0].mxu0 %v2122
        %v2345 = vpop.f32.mrb[0].mxu0
        %v2346 = vadd.f32 0.0, %v2345
        %v2347 = vpop.f32.mrb[0].mxu0
        %2348 = vmatprep.mubr.f32.mxu0 %v2126
        %2349 = vmatmul.mubr.f32.gmra.mrb[0].mxu0 %v2125
        %v2350 = vpop.f32.mrb[0].mxu0
        %v2351 = vadd.f32 0.0, %v2350
        %v2352 = vpop.f32.mrb[0].mxu0
        %2353 = vmatprep.mubr.f32.mxu0 %v2129
        %2354 = vmatmul.mubr.f32.gmra.mrb[0].mxu0 %v2128
        %v2355 = vpop.f32.mrb[0].mxu0
        %v2356 = vadd.f32 0.0, %v2355
        %v2357 = vpop.f32.mrb[0].mxu0
        %2358 = vmatprep.mubr.f32.mxu0 %v2132
        %2359 = vmatmul.mubr.f32.gmra.mrb[0].mxu0 %v2131
        %v2360 = vpop.f32.mrb[0].mxu0
        %v2361 = vadd.f32 0.0, %v2360
        %v2362 = vpop.f32.mrb[0].mxu0
        %2363 = vmatprep.mubr.f32.mxu0 %v2135
        %2364 = vmatmul.mubr.f32.gmra.mrb[0].mxu0 %v2134
        %v2365 = vpop.f32.mrb[0].mxu0
        %v2366 = vadd.f32 0.0, %v2365
        %v2367 = vpop.f32.mrb[0].mxu0
        %2368 = vmatprep.mubr.f32.mxu0 %v2138
        %2369 = vmatmul.mubr.f32.gmra.mrb[0].mxu0 %v2137
        %v2370 = vpop.f32.mrb[0].mxu0
        %v2371 = vadd.f32 0.0, %v2370
        %v2372 = vpop.f32.mrb[0].mxu0
        %2373 = vmatprep.mubr.f32.mxu0 %v2141
        %2374 = vmatmul.mubr.f32.gmra.mrb[0].mxu0 %v2140
        %v2375 = vpop.f32.mrb[0].mxu0
        %v2376 = vadd.f32 0.0, %v2375
        %v2377 = vpop.f32.mrb[0].mxu0
        %2378 = vmatprep.mubr.f32.mxu0 %v2144
        %2379 = vmatmul.mubr.f32.gmra.mrb[0].mxu0 %v2143
        %v2380 = vpop.f32.mrb[0].mxu0
        %v2381 = vadd.f32 0.0, %v2380
        %v2382 = vpop.f32.mrb[0].mxu0
        %2383 = vmatprep.mubr.f32.mxu0 %v2147
        %2384 = vmatmul.mubr.f32.gmra.mrb[0].mxu0 %v2146
        %v2385 = vpop.f32.mrb[0].mxu0
        %v2386 = vadd.f32 0.0, %v2385
        %v2387 = vpop.f32.mrb[0].mxu0
        %2388 = vmatprep.mubr.f32.mxu0 %v2150
        %2389 = vmatmul.mubr.f32.gmra.mrb[0].mxu0 %v2149
        %v2390 = vpop.f32.mrb[0].mxu0
        %v2391 = vadd.f32 0.0, %v2390
        %v2392 = vpop.f32.mrb[0].mxu0
        %2393 = vmatprep.mubr.f32.mxu0 %v2153
        %2394 = vmatmul.mubr.f32.gmra.mrb[0].mxu0 %v2152
        %v2395 = vpop.f32.mrb[0].mxu0
        %v2396 = vadd.f32 0.0, %v2395
        %v2397 = vpop.f32.mrb[0].mxu0
        %2398 = vmatprep.mubr.f32.mxu0 %v2156
        %2399 = vmatmul.mubr.f32.gmra.mrb[0].mxu0 %v2155
        %v2400 = vpop.f32.mrb[0].mxu0
        %v2401 = vadd.f32 0.0, %v2400
        %v2402 = vpop.f32.mrb[0].mxu0
        %2403 = vmatprep.mubr.f32.mxu0 %v2159
        %2404 = vmatmul.mubr.f32.gmra.mrb[0].mxu0 %v2158
        %v2405 = vpop.f32.mrb[0].mxu0
        %v2406 = vadd.f32 0.0, %v2405
        %v2407 = vpop.f32.mrb[0].mxu0
        %2408 = vmatprep.mubr.f32.mxu0 %v2162
        %2409 = vmatmul.mubr.f32.gmra.mrb[0].mxu0 %v2161
        %v2410 = vpop.f32.mrb[0].mxu0
        %v2411 = vadd.f32 0.0, %v2410
        %v2412 = vpop.f32.mrb[0].mxu0
        %2413 = vmatprep.mubr.f32.mxu0 %v2165
        %2414 = vmatmul.mubr.f32.gmra.mrb[0].mxu0 %v2164
        %v2415 = vpop.f32.mrb[0].mxu0
        %v2416 = vadd.f32 0.0, %v2415
        %v2417 = vpop.f32.mrb[0].mxu0
        %2418 = vmatprep.mubr.f32.mxu0 %v2168
        %2419 = vmatmul.mubr.f32.gmra.mrb[0].mxu0 %v2167
        %v2420 = vpop.f32.mrb[0].mxu0
        %v2421 = vadd.f32 0.0, %v2420
        %v2422 = vpop.f32.mrb[0].mxu0
        %2423 = vmatprep.mubr.f32.mxu0 %v2171
        %2424 = vmatmul.mubr.f32.gmra.mrb[0].mxu0 %v2170
        %v2425 = vpop.f32.mrb[0].mxu0
        %v2426 = vadd.f32 0.0, %v2425
        %v2427 = vpop.f32.mrb[0].mxu0
        %2428 = vmatprep.mubr.f32.mxu0 %v2174
        %2429 = vmatmul.mubr.f32.gmra.mrb[0].mxu0 %v2173
        %v2430 = vpop.f32.mrb[0].mxu0
        %v2431 = vadd.f32 0.0, %v2430
        %v2432 = vpop.f32.mrb[0].mxu0
        %2433 = vmatprep.mubr.f32.mxu0 %v2177
        %2434 = vmatmul.mubr.f32.gmra.mrb[0].mxu0 %v2176
        %v2435 = vpop.f32.mrb[0].mxu0
        %v2436 = vadd.f32 0.0, %v2435
        %v2437 = vpop.f32.mrb[0].mxu0
        %2438 = vmatprep.mubr.f32.mxu0 %v2180
        %2439 = vmatmul.mubr.f32.gmra.mrb[0].mxu0 %v2179
        %v2440 = vpop.f32.mrb[0].mxu0
        %v2441 = vadd.f32 0.0, %v2440
        %v2442 = vpop.f32.mrb[0].mxu0
        %2443 = vmatprep.mubr.f32.mxu0 %v2183
        %2444 = vmatmul.mubr.f32.gmra.mrb[0].mxu0 %v2182
        %v2445 = vpop.f32.mrb[0].mxu0
        %v2446 = vadd.f32 0.0, %v2445
        %v2447 = vpop.f32.mrb[0].mxu0
        %2448 = vmatprep.mubr.f32.mxu0 %v2186
        %2449 = vmatmul.mubr.f32.gmra.mrb[0].mxu0 %v2185
        %v2450 = vpop.f32.mrb[0].mxu0
        %v2451 = vadd.f32 0.0, %v2450
        %v2452 = vpop.f32.mrb[0].mxu0
        %2453 = vmatprep.mubr.f32.mxu0 %v2189
        %2454 = vmatmul.mubr.f32.gmra.mrb[0].mxu0 %v2188
        %v2455 = vpop.f32.mrb[0].mxu0
        %v2456 = vadd.f32 0.0, %v2455
        %v2457 = vpop.f32.mrb[0].mxu0
        %2458 = vmatprep.mubr.f32.mxu0 %v2192
        %2459 = vmatmul.mubr.f32.gmra.mrb[0].mxu0 %v2191
        %v2460 = vpop.f32.mrb[0].mxu0
        %v2461 = vadd.f32 0.0, %v2460
        %v2462 = vpop.f32.mrb[0].mxu0
        %2463 = vmatprep.mubr.f32.mxu0 %v2195
        %2464 = vmatmul.mubr.f32.gmra.mrb[0].mxu0 %v2194
        %v2465 = vpop.f32.mrb[0].mxu0
        %v2466 = vadd.f32 0.0, %v2465
        %v2467 = vpop.f32.mrb[0].mxu0
        %2468 = vmatprep.mubr.f32.mxu0 %v2198
        %2469 = vmatmul.mubr.f32.gmra.mrb[0].mxu0 %v2197
        %v2470 = vpop.f32.mrb[0].mxu0
        %v2471 = vadd.f32 0.0, %v2470
        %v2472 = vpop.f32.mrb[0].mxu0
        %2473 = vdwg.mxu0
        %2474 = vmatprep.subr.mxu0 0.0
        %2475 = vmatpush1.msra.mxu0 %v2233
        %2476 = vmatprep.subr.mxu0 0.0
        %2477 = vmatpush1.msra.mxu0 %v2234
        %2478 = vmatprep.subr.mxu0 0.0
        %2479 = vmatpush1.msra.mxu0 %v2235
        %2480 = vmatprep.subr.mxu0 0.0
        %2481 = vmatpush1.msra.mxu0 %v2236
        %2482 = vmatprep.subr.mxu0 0.0
        %2483 = vmatpush1.msra.mxu0 %v2237
        %2484 = vmatprep.subr.mxu0 0.0
        %2485 = vmatpush1.msra.mxu0 %v2238
        %2486 = vmatprep.subr.mxu0 0.0
        %2487 = vmatpush1.msra.mxu0 %v2239
        %2488 = vmatprep.subr.mxu0 0.0
        %2489 = vmatpush1.msra.mxu0 %v2240
        %2490 = vmatprep.subr.mxu0 0.0
        %2491 = vmatpush1.msra.mxu0 %v2241
        %2492 = vmatprep.subr.mxu0 0.0
        %2493 = vmatpush1.msra.mxu0 %v2242
        %2494 = vmatprep.subr.mxu0 0.0
        %2495 = vmatpush1.msra.mxu0 %v2243
        %2496 = vmatprep.subr.mxu0 0.0
        %2497 = vmatpush1.msra.mxu0 %v2244
        %2498 = vmatprep.subr.mxu0 0.0
        %2499 = vmatpush1.msra.mxu0 %v2245
        %2500 = vmatprep.subr.mxu0 0.0
        %2501 = vmatpush1.msra.mxu0 %v2246
        %2502 = vmatprep.subr.mxu0 0.0
        %2503 = vmatpush1.msra.mxu0 %v2247
        %2504 = vmatprep.subr.mxu0 0.0
        %2505 = vmatpush1.msra.mxu0 %v2248
        %2506 = vmatprep.subr.mxu0 0.0
        %2507 = vmatpush1.msra.mxu0 0.0
        %2508 = vmatprep.subr.mxu0 0.0
        %2509 = vmatpush1.msra.mxu0 0.0
        %2510 = vmatprep.subr.mxu0 0.0
        %2511 = vmatpush1.msra.mxu0 0.0
        %2512 = vmatprep.subr.mxu0 0.0
        %2513 = vmatpush1.msra.mxu0 0.0
        %2514 = vmatprep.subr.mxu0 0.0
        %2515 = vmatpush1.msra.mxu0 0.0
        %2516 = vmatprep.subr.mxu0 0.0
        %2517 = vmatpush1.msra.mxu0 0.0
        %2518 = vmatprep.subr.mxu0 0.0
        %2519 = vmatpush1.msra.mxu0 0.0
        %2520 = vmatprep.subr.mxu0 0.0
        %2521 = vmatpush1.msra.mxu0 0.0
        %2522 = vmatprep.subr.mxu0 0.0
        %2523 = vmatpush1.msra.mxu0 0.0
        %2524 = vmatprep.subr.mxu0 0.0
        %2525 = vmatpush1.msra.mxu0 0.0
        %2526 = vmatprep.subr.mxu0 0.0
        %2527 = vmatpush1.msra.mxu0 0.0
        %2528 = vmatprep.subr.mxu0 0.0
        %2529 = vmatpush1.msra.mxu0 0.0
        %2530 = vmatprep.subr.mxu0 0.0
        %2531 = vmatpush1.msra.mxu0 0.0
        %2532 = vmatprep.subr.mxu0 0.0
        %2533 = vmatpush1.msra.mxu0 0.0
        %2534 = vmatprep.subr.mxu0 0.0
        %2535 = vmatpush1.msra.mxu0 0.0
        %2536 = vmatprep.subr.mxu0 0.0
        %2537 = vmatpush1.msra.mxu0 0.0
        %2538 = vmatprep.mubr.f32.mxu0 0.0
        %2539 = vmatmul.mubr.f32.gmra.mrb[0].mxu0 %v2106
        %v2540 = vpop.f32.mrb[0].mxu0
        %v2541 = vadd.f32 %v2316, %v2540
        %v2542 = vpop.f32.mrb[0].mxu0
        %2543 = vmatprep.mubr.f32.mxu0 0.0
        %2544 = vmatmul.mubr.f32.gmra.mrb[0].mxu0 %v2109
        %v2545 = vpop.f32.mrb[0].mxu0
        %v2546 = vadd.f32 %v2321, %v2545
        %v2547 = vpop.f32.mrb[0].mxu0
        %2548 = vmatprep.mubr.f32.mxu0 0.0
        %2549 = vmatmul.mubr.f32.gmra.mrb[0].mxu0 %v2112
        %v2550 = vpop.f32.mrb[0].mxu0
        %v2551 = vadd.f32 %v2326, %v2550
        %v2552 = vpop.f32.mrb[0].mxu0
        %2553 = vmatprep.mubr.f32.mxu0 0.0
        %2554 = vmatmul.mubr.f32.gmra.mrb[0].mxu0 %v2115
        %v2555 = vpop.f32.mrb[0].mxu0
        %v2556 = vadd.f32 %v2331, %v2555
        %v2557 = vpop.f32.mrb[0].mxu0
        %2558 = vmatprep.mubr.f32.mxu0 0.0
        %2559 = vmatmul.mubr.f32.gmra.mrb[0].mxu0 %v2118
        %v2560 = vpop.f32.mrb[0].mxu0
        %v2561 = vadd.f32 %v2336, %v2560
        %v2562 = vpop.f32.mrb[0].mxu0
        %2563 = vmatprep.mubr.f32.mxu0 0.0
        %2564 = vmatmul.mubr.f32.gmra.mrb[0].mxu0 %v2121
        %v2565 = vpop.f32.mrb[0].mxu0
        %v2566 = vadd.f32 %v2341, %v2565
        %v2567 = vpop.f32.mrb[0].mxu0
        %2568 = vmatprep.mubr.f32.mxu0 0.0
        %2569 = vmatmul.mubr.f32.gmra.mrb[0].mxu0 %v2124
        %v2570 = vpop.f32.mrb[0].mxu0
        %v2571 = vadd.f32 %v2346, %v2570
        %v2572 = vpop.f32.mrb[0].mxu0
        %2573 = vmatprep.mubr.f32.mxu0 0.0
        %2574 = vmatmul.mubr.f32.gmra.mrb[0].mxu0 %v2127
        %v2575 = vpop.f32.mrb[0].mxu0
        %v2576 = vadd.f32 %v2351, %v2575
        %v2577 = vpop.f32.mrb[0].mxu0
        %2578 = vmatprep.mubr.f32.mxu0 0.0
        %2579 = vmatmul.mubr.f32.gmra.mrb[0].mxu0 %v2130
        %v2580 = vpop.f32.mrb[0].mxu0
        %v2581 = vadd.f32 %v2356, %v2580
        %v2582 = vpop.f32.mrb[0].mxu0
        %2583 = vmatprep.mubr.f32.mxu0 0.0
        %2584 = vmatmul.mubr.f32.gmra.mrb[0].mxu0 %v2133
        %v2585 = vpop.f32.mrb[0].mxu0
        %v2586 = vadd.f32 %v2361, %v2585
        %v2587 = vpop.f32.mrb[0].mxu0
        %2588 = vmatprep.mubr.f32.mxu0 0.0
        %2589 = vmatmul.mubr.f32.gmra.mrb[0].mxu0 %v2136
        %v2590 = vpop.f32.mrb[0].mxu0
        %v2591 = vadd.f32 %v2366, %v2590
        %v2592 = vpop.f32.mrb[0].mxu0
        %2593 = vmatprep.mubr.f32.mxu0 0.0
        %2594 = vmatmul.mubr.f32.gmra.mrb[0].mxu0 %v2139
        %v2595 = vpop.f32.mrb[0].mxu0
        %v2596 = vadd.f32 %v2371, %v2595
        %v2597 = vpop.f32.mrb[0].mxu0
        %2598 = vmatprep.mubr.f32.mxu0 0.0
        %2599 = vmatmul.mubr.f32.gmra.mrb[0].mxu0 %v2142
        %v2600 = vpop.f32.mrb[0].mxu0
        %v2601 = vadd.f32 %v2376, %v2600
        %v2602 = vpop.f32.mrb[0].mxu0
        %2603 = vmatprep.mubr.f32.mxu0 0.0
        %2604 = vmatmul.mubr.f32.gmra.mrb[0].mxu0 %v2145
        %v2605 = vpop.f32.mrb[0].mxu0
        %v2606 = vadd.f32 %v2381, %v2605
        %v2607 = vpop.f32.mrb[0].mxu0
        %2608 = vmatprep.mubr.f32.mxu0 0.0
        %2609 = vmatmul.mubr.f32.gmra.mrb[0].mxu0 %v2148
        %v2610 = vpop.f32.mrb[0].mxu0
        %v2611 = vadd.f32 %v2386, %v2610
        %v2612 = vpop.f32.mrb[0].mxu0
        %2613 = vmatprep.mubr.f32.mxu0 0.0
        %2614 = vmatmul.mubr.f32.gmra.mrb[0].mxu0 %v2151
        %v2615 = vpop.f32.mrb[0].mxu0
        %v2616 = vadd.f32 %v2391, %v2615
        %v2617 = vpop.f32.mrb[0].mxu0
        %2618 = vmatprep.mubr.f32.mxu0 0.0
        %2619 = vmatmul.mubr.f32.gmra.mrb[0].mxu0 %v2154
        %v2620 = vpop.f32.mrb[0].mxu0
        %v2621 = vadd.f32 %v2396, %v2620
        %v2622 = vpop.f32.mrb[0].mxu0
        %2623 = vmatprep.mubr.f32.mxu0 0.0
        %2624 = vmatmul.mubr.f32.gmra.mrb[0].mxu0 %v2157
        %v2625 = vpop.f32.mrb[0].mxu0
        %v2626 = vadd.f32 %v2401, %v2625
        %v2627 = vpop.f32.mrb[0].mxu0
        %2628 = vmatprep.mubr.f32.mxu0 0.0
        %2629 = vmatmul.mubr.f32.gmra.mrb[0].mxu0 %v2160
        %v2630 = vpop.f32.mrb[0].mxu0
        %v2631 = vadd.f32 %v2406, %v2630
        %v2632 = vpop.f32.mrb[0].mxu0
        %2633 = vmatprep.mubr.f32.mxu0 0.0
        %2634 = vmatmul.mubr.f32.gmra.mrb[0].mxu0 %v2163
        %v2635 = vpop.f32.mrb[0].mxu0
        %v2636 = vadd.f32 %v2411, %v2635
        %v2637 = vpop.f32.mrb[0].mxu0
        %2638 = vmatprep.mubr.f32.mxu0 0.0
        %2639 = vmatmul.mubr.f32.gmra.mrb[0].mxu0 %v2166
        %v2640 = vpop.f32.mrb[0].mxu0
        %v2641 = vadd.f32 %v2416, %v2640
        %v2642 = vpop.f32.mrb[0].mxu0
        %2643 = vmatprep.mubr.f32.mxu0 0.0
        %2644 = vmatmul.mubr.f32.gmra.mrb[0].mxu0 %v2169
        %v2645 = vpop.f32.mrb[0].mxu0
        %v2646 = vadd.f32 %v2421, %v2645
        %v2647 = vpop.f32.mrb[0].mxu0
        %2648 = vmatprep.mubr.f32.mxu0 0.0
        %2649 = vmatmul.mubr.f32.gmra.mrb[0].mxu0 %v2172
        %v2650 = vpop.f32.mrb[0].mxu0
        %v2651 = vadd.f32 %v2426, %v2650
        %v2652 = vpop.f32.mrb[0].mxu0
        %2653 = vmatprep.mubr.f32.mxu0 0.0
        %2654 = vmatmul.mubr.f32.gmra.mrb[0].mxu0 %v2175
        %v2655 = vpop.f32.mrb[0].mxu0
        %v2656 = vadd.f32 %v2431, %v2655
        %v2657 = vpop.f32.mrb[0].mxu0
        %2658 = vmatprep.mubr.f32.mxu0 0.0
        %2659 = vmatmul.mubr.f32.gmra.mrb[0].mxu0 %v2178
        %v2660 = vpop.f32.mrb[0].mxu0
        %v2661 = vadd.f32 %v2436, %v2660
        %v2662 = vpop.f32.mrb[0].mxu0
        %2663 = vmatprep.mubr.f32.mxu0 0.0
        %2664 = vmatmul.mubr.f32.gmra.mrb[0].mxu0 %v2181
        %v2665 = vpop.f32.mrb[0].mxu0
        %v2666 = vadd.f32 %v2441, %v2665
        %v2667 = vpop.f32.mrb[0].mxu0
        %2668 = vmatprep.mubr.f32.mxu0 0.0
        %2669 = vmatmul.mubr.f32.gmra.mrb[0].mxu0 %v2184
        %v2670 = vpop.f32.mrb[0].mxu0
        %v2671 = vadd.f32 %v2446, %v2670
        %v2672 = vpop.f32.mrb[0].mxu0
        %2673 = vmatprep.mubr.f32.mxu0 0.0
        %2674 = vmatmul.mubr.f32.gmra.mrb[0].mxu0 %v2187
        %v2675 = vpop.f32.mrb[0].mxu0
        %v2676 = vadd.f32 %v2451, %v2675
        %v2677 = vpop.f32.mrb[0].mxu0
        %2678 = vmatprep.mubr.f32.mxu0 0.0
        %2679 = vmatmul.mubr.f32.gmra.mrb[0].mxu0 %v2190
        %v2680 = vpop.f32.mrb[0].mxu0
        %v2681 = vadd.f32 %v2456, %v2680
        %v2682 = vpop.f32.mrb[0].mxu0
        %2683 = vmatprep.mubr.f32.mxu0 0.0
        %2684 = vmatmul.mubr.f32.gmra.mrb[0].mxu0 %v2193
        %v2685 = vpop.f32.mrb[0].mxu0
        %v2686 = vadd.f32 %v2461, %v2685
        %v2687 = vpop.f32.mrb[0].mxu0
        %2688 = vmatprep.mubr.f32.mxu0 0.0
        %2689 = vmatmul.mubr.f32.gmra.mrb[0].mxu0 %v2196
        %v2690 = vpop.f32.mrb[0].mxu0
        %v2691 = vadd.f32 %v2466, %v2690
        %v2692 = vpop.f32.mrb[0].mxu0
        %2693 = vmatprep.mubr.f32.mxu0 0.0
        %2694 = vmatmul.mubr.f32.gmra.mrb[0].mxu0 %v2199
        %v2695 = vpop.f32.mrb[0].mxu0
        %v2696 = vadd.f32 %v2471, %v2695
        %v2697 = vpop.f32.mrb[0].mxu0
        %2698 = vdwg.mxu0
        %v2699 = vld [vmem:[#allocation3] sm:$0xff]
        %v2700 = vld [vmem:[#allocation3 + $0x8] sm:$0xff]
        %v2701 = vld [vmem:[#allocation3 + $0x10] sm:$0xff]
        %v2702 = vld [vmem:[#allocation3 + $0x18] sm:$0xff]
        %v2703 = vld [vmem:[#allocation3 + $0x20] sm:$0xff]
        %v2704 = vld [vmem:[#allocation3 + $0x28] sm:$0xff]
        %v2705 = vld [vmem:[#allocation3 + $0x30] sm:$0xff]
        %v2706 = vld [vmem:[#allocation3 + $0x38] sm:$0xff]
        %v2707 = vld [vmem:[#allocation3 + $0x40] sm:$0xff]
        %v2708 = vld [vmem:[#allocation3 + $0x48] sm:$0xff]
        %v2709 = vld [vmem:[#allocation3 + $0x50] sm:$0xff]
        %v2710 = vld [vmem:[#allocation3 + $0x58] sm:$0xff]
        %v2711 = vld [vmem:[#allocation3 + $0x60] sm:$0xff]
        %v2712 = vld [vmem:[#allocation3 + $0x68] sm:$0xff]
        %v2713 = vld [vmem:[#allocation3 + $0x70] sm:$0xff]
        %v2714 = vld [vmem:[#allocation3 + $0x78] sm:$0xff]
        %v2715 = vld [vmem:[#allocation3 + $0x80] sm:$0xff]
        %v2716 = vld [vmem:[#allocation3 + $0x88] sm:$0xff]
        %v2717 = vld [vmem:[#allocation3 + $0x90] sm:$0xff]
        %v2718 = vld [vmem:[#allocation3 + $0x98] sm:$0xff]
        %v2719 = vld [vmem:[#allocation3 + $0xa0] sm:$0xff]
        %v2720 = vld [vmem:[#allocation3 + $0xa8] sm:$0xff]
        %v2721 = vld [vmem:[#allocation3 + $0xb0] sm:$0xff]
        %v2722 = vld [vmem:[#allocation3 + $0xb8] sm:$0xff]
        %v2723 = vld [vmem:[#allocation3 + $0xc0] sm:$0xff]
        %v2724 = vld [vmem:[#allocation3 + $0xc8] sm:$0xff]
        %v2725 = vld [vmem:[#allocation3 + $0xd0] sm:$0xff]
        %v2726 = vld [vmem:[#allocation3 + $0xd8] sm:$0xff]
        %v2727 = vld [vmem:[#allocation3 + $0xe0] sm:$0xff]
        %v2728 = vld [vmem:[#allocation3 + $0xe8] sm:$0xff]
        %v2729 = vld [vmem:[#allocation3 + $0xf0] sm:$0xff]
        %v2730 = vld [vmem:[#allocation3 + $0xf8] sm:$0xff]
        %v2731 = vadd.f32 %v2699, %v2541
        %v2732 = vadd.f32 %v2700, %v2546
        %v2733 = vadd.f32 %v2701, %v2551
        %v2734 = vadd.f32 %v2702, %v2556
        %v2735 = vadd.f32 %v2703, %v2561
        %v2736 = vadd.f32 %v2704, %v2566
        %v2737 = vadd.f32 %v2705, %v2571
        %v2738 = vadd.f32 %v2706, %v2576
        %v2739 = vadd.f32 %v2707, %v2581
        %v2740 = vadd.f32 %v2708, %v2586
        %v2741 = vadd.f32 %v2709, %v2591
        %v2742 = vadd.f32 %v2710, %v2596
        %v2743 = vadd.f32 %v2711, %v2601
        %v2744 = vadd.f32 %v2712, %v2606
        %v2745 = vadd.f32 %v2713, %v2611
        %v2746 = vadd.f32 %v2714, %v2616
        %v2747 = vadd.f32 %v2715, %v2621
        %v2748 = vadd.f32 %v2716, %v2626
        %v2749 = vadd.f32 %v2717, %v2631
        %v2750 = vadd.f32 %v2718, %v2636
        %v2751 = vadd.f32 %v2719, %v2641
        %v2752 = vadd.f32 %v2720, %v2646
        %v2753 = vadd.f32 %v2721, %v2651
        %v2754 = vadd.f32 %v2722, %v2656
        %v2755 = vadd.f32 %v2723, %v2661
        %v2756 = vadd.f32 %v2724, %v2666
        %v2757 = vadd.f32 %v2725, %v2671
        %v2758 = vadd.f32 %v2726, %v2676
        %v2759 = vadd.f32 %v2727, %v2681
        %v2760 = vadd.f32 %v2728, %v2686
        %v2761 = vadd.f32 %v2729, %v2691
        %v2762 = vadd.f32 %v2730, %v2696
        %2763 = vst [vmem:[#allocation3] sm:$0xff] %v2731
        %2764 = vst [vmem:[#allocation3 + $0x8] sm:$0xff] %v2732
        %2765 = vst [vmem:[#allocation3 + $0x10] sm:$0xff] %v2733
        %2766 = vst [vmem:[#allocation3 + $0x18] sm:$0xff] %v2734
        %2767 = vst [vmem:[#allocation3 + $0x20] sm:$0xff] %v2735
        %2768 = vst [vmem:[#allocation3 + $0x28] sm:$0xff] %v2736
        %2769 = vst [vmem:[#allocation3 + $0x30] sm:$0xff] %v2737
        %2770 = vst [vmem:[#allocation3 + $0x38] sm:$0xff] %v2738
        %2771 = vst [vmem:[#allocation3 + $0x40] sm:$0xff] %v2739
        %2772 = vst [vmem:[#allocation3 + $0x48] sm:$0xff] %v2740
        %2773 = vst [vmem:[#allocation3 + $0x50] sm:$0xff] %v2741
        %2774 = vst [vmem:[#allocation3 + $0x58] sm:$0xff] %v2742
        %2775 = vst [vmem:[#allocation3 + $0x60] sm:$0xff] %v2743
        %2776 = vst [vmem:[#allocation3 + $0x68] sm:$0xff] %v2744
        %2777 = vst [vmem:[#allocation3 + $0x70] sm:$0xff] %v2745
        %2778 = vst [vmem:[#allocation3 + $0x78] sm:$0xff] %v2746
        %2779 = vst [vmem:[#allocation3 + $0x80] sm:$0xff] %v2747
        %2780 = vst [vmem:[#allocation3 + $0x88] sm:$0xff] %v2748
        %2781 = vst [vmem:[#allocation3 + $0x90] sm:$0xff] %v2749
        %2782 = vst [vmem:[#allocation3 + $0x98] sm:$0xff] %v2750
        %2783 = vst [vmem:[#allocation3 + $0xa0] sm:$0xff] %v2751
        %2784 = vst [vmem:[#allocation3 + $0xa8] sm:$0xff] %v2752
        %2785 = vst [vmem:[#allocation3 + $0xb0] sm:$0xff] %v2753
        %2786 = vst [vmem:[#allocation3 + $0xb8] sm:$0xff] %v2754
        %2787 = vst [vmem:[#allocation3 + $0xc0] sm:$0xff] %v2755
        %2788 = vst [vmem:[#allocation3 + $0xc8] sm:$0xff] %v2756
        %2789 = vst [vmem:[#allocation3 + $0xd0] sm:$0xff] %v2757
        %2790 = vst [vmem:[#allocation3 + $0xd8] sm:$0xff] %v2758
        %2791 = vst [vmem:[#allocation3 + $0xe0] sm:$0xff] %v2759
        %2792 = vst [vmem:[#allocation3 + $0xe8] sm:$0xff] %v2760
        %2793 = vst [vmem:[#allocation3 + $0xf0] sm:$0xff] %v2761
        %2794 = vst [vmem:[#allocation3 + $0xf8] sm:$0xff] %v2762
        %v2795 = vld [vmem:[%s2] sm:$0x1]
        %v2796 = vld [vmem:[%s3] sm:$0x1]
        %v2797 = vld [vmem:[#allocation3] sm:$0xff]
        %v2798 = vld [vmem:[#allocation3 + $0x8] sm:$0xff]
        %v2799 = vld [vmem:[#allocation3 + $0x10] sm:$0xff]
        %v2800 = vld [vmem:[#allocation3 + $0x18] sm:$0xff]
        %v2801 = vld [vmem:[#allocation3 + $0x20] sm:$0xff]
        %v2802 = vld [vmem:[#allocation3 + $0x28] sm:$0xff]
        %v2803 = vld [vmem:[#allocation3 + $0x30] sm:$0xff]
        %v2804 = vld [vmem:[#allocation3 + $0x38] sm:$0xff]
        %v2805 = vld [vmem:[#allocation3 + $0x40] sm:$0xff]
        %v2806 = vld [vmem:[#allocation3 + $0x48] sm:$0xff]
        %v2807 = vld [vmem:[#allocation3 + $0x50] sm:$0xff]
        %v2808 = vld [vmem:[#allocation3 + $0x58] sm:$0xff]
        %v2809 = vld [vmem:[#allocation3 + $0x60] sm:$0xff]
        %v2810 = vld [vmem:[#allocation3 + $0x68] sm:$0xff]
        %v2811 = vld [vmem:[#allocation3 + $0x70] sm:$0xff]
        %v2812 = vld [vmem:[#allocation3 + $0x78] sm:$0xff]
        %v2813 = vld [vmem:[#allocation3 + $0x80] sm:$0xff]
        %v2814 = vld [vmem:[#allocation3 + $0x88] sm:$0xff]
        %v2815 = vld [vmem:[#allocation3 + $0x90] sm:$0xff]
        %v2816 = vld [vmem:[#allocation3 + $0x98] sm:$0xff]
        %v2817 = vld [vmem:[#allocation3 + $0xa0] sm:$0xff]
        %v2818 = vld [vmem:[#allocation3 + $0xa8] sm:$0xff]
        %v2819 = vld [vmem:[#allocation3 + $0xb0] sm:$0xff]
        %v2820 = vld [vmem:[#allocation3 + $0xb8] sm:$0xff]
        %v2821 = vld [vmem:[#allocation3 + $0xc0] sm:$0xff]
        %v2822 = vld [vmem:[#allocation3 + $0xc8] sm:$0xff]
        %v2823 = vld [vmem:[#allocation3 + $0xd0] sm:$0xff]
        %v2824 = vld [vmem:[#allocation3 + $0xd8] sm:$0xff]
        %v2825 = vld [vmem:[#allocation3 + $0xe0] sm:$0xff]
        %v2826 = vld [vmem:[#allocation3 + $0xe8] sm:$0xff]
        %v2827 = vld [vmem:[#allocation3 + $0xf0] sm:$0xff]
        %v2828 = vld [vmem:[#allocation3 + $0xf8] sm:$0xff]
        %v2829 = vadd.f32 %v2797, %v2798
        %v2830 = vadd.f32 %v2829, %v2799
        %v2831 = vadd.f32 %v2830, %v2800
        %v2832 = vadd.f32 %v2831, %v2801
        %v2833 = vadd.f32 %v2832, %v2802
        %v2834 = vadd.f32 %v2833, %v2803
        %v2835 = vadd.f32 %v2834, %v2804
        %v2836 = vadd.f32 %v2835, %v2805
        %v2837 = vadd.f32 %v2836, %v2806
        %v2838 = vadd.f32 %v2837, %v2807
        %v2839 = vadd.f32 %v2838, %v2808
        %v2840 = vadd.f32 %v2839, %v2809
        %v2841 = vadd.f32 %v2840, %v2810
        %v2842 = vadd.f32 %v2841, %v2811
        %v2843 = vadd.f32 %v2842, %v2812
        %v2844 = vadd.f32 %v2843, %v2813
        %v2845 = vadd.f32 %v2844, %v2814
        %v2846 = vadd.f32 %v2845, %v2815
        %v2847 = vadd.f32 %v2846, %v2816
        %v2848 = vadd.f32 %v2847, %v2817
        %v2849 = vadd.f32 %v2848, %v2818
        %v2850 = vadd.f32 %v2849, %v2819
        %v2851 = vadd.f32 %v2850, %v2820
        %v2852 = vadd.f32 %v2851, %v2821
        %v2853 = vadd.f32 %v2852, %v2822
        %v2854 = vadd.f32 %v2853, %v2823
        %v2855 = vadd.f32 %v2854, %v2824
        %v2856 = vadd.f32 %v2855, %v2825
        %v2857 = vadd.f32 %v2856, %v2826
        %v2858 = vadd.f32 %v2857, %v2827
        %v2859 = vadd.f32 %v2858, %v2828
        %v2860 = vrot.slane %v2859, 4
        %v2861 = vadd.f32 %v2859, %v2860
        %v2862 = vrot.slane %v2861, 2
        %v2863 = vadd.f32 %v2861, %v2862
        %v2864 = vrot.slane %v2863, 1
        %v2865 = vadd.f32 %v2863, %v2864
        %v2866 = vadd.f32 %v2865, 0.0
        %v2867 = vmul.f32 %v2797, %v2797
        %v2868 = vmul.f32 %v2798, %v2798
        %v2869 = vmul.f32 %v2799, %v2799
        %v2870 = vmul.f32 %v2800, %v2800
        %v2871 = vmul.f32 %v2801, %v2801
        %v2872 = vmul.f32 %v2802, %v2802
        %v2873 = vmul.f32 %v2803, %v2803
        %v2874 = vmul.f32 %v2804, %v2804
        %v2875 = vmul.f32 %v2805, %v2805
        %v2876 = vmul.f32 %v2806, %v2806
        %v2877 = vmul.f32 %v2807, %v2807
        %v2878 = vmul.f32 %v2808, %v2808
        %v2879 = vmul.f32 %v2809, %v2809
        %v2880 = vmul.f32 %v2810, %v2810
        %v2881 = vmul.f32 %v2811, %v2811
        %v2882 = vmul.f32 %v2812, %v2812
        %v2883 = vmul.f32 %v2813, %v2813
        %v2884 = vmul.f32 %v2814, %v2814
        %v2885 = vmul.f32 %v2815, %v2815
        %v2886 = vmul.f32 %v2816, %v2816
        %v2887 = vmul.f32 %v2817, %v2817
        %v2888 = vmul.f32 %v2818, %v2818
        %v2889 = vmul.f32 %v2819, %v2819
        %v2890 = vmul.f32 %v2820, %v2820
        %v2891 = vmul.f32 %v2821, %v2821
        %v2892 = vmul.f32 %v2822, %v2822
        %v2893 = vmul.f32 %v2823, %v2823
        %v2894 = vmul.f32 %v2824, %v2824
        %v2895 = vmul.f32 %v2825, %v2825
        %v2896 = vmul.f32 %v2826, %v2826
        %v2897 = vmul.f32 %v2827, %v2827
        %v2898 = vmul.f32 %v2828, %v2828
        %v2899 = vadd.f32 %v2867, %v2868
        %v2900 = vadd.f32 %v2899, %v2869
        %v2901 = vadd.f32 %v2900, %v2870
        %v2902 = vadd.f32 %v2901, %v2871
        %v2903 = vadd.f32 %v2902, %v2872
        %v2904 = vadd.f32 %v2903, %v2873
        %v2905 = vadd.f32 %v2904, %v2874
        %v2906 = vadd.f32 %v2905, %v2875
        %v2907 = vadd.f32 %v2906, %v2876
        %v2908 = vadd.f32 %v2907, %v2877
        %v2909 = vadd.f32 %v2908, %v2878
        %v2910 = vadd.f32 %v2909, %v2879
        %v2911 = vadd.f32 %v2910, %v2880
        %v2912 = vadd.f32 %v2911, %v2881
        %v2913 = vadd.f32 %v2912, %v2882
        %v2914 = vadd.f32 %v2913, %v2883
        %v2915 = vadd.f32 %v2914, %v2884
        %v2916 = vadd.f32 %v2915, %v2885
        %v2917 = vadd.f32 %v2916, %v2886
        %v2918 = vadd.f32 %v2917, %v2887
        %v2919 = vadd.f32 %v2918, %v2888
        %v2920 = vadd.f32 %v2919, %v2889
        %v2921 = vadd.f32 %v2920, %v2890
        %v2922 = vadd.f32 %v2921, %v2891
        %v2923 = vadd.f32 %v2922, %v2892
        %v2924 = vadd.f32 %v2923, %v2893
        %v2925 = vadd.f32 %v2924, %v2894
        %v2926 = vadd.f32 %v2925, %v2895
        %v2927 = vadd.f32 %v2926, %v2896
        %v2928 = vadd.f32 %v2927, %v2897
        %v2929 = vadd.f32 %v2928, %v2898
        %v2930 = vrot.slane %v2929, 4
        %v2931 = vadd.f32 %v2929, %v2930
        %v2932 = vrot.slane %v2931, 2
        %v2933 = vadd.f32 %v2931, %v2932
        %v2934 = vrot.slane %v2933, 1
        %v2935 = vadd.f32 %v2933, %v2934
        %v2936 = vadd.f32 %v2935, 0.0
        %v2937 = vmul.f32 %v2866, 0.00390625
        %v2938 = vmul.f32 %v2936, 0.00390625
        %v2939 = vmul.f32 %v2937, %v2937
        %v2940 = vsub.f32 %v2938, %v2939
        %v2941 = vmax.f32 %v2940, 0.0
        %v2942 = vadd.f32 %v2941, 1e-05
        %v2943 = vrsqrt.pop %v2942
        %v2944 = vmul.f32 %v2943, %v2795
        %v2945 = vmul.f32 %v2937, %v2944
        %v2946 = vsub.f32 %v2796, %v2945
        %v2947 = vlaneseq
        %v2948 = vshrl.u32 %v2947, 7
        %v2949 = vsub.s32 0, %v2948
        %v2950 = vrot.slane %v2944, %v2949
        %v2951 = vmul.f32 %v2797, %v2950
        %v2952 = vmul.f32 %v2798, %v2950
        %v2953 = vmul.f32 %v2799, %v2950
        %v2954 = vmul.f32 %v2800, %v2950
        %v2955 = vmul.f32 %v2801, %v2950
        %v2956 = vmul.f32 %v2802, %v2950
        %v2957 = vmul.f32 %v2803, %v2950
        %v2958 = vmul.f32 %v2804, %v2950
        %v2959 = vmul.f32 %v2805, %v2950
        %v2960 = vmul.f32 %v2806, %v2950
        %v2961 = vmul.f32 %v2807, %v2950
        %v2962 = vmul.f32 %v2808, %v2950
        %v2963 = vmul.f32 %v2809, %v2950
        %v2964 = vmul.f32 %v2810, %v2950
        %v2965 = vmul.f32 %v2811, %v2950
        %v2966 = vmul.f32 %v2812, %v2950
        %v2967 = vmul.f32 %v2813, %v2950
        %v2968 = vmul.f32 %v2814, %v2950
        %v2969 = vmul.f32 %v2815, %v2950
        %v2970 = vmul.f32 %v2816, %v2950
        %v2971 = vmul.f32 %v2817, %v2950
        %v2972 = vmul.f32 %v2818, %v2950
        %v2973 = vmul.f32 %v2819, %v2950
        %v2974 = vmul.f32 %v2820, %v2950
        %v2975 = vmul.f32 %v2821, %v2950
        %v2976 = vmul.f32 %v2822, %v2950
        %v2977 = vmul.f32 %v2823, %v2950
        %v2978 = vmul.f32 %v2824, %v2950
        %v2979 = vmul.f32 %v2825, %v2950
        %v2980 = vmul.f32 %v2826, %v2950
        %v2981 = vmul.f32 %v2827, %v2950
        %v2982 = vmul.f32 %v2828, %v2950
        %v2984 = vlaneseq
        %v2985 = vshrl.u32 %v2984, 7
        %v2986 = vsub.s32 0, %v2985
        %v2987 = vrot.slane %v2946, %v2986
        %v2989 = vadd.f32 %v2951, %v2987
        %v2990 = vadd.f32 %v2952, %v2987
        %v2991 = vadd.f32 %v2953, %v2987
        %v2992 = vadd.f32 %v2954, %v2987
        %v2993 = vadd.f32 %v2955, %v2987
        %v2994 = vadd.f32 %v2956, %v2987
        %v2995 = vadd.f32 %v2957, %v2987
        %v2996 = vadd.f32 %v2958, %v2987
        %v2997 = vadd.f32 %v2959, %v2987
        %v2998 = vadd.f32 %v2960, %v2987
        %v2999 = vadd.f32 %v2961, %v2987
        %v3000 = vadd.f32 %v2962, %v2987
        %v3001 = vadd.f32 %v2963, %v2987
        %v3002 = vadd.f32 %v2964, %v2987
        %v3003 = vadd.f32 %v2965, %v2987
        %v3004 = vadd.f32 %v2966, %v2987
        %v3005 = vadd.f32 %v2967, %v2987
        %v3006 = vadd.f32 %v2968, %v2987
        %v3007 = vadd.f32 %v2969, %v2987
        %v3008 = vadd.f32 %v2970, %v2987
        %v3009 = vadd.f32 %v2971, %v2987
        %v3010 = vadd.f32 %v2972, %v2987
        %v3011 = vadd.f32 %v2973, %v2987
        %v3012 = vadd.f32 %v2974, %v2987
        %v3013 = vadd.f32 %v2975, %v2987
        %v3014 = vadd.f32 %v2976, %v2987
        %v3015 = vadd.f32 %v2977, %v2987
        %v3016 = vadd.f32 %v2978, %v2987
        %v3017 = vadd.f32 %v2979, %v2987
        %v3018 = vadd.f32 %v2980, %v2987
        %v3019 = vadd.f32 %v2981, %v2987
        %v3020 = vadd.f32 %v2982, %v2987
        %v3021 = vmax.f32 %v2989, 0.0
        %v3022 = vmax.f32 %v2990, 0.0
        %v3023 = vmax.f32 %v2991, 0.0
        %v3024 = vmax.f32 %v2992, 0.0
        %v3025 = vmax.f32 %v2993, 0.0
        %v3026 = vmax.f32 %v2994, 0.0
        %v3027 = vmax.f32 %v2995, 0.0
        %v3028 = vmax.f32 %v2996, 0.0
        %v3029 = vmax.f32 %v2997, 0.0
        %v3030 = vmax.f32 %v2998, 0.0
        %v3031 = vmax.f32 %v2999, 0.0
        %v3032 = vmax.f32 %v3000, 0.0
        %v3033 = vmax.f32 %v3001, 0.0
        %v3034 = vmax.f32 %v3002, 0.0
        %v3035 = vmax.f32 %v3003, 0.0
        %v3036 = vmax.f32 %v3004, 0.0
        %v3037 = vmax.f32 %v3005, 0.0
        %v3038 = vmax.f32 %v3006, 0.0
        %v3039 = vmax.f32 %v3007, 0.0
        %v3040 = vmax.f32 %v3008, 0.0
        %v3041 = vmax.f32 %v3009, 0.0
        %v3042 = vmax.f32 %v3010, 0.0
        %v3043 = vmax.f32 %v3011, 0.0
        %v3044 = vmax.f32 %v3012, 0.0
        %v3045 = vmax.f32 %v3013, 0.0
        %v3046 = vmax.f32 %v3014, 0.0
        %v3047 = vmax.f32 %v3015, 0.0
        %v3048 = vmax.f32 %v3016, 0.0
        %v3049 = vmax.f32 %v3017, 0.0
        %v3050 = vmax.f32 %v3018, 0.0
        %v3051 = vmax.f32 %v3019, 0.0
        %v3052 = vmax.f32 %v3020, 0.0
        %3053 = vst [vmem:[#allocation4] sm:$0xff] %v3021
        %3054 = vst [vmem:[#allocation4 + $0x8] sm:$0xff] %v3022
        %3055 = vst [vmem:[#allocation4 + $0x10] sm:$0xff] %v3023
        %3056 = vst [vmem:[#allocation4 + $0x18] sm:$0xff] %v3024
        %3057 = vst [vmem:[#allocation4 + $0x20] sm:$0xff] %v3025
        %3058 = vst [vmem:[#allocation4 + $0x28] sm:$0xff] %v3026
        %3059 = vst [vmem:[#allocation4 + $0x30] sm:$0xff] %v3027
        %3060 = vst [vmem:[#allocation4 + $0x38] sm:$0xff] %v3028
        %3061 = vst [vmem:[#allocation4 + $0x40] sm:$0xff] %v3029
        %3062 = vst [vmem:[#allocation4 + $0x48] sm:$0xff] %v3030
        %3063 = vst [vmem:[#allocation4 + $0x50] sm:$0xff] %v3031
        %3064 = vst [vmem:[#allocation4 + $0x58] sm:$0xff] %v3032
        %3065 = vst [vmem:[#allocation4 + $0x60] sm:$0xff] %v3033
        %3066 = vst [vmem:[#allocation4 + $0x68] sm:$0xff] %v3034
        %3067 = vst [vmem:[#allocation4 + $0x70] sm:$0xff] %v3035
        %3068 = vst [vmem:[#allocation4 + $0x78] sm:$0xff] %v3036
        %3069 = vst [vmem:[#allocation4 + $0x80] sm:$0xff] %v3037
        %3070 = vst [vmem:[#allocation4 + $0x88] sm:$0xff] %v3038
        %3071 = vst [vmem:[#allocation4 + $0x90] sm:$0xff] %v3039
        %3072 = vst [vmem:[#allocation4 + $0x98] sm:$0xff] %v3040
        %3073 = vst [vmem:[#allocation4 + $0xa0] sm:$0xff] %v3041
        %3074 = vst [vmem:[#allocation4 + $0xa8] sm:$0xff] %v3042
        %3075 = vst [vmem:[#allocation4 + $0xb0] sm:$0xff] %v3043
        %3076 = vst [vmem:[#allocation4 + $0xb8] sm:$0xff] %v3044
        %3077 = vst [vmem:[#allocation4 + $0xc0] sm:$0xff] %v3045
        %3078 = vst [vmem:[#allocation4 + $0xc8] sm:$0xff] %v3046
        %3079 = vst [vmem:[#allocation4 + $0xd0] sm:$0xff] %v3047
        %3080 = vst [vmem:[#allocation4 + $0xd8] sm:$0xff] %v3048
        %3081 = vst [vmem:[#allocation4 + $0xe0] sm:$0xff] %v3049
        %3082 = vst [vmem:[#allocation4 + $0xe8] sm:$0xff] %v3050
        %3083 = vst [vmem:[#allocation4 + $0xf0] sm:$0xff] %v3051
        %3084 = vst [vmem:[#allocation4 + $0xf8] sm:$0xff] %v3052
        %v3085 = vld [vmem:[#allocation4] sm:$0xff]
        %v3086 = vld [vmem:[#allocation4 + $0x8] sm:$0xff]
        %v3087 = vld [vmem:[#allocation4 + $0x10] sm:$0xff]
        %v3088 = vld [vmem:[#allocation4 + $0x18] sm:$0xff]
        %v3089 = vld [vmem:[#allocation4 + $0x20] sm:$0xff]
        %v3090 = vld [vmem:[#allocation4 + $0x28] sm:$0xff]
        %v3091 = vld [vmem:[#allocation4 + $0x30] sm:$0xff]
        %v3092 = vld [vmem:[#allocation4 + $0x38] sm:$0xff]
        %v3093 = vld [vmem:[#allocation4 + $0x40] sm:$0xff]
        %v3094 = vld [vmem:[#allocation4 + $0x48] sm:$0xff]
        %v3095 = vld [vmem:[#allocation4 + $0x50] sm:$0xff]
        %v3096 = vld [vmem:[#allocation4 + $0x58] sm:$0xff]
        %v3097 = vld [vmem:[#allocation4 + $0x60] sm:$0xff]
        %v3098 = vld [vmem:[#allocation4 + $0x68] sm:$0xff]
        %v3099 = vld [vmem:[#allocation4 + $0x70] sm:$0xff]
        %v3100 = vld [vmem:[#allocation4 + $0x78] sm:$0xff]
        %v3101 = vld [vmem:[#allocation4 + $0x80] sm:$0xff]
        %v3102 = vld [vmem:[#allocation4 + $0x88] sm:$0xff]
        %v3103 = vld [vmem:[#allocation4 + $0x90] sm:$0xff]
        %v3104 = vld [vmem:[#allocation4 + $0x98] sm:$0xff]
        %v3105 = vld [vmem:[#allocation4 + $0xa0] sm:$0xff]
        %v3106 = vld [vmem:[#allocation4 + $0xa8] sm:$0xff]
        %v3107 = vld [vmem:[#allocation4 + $0xb0] sm:$0xff]
        %v3108 = vld [vmem:[#allocation4 + $0xb8] sm:$0xff]
        %v3109 = vld [vmem:[#allocation4 + $0xc0] sm:$0xff]
        %v3110 = vld [vmem:[#allocation4 + $0xc8] sm:$0xff]
        %v3111 = vld [vmem:[#allocation4 + $0xd0] sm:$0xff]
        %v3112 = vld [vmem:[#allocation4 + $0xd8] sm:$0xff]
        %v3113 = vld [vmem:[#allocation4 + $0xe0] sm:$0xff]
        %v3114 = vld [vmem:[#allocation4 + $0xe8] sm:$0xff]
        %v3115 = vld [vmem:[#allocation4 + $0xf0] sm:$0xff]
        %v3116 = vld [vmem:[#allocation4 + $0xf8] sm:$0xff]
        %3117 = vst [vmem:[%s422 + $0x8] sm:$0xff] %v3085
        %3118 = vst [vmem:[%s422 + $0x20] sm:$0xff] %v3086
        %3119 = vst [vmem:[%s422 + $0x38] sm:$0xff] %v3087
        %3120 = vst [vmem:[%s422 + $0x50] sm:$0xff] %v3088
        %3121 = vst [vmem:[%s422 + $0x68] sm:$0xff] %v3089
        %3122 = vst [vmem:[%s422 + $0x80] sm:$0xff] %v3090
        %3123 = vst [vmem:[%s422 + $0x98] sm:$0xff] %v3091
        %3124 = vst [vmem:[%s422 + $0xb0] sm:$0xff] %v3092
        %3125 = vst [vmem:[%s422 + $0xc8] sm:$0xff] %v3093
        %3126 = vst [vmem:[%s422 + $0xe0] sm:$0xff] %v3094
        %3127 = vst [vmem:[%s422 + $0xf8] sm:$0xff] %v3095
        %3128 = vst [vmem:[%s422 + $0x110] sm:$0xff] %v3096
        %3129 = vst [vmem:[%s422 + $0x128] sm:$0xff] %v3097
        %3130 = vst [vmem:[%s422 + $0x140] sm:$0xff] %v3098
        %3131 = vst [vmem:[%s422 + $0x158] sm:$0xff] %v3099
        %3132 = vst [vmem:[%s422 + $0x170] sm:$0xff] %v3100
        %3133 = vst [vmem:[%s422 + $0x188] sm:$0xff] %v3101
        %3134 = vst [vmem:[%s422 + $0x1a0] sm:$0xff] %v3102
        %3135 = vst [vmem:[%s422 + $0x1b8] sm:$0xff] %v3103
        %3136 = vst [vmem:[%s422 + $0x1d0] sm:$0xff] %v3104
        %3137 = vst [vmem:[%s422 + $0x1e8] sm:$0xff] %v3105
        %3138 = vst [vmem:[%s422 + $0x200] sm:$0xff] %v3106
        %3139 = vst [vmem:[%s422 + $0x218] sm:$0xff] %v3107
        %3140 = vst [vmem:[%s422 + $0x230] sm:$0xff] %v3108
        %3141 = vst [vmem:[%s422 + $0x248] sm:$0xff] %v3109
        %3142 = vst [vmem:[%s422 + $0x260] sm:$0xff] %v3110
        %3143 = vst [vmem:[%s422 + $0x278] sm:$0xff] %v3111
        %3144 = vst [vmem:[%s422 + $0x290] sm:$0xff] %v3112
        %3145 = vst [vmem:[%s422 + $0x2a8] sm:$0xff] %v3113
        %3146 = vst [vmem:[%s422 + $0x2c0] sm:$0xff] %v3114
        %3147 = vst [vmem:[%s422 + $0x2d8] sm:$0xff] %v3115
        %3148 = vst [vmem:[%s422 + $0x2f0] sm:$0xff] %v3116
        %v3149 = vld [vmem:[#allocation4] sm:$0xff]
        %v3150 = vld [vmem:[#allocation4 + $0x8] sm:$0x7f]
        %v3151 = vld [vmem:[#allocation4 + $0x10] sm:$0xff]
        %v3152 = vld [vmem:[#allocation4 + $0x18] sm:$0x7f]
        %v3153 = vld [vmem:[#allocation4 + $0x20] sm:$0xff]
        %v3154 = vld [vmem:[#allocation4 + $0x28] sm:$0x7f]
        %v3155 = vld [vmem:[#allocation4 + $0x30] sm:$0xff]
        %v3156 = vld [vmem:[#allocation4 + $0x38] sm:$0x7f]
        %v3157 = vld [vmem:[#allocation4 + $0x40] sm:$0xff]
        %v3158 = vld [vmem:[#allocation4 + $0x48] sm:$0x7f]
        %v3159 = vld [vmem:[#allocation4 + $0x50] sm:$0xff]
        %v3160 = vld [vmem:[#allocation4 + $0x58] sm:$0x7f]
        %v3161 = vld [vmem:[#allocation4 + $0x60] sm:$0xff]
        %v3162 = vld [vmem:[#allocation4 + $0x68] sm:$0x7f]
        %v3163 = vld [vmem:[#allocation4 + $0x70] sm:$0xff]
        %v3164 = vld [vmem:[#allocation4 + $0x78] sm:$0x7f]
        %v3165 = vld [vmem:[#allocation4 + $0x80] sm:$0xff]
        %v3166 = vld [vmem:[#allocation4 + $0x88] sm:$0x7f]
        %v3167 = vld [vmem:[#allocation4 + $0x90] sm:$0xff]
        %v3168 = vld [vmem:[#allocation4 + $0x98] sm:$0x7f]
        %v3169 = vld [vmem:[#allocation4 + $0xa0] sm:$0xff]
        %v3170 = vld [vmem:[#allocation4 + $0xa8] sm:$0x7f]
        %v3171 = vld [vmem:[#allocation4 + $0xb0] sm:$0xff]
        %v3172 = vld [vmem:[#allocation4 + $0xb8] sm:$0x7f]
        %v3173 = vld [vmem:[#allocation4 + $0xc0] sm:$0xff]
        %v3174 = vld [vmem:[#allocation4 + $0xc8] sm:$0x7f]
        %v3175 = vld [vmem:[#allocation4 + $0xd0] sm:$0xff]
        %v3176 = vld [vmem:[#allocation4 + $0xd8] sm:$0x7f]
        %v3177 = vld [vmem:[#allocation4 + $0xe0] sm:$0xff]
        %v3178 = vld [vmem:[#allocation4 + $0xe8] sm:$0x7f]
        %v3179 = vld [vmem:[#allocation4 + $0xf0] sm:$0xff]
        %v3180 = vld [vmem:[#allocation4 + $0xf8] sm:$0x7f]
        %v3213 = vrot.slane %v3149, 7
        %v3214 = vrot.slane %v3150, 7
        %v3215 = vsel %vm519, %v3213, %v3214
        %v3216 = vrot.slane %v3151, 7
        %v3217 = vrot.slane %v3152, 7
        %v3218 = vsel %vm519, %v3216, %v3217
        %v3219 = vrot.slane %v3153, 7
        %v3220 = vrot.slane %v3154, 7
        %v3221 = vsel %vm519, %v3219, %v3220
        %v3222 = vrot.slane %v3155, 7
        %v3223 = vrot.slane %v3156, 7
        %v3224 = vsel %vm519, %v3222, %v3223
        %v3225 = vrot.slane %v3157, 7
        %v3226 = vrot.slane %v3158, 7
        %v3227 = vsel %vm519, %v3225, %v3226
        %v3228 = vrot.slane %v3159, 7
        %v3229 = vrot.slane %v3160, 7
        %v3230 = vsel %vm519, %v3228, %v3229
        %v3231 = vrot.slane %v3161, 7
        %v3232 = vrot.slane %v3162, 7
        %v3233 = vsel %vm519, %v3231, %v3232
        %v3234 = vrot.slane %v3163, 7
        %v3235 = vrot.slane %v3164, 7
        %v3236 = vsel %vm519, %v3234, %v3235
        %v3237 = vrot.slane %v3165, 7
        %v3238 = vrot.slane %v3166, 7
        %v3239 = vsel %vm519, %v3237, %v3238
        %v3240 = vrot.slane %v3167, 7
        %v3241 = vrot.slane %v3168, 7
        %v3242 = vsel %vm519, %v3240, %v3241
        %v3243 = vrot.slane %v3169, 7
        %v3244 = vrot.slane %v3170, 7
        %v3245 = vsel %vm519, %v3243, %v3244
        %v3246 = vrot.slane %v3171, 7
        %v3247 = vrot.slane %v3172, 7
        %v3248 = vsel %vm519, %v3246, %v3247
        %v3249 = vrot.slane %v3173, 7
        %v3250 = vrot.slane %v3174, 7
        %v3251 = vsel %vm519, %v3249, %v3250
        %v3252 = vrot.slane %v3175, 7
        %v3253 = vrot.slane %v3176, 7
        %v3254 = vsel %vm519, %v3252, %v3253
        %v3255 = vrot.slane %v3177, 7
        %v3256 = vrot.slane %v3178, 7
        %v3257 = vsel %vm519, %v3255, %v3256
        %v3258 = vrot.slane %v3179, 7
        %v3259 = vrot.slane %v3180, 7
        %v3260 = vsel %vm519, %v3258, %v3259
        %3293 = vst [vmem:[%s422] sm:$0xfe] %v3213
        %3294 = vst [vmem:[%s422 + $0x18] sm:$0xff] %v3215
        %3295 = vst [vmem:[%s422 + $0x30] sm:$0xfe] %v3216
        %3296 = vst [vmem:[%s422 + $0x48] sm:$0xff] %v3218
        %3297 = vst [vmem:[%s422 + $0x60] sm:$0xfe] %v3219
        %3298 = vst [vmem:[%s422 + $0x78] sm:$0xff] %v3221
        %3299 = vst [vmem:[%s422 + $0x90] sm:$0xfe] %v3222
        %3300 = vst [vmem:[%s422 + $0xa8] sm:$0xff] %v3224
        %3301 = vst [vmem:[%s422 + $0xc0] sm:$0xfe] %v3225
        %3302 = vst [vmem:[%s422 + $0xd8] sm:$0xff] %v3227
        %3303 = vst [vmem:[%s422 + $0xf0] sm:$0xfe] %v3228
        %3304 = vst [vmem:[%s422 + $0x108] sm:$0xff] %v3230
        %3305 = vst [vmem:[%s422 + $0x120] sm:$0xfe] %v3231
        %3306 = vst [vmem:[%s422 + $0x138] sm:$0xff] %v3233
        %3307 = vst [vmem:[%s422 + $0x150] sm:$0xfe] %v3234
        %3308 = vst [vmem:[%s422 + $0x168] sm:$0xff] %v3236
        %3309 = vst [vmem:[%s422 + $0x180] sm:$0xfe] %v3237
        %3310 = vst [vmem:[%s422 + $0x198] sm:$0xff] %v3239
        %3311 = vst [vmem:[%s422 + $0x1b0] sm:$0xfe] %v3240
        %3312 = vst [vmem:[%s422 + $0x1c8] sm:$0xff] %v3242
        %3313 = vst [vmem:[%s422 + $0x1e0] sm:$0xfe] %v3243
        %3314 = vst [vmem:[%s422 + $0x1f8] sm:$0xff] %v3245
        %3315 = vst [vmem:[%s422 + $0x210] sm:$0xfe] %v3246
        %3316 = vst [vmem:[%s422 + $0x228] sm:$0xff] %v3248
        %3317 = vst [vmem:[%s422 + $0x240] sm:$0xfe] %v3249
        %3318 = vst [vmem:[%s422 + $0x258] sm:$0xff] %v3251
        %3319 = vst [vmem:[%s422 + $0x270] sm:$0xfe] %v3252
        %3320 = vst [vmem:[%s422 + $0x288] sm:$0xff] %v3254
        %3321 = vst [vmem:[%s422 + $0x2a0] sm:$0xfe] %v3255
        %3322 = vst [vmem:[%s422 + $0x2b8] sm:$0xff] %v3257
        %3323 = vst [vmem:[%s422 + $0x2d0] sm:$0xfe] %v3258
        %3324 = vst [vmem:[%s422 + $0x2e8] sm:$0xff] %v3260
        %v3325 = vld [vmem:[#allocation4 + $0x1] sm:$0x1]
        %v3326 = vld [vmem:[#allocation4 + $0x11] sm:$0x1]
        %v3327 = vld [vmem:[#allocation4 + $0x21] sm:$0x1]
        %v3328 = vld [vmem:[#allocation4 + $0x31] sm:$0x1]
        %v3329 = vld [vmem:[#allocation4 + $0x41] sm:$0x1]
        %v3330 = vld [vmem:[#allocation4 + $0x51] sm:$0x1]
        %v3331 = vld [vmem:[#allocation4 + $0x61] sm:$0x1]
        %v3332 = vld [vmem:[#allocation4 + $0x71] sm:$0x1]
        %v3333 = vld [vmem:[#allocation4 + $0x81] sm:$0x1]
        %v3334 = vld [vmem:[#allocation4 + $0x91] sm:$0x1]
        %v3335 = vld [vmem:[#allocation4 + $0xa1] sm:$0x1]
        %v3336 = vld [vmem:[#allocation4 + $0xb1] sm:$0x1]
        %v3337 = vld [vmem:[#allocation4 + $0xc1] sm:$0x1]
        %v3338 = vld [vmem:[#allocation4 + $0xd1] sm:$0x1]
        %v3339 = vld [vmem:[#allocation4 + $0xe1] sm:$0x1]
        %v3340 = vld [vmem:[#allocation4 + $0xf1] sm:$0x1]
        %3341 = vst [vmem:[%s422] sm:$0x1] %v3325
        %3342 = vst [vmem:[%s422 + $0x30] sm:$0x1] %v3326
        %3343 = vst [vmem:[%s422 + $0x60] sm:$0x1] %v3327
        %3344 = vst [vmem:[%s422 + $0x90] sm:$0x1] %v3328
        %3345 = vst [vmem:[%s422 + $0xc0] sm:$0x1] %v3329
        %3346 = vst [vmem:[%s422 + $0xf0] sm:$0x1] %v3330
        %3347 = vst [vmem:[%s422 + $0x120] sm:$0x1] %v3331
        %3348 = vst [vmem:[%s422 + $0x150] sm:$0x1] %v3332
        %3349 = vst [vmem:[%s422 + $0x180] sm:$0x1] %v3333
        %3350 = vst [vmem:[%s422 + $0x1b0] sm:$0x1] %v3334
        %3351 = vst [vmem:[%s422 + $0x1e0] sm:$0x1] %v3335
        %3352 = vst [vmem:[%s422 + $0x210] sm:$0x1] %v3336
        %3353 = vst [vmem:[%s422 + $0x240] sm:$0x1] %v3337
        %3354 = vst [vmem:[%s422 + $0x270] sm:$0x1] %v3338
        %3355 = vst [vmem:[%s422 + $0x2a0] sm:$0x1] %v3339
        %3356 = vst [vmem:[%s422 + $0x2d0] sm:$0x1] %v3340
        %v3357 = vld [vmem:[#allocation4 + $0x1] sm:$0xff]
        %v3358 = vld [vmem:[#allocation4 + $0x9] sm:$0x7f]
        %v3359 = vld [vmem:[#allocation4 + $0x11] sm:$0xff]
        %v3360 = vld [vmem:[#allocation4 + $0x19] sm:$0x7f]
        %v3361 = vld [vmem:[#allocation4 + $0x21] sm:$0xff]
        %v3362 = vld [vmem:[#allocation4 + $0x29] sm:$0x7f]
        %v3363 = vld [vmem:[#allocation4 + $0x31] sm:$0xff]
        %v3364 = vld [vmem:[#allocation4 + $0x39] sm:$0x7f]
        %v3365 = vld [vmem:[#allocation4 + $0x41] sm:$0xff]
        %v3366 = vld [vmem:[#allocation4 + $0x49] sm:$0x7f]
        %v3367 = vld [vmem:[#allocation4 + $0x51] sm:$0xff]
        %v3368 = vld [vmem:[#allocation4 + $0x59] sm:$0x7f]
        %v3369 = vld [vmem:[#allocation4 + $0x61] sm:$0xff]
        %v3370 = vld [vmem:[#allocation4 + $0x69] sm:$0x7f]
        %v3371 = vld [vmem:[#allocation4 + $0x71] sm:$0xff]
        %v3372 = vld [vmem:[#allocation4 + $0x79] sm:$0x7f]
        %v3373 = vld [vmem:[#allocation4 + $0x81] sm:$0xff]
        %v3374 = vld [vmem:[#allocation4 + $0x89] sm:$0x7f]
        %v3375 = vld [vmem:[#allocation4 + $0x91] sm:$0xff]
        %v3376 = vld [vmem:[#allocation4 + $0x99] sm:$0x7f]
        %v3377 = vld [vmem:[#allocation4 + $0xa1] sm:$0xff]
        %v3378 = vld [vmem:[#allocation4 + $0xa9] sm:$0x7f]
        %v3379 = vld [vmem:[#allocation4 + $0xb1] sm:$0xff]
        %v3380 = vld [vmem:[#allocation4 + $0xb9] sm:$0x7f]
        %v3381 = vld [vmem:[#allocation4 + $0xc1] sm:$0xff]
        %v3382 = vld [vmem:[#allocation4 + $0xc9] sm:$0x7f]
        %v3383 = vld [vmem:[#allocation4 + $0xd1] sm:$0xff]
        %v3384 = vld [vmem:[#allocation4 + $0xd9] sm:$0x7f]
        %v3385 = vld [vmem:[#allocation4 + $0xe1] sm:$0xff]
        %v3386 = vld [vmem:[#allocation4 + $0xe9] sm:$0x7f]
        %v3387 = vld [vmem:[#allocation4 + $0xf1] sm:$0xff]
        %v3388 = vld [vmem:[#allocation4 + $0xf9] sm:$0x7f]
        %3389 = vst [vmem:[%s422 + $0x10] sm:$0xff] %v3357
        %3390 = vst [vmem:[%s422 + $0x28] sm:$0x7f] %v3358
        %3391 = vst [vmem:[%s422 + $0x40] sm:$0xff] %v3359
        %3392 = vst [vmem:[%s422 + $0x58] sm:$0x7f] %v3360
        %3393 = vst [vmem:[%s422 + $0x70] sm:$0xff] %v3361
        %3394 = vst [vmem:[%s422 + $0x88] sm:$0x7f] %v3362
        %3395 = vst [vmem:[%s422 + $0xa0] sm:$0xff] %v3363
        %3396 = vst [vmem:[%s422 + $0xb8] sm:$0x7f] %v3364
        %3397 = vst [vmem:[%s422 + $0xd0] sm:$0xff] %v3365
        %3398 = vst [vmem:[%s422 + $0xe8] sm:$0x7f] %v3366
        %3399 = vst [vmem:[%s422 + $0x100] sm:$0xff] %v3367
        %3400 = vst [vmem:[%s422 + $0x118] sm:$0x7f] %v3368
        %3401 = vst [vmem:[%s422 + $0x130] sm:$0xff] %v3369
        %3402 = vst [vmem:[%s422 + $0x148] sm:$0x7f] %v3370
        %3403 = vst [vmem:[%s422 + $0x160] sm:$0xff] %v3371
        %3404 = vst [vmem:[%s422 + $0x178] sm:$0x7f] %v3372
        %3405 = vst [vmem:[%s422 + $0x190] sm:$0xff] %v3373
        %3406 = vst [vmem:[%s422 + $0x1a8] sm:$0x7f] %v3374
        %3407 = vst [vmem:[%s422 + $0x1c0] sm:$0xff] %v3375
        %3408 = vst [vmem:[%s422 + $0x1d8] sm:$0x7f] %v3376
        %3409 = vst [vmem:[%s422 + $0x1f0] sm:$0xff] %v3377
        %3410 = vst [vmem:[%s422 + $0x208] sm:$0x7f] %v3378
        %3411 = vst [vmem:[%s422 + $0x220] sm:$0xff] %v3379
        %3412 = vst [vmem:[%s422 + $0x238] sm:$0x7f] %v3380
        %3413 = vst [vmem:[%s422 + $0x250] sm:$0xff] %v3381
        %3414 = vst [vmem:[%s422 + $0x268] sm:$0x7f] %v3382
        %3415 = vst [vmem:[%s422 + $0x280] sm:$0xff] %v3383
        %3416 = vst [vmem:[%s422 + $0x298] sm:$0x7f] %v3384
        %3417 = vst [vmem:[%s422 + $0x2b0] sm:$0xff] %v3385
        %3418 = vst [vmem:[%s422 + $0x2c8] sm:$0x7f] %v3386
        %3419 = vst [vmem:[%s422 + $0x2e0] sm:$0xff] %v3387
        %3420 = vst [vmem:[%s422 + $0x2f8] sm:$0x7f] %v3388
        %v3421 = vld [vmem:[#allocation4 + $0xe] sm:$0x1]
        %v3422 = vld [vmem:[#allocation4 + $0x1e] sm:$0x1]
        %v3423 = vld [vmem:[#allocation4 + $0x2e] sm:$0x1]
        %v3424 = vld [vmem:[#allocation4 + $0x3e] sm:$0x1]
        %v3425 = vld [vmem:[#allocation4 + $0x4e] sm:$0x1]
        %v3426 = vld [vmem:[#allocation4 + $0x5e] sm:$0x1]
        %v3427 = vld [vmem:[#allocation4 + $0x6e] sm:$0x1]
        %v3428 = vld [vmem:[#allocation4 + $0x7e] sm:$0x1]
        %v3429 = vld [vmem:[#allocation4 + $0x8e] sm:$0x1]
        %v3430 = vld [vmem:[#allocation4 + $0x9e] sm:$0x1]
        %v3431 = vld [vmem:[#allocation4 + $0xae] sm:$0x1]
        %v3432 = vld [vmem:[#allocation4 + $0xbe] sm:$0x1]
        %v3433 = vld [vmem:[#allocation4 + $0xce] sm:$0x1]
        %v3434 = vld [vmem:[#allocation4 + $0xde] sm:$0x1]
        %v3435 = vld [vmem:[#allocation4 + $0xee] sm:$0x1]
        %v3436 = vld [vmem:[#allocation4 + $0xfe] sm:$0x1]
        %3437 = vst [vmem:[%s422 + $0x2f] sm:$0x1] %v3421
        %3438 = vst [vmem:[%s422 + $0x5f] sm:$0x1] %v3422
        %3439 = vst [vmem:[%s422 + $0x8f] sm:$0x1] %v3423
        %3440 = vst [vmem:[%s422 + $0xbf] sm:$0x1] %v3424
        %3441 = vst [vmem:[%s422 + $0xef] sm:$0x1] %v3425
        %3442 = vst [vmem:[%s422 + $0x11f] sm:$0x1] %v3426
        %3443 = vst [vmem:[%s422 + $0x14f] sm:$0x1] %v3427
        %3444 = vst [vmem:[%s422 + $0x17f] sm:$0x1] %v3428
        %3445 = vst [vmem:[%s422 + $0x1af] sm:$0x1] %v3429
        %3446 = vst [vmem:[%s422 + $0x1df] sm:$0x1] %v3430
        %3447 = vst [vmem:[%s422 + $0x20f] sm:$0x1] %v3431
        %3448 = vst [vmem:[%s422 + $0x23f] sm:$0x1] %v3432
        %3449 = vst [vmem:[%s422 + $0x26f] sm:$0x1] %v3433
        %3450 = vst [vmem:[%s422 + $0x29f] sm:$0x1] %v3434
        %3451 = vst [vmem:[%s422 + $0x2cf] sm:$0x1] %v3435
        %3452 = vst [vmem:[%s422 + $0x2ff] sm:$0x1] %v3436
        %v3453 = vld [vmem:[%s760] sm:$0xff]
        %v3454 = vld [vmem:[%s760 + $0x8] sm:$0xff]
        %v3455 = vld [vmem:[%s760 + $0x10] sm:$0xff]
        %v3456 = vld [vmem:[%s760 + $0x18] sm:$0xff]
        %v3457 = vld [vmem:[%s760 + $0x20] sm:$0xff]
        %v3458 = vld [vmem:[%s760 + $0x28] sm:$0xff]
        %3459 = vst [vmem:[#allocation2] sm:$0xff] %v3453
        %3460 = vst [vmem:[#allocation2 + $0x8] sm:$0xff] %v3454
        %3461 = vst [vmem:[#allocation2 + $0x10] sm:$0xff] %v3455
        %3462 = vst [vmem:[#allocation2 + $0x18] sm:$0xff] %v3456
        %3463 = vst [vmem:[#allocation2 + $0x20] sm:$0xff] %v3457
        %3464 = vst [vmem:[#allocation2 + $0x28] sm:$0xff] %v3458
        %v3465 = vld [vmem:[%s773] sm:$0xff]
        %v3466 = vld [vmem:[%s773 + $0x8] sm:$0xff]
        %v3467 = vld [vmem:[%s773 + $0x10] sm:$0xff]
        %v3468 = vld [vmem:[%s773 + $0x18] sm:$0xff]
        %v3469 = vld [vmem:[%s773 + $0x20] sm:$0xff]
        %v3470 = vld [vmem:[%s773 + $0x28] sm:$0xff]
        %3471 = vst [vmem:[%s780] sm:$0xff] %v3465
        %3472 = vst [vmem:[%s780 + $0x8] sm:$0xff] %v3466
        %3473 = vst [vmem:[%s780 + $0x10] sm:$0xff] %v3467
        %3474 = vst [vmem:[%s780 + $0x18] sm:$0xff] %v3468
        %3475 = vst [vmem:[%s780 + $0x20] sm:$0xff] %v3469
        %3476 = vst [vmem:[%s780 + $0x28] sm:$0xff] %v3470
        %v3477 = vld [vmem:[#allocation2] sm:$0xff]
        %v3478 = vld [vmem:[#allocation2 + $0x8] sm:$0xff]
        %v3479 = vld [vmem:[#allocation2 + $0x10] sm:$0xff]
        %v3480 = vld [vmem:[#allocation2 + $0x18] sm:$0xff]
        %v3481 = vld [vmem:[#allocation2 + $0x20] sm:$0xff]
        %v3482 = vld [vmem:[#allocation2 + $0x28] sm:$0xff]
        %v3483 = vld [vmem:[#allocation2 + $0x30] sm:$0xff]
        %v3484 = vld [vmem:[#allocation2 + $0x38] sm:$0xff]
        %v3485 = vld [vmem:[#allocation2 + $0x40] sm:$0xff]
        %v3486 = vld [vmem:[#allocation2 + $0x48] sm:$0xff]
        %v3487 = vld [vmem:[#allocation2 + $0x50] sm:$0xff]
        %v3488 = vld [vmem:[#allocation2 + $0x58] sm:$0xff]
        %v3489 = vld [vmem:[#allocation2 + $0x60] sm:$0xff]
        %v3490 = vld [vmem:[#allocation2 + $0x68] sm:$0xff]
        %v3491 = vld [vmem:[#allocation2 + $0x70] sm:$0xff]
        %v3492 = vld [vmem:[#allocation2 + $0x78] sm:$0xff]
        %v3493 = vld [vmem:[#allocation2 + $0x80] sm:$0xff]
        %v3494 = vld [vmem:[#allocation2 + $0x88] sm:$0xff]
        %v3495 = vld [vmem:[#allocation2 + $0x90] sm:$0xff]
        %v3496 = vld [vmem:[#allocation2 + $0x98] sm:$0xff]
        %v3497 = vld [vmem:[#allocation2 + $0xa0] sm:$0xff]
        %v3498 = vld [vmem:[#allocation2 + $0xa8] sm:$0xff]
        %v3499 = vld [vmem:[#allocation2 + $0xb0] sm:$0xff]
        %v3500 = vld [vmem:[#allocation2 + $0xb8] sm:$0xff]
        %v3501 = vld [vmem:[#allocation2 + $0xc0] sm:$0xff]
        %v3502 = vld [vmem:[#allocation2 + $0xc8] sm:$0xff]
        %v3503 = vld [vmem:[#allocation2 + $0xd0] sm:$0xff]
        %v3504 = vld [vmem:[#allocation2 + $0xd8] sm:$0xff]
        %v3505 = vld [vmem:[#allocation2 + $0xe0] sm:$0xff]
        %v3506 = vld [vmem:[#allocation2 + $0xe8] sm:$0xff]
        %v3507 = vld [vmem:[#allocation2 + $0xf0] sm:$0xff]
        %v3508 = vld [vmem:[#allocation2 + $0xf8] sm:$0xff]
        %v3509 = vld [vmem:[#allocation2 + $0x100] sm:$0xff]
        %v3510 = vld [vmem:[#allocation2 + $0x108] sm:$0xff]
        %v3511 = vld [vmem:[#allocation2 + $0x110] sm:$0xff]
        %v3512 = vld [vmem:[#allocation2 + $0x118] sm:$0xff]
        %v3513 = vld [vmem:[#allocation2 + $0x120] sm:$0xff]
        %v3514 = vld [vmem:[#allocation2 + $0x128] sm:$0xff]
        %v3515 = vld [vmem:[#allocation2 + $0x130] sm:$0xff]
        %v3516 = vld [vmem:[#allocation2 + $0x138] sm:$0xff]
        %v3517 = vld [vmem:[#allocation2 + $0x140] sm:$0xff]
        %v3518 = vld [vmem:[#allocation2 + $0x148] sm:$0xff]
        %v3519 = vld [vmem:[#allocation2 + $0x150] sm:$0xff]
        %v3520 = vld [vmem:[#allocation2 + $0x158] sm:$0xff]
        %v3521 = vld [vmem:[#allocation2 + $0x160] sm:$0xff]
        %v3522 = vld [vmem:[#allocation2 + $0x168] sm:$0xff]
        %v3523 = vld [vmem:[#allocation2 + $0x170] sm:$0xff]
        %v3524 = vld [vmem:[#allocation2 + $0x178] sm:$0xff]
        %v3525 = vld [vmem:[#allocation2 + $0x180] sm:$0xff]
        %v3526 = vld [vmem:[#allocation2 + $0x188] sm:$0xff]
        %v3527 = vld [vmem:[#allocation2 + $0x190] sm:$0xff]
        %v3528 = vld [vmem:[#allocation2 + $0x198] sm:$0xff]
        %v3529 = vld [vmem:[#allocation2 + $0x1a0] sm:$0xff]
        %v3530 = vld [vmem:[#allocation2 + $0x1a8] sm:$0xff]
        %v3531 = vld [vmem:[#allocation2 + $0x1b0] sm:$0xff]
        %v3532 = vld [vmem:[#allocation2 + $0x1b8] sm:$0xff]
        %v3533 = vld [vmem:[#allocation2 + $0x1c0] sm:$0xff]
        %v3534 = vld [vmem:[#allocation2 + $0x1c8] sm:$0xff]
        %v3535 = vld [vmem:[#allocation2 + $0x1d0] sm:$0xff]
        %v3536 = vld [vmem:[#allocation2 + $0x1d8] sm:$0xff]
        %v3537 = vld [vmem:[#allocation2 + $0x1e0] sm:$0xff]
        %v3538 = vld [vmem:[#allocation2 + $0x1e8] sm:$0xff]
        %v3539 = vld [vmem:[#allocation2 + $0x1f0] sm:$0xff]
        %v3540 = vld [vmem:[#allocation2 + $0x1f8] sm:$0xff]
        %v3541 = vld [vmem:[#allocation2 + $0x200] sm:$0xff]
        %v3542 = vld [vmem:[#allocation2 + $0x208] sm:$0xff]
        %v3543 = vld [vmem:[#allocation2 + $0x210] sm:$0xff]
        %v3544 = vld [vmem:[#allocation2 + $0x218] sm:$0xff]
        %v3545 = vld [vmem:[#allocation2 + $0x220] sm:$0xff]
        %v3546 = vld [vmem:[#allocation2 + $0x228] sm:$0xff]
        %v3547 = vld [vmem:[#allocation2 + $0x230] sm:$0xff]
        %v3548 = vld [vmem:[#allocation2 + $0x238] sm:$0xff]
        %v3549 = vld [vmem:[#allocation2 + $0x240] sm:$0xff]
        %v3550 = vld [vmem:[#allocation2 + $0x248] sm:$0xff]
        %v3551 = vld [vmem:[#allocation2 + $0x250] sm:$0xff]
        %v3552 = vld [vmem:[#allocation2 + $0x258] sm:$0xff]
        %v3553 = vld [vmem:[#allocation2 + $0x260] sm:$0xff]
        %v3554 = vld [vmem:[#allocation2 + $0x268] sm:$0xff]
        %v3555 = vld [vmem:[#allocation2 + $0x270] sm:$0xff]
        %v3556 = vld [vmem:[#allocation2 + $0x278] sm:$0xff]
        %v3557 = vld [vmem:[#allocation2 + $0x280] sm:$0xff]
        %v3558 = vld [vmem:[#allocation2 + $0x288] sm:$0xff]
        %v3559 = vld [vmem:[#allocation2 + $0x290] sm:$0xff]
        %v3560 = vld [vmem:[#allocation2 + $0x298] sm:$0xff]
        %v3561 = vld [vmem:[#allocation2 + $0x2a0] sm:$0xff]
        %v3562 = vld [vmem:[#allocation2 + $0x2a8] sm:$0xff]
        %v3563 = vld [vmem:[#allocation2 + $0x2b0] sm:$0xff]
        %v3564 = vld [vmem:[#allocation2 + $0x2b8] sm:$0xff]
        %v3565 = vld [vmem:[#allocation2 + $0x2c0] sm:$0xff]
        %v3566 = vld [vmem:[#allocation2 + $0x2c8] sm:$0xff]
        %v3567 = vld [vmem:[#allocation2 + $0x2d0] sm:$0xff]
        %v3568 = vld [vmem:[#allocation2 + $0x2d8] sm:$0xff]
        %v3569 = vld [vmem:[#allocation2 + $0x2e0] sm:$0xff]
        %v3570 = vld [vmem:[#allocation2 + $0x2e8] sm:$0xff]
        %v3571 = vld [vmem:[#allocation2 + $0x2f0] sm:$0xff]
        %v3572 = vld [vmem:[#allocation2 + $0x2f8] sm:$0xff]
        %v3573 = vld [vmem:[#allocation10] sm:$0xff]
        %v3574 = vld [vmem:[#allocation10 + $0x8] sm:$0xff]
        %v3575 = vld [vmem:[#allocation10 + $0x10] sm:$0xff]
        %v3576 = vld [vmem:[#allocation10 + $0x18] sm:$0xff]
        %v3577 = vld [vmem:[#allocation10 + $0x20] sm:$0xff]
        %v3578 = vld [vmem:[#allocation10 + $0x28] sm:$0xff]
        %v3579 = vld [vmem:[#allocation10 + $0x30] sm:$0xff]
        %v3580 = vld [vmem:[#allocation10 + $0x38] sm:$0xff]
        %v3581 = vld [vmem:[#allocation10 + $0x40] sm:$0xff]
        %v3582 = vld [vmem:[#allocation10 + $0x48] sm:$0xff]
        %v3583 = vld [vmem:[#allocation10 + $0x50] sm:$0xff]
        %v3584 = vld [vmem:[#allocation10 + $0x58] sm:$0xff]
        %v3585 = vld [vmem:[#allocation10 + $0x60] sm:$0xff]
        %v3586 = vld [vmem:[#allocation10 + $0x68] sm:$0xff]
        %v3587 = vld [vmem:[#allocation10 + $0x70] sm:$0xff]
        %v3588 = vld [vmem:[#allocation10 + $0x78] sm:$0xff]
        %v3589 = vld [vmem:[#allocation10 + $0x80] sm:$0xff]
        %v3590 = vld [vmem:[#allocation10 + $0x88] sm:$0xff]
        %v3591 = vld [vmem:[#allocation10 + $0x90] sm:$0xff]
        %v3592 = vld [vmem:[#allocation10 + $0x98] sm:$0xff]
        %v3593 = vld [vmem:[#allocation10 + $0xa0] sm:$0xff]
        %v3594 = vld [vmem:[#allocation10 + $0xa8] sm:$0xff]
        %v3595 = vld [vmem:[#allocation10 + $0xb0] sm:$0xff]
        %v3596 = vld [vmem:[#allocation10 + $0xb8] sm:$0xff]
        %v3597 = vld [vmem:[#allocation10 + $0xc0] sm:$0xff]
        %v3598 = vld [vmem:[#allocation10 + $0xc8] sm:$0xff]
        %v3599 = vld [vmem:[#allocation10 + $0xd0] sm:$0xff]
        %v3600 = vld [vmem:[#allocation10 + $0xd8] sm:$0xff]
        %v3601 = vld [vmem:[#allocation10 + $0xe0] sm:$0xff]
        %v3602 = vld [vmem:[#allocation10 + $0xe8] sm:$0xff]
        %v3603 = vld [vmem:[#allocation10 + $0xf0] sm:$0xff]
        %v3604 = vld [vmem:[#allocation10 + $0xf8] sm:$0xff]
        %v3605 = vld [vmem:[#allocation10 + $0x100] sm:$0xff]
        %v3606 = vld [vmem:[#allocation10 + $0x108] sm:$0xff]
        %v3607 = vld [vmem:[#allocation10 + $0x110] sm:$0xff]
        %v3608 = vld [vmem:[#allocation10 + $0x118] sm:$0xff]
        %v3609 = vld [vmem:[#allocation10 + $0x120] sm:$0xff]
        %v3610 = vld [vmem:[#allocation10 + $0x128] sm:$0xff]
        %v3611 = vld [vmem:[#allocation10 + $0x130] sm:$0xff]
        %v3612 = vld [vmem:[#allocation10 + $0x138] sm:$0xff]
        %v3613 = vld [vmem:[#allocation10 + $0x140] sm:$0xff]
        %v3614 = vld [vmem:[#allocation10 + $0x148] sm:$0xff]
        %v3615 = vld [vmem:[#allocation10 + $0x150] sm:$0xff]
        %v3616 = vld [vmem:[#allocation10 + $0x158] sm:$0xff]
        %v3617 = vld [vmem:[#allocation10 + $0x160] sm:$0xff]
        %v3618 = vld [vmem:[#allocation10 + $0x168] sm:$0xff]
        %v3619 = vld [vmem:[#allocation10 + $0x170] sm:$0xff]
        %v3620 = vld [vmem:[#allocation10 + $0x178] sm:$0xff]
        %3621 = vmatprep.subr.mxu0 0.0
        %3622 = vmatpush1.msra.mxu0 %v3573
        %3623 = vmatprep.subr.mxu0 0.0
        %3624 = vmatpush1.msra.mxu0 %v3574
        %3625 = vmatprep.subr.mxu0 0.0
        %3626 = vmatpush1.msra.mxu0 %v3575
        %3627 = vmatprep.subr.mxu0 0.0
        %3628 = vmatpush1.msra.mxu0 %v3576
        %3629 = vmatprep.subr.mxu0 0.0
        %3630 = vmatpush1.msra.mxu0 %v3577
        %3631 = vmatprep.subr.mxu0 0.0
        %3632 = vmatpush1.msra.mxu0 %v3578
        %3633 = vmatprep.subr.mxu0 0.0
        %3634 = vmatpush1.msra.mxu0 %v3579
        %3635 = vmatprep.subr.mxu0 0.0
        %3636 = vmatpush1.msra.mxu0 %v3580
        %3637 = vmatprep.subr.mxu0 0.0
        %3638 = vmatpush1.msra.mxu0 %v3581
        %3639 = vmatprep.subr.mxu0 0.0
        %3640 = vmatpush1.msra.mxu0 %v3582
        %3641 = vmatprep.subr.mxu0 0.0
        %3642 = vmatpush1.msra.mxu0 %v3583
        %3643 = vmatprep.subr.mxu0 0.0
        %3644 = vmatpush1.msra.mxu0 %v3584
        %3645 = vmatprep.subr.mxu0 0.0
        %3646 = vmatpush1.msra.mxu0 %v3585
        %3647 = vmatprep.subr.mxu0 0.0
        %3648 = vmatpush1.msra.mxu0 %v3586
        %3649 = vmatprep.subr.mxu0 0.0
        %3650 = vmatpush1.msra.mxu0 %v3587
        %3651 = vmatprep.subr.mxu0 0.0
        %3652 = vmatpush1.msra.mxu0 %v3588
        %3653 = vmatprep.subr.mxu0 0.0
        %3654 = vmatpush1.msra.mxu0 %v3589
        %3655 = vmatprep.subr.mxu0 0.0
        %3656 = vmatpush1.msra.mxu0 %v3590
        %3657 = vmatprep.subr.mxu0 0.0
        %3658 = vmatpush1.msra.mxu0 %v3591
        %3659 = vmatprep.subr.mxu0 0.0
        %3660 = vmatpush1.msra.mxu0 %v3592
        %3661 = vmatprep.subr.mxu0 0.0
        %3662 = vmatpush1.msra.mxu0 %v3593
        %3663 = vmatprep.subr.mxu0 0.0
        %3664 = vmatpush1.msra.mxu0 %v3594
        %3665 = vmatprep.subr.mxu0 0.0
        %3666 = vmatpush1.msra.mxu0 %v3595
        %3667 = vmatprep.subr.mxu0 0.0
        %3668 = vmatpush1.msra.mxu0 %v3596
        %3669 = vmatprep.subr.mxu0 0.0
        %3670 = vmatpush1.msra.mxu0 %v3597
        %3671 = vmatprep.subr.mxu0 0.0
        %3672 = vmatpush1.msra.mxu0 %v3598
        %3673 = vmatprep.subr.mxu0 0.0
        %3674 = vmatpush1.msra.mxu0 %v3599
        %3675 = vmatprep.subr.mxu0 0.0
        %3676 = vmatpush1.msra.mxu0 %v3600
        %3677 = vmatprep.subr.mxu0 0.0
        %3678 = vmatpush1.msra.mxu0 %v3601
        %3679 = vmatprep.subr.mxu0 0.0
        %3680 = vmatpush1.msra.mxu0 %v3602
        %3681 = vmatprep.subr.mxu0 0.0
        %3682 = vmatpush1.msra.mxu0 %v3603
        %3683 = vmatprep.subr.mxu0 0.0
        %3684 = vmatpush1.msra.mxu0 %v3604
        %3685 = vmatprep.mubr.f32.mxu0 %v3478
        %3686 = vmatmul.mubr.f32.gmra.mrb[0].mxu0 %v3477
        %v3687 = vpop.f32.mrb[0].mxu0
        %v3688 = vadd.f32 0.0, %v3687
        %v3689 = vpop.f32.mrb[0].mxu0
        %3690 = vmatprep.mubr.f32.mxu0 %v3481
        %3691 = vmatmul.mubr.f32.gmra.mrb[0].mxu0 %v3480
        %v3692 = vpop.f32.mrb[0].mxu0
        %v3693 = vadd.f32 0.0, %v3692
        %v3694 = vpop.f32.mrb[0].mxu0
        %3695 = vmatprep.mubr.f32.mxu0 %v3484
        %3696 = vmatmul.mubr.f32.gmra.mrb[0].mxu0 %v3483
        %v3697 = vpop.f32.mrb[0].mxu0
        %v3698 = vadd.f32 0.0, %v3697
        %v3699 = vpop.f32.mrb[0].mxu0
        %3700 = vmatprep.mubr.f32.mxu0 %v3487
        %3701 = vmatmul.mubr.f32.gmra.mrb[0].mxu0 %v3486
        %v3702 = vpop.f32.mrb[0].mxu0
        %v3703 = vadd.f32 0.0, %v3702
        %v3704 = vpop.f32.mrb[0].mxu0
        %3705 = vmatprep.mubr.f32.mxu0 %v3490
        %3706 = vmatmul.mubr.f32.gmra.mrb[0].mxu0 %v3489
        %v3707 = vpop.f32.mrb[0].mxu0
        %v3708 = vadd.f32 0.0, %v3707
        %v3709 = vpop.f32.mrb[0].mxu0
        %3710 = vmatprep.mubr.f32.mxu0 %v3493
        %3711 = vmatmul.mubr.f32.gmra.mrb[0].mxu0 %v3492
        %v3712 = vpop.f32.mrb[0].mxu0
        %v3713 = vadd.f32 0.0, %v3712
        %v3714 = vpop.f32.mrb[0].mxu0
        %3715 = vmatprep.mubr.f32.mxu0 %v3496
        %3716 = vmatmul.mubr.f32.gmra.mrb[0].mxu0 %v3495
        %v3717 = vpop.f32.mrb[0].mxu0
        %v3718 = vadd.f32 0.0, %v3717
        %v3719 = vpop.f32.mrb[0].mxu0
        %3720 = vmatprep.mubr.f32.mxu0 %v3499
        %3721 = vmatmul.mubr.f32.gmra.mrb[0].mxu0 %v3498
        %v3722 = vpop.f32.mrb[0].mxu0
        %v3723 = vadd.f32 0.0, %v3722
        %v3724 = vpop.f32.mrb[0].mxu0
        %3725 = vmatprep.mubr.f32.mxu0 %v3502
        %3726 = vmatmul.mubr.f32.gmra.mrb[0].mxu0 %v3501
        %v3727 = vpop.f32.mrb[0].mxu0
        %v3728 = vadd.f32 0.0, %v3727
        %v3729 = vpop.f32.mrb[0].mxu0
        %3730 = vmatprep.mubr.f32.mxu0 %v3505
        %3731 = vmatmul.mubr.f32.gmra.mrb[0].mxu0 %v3504
        %v3732 = vpop.f32.mrb[0].mxu0
        %v3733 = vadd.f32 0.0, %v3732
        %v3734 = vpop.f32.mrb[0].mxu0
        %3735 = vmatprep.mubr.f32.mxu0 %v3508
        %3736 = vmatmul.mubr.f32.gmra.mrb[0].mxu0 %v3507
        %v3737 = vpop.f32.mrb[0].mxu0
        %v3738 = vadd.f32 0.0, %v3737
        %v3739 = vpop.f32.mrb[0].mxu0
        %3740 = vmatprep.mubr.f32.mxu0 %v3511
        %3741 = vmatmul.mubr.f32.gmra.mrb[0].mxu0 %v3510
        %v3742 = vpop.f32.mrb[0].mxu0
        %v3743 = vadd.f32 0.0, %v3742
        %v3744 = vpop.f32.mrb[0].mxu0
        %3745 = vmatprep.mubr.f32.mxu0 %v3514
        %3746 = vmatmul.mubr.f32.gmra.mrb[0].mxu0 %v3513
        %v3747 = vpop.f32.mrb[0].mxu0
        %v3748 = vadd.f32 0.0, %v3747
        %v3749 = vpop.f32.mrb[0].mxu0
        %3750 = vmatprep.mubr.f32.mxu0 %v3517
        %3751 = vmatmul.mubr.f32.gmra.mrb[0].mxu0 %v3516
        %v3752 = vpop.f32.mrb[0].mxu0
        %v3753 = vadd.f32 0.0, %v3752
        %v3754 = vpop.f32.mrb[0].mxu0
        %3755 = vmatprep.mubr.f32.mxu0 %v3520
        %3756 = vmatmul.mubr.f32.gmra.mrb[0].mxu0 %v3519
        %v3757 = vpop.f32.mrb[0].mxu0
        %v3758 = vadd.f32 0.0, %v3757
        %v3759 = vpop.f32.mrb[0].mxu0
        %3760 = vmatprep.mubr.f32.mxu0 %v3523
        %3761 = vmatmul.mubr.f32.gmra.mrb[0].mxu0 %v3522
        %v3762 = vpop.f32.mrb[0].mxu0
        %v3763 = vadd.f32 0.0, %v3762
        %v3764 = vpop.f32.mrb[0].mxu0
        %3765 = vmatprep.mubr.f32.mxu0 %v3526
        %3766 = vmatmul.mubr.f32.gmra.mrb[0].mxu0 %v3525
        %v3767 = vpop.f32.mrb[0].mxu0
        %v3768 = vadd.f32 0.0, %v3767
        %v3769 = vpop.f32.mrb[0].mxu0
        %3770 = vmatprep.mubr.f32.mxu0 %v3529
        %3771 = vmatmul.mubr.f32.gmra.mrb[0].mxu0 %v3528
        %v3772 = vpop.f32.mrb[0].mxu0
        %v3773 = vadd.f32 0.0, %v3772
        %v3774 = vpop.f32.mrb[0].mxu0
        %3775 = vmatprep.mubr.f32.mxu0 %v3532
        %3776 = vmatmul.mubr.f32.gmra.mrb[0].mxu0 %v3531
        %v3777 = vpop.f32.mrb[0].mxu0
        %v3778 = vadd.f32 0.0, %v3777
        %v3779 = vpop.f32.mrb[0].mxu0
        %3780 = vmatprep.mubr.f32.mxu0 %v3535
        %3781 = vmatmul.mubr.f32.gmra.mrb[0].mxu0 %v3534
        %v3782 = vpop.f32.mrb[0].mxu0
        %v3783 = vadd.f32 0.0, %v3782
        %v3784 = vpop.f32.mrb[0].mxu0
        %3785 = vmatprep.mubr.f32.mxu0 %v3538
        %3786 = vmatmul.mubr.f32.gmra.mrb[0].mxu0 %v3537
        %v3787 = vpop.f32.mrb[0].mxu0
        %v3788 = vadd.f32 0.0, %v3787
        %v3789 = vpop.f32.mrb[0].mxu0
        %3790 = vmatprep.mubr.f32.mxu0 %v3541
        %3791 = vmatmul.mubr.f32.gmra.mrb[0].mxu0 %v3540
        %v3792 = vpop.f32.mrb[0].mxu0
        %v3793 = vadd.f32 0.0, %v3792
        %v3794 = vpop.f32.mrb[0].mxu0
        %3795 = vmatprep.mubr.f32.mxu0 %v3544
        %3796 = vmatmul.mubr.f32.gmra.mrb[0].mxu0 %v3543
        %v3797 = vpop.f32.mrb[0].mxu0
        %v3798 = vadd.f32 0.0, %v3797
        %v3799 = vpop.f32.mrb[0].mxu0
        %3800 = vmatprep.mubr.f32.mxu0 %v3547
        %3801 = vmatmul.mubr.f32.gmra.mrb[0].mxu0 %v3546
        %v3802 = vpop.f32.mrb[0].mxu0
        %v3803 = vadd.f32 0.0, %v3802
        %v3804 = vpop.f32.mrb[0].mxu0
        %3805 = vmatprep.mubr.f32.mxu0 %v3550
        %3806 = vmatmul.mubr.f32.gmra.mrb[0].mxu0 %v3549
        %v3807 = vpop.f32.mrb[0].mxu0
        %v3808 = vadd.f32 0.0, %v3807
        %v3809 = vpop.f32.mrb[0].mxu0
        %3810 = vmatprep.mubr.f32.mxu0 %v3553
        %3811 = vmatmul.mubr.f32.gmra.mrb[0].mxu0 %v3552
        %v3812 = vpop.f32.mrb[0].mxu0
        %v3813 = vadd.f32 0.0, %v3812
        %v3814 = vpop.f32.mrb[0].mxu0
        %3815 = vmatprep.mubr.f32.mxu0 %v3556
        %3816 = vmatmul.mubr.f32.gmra.mrb[0].mxu0 %v3555
        %v3817 = vpop.f32.mrb[0].mxu0
        %v3818 = vadd.f32 0.0, %v3817
        %v3819 = vpop.f32.mrb[0].mxu0
        %3820 = vmatprep.mubr.f32.mxu0 %v3559
        %3821 = vmatmul.mubr.f32.gmra.mrb[0].mxu0 %v3558
        %v3822 = vpop.f32.mrb[0].mxu0
        %v3823 = vadd.f32 0.0, %v3822
        %v3824 = vpop.f32.mrb[0].mxu0
        %3825 = vmatprep.mubr.f32.mxu0 %v3562
        %3826 = vmatmul.mubr.f32.gmra.mrb[0].mxu0 %v3561
        %v3827 = vpop.f32.mrb[0].mxu0
        %v3828 = vadd.f32 0.0, %v3827
        %v3829 = vpop.f32.mrb[0].mxu0
        %3830 = vmatprep.mubr.f32.mxu0 %v3565
        %3831 = vmatmul.mubr.f32.gmra.mrb[0].mxu0 %v3564
        %v3832 = vpop.f32.mrb[0].mxu0
        %v3833 = vadd.f32 0.0, %v3832
        %v3834 = vpop.f32.mrb[0].mxu0
        %3835 = vmatprep.mubr.f32.mxu0 %v3568
        %3836 = vmatmul.mubr.f32.gmra.mrb[0].mxu0 %v3567
        %v3837 = vpop.f32.mrb[0].mxu0
        %v3838 = vadd.f32 0.0, %v3837
        %v3839 = vpop.f32.mrb[0].mxu0
        %3840 = vmatprep.mubr.f32.mxu0 %v3571
        %3841 = vmatmul.mubr.f32.gmra.mrb[0].mxu0 %v3570
        %v3842 = vpop.f32.mrb[0].mxu0
        %v3843 = vadd.f32 0.0, %v3842
        %v3844 = vpop.f32.mrb[0].mxu0
        %3845 = vdwg.mxu0
        %3846 = vmatprep.subr.mxu0 0.0
        %3847 = vmatpush1.msra.mxu0 %v3605
        %3848 = vmatprep.subr.mxu0 0.0
        %3849 = vmatpush1.msra.mxu0 %v3606
        %3850 = vmatprep.subr.mxu0 0.0
        %3851 = vmatpush1.msra.mxu0 %v3607
        %3852 = vmatprep.subr.mxu0 0.0
        %3853 = vmatpush1.msra.mxu0 %v3608
        %3854 = vmatprep.subr.mxu0 0.0
        %3855 = vmatpush1.msra.mxu0 %v3609
        %3856 = vmatprep.subr.mxu0 0.0
        %3857 = vmatpush1.msra.mxu0 %v3610
        %3858 = vmatprep.subr.mxu0 0.0
        %3859 = vmatpush1.msra.mxu0 %v3611
        %3860 = vmatprep.subr.mxu0 0.0
        %3861 = vmatpush1.msra.mxu0 %v3612
        %3862 = vmatprep.subr.mxu0 0.0
        %3863 = vmatpush1.msra.mxu0 %v3613
        %3864 = vmatprep.subr.mxu0 0.0
        %3865 = vmatpush1.msra.mxu0 %v3614
        %3866 = vmatprep.subr.mxu0 0.0
        %3867 = vmatpush1.msra.mxu0 %v3615
        %3868 = vmatprep.subr.mxu0 0.0
        %3869 = vmatpush1.msra.mxu0 %v3616
        %3870 = vmatprep.subr.mxu0 0.0
        %3871 = vmatpush1.msra.mxu0 %v3617
        %3872 = vmatprep.subr.mxu0 0.0
        %3873 = vmatpush1.msra.mxu0 %v3618
        %3874 = vmatprep.subr.mxu0 0.0
        %3875 = vmatpush1.msra.mxu0 %v3619
        %3876 = vmatprep.subr.mxu0 0.0
        %3877 = vmatpush1.msra.mxu0 %v3620
        %3878 = vmatprep.subr.mxu0 0.0
        %3879 = vmatpush1.msra.mxu0 0.0
        %3880 = vmatprep.subr.mxu0 0.0
        %3881 = vmatpush1.msra.mxu0 0.0
        %3882 = vmatprep.subr.mxu0 0.0
        %3883 = vmatpush1.msra.mxu0 0.0
        %3884 = vmatprep.subr.mxu0 0.0
        %3885 = vmatpush1.msra.mxu0 0.0
        %3886 = vmatprep.subr.mxu0 0.0
        %3887 = vmatpush1.msra.mxu0 0.0
        %3888 = vmatprep.subr.mxu0 0.0
        %3889 = vmatpush1.msra.mxu0 0.0
        %3890 = vmatprep.subr.mxu0 0.0
        %3891 = vmatpush1.msra.mxu0 0.0
        %3892 = vmatprep.subr.mxu0 0.0
        %3893 = vmatpush1.msra.mxu0 0.0
        %3894 = vmatprep.subr.mxu0 0.0
        %3895 = vmatpush1.msra.mxu0 0.0
        %3896 = vmatprep.subr.mxu0 0.0
        %3897 = vmatpush1.msra.mxu0 0.0
        %3898 = vmatprep.subr.mxu0 0.0
        %3899 = vmatpush1.msra.mxu0 0.0
        %3900 = vmatprep.subr.mxu0 0.0
        %3901 = vmatpush1.msra.mxu0 0.0
        %3902 = vmatprep.subr.mxu0 0.0
        %3903 = vmatpush1.msra.mxu0 0.0
        %3904 = vmatprep.subr.mxu0 0.0
        %3905 = vmatpush1.msra.mxu0 0.0
        %3906 = vmatprep.subr.mxu0 0.0
        %3907 = vmatpush1.msra.mxu0 0.0
        %3908 = vmatprep.subr.mxu0 0.0
        %3909 = vmatpush1.msra.mxu0 0.0
        %3910 = vmatprep.mubr.f32.mxu0 0.0
        %3911 = vmatmul.mubr.f32.gmra.mrb[0].mxu0 %v3479
        %v3912 = vpop.f32.mrb[0].mxu0
        %v3913 = vadd.f32 %v3688, %v3912
        %v3914 = vpop.f32.mrb[0].mxu0
        %3915 = vmatprep.mubr.f32.mxu0 0.0
        %3916 = vmatmul.mubr.f32.gmra.mrb[0].mxu0 %v3482
        %v3917 = vpop.f32.mrb[0].mxu0
        %v3918 = vadd.f32 %v3693, %v3917
        %v3919 = vpop.f32.mrb[0].mxu0
        %3920 = vmatprep.mubr.f32.mxu0 0.0
        %3921 = vmatmul.mubr.f32.gmra.mrb[0].mxu0 %v3485
        %v3922 = vpop.f32.mrb[0].mxu0
        %v3923 = vadd.f32 %v3698, %v3922
        %v3924 = vpop.f32.mrb[0].mxu0
        %3925 = vmatprep.mubr.f32.mxu0 0.0
        %3926 = vmatmul.mubr.f32.gmra.mrb[0].mxu0 %v3488
        %v3927 = vpop.f32.mrb[0].mxu0
        %v3928 = vadd.f32 %v3703, %v3927
        %v3929 = vpop.f32.mrb[0].mxu0
        %3930 = vmatprep.mubr.f32.mxu0 0.0
        %3931 = vmatmul.mubr.f32.gmra.mrb[0].mxu0 %v3491
        %v3932 = vpop.f32.mrb[0].mxu0
        %v3933 = vadd.f32 %v3708, %v3932
        %v3934 = vpop.f32.mrb[0].mxu0
        %3935 = vmatprep.mubr.f32.mxu0 0.0
        %3936 = vmatmul.mubr.f32.gmra.mrb[0].mxu0 %v3494
        %v3937 = vpop.f32.mrb[0].mxu0
        %v3938 = vadd.f32 %v3713, %v3937
        %v3939 = vpop.f32.mrb[0].mxu0
        %3940 = vmatprep.mubr.f32.mxu0 0.0
        %3941 = vmatmul.mubr.f32.gmra.mrb[0].mxu0 %v3497
        %v3942 = vpop.f32.mrb[0].mxu0
        %v3943 = vadd.f32 %v3718, %v3942
        %v3944 = vpop.f32.mrb[0].mxu0
        %3945 = vmatprep.mubr.f32.mxu0 0.0
        %3946 = vmatmul.mubr.f32.gmra.mrb[0].mxu0 %v3500
        %v3947 = vpop.f32.mrb[0].mxu0
        %v3948 = vadd.f32 %v3723, %v3947
        %v3949 = vpop.f32.mrb[0].mxu0
        %3950 = vmatprep.mubr.f32.mxu0 0.0
        %3951 = vmatmul.mubr.f32.gmra.mrb[0].mxu0 %v3503
        %v3952 = vpop.f32.mrb[0].mxu0
        %v3953 = vadd.f32 %v3728, %v3952
        %v3954 = vpop.f32.mrb[0].mxu0
        %3955 = vmatprep.mubr.f32.mxu0 0.0
        %3956 = vmatmul.mubr.f32.gmra.mrb[0].mxu0 %v3506
        %v3957 = vpop.f32.mrb[0].mxu0
        %v3958 = vadd.f32 %v3733, %v3957
        %v3959 = vpop.f32.mrb[0].mxu0
        %3960 = vmatprep.mubr.f32.mxu0 0.0
        %3961 = vmatmul.mubr.f32.gmra.mrb[0].mxu0 %v3509
        %v3962 = vpop.f32.mrb[0].mxu0
        %v3963 = vadd.f32 %v3738, %v3962
        %v3964 = vpop.f32.mrb[0].mxu0
        %3965 = vmatprep.mubr.f32.mxu0 0.0
        %3966 = vmatmul.mubr.f32.gmra.mrb[0].mxu0 %v3512
        %v3967 = vpop.f32.mrb[0].mxu0
        %v3968 = vadd.f32 %v3743, %v3967
        %v3969 = vpop.f32.mrb[0].mxu0
        %3970 = vmatprep.mubr.f32.mxu0 0.0
        %3971 = vmatmul.mubr.f32.gmra.mrb[0].mxu0 %v3515
        %v3972 = vpop.f32.mrb[0].mxu0
        %v3973 = vadd.f32 %v3748, %v3972
        %v3974 = vpop.f32.mrb[0].mxu0
        %3975 = vmatprep.mubr.f32.mxu0 0.0
        %3976 = vmatmul.mubr.f32.gmra.mrb[0].mxu0 %v3518
        %v3977 = vpop.f32.mrb[0].mxu0
        %v3978 = vadd.f32 %v3753, %v3977
        %v3979 = vpop.f32.mrb[0].mxu0
        %3980 = vmatprep.mubr.f32.mxu0 0.0
        %3981 = vmatmul.mubr.f32.gmra.mrb[0].mxu0 %v3521
        %v3982 = vpop.f32.mrb[0].mxu0
        %v3983 = vadd.f32 %v3758, %v3982
        %v3984 = vpop.f32.mrb[0].mxu0
        %3985 = vmatprep.mubr.f32.mxu0 0.0
        %3986 = vmatmul.mubr.f32.gmra.mrb[0].mxu0 %v3524
        %v3987 = vpop.f32.mrb[0].mxu0
        %v3988 = vadd.f32 %v3763, %v3987
        %v3989 = vpop.f32.mrb[0].mxu0
        %3990 = vmatprep.mubr.f32.mxu0 0.0
        %3991 = vmatmul.mubr.f32.gmra.mrb[0].mxu0 %v3527
        %v3992 = vpop.f32.mrb[0].mxu0
        %v3993 = vadd.f32 %v3768, %v3992
        %v3994 = vpop.f32.mrb[0].mxu0
        %3995 = vmatprep.mubr.f32.mxu0 0.0
        %3996 = vmatmul.mubr.f32.gmra.mrb[0].mxu0 %v3530
        %v3997 = vpop.f32.mrb[0].mxu0
        %v3998 = vadd.f32 %v3773, %v3997
        %v3999 = vpop.f32.mrb[0].mxu0
        %4000 = vmatprep.mubr.f32.mxu0 0.0
        %4001 = vmatmul.mubr.f32.gmra.mrb[0].mxu0 %v3533
        %v4002 = vpop.f32.mrb[0].mxu0
        %v4003 = vadd.f32 %v3778, %v4002
        %v4004 = vpop.f32.mrb[0].mxu0
        %4005 = vmatprep.mubr.f32.mxu0 0.0
        %4006 = vmatmul.mubr.f32.gmra.mrb[0].mxu0 %v3536
        %v4007 = vpop.f32.mrb[0].mxu0
        %v4008 = vadd.f32 %v3783, %v4007
        %v4009 = vpop.f32.mrb[0].mxu0
        %4010 = vmatprep.mubr.f32.mxu0 0.0
        %4011 = vmatmul.mubr.f32.gmra.mrb[0].mxu0 %v3539
        %v4012 = vpop.f32.mrb[0].mxu0
        %v4013 = vadd.f32 %v3788, %v4012
        %v4014 = vpop.f32.mrb[0].mxu0
        %4015 = vmatprep.mubr.f32.mxu0 0.0
        %4016 = vmatmul.mubr.f32.gmra.mrb[0].mxu0 %v3542
        %v4017 = vpop.f32.mrb[0].mxu0
        %v4018 = vadd.f32 %v3793, %v4017
        %v4019 = vpop.f32.mrb[0].mxu0
        %4020 = vmatprep.mubr.f32.mxu0 0.0
        %4021 = vmatmul.mubr.f32.gmra.mrb[0].mxu0 %v3545
        %v4022 = vpop.f32.mrb[0].mxu0
        %v4023 = vadd.f32 %v3798, %v4022
        %v4024 = vpop.f32.mrb[0].mxu0
        %4025 = vmatprep.mubr.f32.mxu0 0.0
        %4026 = vmatmul.mubr.f32.gmra.mrb[0].mxu0 %v3548
        %v4027 = vpop.f32.mrb[0].mxu0
        %v4028 = vadd.f32 %v3803, %v4027
        %v4029 = vpop.f32.mrb[0].mxu0
        %4030 = vmatprep.mubr.f32.mxu0 0.0
        %4031 = vmatmul.mubr.f32.gmra.mrb[0].mxu0 %v3551
        %v4032 = vpop.f32.mrb[0].mxu0
        %v4033 = vadd.f32 %v3808, %v4032
        %v4034 = vpop.f32.mrb[0].mxu0
        %4035 = vmatprep.mubr.f32.mxu0 0.0
        %4036 = vmatmul.mubr.f32.gmra.mrb[0].mxu0 %v3554
        %v4037 = vpop.f32.mrb[0].mxu0
        %v4038 = vadd.f32 %v3813, %v4037
        %v4039 = vpop.f32.mrb[0].mxu0
        %4040 = vmatprep.mubr.f32.mxu0 0.0
        %4041 = vmatmul.mubr.f32.gmra.mrb[0].mxu0 %v3557
        %v4042 = vpop.f32.mrb[0].mxu0
        %v4043 = vadd.f32 %v3818, %v4042
        %v4044 = vpop.f32.mrb[0].mxu0
        %4045 = vmatprep.mubr.f32.mxu0 0.0
        %4046 = vmatmul.mubr.f32.gmra.mrb[0].mxu0 %v3560
        %v4047 = vpop.f32.mrb[0].mxu0
        %v4048 = vadd.f32 %v3823, %v4047
        %v4049 = vpop.f32.mrb[0].mxu0
        %4050 = vmatprep.mubr.f32.mxu0 0.0
        %4051 = vmatmul.mubr.f32.gmra.mrb[0].mxu0 %v3563
        %v4052 = vpop.f32.mrb[0].mxu0
        %v4053 = vadd.f32 %v3828, %v4052
        %v4054 = vpop.f32.mrb[0].mxu0
        %4055 = vmatprep.mubr.f32.mxu0 0.0
        %4056 = vmatmul.mubr.f32.gmra.mrb[0].mxu0 %v3566
        %v4057 = vpop.f32.mrb[0].mxu0
        %v4058 = vadd.f32 %v3833, %v4057
        %v4059 = vpop.f32.mrb[0].mxu0
        %4060 = vmatprep.mubr.f32.mxu0 0.0
        %4061 = vmatmul.mubr.f32.gmra.mrb[0].mxu0 %v3569
        %v4062 = vpop.f32.mrb[0].mxu0
        %v4063 = vadd.f32 %v3838, %v4062
        %v4064 = vpop.f32.mrb[0].mxu0
        %4065 = vmatprep.mubr.f32.mxu0 0.0
        %4066 = vmatmul.mubr.f32.gmra.mrb[0].mxu0 %v3572
        %v4067 = vpop.f32.mrb[0].mxu0
        %v4068 = vadd.f32 %v3843, %v4067
        %v4069 = vpop.f32.mrb[0].mxu0
        %4070 = vdwg.mxu0
        %4071 = vst [vmem:[#allocation3] sm:$0xff] %v3913
        %4072 = vst [vmem:[#allocation3 + $0x8] sm:$0xff] %v3918
        %4073 = vst [vmem:[#allocation3 + $0x10] sm:$0xff] %v3923
        %4074 = vst [vmem:[#allocation3 + $0x18] sm:$0xff] %v3928
        %4075 = vst [vmem:[#allocation3 + $0x20] sm:$0xff] %v3933
        %4076 = vst [vmem:[#allocation3 + $0x28] sm:$0xff] %v3938
        %4077 = vst [vmem:[#allocation3 + $0x30] sm:$0xff] %v3943
        %4078 = vst [vmem:[#allocation3 + $0x38] sm:$0xff] %v3948
        %4079 = vst [vmem:[#allocation3 + $0x40] sm:$0xff] %v3953
        %4080 = vst [vmem:[#allocation3 + $0x48] sm:$0xff] %v3958
        %4081 = vst [vmem:[#allocation3 + $0x50] sm:$0xff] %v3963
        %4082 = vst [vmem:[#allocation3 + $0x58] sm:$0xff] %v3968
        %4083 = vst [vmem:[#allocation3 + $0x60] sm:$0xff] %v3973
        %4084 = vst [vmem:[#allocation3 + $0x68] sm:$0xff] %v3978
        %4085 = vst [vmem:[#allocation3 + $0x70] sm:$0xff] %v3983
        %4086 = vst [vmem:[#allocation3 + $0x78] sm:$0xff] %v3988
        %4087 = vst [vmem:[#allocation3 + $0x80] sm:$0xff] %v3993
        %4088 = vst [vmem:[#allocation3 + $0x88] sm:$0xff] %v3998
        %4089 = vst [vmem:[#allocation3 + $0x90] sm:$0xff] %v4003
        %4090 = vst [vmem:[#allocation3 + $0x98] sm:$0xff] %v4008
        %4091 = vst [vmem:[#allocation3 + $0xa0] sm:$0xff] %v4013
        %4092 = vst [vmem:[#allocation3 + $0xa8] sm:$0xff] %v4018
        %4093 = vst [vmem:[#allocation3 + $0xb0] sm:$0xff] %v4023
        %4094 = vst [vmem:[#allocation3 + $0xb8] sm:$0xff] %v4028
        %4095 = vst [vmem:[#allocation3 + $0xc0] sm:$0xff] %v4033
        %4096 = vst [vmem:[#allocation3 + $0xc8] sm:$0xff] %v4038
        %4097 = vst [vmem:[#allocation3 + $0xd0] sm:$0xff] %v4043
        %4098 = vst [vmem:[#allocation3 + $0xd8] sm:$0xff] %v4048
        %4099 = vst [vmem:[#allocation3 + $0xe0] sm:$0xff] %v4053
        %4100 = vst [vmem:[#allocation3 + $0xe8] sm:$0xff] %v4058
        %4101 = vst [vmem:[#allocation3 + $0xf0] sm:$0xff] %v4063
        %4102 = vst [vmem:[#allocation3 + $0xf8] sm:$0xff] %v4068
        %v4103 = vld [vmem:[%s422] sm:$0xff]
        %v4104 = vld [vmem:[%s422 + $0x8] sm:$0xff]
        %v4105 = vld [vmem:[%s422 + $0x10] sm:$0xff]
        %v4106 = vld [vmem:[%s422 + $0x18] sm:$0xff]
        %v4107 = vld [vmem:[%s422 + $0x20] sm:$0xff]
        %v4108 = vld [vmem:[%s422 + $0x28] sm:$0xff]
        %v4109 = vld [vmem:[%s422 + $0x30] sm:$0xff]
        %v4110 = vld [vmem:[%s422 + $0x38] sm:$0xff]
        %v4111 = vld [vmem:[%s422 + $0x40] sm:$0xff]
        %v4112 = vld [vmem:[%s422 + $0x48] sm:$0xff]
        %v4113 = vld [vmem:[%s422 + $0x50] sm:$0xff]
        %v4114 = vld [vmem:[%s422 + $0x58] sm:$0xff]
        %v4115 = vld [vmem:[%s422 + $0x60] sm:$0xff]
        %v4116 = vld [vmem:[%s422 + $0x68] sm:$0xff]
        %v4117 = vld [vmem:[%s422 + $0x70] sm:$0xff]
        %v4118 = vld [vmem:[%s422 + $0x78] sm:$0xff]
        %v4119 = vld [vmem:[%s422 + $0x80] sm:$0xff]
        %v4120 = vld [vmem:[%s422 + $0x88] sm:$0xff]
        %v4121 = vld [vmem:[%s422 + $0x90] sm:$0xff]
        %v4122 = vld [vmem:[%s422 + $0x98] sm:$0xff]
        %v4123 = vld [vmem:[%s422 + $0xa0] sm:$0xff]
        %v4124 = vld [vmem:[%s422 + $0xa8] sm:$0xff]
        %v4125 = vld [vmem:[%s422 + $0xb0] sm:$0xff]
        %v4126 = vld [vmem:[%s422 + $0xb8] sm:$0xff]
        %v4127 = vld [vmem:[%s422 + $0xc0] sm:$0xff]
        %v4128 = vld [vmem:[%s422 + $0xc8] sm:$0xff]
        %v4129 = vld [vmem:[%s422 + $0xd0] sm:$0xff]
        %v4130 = vld [vmem:[%s422 + $0xd8] sm:$0xff]
        %v4131 = vld [vmem:[%s422 + $0xe0] sm:$0xff]
        %v4132 = vld [vmem:[%s422 + $0xe8] sm:$0xff]
        %v4133 = vld [vmem:[%s422 + $0xf0] sm:$0xff]
        %v4134 = vld [vmem:[%s422 + $0xf8] sm:$0xff]
        %v4135 = vld [vmem:[%s422 + $0x100] sm:$0xff]
        %v4136 = vld [vmem:[%s422 + $0x108] sm:$0xff]
        %v4137 = vld [vmem:[%s422 + $0x110] sm:$0xff]
        %v4138 = vld [vmem:[%s422 + $0x118] sm:$0xff]
        %v4139 = vld [vmem:[%s422 + $0x120] sm:$0xff]
        %v4140 = vld [vmem:[%s422 + $0x128] sm:$0xff]
        %v4141 = vld [vmem:[%s422 + $0x130] sm:$0xff]
        %v4142 = vld [vmem:[%s422 + $0x138] sm:$0xff]
        %v4143 = vld [vmem:[%s422 + $0x140] sm:$0xff]
        %v4144 = vld [vmem:[%s422 + $0x148] sm:$0xff]
        %v4145 = vld [vmem:[%s422 + $0x150] sm:$0xff]
        %v4146 = vld [vmem:[%s422 + $0x158] sm:$0xff]
        %v4147 = vld [vmem:[%s422 + $0x160] sm:$0xff]
        %v4148 = vld [vmem:[%s422 + $0x168] sm:$0xff]
        %v4149 = vld [vmem:[%s422 + $0x170] sm:$0xff]
        %v4150 = vld [vmem:[%s422 + $0x178] sm:$0xff]
        %v4151 = vld [vmem:[%s422 + $0x180] sm:$0xff]
        %v4152 = vld [vmem:[%s422 + $0x188] sm:$0xff]
        %v4153 = vld [vmem:[%s422 + $0x190] sm:$0xff]
        %v4154 = vld [vmem:[%s422 + $0x198] sm:$0xff]
        %v4155 = vld [vmem:[%s422 + $0x1a0] sm:$0xff]
        %v4156 = vld [vmem:[%s422 + $0x1a8] sm:$0xff]
        %v4157 = vld [vmem:[%s422 + $0x1b0] sm:$0xff]
        %v4158 = vld [vmem:[%s422 + $0x1b8] sm:$0xff]
        %v4159 = vld [vmem:[%s422 + $0x1c0] sm:$0xff]
        %v4160 = vld [vmem:[%s422 + $0x1c8] sm:$0xff]
        %v4161 = vld [vmem:[%s422 + $0x1d0] sm:$0xff]
        %v4162 = vld [vmem:[%s422 + $0x1d8] sm:$0xff]
        %v4163 = vld [vmem:[%s422 + $0x1e0] sm:$0xff]
        %v4164 = vld [vmem:[%s422 + $0x1e8] sm:$0xff]
        %v4165 = vld [vmem:[%s422 + $0x1f0] sm:$0xff]
        %v4166 = vld [vmem:[%s422 + $0x1f8] sm:$0xff]
        %v4167 = vld [vmem:[%s422 + $0x200] sm:$0xff]
        %v4168 = vld [vmem:[%s422 + $0x208] sm:$0xff]
        %v4169 = vld [vmem:[%s422 + $0x210] sm:$0xff]
        %v4170 = vld [vmem:[%s422 + $0x218] sm:$0xff]
        %v4171 = vld [vmem:[%s422 + $0x220] sm:$0xff]
        %v4172 = vld [vmem:[%s422 + $0x228] sm:$0xff]
        %v4173 = vld [vmem:[%s422 + $0x230] sm:$0xff]
        %v4174 = vld [vmem:[%s422 + $0x238] sm:$0xff]
        %v4175 = vld [vmem:[%s422 + $0x240] sm:$0xff]
        %v4176 = vld [vmem:[%s422 + $0x248] sm:$0xff]
        %v4177 = vld [vmem:[%s422 + $0x250] sm:$0xff]
        %v4178 = vld [vmem:[%s422 + $0x258] sm:$0xff]
        %v4179 = vld [vmem:[%s422 + $0x260] sm:$0xff]
        %v4180 = vld [vmem:[%s422 + $0x268] sm:$0xff]
        %v4181 = vld [vmem:[%s422 + $0x270] sm:$0xff]
        %v4182 = vld [vmem:[%s422 + $0x278] sm:$0xff]
        %v4183 = vld [vmem:[%s422 + $0x280] sm:$0xff]
        %v4184 = vld [vmem:[%s422 + $0x288] sm:$0xff]
        %v4185 = vld [vmem:[%s422 + $0x290] sm:$0xff]
        %v4186 = vld [vmem:[%s422 + $0x298] sm:$0xff]
        %v4187 = vld [vmem:[%s422 + $0x2a0] sm:$0xff]
        %v4188 = vld [vmem:[%s422 + $0x2a8] sm:$0xff]
        %v4189 = vld [vmem:[%s422 + $0x2b0] sm:$0xff]
        %v4190 = vld [vmem:[%s422 + $0x2b8] sm:$0xff]
        %v4191 = vld [vmem:[%s422 + $0x2c0] sm:$0xff]
        %v4192 = vld [vmem:[%s422 + $0x2c8] sm:$0xff]
        %v4193 = vld [vmem:[%s422 + $0x2d0] sm:$0xff]
        %v4194 = vld [vmem:[%s422 + $0x2d8] sm:$0xff]
        %v4195 = vld [vmem:[%s422 + $0x2e0] sm:$0xff]
        %v4196 = vld [vmem:[%s422 + $0x2e8] sm:$0xff]
        %v4197 = vld [vmem:[%s422 + $0x2f0] sm:$0xff]
        %v4198 = vld [vmem:[%s422 + $0x2f8] sm:$0xff]
        %s4199 = scalar_lea.vmem [#allocation10], 384
        %v4200 = vld [vmem:[%s4199] sm:$0xff]
        %v4201 = vld [vmem:[%s4199 + $0x8] sm:$0xff]
        %v4202 = vld [vmem:[%s4199 + $0x10] sm:$0xff]
        %v4203 = vld [vmem:[%s4199 + $0x18] sm:$0xff]
        %v4204 = vld [vmem:[%s4199 + $0x20] sm:$0xff]
        %v4205 = vld [vmem:[%s4199 + $0x28] sm:$0xff]
        %v4206 = vld [vmem:[%s4199 + $0x30] sm:$0xff]
        %v4207 = vld [vmem:[%s4199 + $0x38] sm:$0xff]
        %v4208 = vld [vmem:[%s4199 + $0x40] sm:$0xff]
        %v4209 = vld [vmem:[%s4199 + $0x48] sm:$0xff]
        %v4210 = vld [vmem:[%s4199 + $0x50] sm:$0xff]
        %v4211 = vld [vmem:[%s4199 + $0x58] sm:$0xff]
        %v4212 = vld [vmem:[%s4199 + $0x60] sm:$0xff]
        %v4213 = vld [vmem:[%s4199 + $0x68] sm:$0xff]
        %v4214 = vld [vmem:[%s4199 + $0x70] sm:$0xff]
        %v4215 = vld [vmem:[%s4199 + $0x78] sm:$0xff]
        %v4216 = vld [vmem:[%s4199 + $0x80] sm:$0xff]
        %v4217 = vld [vmem:[%s4199 + $0x88] sm:$0xff]
        %v4218 = vld [vmem:[%s4199 + $0x90] sm:$0xff]
        %v4219 = vld [vmem:[%s4199 + $0x98] sm:$0xff]
        %v4220 = vld [vmem:[%s4199 + $0xa0] sm:$0xff]
        %v4221 = vld [vmem:[%s4199 + $0xa8] sm:$0xff]
        %v4222 = vld [vmem:[%s4199 + $0xb0] sm:$0xff]
        %v4223 = vld [vmem:[%s4199 + $0xb8] sm:$0xff]
        %v4224 = vld [vmem:[%s4199 + $0xc0] sm:$0xff]
        %v4225 = vld [vmem:[%s4199 + $0xc8] sm:$0xff]
        %v4226 = vld [vmem:[%s4199 + $0xd0] sm:$0xff]
        %v4227 = vld [vmem:[%s4199 + $0xd8] sm:$0xff]
        %v4228 = vld [vmem:[%s4199 + $0xe0] sm:$0xff]
        %v4229 = vld [vmem:[%s4199 + $0xe8] sm:$0xff]
        %v4230 = vld [vmem:[%s4199 + $0xf0] sm:$0xff]
        %v4231 = vld [vmem:[%s4199 + $0xf8] sm:$0xff]
        %v4232 = vld [vmem:[%s4199 + $0x100] sm:$0xff]
        %v4233 = vld [vmem:[%s4199 + $0x108] sm:$0xff]
        %v4234 = vld [vmem:[%s4199 + $0x110] sm:$0xff]
        %v4235 = vld [vmem:[%s4199 + $0x118] sm:$0xff]
        %v4236 = vld [vmem:[%s4199 + $0x120] sm:$0xff]
        %v4237 = vld [vmem:[%s4199 + $0x128] sm:$0xff]
        %v4238 = vld [vmem:[%s4199 + $0x130] sm:$0xff]
        %v4239 = vld [vmem:[%s4199 + $0x138] sm:$0xff]
        %v4240 = vld [vmem:[%s4199 + $0x140] sm:$0xff]
        %v4241 = vld [vmem:[%s4199 + $0x148] sm:$0xff]
        %v4242 = vld [vmem:[%s4199 + $0x150] sm:$0xff]
        %v4243 = vld [vmem:[%s4199 + $0x158] sm:$0xff]
        %v4244 = vld [vmem:[%s4199 + $0x160] sm:$0xff]
        %v4245 = vld [vmem:[%s4199 + $0x168] sm:$0xff]
        %v4246 = vld [vmem:[%s4199 + $0x170] sm:$0xff]
        %v4247 = vld [vmem:[%s4199 + $0x178] sm:$0xff]
        %4248 = vmatprep.subr.mxu0 0.0
        %4249 = vmatpush1.msra.mxu0 %v4200
        %4250 = vmatprep.subr.mxu0 0.0
        %4251 = vmatpush1.msra.mxu0 %v4201
        %4252 = vmatprep.subr.mxu0 0.0
        %4253 = vmatpush1.msra.mxu0 %v4202
        %4254 = vmatprep.subr.mxu0 0.0
        %4255 = vmatpush1.msra.mxu0 %v4203
        %4256 = vmatprep.subr.mxu0 0.0
        %4257 = vmatpush1.msra.mxu0 %v4204
        %4258 = vmatprep.subr.mxu0 0.0
        %4259 = vmatpush1.msra.mxu0 %v4205
        %4260 = vmatprep.subr.mxu0 0.0
        %4261 = vmatpush1.msra.mxu0 %v4206
        %4262 = vmatprep.subr.mxu0 0.0
        %4263 = vmatpush1.msra.mxu0 %v4207
        %4264 = vmatprep.subr.mxu0 0.0
        %4265 = vmatpush1.msra.mxu0 %v4208
        %4266 = vmatprep.subr.mxu0 0.0
        %4267 = vmatpush1.msra.mxu0 %v4209
        %4268 = vmatprep.subr.mxu0 0.0
        %4269 = vmatpush1.msra.mxu0 %v4210
        %4270 = vmatprep.subr.mxu0 0.0
        %4271 = vmatpush1.msra.mxu0 %v4211
        %4272 = vmatprep.subr.mxu0 0.0
        %4273 = vmatpush1.msra.mxu0 %v4212
        %4274 = vmatprep.subr.mxu0 0.0
        %4275 = vmatpush1.msra.mxu0 %v4213
        %4276 = vmatprep.subr.mxu0 0.0
        %4277 = vmatpush1.msra.mxu0 %v4214
        %4278 = vmatprep.subr.mxu0 0.0
        %4279 = vmatpush1.msra.mxu0 %v4215
        %4280 = vmatprep.subr.mxu0 0.0
        %4281 = vmatpush1.msra.mxu0 %v4216
        %4282 = vmatprep.subr.mxu0 0.0
        %4283 = vmatpush1.msra.mxu0 %v4217
        %4284 = vmatprep.subr.mxu0 0.0
        %4285 = vmatpush1.msra.mxu0 %v4218
        %4286 = vmatprep.subr.mxu0 0.0
        %4287 = vmatpush1.msra.mxu0 %v4219
        %4288 = vmatprep.subr.mxu0 0.0
        %4289 = vmatpush1.msra.mxu0 %v4220
        %4290 = vmatprep.subr.mxu0 0.0
        %4291 = vmatpush1.msra.mxu0 %v4221
        %4292 = vmatprep.subr.mxu0 0.0
        %4293 = vmatpush1.msra.mxu0 %v4222
        %4294 = vmatprep.subr.mxu0 0.0
        %4295 = vmatpush1.msra.mxu0 %v4223
        %4296 = vmatprep.subr.mxu0 0.0
        %4297 = vmatpush1.msra.mxu0 %v4224
        %4298 = vmatprep.subr.mxu0 0.0
        %4299 = vmatpush1.msra.mxu0 %v4225
        %4300 = vmatprep.subr.mxu0 0.0
        %4301 = vmatpush1.msra.mxu0 %v4226
        %4302 = vmatprep.subr.mxu0 0.0
        %4303 = vmatpush1.msra.mxu0 %v4227
        %4304 = vmatprep.subr.mxu0 0.0
        %4305 = vmatpush1.msra.mxu0 %v4228
        %4306 = vmatprep.subr.mxu0 0.0
        %4307 = vmatpush1.msra.mxu0 %v4229
        %4308 = vmatprep.subr.mxu0 0.0
        %4309 = vmatpush1.msra.mxu0 %v4230
        %4310 = vmatprep.subr.mxu0 0.0
        %4311 = vmatpush1.msra.mxu0 %v4231
        %4312 = vmatprep.mubr.f32.mxu0 %v4104
        %4313 = vmatmul.mubr.f32.gmra.mrb[0].mxu0 %v4103
        %v4314 = vpop.f32.mrb[0].mxu0
        %v4315 = vadd.f32 0.0, %v4314
        %v4316 = vpop.f32.mrb[0].mxu0
        %4317 = vmatprep.mubr.f32.mxu0 %v4107
        %4318 = vmatmul.mubr.f32.gmra.mrb[0].mxu0 %v4106
        %v4319 = vpop.f32.mrb[0].mxu0
        %v4320 = vadd.f32 0.0, %v4319
        %v4321 = vpop.f32.mrb[0].mxu0
        %4322 = vmatprep.mubr.f32.mxu0 %v4110
        %4323 = vmatmul.mubr.f32.gmra.mrb[0].mxu0 %v4109
        %v4324 = vpop.f32.mrb[0].mxu0
        %v4325 = vadd.f32 0.0, %v4324
        %v4326 = vpop.f32.mrb[0].mxu0
        %4327 = vmatprep.mubr.f32.mxu0 %v4113
        %4328 = vmatmul.mubr.f32.gmra.mrb[0].mxu0 %v4112
        %v4329 = vpop.f32.mrb[0].mxu0
        %v4330 = vadd.f32 0.0, %v4329
        %v4331 = vpop.f32.mrb[0].mxu0
        %4332 = vmatprep.mubr.f32.mxu0 %v4116
        %4333 = vmatmul.mubr.f32.gmra.mrb[0].mxu0 %v4115
        %v4334 = vpop.f32.mrb[0].mxu0
        %v4335 = vadd.f32 0.0, %v4334
        %v4336 = vpop.f32.mrb[0].mxu0
        %4337 = vmatprep.mubr.f32.mxu0 %v4119
        %4338 = vmatmul.mubr.f32.gmra.mrb[0].mxu0 %v4118
        %v4339 = vpop.f32.mrb[0].mxu0
        %v4340 = vadd.f32 0.0, %v4339
        %v4341 = vpop.f32.mrb[0].mxu0
        %4342 = vmatprep.mubr.f32.mxu0 %v4122
        %4343 = vmatmul.mubr.f32.gmra.mrb[0].mxu0 %v4121
        %v4344 = vpop.f32.mrb[0].mxu0
        %v4345 = vadd.f32 0.0, %v4344
        %v4346 = vpop.f32.mrb[0].mxu0
        %4347 = vmatprep.mubr.f32.mxu0 %v4125
        %4348 = vmatmul.mubr.f32.gmra.mrb[0].mxu0 %v4124
        %v4349 = vpop.f32.mrb[0].mxu0
        %v4350 = vadd.f32 0.0, %v4349
        %v4351 = vpop.f32.mrb[0].mxu0
        %4352 = vmatprep.mubr.f32.mxu0 %v4128
        %4353 = vmatmul.mubr.f32.gmra.mrb[0].mxu0 %v4127
        %v4354 = vpop.f32.mrb[0].mxu0
        %v4355 = vadd.f32 0.0, %v4354
        %v4356 = vpop.f32.mrb[0].mxu0
        %4357 = vmatprep.mubr.f32.mxu0 %v4131
        %4358 = vmatmul.mubr.f32.gmra.mrb[0].mxu0 %v4130
        %v4359 = vpop.f32.mrb[0].mxu0
        %v4360 = vadd.f32 0.0, %v4359
        %v4361 = vpop.f32.mrb[0].mxu0
        %4362 = vmatprep.mubr.f32.mxu0 %v4134
        %4363 = vmatmul.mubr.f32.gmra.mrb[0].mxu0 %v4133
        %v4364 = vpop.f32.mrb[0].mxu0
        %v4365 = vadd.f32 0.0, %v4364
        %v4366 = vpop.f32.mrb[0].mxu0
        %4367 = vmatprep.mubr.f32.mxu0 %v4137
        %4368 = vmatmul.mubr.f32.gmra.mrb[0].mxu0 %v4136
        %v4369 = vpop.f32.mrb[0].mxu0
        %v4370 = vadd.f32 0.0, %v4369
        %v4371 = vpop.f32.mrb[0].mxu0
        %4372 = vmatprep.mubr.f32.mxu0 %v4140
        %4373 = vmatmul.mubr.f32.gmra.mrb[0].mxu0 %v4139
        %v4374 = vpop.f32.mrb[0].mxu0
        %v4375 = vadd.f32 0.0, %v4374
        %v4376 = vpop.f32.mrb[0].mxu0
        %4377 = vmatprep.mubr.f32.mxu0 %v4143
        %4378 = vmatmul.mubr.f32.gmra.mrb[0].mxu0 %v4142
        %v4379 = vpop.f32.mrb[0].mxu0
        %v4380 = vadd.f32 0.0, %v4379
        %v4381 = vpop.f32.mrb[0].mxu0
        %4382 = vmatprep.mubr.f32.mxu0 %v4146
        %4383 = vmatmul.mubr.f32.gmra.mrb[0].mxu0 %v4145
        %v4384 = vpop.f32.mrb[0].mxu0
        %v4385 = vadd.f32 0.0, %v4384
        %v4386 = vpop.f32.mrb[0].mxu0
        %4387 = vmatprep.mubr.f32.mxu0 %v4149
        %4388 = vmatmul.mubr.f32.gmra.mrb[0].mxu0 %v4148
        %v4389 = vpop.f32.mrb[0].mxu0
        %v4390 = vadd.f32 0.0, %v4389
        %v4391 = vpop.f32.mrb[0].mxu0
        %4392 = vmatprep.mubr.f32.mxu0 %v4152
        %4393 = vmatmul.mubr.f32.gmra.mrb[0].mxu0 %v4151
        %v4394 = vpop.f32.mrb[0].mxu0
        %v4395 = vadd.f32 0.0, %v4394
        %v4396 = vpop.f32.mrb[0].mxu0
        %4397 = vmatprep.mubr.f32.mxu0 %v4155
        %4398 = vmatmul.mubr.f32.gmra.mrb[0].mxu0 %v4154
        %v4399 = vpop.f32.mrb[0].mxu0
        %v4400 = vadd.f32 0.0, %v4399
        %v4401 = vpop.f32.mrb[0].mxu0
        %4402 = vmatprep.mubr.f32.mxu0 %v4158
        %4403 = vmatmul.mubr.f32.gmra.mrb[0].mxu0 %v4157
        %v4404 = vpop.f32.mrb[0].mxu0
        %v4405 = vadd.f32 0.0, %v4404
        %v4406 = vpop.f32.mrb[0].mxu0
        %4407 = vmatprep.mubr.f32.mxu0 %v4161
        %4408 = vmatmul.mubr.f32.gmra.mrb[0].mxu0 %v4160
        %v4409 = vpop.f32.mrb[0].mxu0
        %v4410 = vadd.f32 0.0, %v4409
        %v4411 = vpop.f32.mrb[0].mxu0
        %4412 = vmatprep.mubr.f32.mxu0 %v4164
        %4413 = vmatmul.mubr.f32.gmra.mrb[0].mxu0 %v4163
        %v4414 = vpop.f32.mrb[0].mxu0
        %v4415 = vadd.f32 0.0, %v4414
        %v4416 = vpop.f32.mrb[0].mxu0
        %4417 = vmatprep.mubr.f32.mxu0 %v4167
        %4418 = vmatmul.mubr.f32.gmra.mrb[0].mxu0 %v4166
        %v4419 = vpop.f32.mrb[0].mxu0
        %v4420 = vadd.f32 0.0, %v4419
        %v4421 = vpop.f32.mrb[0].mxu0
        %4422 = vmatprep.mubr.f32.mxu0 %v4170
        %4423 = vmatmul.mubr.f32.gmra.mrb[0].mxu0 %v4169
        %v4424 = vpop.f32.mrb[0].mxu0
        %v4425 = vadd.f32 0.0, %v4424
        %v4426 = vpop.f32.mrb[0].mxu0
        %4427 = vmatprep.mubr.f32.mxu0 %v4173
        %4428 = vmatmul.mubr.f32.gmra.mrb[0].mxu0 %v4172
        %v4429 = vpop.f32.mrb[0].mxu0
        %v4430 = vadd.f32 0.0, %v4429
        %v4431 = vpop.f32.mrb[0].mxu0
        %4432 = vmatprep.mubr.f32.mxu0 %v4176
        %4433 = vmatmul.mubr.f32.gmra.mrb[0].mxu0 %v4175
        %v4434 = vpop.f32.mrb[0].mxu0
        %v4435 = vadd.f32 0.0, %v4434
        %v4436 = vpop.f32.mrb[0].mxu0
        %4437 = vmatprep.mubr.f32.mxu0 %v4179
        %4438 = vmatmul.mubr.f32.gmra.mrb[0].mxu0 %v4178
        %v4439 = vpop.f32.mrb[0].mxu0
        %v4440 = vadd.f32 0.0, %v4439
        %v4441 = vpop.f32.mrb[0].mxu0
        %4442 = vmatprep.mubr.f32.mxu0 %v4182
        %4443 = vmatmul.mubr.f32.gmra.mrb[0].mxu0 %v4181
        %v4444 = vpop.f32.mrb[0].mxu0
        %v4445 = vadd.f32 0.0, %v4444
        %v4446 = vpop.f32.mrb[0].mxu0
        %4447 = vmatprep.mubr.f32.mxu0 %v4185
        %4448 = vmatmul.mubr.f32.gmra.mrb[0].mxu0 %v4184
        %v4449 = vpop.f32.mrb[0].mxu0
        %v4450 = vadd.f32 0.0, %v4449
        %v4451 = vpop.f32.mrb[0].mxu0
        %4452 = vmatprep.mubr.f32.mxu0 %v4188
        %4453 = vmatmul.mubr.f32.gmra.mrb[0].mxu0 %v4187
        %v4454 = vpop.f32.mrb[0].mxu0
        %v4455 = vadd.f32 0.0, %v4454
        %v4456 = vpop.f32.mrb[0].mxu0
        %4457 = vmatprep.mubr.f32.mxu0 %v4191
        %4458 = vmatmul.mubr.f32.gmra.mrb[0].mxu0 %v4190
        %v4459 = vpop.f32.mrb[0].mxu0
        %v4460 = vadd.f32 0.0, %v4459
        %v4461 = vpop.f32.mrb[0].mxu0
        %4462 = vmatprep.mubr.f32.mxu0 %v4194
        %4463 = vmatmul.mubr.f32.gmra.mrb[0].mxu0 %v4193
        %v4464 = vpop.f32.mrb[0].mxu0
        %v4465 = vadd.f32 0.0, %v4464
        %v4466 = vpop.f32.mrb[0].mxu0
        %4467 = vmatprep.mubr.f32.mxu0 %v4197
        %4468 = vmatmul.mubr.f32.gmra.mrb[0].mxu0 %v4196
        %v4469 = vpop.f32.mrb[0].mxu0
        %v4470 = vadd.f32 0.0, %v4469
        %v4471 = vpop.f32.mrb[0].mxu0
        %4472 = vdwg.mxu0
        %4473 = vmatprep.subr.mxu0 0.0
        %4474 = vmatpush1.msra.mxu0 %v4232
        %4475 = vmatprep.subr.mxu0 0.0
        %4476 = vmatpush1.msra.mxu0 %v4233
        %4477 = vmatprep.subr.mxu0 0.0
        %4478 = vmatpush1.msra.mxu0 %v4234
        %4479 = vmatprep.subr.mxu0 0.0
        %4480 = vmatpush1.msra.mxu0 %v4235
        %4481 = vmatprep.subr.mxu0 0.0
        %4482 = vmatpush1.msra.mxu0 %v4236
        %4483 = vmatprep.subr.mxu0 0.0
        %4484 = vmatpush1.msra.mxu0 %v4237
        %4485 = vmatprep.subr.mxu0 0.0
        %4486 = vmatpush1.msra.mxu0 %v4238
        %4487 = vmatprep.subr.mxu0 0.0
        %4488 = vmatpush1.msra.mxu0 %v4239
        %4489 = vmatprep.subr.mxu0 0.0
        %4490 = vmatpush1.msra.mxu0 %v4240
        %4491 = vmatprep.subr.mxu0 0.0
        %4492 = vmatpush1.msra.mxu0 %v4241
        %4493 = vmatprep.subr.mxu0 0.0
        %4494 = vmatpush1.msra.mxu0 %v4242
        %4495 = vmatprep.subr.mxu0 0.0
        %4496 = vmatpush1.msra.mxu0 %v4243
        %4497 = vmatprep.subr.mxu0 0.0
        %4498 = vmatpush1.msra.mxu0 %v4244
        %4499 = vmatprep.subr.mxu0 0.0
        %4500 = vmatpush1.msra.mxu0 %v4245
        %4501 = vmatprep.subr.mxu0 0.0
        %4502 = vmatpush1.msra.mxu0 %v4246
        %4503 = vmatprep.subr.mxu0 0.0
        %4504 = vmatpush1.msra.mxu0 %v4247
        %4505 = vmatprep.subr.mxu0 0.0
        %4506 = vmatpush1.msra.mxu0 0.0
        %4507 = vmatprep.subr.mxu0 0.0
        %4508 = vmatpush1.msra.mxu0 0.0
        %4509 = vmatprep.subr.mxu0 0.0
        %4510 = vmatpush1.msra.mxu0 0.0
        %4511 = vmatprep.subr.mxu0 0.0
        %4512 = vmatpush1.msra.mxu0 0.0
        %4513 = vmatprep.subr.mxu0 0.0
        %4514 = vmatpush1.msra.mxu0 0.0
        %4515 = vmatprep.subr.mxu0 0.0
        %4516 = vmatpush1.msra.mxu0 0.0
        %4517 = vmatprep.subr.mxu0 0.0
        %4518 = vmatpush1.msra.mxu0 0.0
        %4519 = vmatprep.subr.mxu0 0.0
        %4520 = vmatpush1.msra.mxu0 0.0
        %4521 = vmatprep.subr.mxu0 0.0
        %4522 = vmatpush1.msra.mxu0 0.0
        %4523 = vmatprep.subr.mxu0 0.0
        %4524 = vmatpush1.msra.mxu0 0.0
        %4525 = vmatprep.subr.mxu0 0.0
        %4526 = vmatpush1.msra.mxu0 0.0
        %4527 = vmatprep.subr.mxu0 0.0
        %4528 = vmatpush1.msra.mxu0 0.0
        %4529 = vmatprep.subr.mxu0 0.0
        %4530 = vmatpush1.msra.mxu0 0.0
        %4531 = vmatprep.subr.mxu0 0.0
        %4532 = vmatpush1.msra.mxu0 0.0
        %4533 = vmatprep.subr.mxu0 0.0
        %4534 = vmatpush1.msra.mxu0 0.0
        %4535 = vmatprep.subr.mxu0 0.0
        %4536 = vmatpush1.msra.mxu0 0.0
        %4537 = vmatprep.mubr.f32.mxu0 0.0
        %4538 = vmatmul.mubr.f32.gmra.mrb[0].mxu0 %v4105
        %v4539 = vpop.f32.mrb[0].mxu0
        %v4540 = vadd.f32 %v4315, %v4539
        %v4541 = vpop.f32.mrb[0].mxu0
        %4542 = vmatprep.mubr.f32.mxu0 0.0
        %4543 = vmatmul.mubr.f32.gmra.mrb[0].mxu0 %v4108
        %v4544 = vpop.f32.mrb[0].mxu0
        %v4545 = vadd.f32 %v4320, %v4544
        %v4546 = vpop.f32.mrb[0].mxu0
        %4547 = vmatprep.mubr.f32.mxu0 0.0
        %4548 = vmatmul.mubr.f32.gmra.mrb[0].mxu0 %v4111
        %v4549 = vpop.f32.mrb[0].mxu0
        %v4550 = vadd.f32 %v4325, %v4549
        %v4551 = vpop.f32.mrb[0].mxu0
        %4552 = vmatprep.mubr.f32.mxu0 0.0
        %4553 = vmatmul.mubr.f32.gmra.mrb[0].mxu0 %v4114
        %v4554 = vpop.f32.mrb[0].mxu0
        %v4555 = vadd.f32 %v4330, %v4554
        %v4556 = vpop.f32.mrb[0].mxu0
        %4557 = vmatprep.mubr.f32.mxu0 0.0
        %4558 = vmatmul.mubr.f32.gmra.mrb[0].mxu0 %v4117
        %v4559 = vpop.f32.mrb[0].mxu0
        %v4560 = vadd.f32 %v4335, %v4559
        %v4561 = vpop.f32.mrb[0].mxu0
        %4562 = vmatprep.mubr.f32.mxu0 0.0
        %4563 = vmatmul.mubr.f32.gmra.mrb[0].mxu0 %v4120
        %v4564 = vpop.f32.mrb[0].mxu0
        %v4565 = vadd.f32 %v4340, %v4564
        %v4566 = vpop.f32.mrb[0].mxu0
        %4567 = vmatprep.mubr.f32.mxu0 0.0
        %4568 = vmatmul.mubr.f32.gmra.mrb[0].mxu0 %v4123
        %v4569 = vpop.f32.mrb[0].mxu0
        %v4570 = vadd.f32 %v4345, %v4569
        %v4571 = vpop.f32.mrb[0].mxu0
        %4572 = vmatprep.mubr.f32.mxu0 0.0
        %4573 = vmatmul.mubr.f32.gmra.mrb[0].mxu0 %v4126
        %v4574 = vpop.f32.mrb[0].mxu0
        %v4575 = vadd.f32 %v4350, %v4574
        %v4576 = vpop.f32.mrb[0].mxu0
        %4577 = vmatprep.mubr.f32.mxu0 0.0
        %4578 = vmatmul.mubr.f32.gmra.mrb[0].mxu0 %v4129
        %v4579 = vpop.f32.mrb[0].mxu0
        %v4580 = vadd.f32 %v4355, %v4579
        %v4581 = vpop.f32.mrb[0].mxu0
        %4582 = vmatprep.mubr.f32.mxu0 0.0
        %4583 = vmatmul.mubr.f32.gmra.mrb[0].mxu0 %v4132
        %v4584 = vpop.f32.mrb[0].mxu0
        %v4585 = vadd.f32 %v4360, %v4584
        %v4586 = vpop.f32.mrb[0].mxu0
        %4587 = vmatprep.mubr.f32.mxu0 0.0
        %4588 = vmatmul.mubr.f32.gmra.mrb[0].mxu0 %v4135
        %v4589 = vpop.f32.mrb[0].mxu0
        %v4590 = vadd.f32 %v4365, %v4589
        %v4591 = vpop.f32.mrb[0].mxu0
        %4592 = vmatprep.mubr.f32.mxu0 0.0
        %4593 = vmatmul.mubr.f32.gmra.mrb[0].mxu0 %v4138
        %v4594 = vpop.f32.mrb[0].mxu0
        %v4595 = vadd.f32 %v4370, %v4594
        %v4596 = vpop.f32.mrb[0].mxu0
        %4597 = vmatprep.mubr.f32.mxu0 0.0
        %4598 = vmatmul.mubr.f32.gmra.mrb[0].mxu0 %v4141
        %v4599 = vpop.f32.mrb[0].mxu0
        %v4600 = vadd.f32 %v4375, %v4599
        %v4601 = vpop.f32.mrb[0].mxu0
        %4602 = vmatprep.mubr.f32.mxu0 0.0
        %4603 = vmatmul.mubr.f32.gmra.mrb[0].mxu0 %v4144
        %v4604 = vpop.f32.mrb[0].mxu0
        %v4605 = vadd.f32 %v4380, %v4604
        %v4606 = vpop.f32.mrb[0].mxu0
        %4607 = vmatprep.mubr.f32.mxu0 0.0
        %4608 = vmatmul.mubr.f32.gmra.mrb[0].mxu0 %v4147
        %v4609 = vpop.f32.mrb[0].mxu0
        %v4610 = vadd.f32 %v4385, %v4609
        %v4611 = vpop.f32.mrb[0].mxu0
        %4612 = vmatprep.mubr.f32.mxu0 0.0
        %4613 = vmatmul.mubr.f32.gmra.mrb[0].mxu0 %v4150
        %v4614 = vpop.f32.mrb[0].mxu0
        %v4615 = vadd.f32 %v4390, %v4614
        %v4616 = vpop.f32.mrb[0].mxu0
        %4617 = vmatprep.mubr.f32.mxu0 0.0
        %4618 = vmatmul.mubr.f32.gmra.mrb[0].mxu0 %v4153
        %v4619 = vpop.f32.mrb[0].mxu0
        %v4620 = vadd.f32 %v4395, %v4619
        %v4621 = vpop.f32.mrb[0].mxu0
        %4622 = vmatprep.mubr.f32.mxu0 0.0
        %4623 = vmatmul.mubr.f32.gmra.mrb[0].mxu0 %v4156
        %v4624 = vpop.f32.mrb[0].mxu0
        %v4625 = vadd.f32 %v4400, %v4624
        %v4626 = vpop.f32.mrb[0].mxu0
        %4627 = vmatprep.mubr.f32.mxu0 0.0
        %4628 = vmatmul.mubr.f32.gmra.mrb[0].mxu0 %v4159
        %v4629 = vpop.f32.mrb[0].mxu0
        %v4630 = vadd.f32 %v4405, %v4629
        %v4631 = vpop.f32.mrb[0].mxu0
        %4632 = vmatprep.mubr.f32.mxu0 0.0
        %4633 = vmatmul.mubr.f32.gmra.mrb[0].mxu0 %v4162
        %v4634 = vpop.f32.mrb[0].mxu0
        %v4635 = vadd.f32 %v4410, %v4634
        %v4636 = vpop.f32.mrb[0].mxu0
        %4637 = vmatprep.mubr.f32.mxu0 0.0
        %4638 = vmatmul.mubr.f32.gmra.mrb[0].mxu0 %v4165
        %v4639 = vpop.f32.mrb[0].mxu0
        %v4640 = vadd.f32 %v4415, %v4639
        %v4641 = vpop.f32.mrb[0].mxu0
        %4642 = vmatprep.mubr.f32.mxu0 0.0
        %4643 = vmatmul.mubr.f32.gmra.mrb[0].mxu0 %v4168
        %v4644 = vpop.f32.mrb[0].mxu0
        %v4645 = vadd.f32 %v4420, %v4644
        %v4646 = vpop.f32.mrb[0].mxu0
        %4647 = vmatprep.mubr.f32.mxu0 0.0
        %4648 = vmatmul.mubr.f32.gmra.mrb[0].mxu0 %v4171
        %v4649 = vpop.f32.mrb[0].mxu0
        %v4650 = vadd.f32 %v4425, %v4649
        %v4651 = vpop.f32.mrb[0].mxu0
        %4652 = vmatprep.mubr.f32.mxu0 0.0
        %4653 = vmatmul.mubr.f32.gmra.mrb[0].mxu0 %v4174
        %v4654 = vpop.f32.mrb[0].mxu0
        %v4655 = vadd.f32 %v4430, %v4654
        %v4656 = vpop.f32.mrb[0].mxu0
        %4657 = vmatprep.mubr.f32.mxu0 0.0
        %4658 = vmatmul.mubr.f32.gmra.mrb[0].mxu0 %v4177
        %v4659 = vpop.f32.mrb[0].mxu0
        %v4660 = vadd.f32 %v4435, %v4659
        %v4661 = vpop.f32.mrb[0].mxu0
        %4662 = vmatprep.mubr.f32.mxu0 0.0
        %4663 = vmatmul.mubr.f32.gmra.mrb[0].mxu0 %v4180
        %v4664 = vpop.f32.mrb[0].mxu0
        %v4665 = vadd.f32 %v4440, %v4664
        %v4666 = vpop.f32.mrb[0].mxu0
        %4667 = vmatprep.mubr.f32.mxu0 0.0
        %4668 = vmatmul.mubr.f32.gmra.mrb[0].mxu0 %v4183
        %v4669 = vpop.f32.mrb[0].mxu0
        %v4670 = vadd.f32 %v4445, %v4669
        %v4671 = vpop.f32.mrb[0].mxu0
        %4672 = vmatprep.mubr.f32.mxu0 0.0
        %4673 = vmatmul.mubr.f32.gmra.mrb[0].mxu0 %v4186
        %v4674 = vpop.f32.mrb[0].mxu0
        %v4675 = vadd.f32 %v4450, %v4674
        %v4676 = vpop.f32.mrb[0].mxu0
        %4677 = vmatprep.mubr.f32.mxu0 0.0
        %4678 = vmatmul.mubr.f32.gmra.mrb[0].mxu0 %v4189
        %v4679 = vpop.f32.mrb[0].mxu0
        %v4680 = vadd.f32 %v4455, %v4679
        %v4681 = vpop.f32.mrb[0].mxu0
        %4682 = vmatprep.mubr.f32.mxu0 0.0
        %4683 = vmatmul.mubr.f32.gmra.mrb[0].mxu0 %v4192
        %v4684 = vpop.f32.mrb[0].mxu0
        %v4685 = vadd.f32 %v4460, %v4684
        %v4686 = vpop.f32.mrb[0].mxu0
        %4687 = vmatprep.mubr.f32.mxu0 0.0
        %4688 = vmatmul.mubr.f32.gmra.mrb[0].mxu0 %v4195
        %v4689 = vpop.f32.mrb[0].mxu0
        %v4690 = vadd.f32 %v4465, %v4689
        %v4691 = vpop.f32.mrb[0].mxu0
        %4692 = vmatprep.mubr.f32.mxu0 0.0
        %4693 = vmatmul.mubr.f32.gmra.mrb[0].mxu0 %v4198
        %v4694 = vpop.f32.mrb[0].mxu0
        %v4695 = vadd.f32 %v4470, %v4694
        %v4696 = vpop.f32.mrb[0].mxu0
        %4697 = vdwg.mxu0
        %v4698 = vld [vmem:[#allocation3] sm:$0xff]
        %v4699 = vld [vmem:[#allocation3 + $0x8] sm:$0xff]
        %v4700 = vld [vmem:[#allocation3 + $0x10] sm:$0xff]
        %v4701 = vld [vmem:[#allocation3 + $0x18] sm:$0xff]
        %v4702 = vld [vmem:[#allocation3 + $0x20] sm:$0xff]
        %v4703 = vld [vmem:[#allocation3 + $0x28] sm:$0xff]
        %v4704 = vld [vmem:[#allocation3 + $0x30] sm:$0xff]
        %v4705 = vld [vmem:[#allocation3 + $0x38] sm:$0xff]
        %v4706 = vld [vmem:[#allocation3 + $0x40] sm:$0xff]
        %v4707 = vld [vmem:[#allocation3 + $0x48] sm:$0xff]
        %v4708 = vld [vmem:[#allocation3 + $0x50] sm:$0xff]
        %v4709 = vld [vmem:[#allocation3 + $0x58] sm:$0xff]
        %v4710 = vld [vmem:[#allocation3 + $0x60] sm:$0xff]
        %v4711 = vld [vmem:[#allocation3 + $0x68] sm:$0xff]
        %v4712 = vld [vmem:[#allocation3 + $0x70] sm:$0xff]
        %v4713 = vld [vmem:[#allocation3 + $0x78] sm:$0xff]
        %v4714 = vld [vmem:[#allocation3 + $0x80] sm:$0xff]
        %v4715 = vld [vmem:[#allocation3 + $0x88] sm:$0xff]
        %v4716 = vld [vmem:[#allocation3 + $0x90] sm:$0xff]
        %v4717 = vld [vmem:[#allocation3 + $0x98] sm:$0xff]
        %v4718 = vld [vmem:[#allocation3 + $0xa0] sm:$0xff]
        %v4719 = vld [vmem:[#allocation3 + $0xa8] sm:$0xff]
        %v4720 = vld [vmem:[#allocation3 + $0xb0] sm:$0xff]
        %v4721 = vld [vmem:[#allocation3 + $0xb8] sm:$0xff]
        %v4722 = vld [vmem:[#allocation3 + $0xc0] sm:$0xff]
        %v4723 = vld [vmem:[#allocation3 + $0xc8] sm:$0xff]
        %v4724 = vld [vmem:[#allocation3 + $0xd0] sm:$0xff]
        %v4725 = vld [vmem:[#allocation3 + $0xd8] sm:$0xff]
        %v4726 = vld [vmem:[#allocation3 + $0xe0] sm:$0xff]
        %v4727 = vld [vmem:[#allocation3 + $0xe8] sm:$0xff]
        %v4728 = vld [vmem:[#allocation3 + $0xf0] sm:$0xff]
        %v4729 = vld [vmem:[#allocation3 + $0xf8] sm:$0xff]
        %v4730 = vadd.f32 %v4698, %v4540
        %v4731 = vadd.f32 %v4699, %v4545
        %v4732 = vadd.f32 %v4700, %v4550
        %v4733 = vadd.f32 %v4701, %v4555
        %v4734 = vadd.f32 %v4702, %v4560
        %v4735 = vadd.f32 %v4703, %v4565
        %v4736 = vadd.f32 %v4704, %v4570
        %v4737 = vadd.f32 %v4705, %v4575
        %v4738 = vadd.f32 %v4706, %v4580
        %v4739 = vadd.f32 %v4707, %v4585
        %v4740 = vadd.f32 %v4708, %v4590
        %v4741 = vadd.f32 %v4709, %v4595
        %v4742 = vadd.f32 %v4710, %v4600
        %v4743 = vadd.f32 %v4711, %v4605
        %v4744 = vadd.f32 %v4712, %v4610
        %v4745 = vadd.f32 %v4713, %v4615
        %v4746 = vadd.f32 %v4714, %v4620
        %v4747 = vadd.f32 %v4715, %v4625
        %v4748 = vadd.f32 %v4716, %v4630
        %v4749 = vadd.f32 %v4717, %v4635
        %v4750 = vadd.f32 %v4718, %v4640
        %v4751 = vadd.f32 %v4719, %v4645
        %v4752 = vadd.f32 %v4720, %v4650
        %v4753 = vadd.f32 %v4721, %v4655
        %v4754 = vadd.f32 %v4722, %v4660
        %v4755 = vadd.f32 %v4723, %v4665
        %v4756 = vadd.f32 %v4724, %v4670
        %v4757 = vadd.f32 %v4725, %v4675
        %v4758 = vadd.f32 %v4726, %v4680
        %v4759 = vadd.f32 %v4727, %v4685
        %v4760 = vadd.f32 %v4728, %v4690
        %v4761 = vadd.f32 %v4729, %v4695
        %4762 = vst [vmem:[#allocation3] sm:$0xff] %v4730
        %4763 = vst [vmem:[#allocation3 + $0x8] sm:$0xff] %v4731
        %4764 = vst [vmem:[#allocation3 + $0x10] sm:$0xff] %v4732
        %4765 = vst [vmem:[#allocation3 + $0x18] sm:$0xff] %v4733
        %4766 = vst [vmem:[#allocation3 + $0x20] sm:$0xff] %v4734
        %4767 = vst [vmem:[#allocation3 + $0x28] sm:$0xff] %v4735
        %4768 = vst [vmem:[#allocation3 + $0x30] sm:$0xff] %v4736
        %4769 = vst [vmem:[#allocation3 + $0x38] sm:$0xff] %v4737
        %4770 = vst [vmem:[#allocation3 + $0x40] sm:$0xff] %v4738
        %4771 = vst [vmem:[#allocation3 + $0x48] sm:$0xff] %v4739
        %4772 = vst [vmem:[#allocation3 + $0x50] sm:$0xff] %v4740
        %4773 = vst [vmem:[#allocation3 + $0x58] sm:$0xff] %v4741
        %4774 = vst [vmem:[#allocation3 + $0x60] sm:$0xff] %v4742
        %4775 = vst [vmem:[#allocation3 + $0x68] sm:$0xff] %v4743
        %4776 = vst [vmem:[#allocation3 + $0x70] sm:$0xff] %v4744
        %4777 = vst [vmem:[#allocation3 + $0x78] sm:$0xff] %v4745
        %4778 = vst [vmem:[#allocation3 + $0x80] sm:$0xff] %v4746
        %4779 = vst [vmem:[#allocation3 + $0x88] sm:$0xff] %v4747
        %4780 = vst [vmem:[#allocation3 + $0x90] sm:$0xff] %v4748
        %4781 = vst [vmem:[#allocation3 + $0x98] sm:$0xff] %v4749
        %4782 = vst [vmem:[#allocation3 + $0xa0] sm:$0xff] %v4750
        %4783 = vst [vmem:[#allocation3 + $0xa8] sm:$0xff] %v4751
        %4784 = vst [vmem:[#allocation3 + $0xb0] sm:$0xff] %v4752
        %4785 = vst [vmem:[#allocation3 + $0xb8] sm:$0xff] %v4753
        %4786 = vst [vmem:[#allocation3 + $0xc0] sm:$0xff] %v4754
        %4787 = vst [vmem:[#allocation3 + $0xc8] sm:$0xff] %v4755
        %4788 = vst [vmem:[#allocation3 + $0xd0] sm:$0xff] %v4756
        %4789 = vst [vmem:[#allocation3 + $0xd8] sm:$0xff] %v4757
        %4790 = vst [vmem:[#allocation3 + $0xe0] sm:$0xff] %v4758
        %4791 = vst [vmem:[#allocation3 + $0xe8] sm:$0xff] %v4759
        %4792 = vst [vmem:[#allocation3 + $0xf0] sm:$0xff] %v4760
        %4793 = vst [vmem:[#allocation3 + $0xf8] sm:$0xff] %v4761
        %v4794 = vld [vmem:[%s760] sm:$0xff]
        %v4795 = vld [vmem:[%s760 + $0x8] sm:$0xff]
        %v4796 = vld [vmem:[%s760 + $0x10] sm:$0xff]
        %v4797 = vld [vmem:[%s760 + $0x18] sm:$0xff]
        %v4798 = vld [vmem:[%s760 + $0x20] sm:$0xff]
        %v4799 = vld [vmem:[%s760 + $0x28] sm:$0xff]
        %v4800 = vld [vmem:[%s760 + $0x30] sm:$0xff]
        %v4801 = vld [vmem:[%s760 + $0x38] sm:$0xff]
        %v4802 = vld [vmem:[%s760 + $0x40] sm:$0xff]
        %v4803 = vld [vmem:[%s760 + $0x48] sm:$0xff]
        %v4804 = vld [vmem:[%s760 + $0x50] sm:$0xff]
        %v4805 = vld [vmem:[%s760 + $0x58] sm:$0xff]
        %v4806 = vld [vmem:[%s760 + $0x60] sm:$0xff]
        %v4807 = vld [vmem:[%s760 + $0x68] sm:$0xff]
        %v4808 = vld [vmem:[%s760 + $0x70] sm:$0xff]
        %v4809 = vld [vmem:[%s760 + $0x78] sm:$0xff]
        %v4810 = vld [vmem:[%s760 + $0x80] sm:$0xff]
        %v4811 = vld [vmem:[%s760 + $0x88] sm:$0xff]
        %v4812 = vld [vmem:[%s760 + $0x90] sm:$0xff]
        %v4813 = vld [vmem:[%s760 + $0x98] sm:$0xff]
        %v4814 = vld [vmem:[%s760 + $0xa0] sm:$0xff]
        %v4815 = vld [vmem:[%s760 + $0xa8] sm:$0xff]
        %v4816 = vld [vmem:[%s760 + $0xb0] sm:$0xff]
        %v4817 = vld [vmem:[%s760 + $0xb8] sm:$0xff]
        %v4818 = vld [vmem:[%s760 + $0xc0] sm:$0xff]
        %v4819 = vld [vmem:[%s760 + $0xc8] sm:$0xff]
        %v4820 = vld [vmem:[%s760 + $0xd0] sm:$0xff]
        %v4821 = vld [vmem:[%s760 + $0xd8] sm:$0xff]
        %v4822 = vld [vmem:[%s760 + $0xe0] sm:$0xff]
        %v4823 = vld [vmem:[%s760 + $0xe8] sm:$0xff]
        %v4824 = vld [vmem:[%s760 + $0xf0] sm:$0xff]
        %v4825 = vld [vmem:[%s760 + $0xf8] sm:$0xff]
        %v4826 = vld [vmem:[%s760 + $0x100] sm:$0xff]
        %v4827 = vld [vmem:[%s760 + $0x108] sm:$0xff]
        %v4828 = vld [vmem:[%s760 + $0x110] sm:$0xff]
        %v4829 = vld [vmem:[%s760 + $0x118] sm:$0xff]
        %v4830 = vld [vmem:[%s760 + $0x120] sm:$0xff]
        %v4831 = vld [vmem:[%s760 + $0x128] sm:$0xff]
        %v4832 = vld [vmem:[%s760 + $0x130] sm:$0xff]
        %v4833 = vld [vmem:[%s760 + $0x138] sm:$0xff]
        %v4834 = vld [vmem:[%s760 + $0x140] sm:$0xff]
        %v4835 = vld [vmem:[%s760 + $0x148] sm:$0xff]
        %v4836 = vld [vmem:[%s760 + $0x150] sm:$0xff]
        %v4837 = vld [vmem:[%s760 + $0x158] sm:$0xff]
        %v4838 = vld [vmem:[%s760 + $0x160] sm:$0xff]
        %v4839 = vld [vmem:[%s760 + $0x168] sm:$0xff]
        %v4840 = vld [vmem:[%s760 + $0x170] sm:$0xff]
        %v4841 = vld [vmem:[%s760 + $0x178] sm:$0xff]
        %v4842 = vld [vmem:[%s760 + $0x180] sm:$0xff]
        %v4843 = vld [vmem:[%s760 + $0x188] sm:$0xff]
        %v4844 = vld [vmem:[%s760 + $0x190] sm:$0xff]
        %v4845 = vld [vmem:[%s760 + $0x198] sm:$0xff]
        %v4846 = vld [vmem:[%s760 + $0x1a0] sm:$0xff]
        %v4847 = vld [vmem:[%s760 + $0x1a8] sm:$0xff]
        %v4848 = vld [vmem:[%s760 + $0x1b0] sm:$0xff]
        %v4849 = vld [vmem:[%s760 + $0x1b8] sm:$0xff]
        %v4850 = vld [vmem:[%s760 + $0x1c0] sm:$0xff]
        %v4851 = vld [vmem:[%s760 + $0x1c8] sm:$0xff]
        %v4852 = vld [vmem:[%s760 + $0x1d0] sm:$0xff]
        %v4853 = vld [vmem:[%s760 + $0x1d8] sm:$0xff]
        %v4854 = vld [vmem:[%s760 + $0x1e0] sm:$0xff]
        %v4855 = vld [vmem:[%s760 + $0x1e8] sm:$0xff]
        %v4856 = vld [vmem:[%s760 + $0x1f0] sm:$0xff]
        %v4857 = vld [vmem:[%s760 + $0x1f8] sm:$0xff]
        %v4858 = vld [vmem:[%s760 + $0x200] sm:$0xff]
        %v4859 = vld [vmem:[%s760 + $0x208] sm:$0xff]
        %v4860 = vld [vmem:[%s760 + $0x210] sm:$0xff]
        %v4861 = vld [vmem:[%s760 + $0x218] sm:$0xff]
        %v4862 = vld [vmem:[%s760 + $0x220] sm:$0xff]
        %v4863 = vld [vmem:[%s760 + $0x228] sm:$0xff]
        %v4864 = vld [vmem:[%s760 + $0x230] sm:$0xff]
        %v4865 = vld [vmem:[%s760 + $0x238] sm:$0xff]
        %v4866 = vld [vmem:[%s760 + $0x240] sm:$0xff]
        %v4867 = vld [vmem:[%s760 + $0x248] sm:$0xff]
        %v4868 = vld [vmem:[%s760 + $0x250] sm:$0xff]
        %v4869 = vld [vmem:[%s760 + $0x258] sm:$0xff]
        %v4870 = vld [vmem:[%s760 + $0x260] sm:$0xff]
        %v4871 = vld [vmem:[%s760 + $0x268] sm:$0xff]
        %v4872 = vld [vmem:[%s760 + $0x270] sm:$0xff]
        %v4873 = vld [vmem:[%s760 + $0x278] sm:$0xff]
        %v4874 = vld [vmem:[%s760 + $0x280] sm:$0xff]
        %v4875 = vld [vmem:[%s760 + $0x288] sm:$0xff]
        %v4876 = vld [vmem:[%s760 + $0x290] sm:$0xff]
        %v4877 = vld [vmem:[%s760 + $0x298] sm:$0xff]
        %v4878 = vld [vmem:[%s760 + $0x2a0] sm:$0xff]
        %v4879 = vld [vmem:[%s760 + $0x2a8] sm:$0xff]
        %v4880 = vld [vmem:[%s760 + $0x2b0] sm:$0xff]
        %v4881 = vld [vmem:[%s760 + $0x2b8] sm:$0xff]
        %v4882 = vld [vmem:[%s760 + $0x2c0] sm:$0xff]
        %v4883 = vld [vmem:[%s760 + $0x2c8] sm:$0xff]
        %v4884 = vld [vmem:[%s760 + $0x2d0] sm:$0xff]
        %v4885 = vld [vmem:[%s760 + $0x2d8] sm:$0xff]
        %v4886 = vld [vmem:[%s760 + $0x2e0] sm:$0xff]
        %v4887 = vld [vmem:[%s760 + $0x2e8] sm:$0xff]
        %v4888 = vld [vmem:[%s760 + $0x2f0] sm:$0xff]
        %v4889 = vld [vmem:[%s760 + $0x2f8] sm:$0xff]
        %s4890 = scalar_lea.vmem [#allocation10], 768
        %v4891 = vld [vmem:[%s4890] sm:$0xff]
        %v4892 = vld [vmem:[%s4890 + $0x8] sm:$0xff]
        %v4893 = vld [vmem:[%s4890 + $0x10] sm:$0xff]
        %v4894 = vld [vmem:[%s4890 + $0x18] sm:$0xff]
        %v4895 = vld [vmem:[%s4890 + $0x20] sm:$0xff]
        %v4896 = vld [vmem:[%s4890 + $0x28] sm:$0xff]
        %v4897 = vld [vmem:[%s4890 + $0x30] sm:$0xff]
        %v4898 = vld [vmem:[%s4890 + $0x38] sm:$0xff]
        %v4899 = vld [vmem:[%s4890 + $0x40] sm:$0xff]
        %v4900 = vld [vmem:[%s4890 + $0x48] sm:$0xff]
        %v4901 = vld [vmem:[%s4890 + $0x50] sm:$0xff]
        %v4902 = vld [vmem:[%s4890 + $0x58] sm:$0xff]
        %v4903 = vld [vmem:[%s4890 + $0x60] sm:$0xff]
        %v4904 = vld [vmem:[%s4890 + $0x68] sm:$0xff]
        %v4905 = vld [vmem:[%s4890 + $0x70] sm:$0xff]
        %v4906 = vld [vmem:[%s4890 + $0x78] sm:$0xff]
        %v4907 = vld [vmem:[%s4890 + $0x80] sm:$0xff]
        %v4908 = vld [vmem:[%s4890 + $0x88] sm:$0xff]
        %v4909 = vld [vmem:[%s4890 + $0x90] sm:$0xff]
        %v4910 = vld [vmem:[%s4890 + $0x98] sm:$0xff]
        %v4911 = vld [vmem:[%s4890 + $0xa0] sm:$0xff]
        %v4912 = vld [vmem:[%s4890 + $0xa8] sm:$0xff]
        %v4913 = vld [vmem:[%s4890 + $0xb0] sm:$0xff]
        %v4914 = vld [vmem:[%s4890 + $0xb8] sm:$0xff]
        %v4915 = vld [vmem:[%s4890 + $0xc0] sm:$0xff]
        %v4916 = vld [vmem:[%s4890 + $0xc8] sm:$0xff]
        %v4917 = vld [vmem:[%s4890 + $0xd0] sm:$0xff]
        %v4918 = vld [vmem:[%s4890 + $0xd8] sm:$0xff]
        %v4919 = vld [vmem:[%s4890 + $0xe0] sm:$0xff]
        %v4920 = vld [vmem:[%s4890 + $0xe8] sm:$0xff]
        %v4921 = vld [vmem:[%s4890 + $0xf0] sm:$0xff]
        %v4922 = vld [vmem:[%s4890 + $0xf8] sm:$0xff]
        %v4923 = vld [vmem:[%s4890 + $0x100] sm:$0xff]
        %v4924 = vld [vmem:[%s4890 + $0x108] sm:$0xff]
        %v4925 = vld [vmem:[%s4890 + $0x110] sm:$0xff]
        %v4926 = vld [vmem:[%s4890 + $0x118] sm:$0xff]
        %v4927 = vld [vmem:[%s4890 + $0x120] sm:$0xff]
        %v4928 = vld [vmem:[%s4890 + $0x128] sm:$0xff]
        %v4929 = vld [vmem:[%s4890 + $0x130] sm:$0xff]
        %v4930 = vld [vmem:[%s4890 + $0x138] sm:$0xff]
        %v4931 = vld [vmem:[%s4890 + $0x140] sm:$0xff]
        %v4932 = vld [vmem:[%s4890 + $0x148] sm:$0xff]
        %v4933 = vld [vmem:[%s4890 + $0x150] sm:$0xff]
        %v4934 = vld [vmem:[%s4890 + $0x158] sm:$0xff]
        %v4935 = vld [vmem:[%s4890 + $0x160] sm:$0xff]
        %v4936 = vld [vmem:[%s4890 + $0x168] sm:$0xff]
        %v4937 = vld [vmem:[%s4890 + $0x170] sm:$0xff]
        %v4938 = vld [vmem:[%s4890 + $0x178] sm:$0xff]
        %4939 = vmatprep.subr.mxu0 0.0
        %4940 = vmatpush1.msra.mxu0 %v4891
        %4941 = vmatprep.subr.mxu0 0.0
        %4942 = vmatpush1.msra.mxu0 %v4892
        %4943 = vmatprep.subr.mxu0 0.0
        %4944 = vmatpush1.msra.mxu0 %v4893
        %4945 = vmatprep.subr.mxu0 0.0
        %4946 = vmatpush1.msra.mxu0 %v4894
        %4947 = vmatprep.subr.mxu0 0.0
        %4948 = vmatpush1.msra.mxu0 %v4895
        %4949 = vmatprep.subr.mxu0 0.0
        %4950 = vmatpush1.msra.mxu0 %v4896
        %4951 = vmatprep.subr.mxu0 0.0
        %4952 = vmatpush1.msra.mxu0 %v4897
        %4953 = vmatprep.subr.mxu0 0.0
        %4954 = vmatpush1.msra.mxu0 %v4898
        %4955 = vmatprep.subr.mxu0 0.0
        %4956 = vmatpush1.msra.mxu0 %v4899
        %4957 = vmatprep.subr.mxu0 0.0
        %4958 = vmatpush1.msra.mxu0 %v4900
        %4959 = vmatprep.subr.mxu0 0.0
        %4960 = vmatpush1.msra.mxu0 %v4901
        %4961 = vmatprep.subr.mxu0 0.0
        %4962 = vmatpush1.msra.mxu0 %v4902
        %4963 = vmatprep.subr.mxu0 0.0
        %4964 = vmatpush1.msra.mxu0 %v4903
        %4965 = vmatprep.subr.mxu0 0.0
        %4966 = vmatpush1.msra.mxu0 %v4904
        %4967 = vmatprep.subr.mxu0 0.0
        %4968 = vmatpush1.msra.mxu0 %v4905
        %4969 = vmatprep.subr.mxu0 0.0
        %4970 = vmatpush1.msra.mxu0 %v4906
        %4971 = vmatprep.subr.mxu0 0.0
        %4972 = vmatpush1.msra.mxu0 %v4907
        %4973 = vmatprep.subr.mxu0 0.0
        %4974 = vmatpush1.msra.mxu0 %v4908
        %4975 = vmatprep.subr.mxu0 0.0
        %4976 = vmatpush1.msra.mxu0 %v4909
        %4977 = vmatprep.subr.mxu0 0.0
        %4978 = vmatpush1.msra.mxu0 %v4910
        %4979 = vmatprep.subr.mxu0 0.0
        %4980 = vmatpush1.msra.mxu0 %v4911
        %4981 = vmatprep.subr.mxu0 0.0
        %4982 = vmatpush1.msra.mxu0 %v4912
        %4983 = vmatprep.subr.mxu0 0.0
        %4984 = vmatpush1.msra.mxu0 %v4913
        %4985 = vmatprep.subr.mxu0 0.0
        %4986 = vmatpush1.msra.mxu0 %v4914
        %4987 = vmatprep.subr.mxu0 0.0
        %4988 = vmatpush1.msra.mxu0 %v4915
        %4989 = vmatprep.subr.mxu0 0.0
        %4990 = vmatpush1.msra.mxu0 %v4916
        %4991 = vmatprep.subr.mxu0 0.0
        %4992 = vmatpush1.msra.mxu0 %v4917
        %4993 = vmatprep.subr.mxu0 0.0
        %4994 = vmatpush1.msra.mxu0 %v4918
        %4995 = vmatprep.subr.mxu0 0.0
        %4996 = vmatpush1.msra.mxu0 %v4919
        %4997 = vmatprep.subr.mxu0 0.0
        %4998 = vmatpush1.msra.mxu0 %v4920
        %4999 = vmatprep.subr.mxu0 0.0
        %5000 = vmatpush1.msra.mxu0 %v4921
        %5001 = vmatprep.subr.mxu0 0.0
        %5002 = vmatpush1.msra.mxu0 %v4922
        %5003 = vmatprep.mubr.f32.mxu0 %v4795
        %5004 = vmatmul.mubr.f32.gmra.mrb[0].mxu0 %v4794
        %v5005 = vpop.f32.mrb[0].mxu0
        %v5006 = vadd.f32 0.0, %v5005
        %v5007 = vpop.f32.mrb[0].mxu0
        %5008 = vmatprep.mubr.f32.mxu0 %v4798
        %5009 = vmatmul.mubr.f32.gmra.mrb[0].mxu0 %v4797
        %v5010 = vpop.f32.mrb[0].mxu0
        %v5011 = vadd.f32 0.0, %v5010
        %v5012 = vpop.f32.mrb[0].mxu0
        %5013 = vmatprep.mubr.f32.mxu0 %v4801
        %5014 = vmatmul.mubr.f32.gmra.mrb[0].mxu0 %v4800
        %v5015 = vpop.f32.mrb[0].mxu0
        %v5016 = vadd.f32 0.0, %v5015
        %v5017 = vpop.f32.mrb[0].mxu0
        %5018 = vmatprep.mubr.f32.mxu0 %v4804
        %5019 = vmatmul.mubr.f32.gmra.mrb[0].mxu0 %v4803
        %v5020 = vpop.f32.mrb[0].mxu0
        %v5021 = vadd.f32 0.0, %v5020
        %v5022 = vpop.f32.mrb[0].mxu0
        %5023 = vmatprep.mubr.f32.mxu0 %v4807
        %5024 = vmatmul.mubr.f32.gmra.mrb[0].mxu0 %v4806
        %v5025 = vpop.f32.mrb[0].mxu0
        %v5026 = vadd.f32 0.0, %v5025
        %v5027 = vpop.f32.mrb[0].mxu0
        %5028 = vmatprep.mubr.f32.mxu0 %v4810
        %5029 = vmatmul.mubr.f32.gmra.mrb[0].mxu0 %v4809
        %v5030 = vpop.f32.mrb[0].mxu0
        %v5031 = vadd.f32 0.0, %v5030
        %v5032 = vpop.f32.mrb[0].mxu0
        %5033 = vmatprep.mubr.f32.mxu0 %v4813
        %5034 = vmatmul.mubr.f32.gmra.mrb[0].mxu0 %v4812
        %v5035 = vpop.f32.mrb[0].mxu0
        %v5036 = vadd.f32 0.0, %v5035
        %v5037 = vpop.f32.mrb[0].mxu0
        %5038 = vmatprep.mubr.f32.mxu0 %v4816
        %5039 = vmatmul.mubr.f32.gmra.mrb[0].mxu0 %v4815
        %v5040 = vpop.f32.mrb[0].mxu0
        %v5041 = vadd.f32 0.0, %v5040
        %v5042 = vpop.f32.mrb[0].mxu0
        %5043 = vmatprep.mubr.f32.mxu0 %v4819
        %5044 = vmatmul.mubr.f32.gmra.mrb[0].mxu0 %v4818
        %v5045 = vpop.f32.mrb[0].mxu0
        %v5046 = vadd.f32 0.0, %v5045
        %v5047 = vpop.f32.mrb[0].mxu0
        %5048 = vmatprep.mubr.f32.mxu0 %v4822
        %5049 = vmatmul.mubr.f32.gmra.mrb[0].mxu0 %v4821
        %v5050 = vpop.f32.mrb[0].mxu0
        %v5051 = vadd.f32 0.0, %v5050
        %v5052 = vpop.f32.mrb[0].mxu0
        %5053 = vmatprep.mubr.f32.mxu0 %v4825
        %5054 = vmatmul.mubr.f32.gmra.mrb[0].mxu0 %v4824
        %v5055 = vpop.f32.mrb[0].mxu0
        %v5056 = vadd.f32 0.0, %v5055
        %v5057 = vpop.f32.mrb[0].mxu0
        %5058 = vmatprep.mubr.f32.mxu0 %v4828
        %5059 = vmatmul.mubr.f32.gmra.mrb[0].mxu0 %v4827
        %v5060 = vpop.f32.mrb[0].mxu0
        %v5061 = vadd.f32 0.0, %v5060
        %v5062 = vpop.f32.mrb[0].mxu0
        %5063 = vmatprep.mubr.f32.mxu0 %v4831
        %5064 = vmatmul.mubr.f32.gmra.mrb[0].mxu0 %v4830
        %v5065 = vpop.f32.mrb[0].mxu0
        %v5066 = vadd.f32 0.0, %v5065
        %v5067 = vpop.f32.mrb[0].mxu0
        %5068 = vmatprep.mubr.f32.mxu0 %v4834
        %5069 = vmatmul.mubr.f32.gmra.mrb[0].mxu0 %v4833
        %v5070 = vpop.f32.mrb[0].mxu0
        %v5071 = vadd.f32 0.0, %v5070
        %v5072 = vpop.f32.mrb[0].mxu0
        %5073 = vmatprep.mubr.f32.mxu0 %v4837
        %5074 = vmatmul.mubr.f32.gmra.mrb[0].mxu0 %v4836
        %v5075 = vpop.f32.mrb[0].mxu0
        %v5076 = vadd.f32 0.0, %v5075
        %v5077 = vpop.f32.mrb[0].mxu0
        %5078 = vmatprep.mubr.f32.mxu0 %v4840
        %5079 = vmatmul.mubr.f32.gmra.mrb[0].mxu0 %v4839
        %v5080 = vpop.f32.mrb[0].mxu0
        %v5081 = vadd.f32 0.0, %v5080
        %v5082 = vpop.f32.mrb[0].mxu0
        %5083 = vmatprep.mubr.f32.mxu0 %v4843
        %5084 = vmatmul.mubr.f32.gmra.mrb[0].mxu0 %v4842
        %v5085 = vpop.f32.mrb[0].mxu0
        %v5086 = vadd.f32 0.0, %v5085
        %v5087 = vpop.f32.mrb[0].mxu0
        %5088 = vmatprep.mubr.f32.mxu0 %v4846
        %5089 = vmatmul.mubr.f32.gmra.mrb[0].mxu0 %v4845
        %v5090 = vpop.f32.mrb[0].mxu0
        %v5091 = vadd.f32 0.0, %v5090
        %v5092 = vpop.f32.mrb[0].mxu0
        %5093 = vmatprep.mubr.f32.mxu0 %v4849
        %5094 = vmatmul.mubr.f32.gmra.mrb[0].mxu0 %v4848
        %v5095 = vpop.f32.mrb[0].mxu0
        %v5096 = vadd.f32 0.0, %v5095
        %v5097 = vpop.f32.mrb[0].mxu0
        %5098 = vmatprep.mubr.f32.mxu0 %v4852
        %5099 = vmatmul.mubr.f32.gmra.mrb[0].mxu0 %v4851
        %v5100 = vpop.f32.mrb[0].mxu0
        %v5101 = vadd.f32 0.0, %v5100
        %v5102 = vpop.f32.mrb[0].mxu0
        %5103 = vmatprep.mubr.f32.mxu0 %v4855
        %5104 = vmatmul.mubr.f32.gmra.mrb[0].mxu0 %v4854
        %v5105 = vpop.f32.mrb[0].mxu0
        %v5106 = vadd.f32 0.0, %v5105
        %v5107 = vpop.f32.mrb[0].mxu0
        %5108 = vmatprep.mubr.f32.mxu0 %v4858
        %5109 = vmatmul.mubr.f32.gmra.mrb[0].mxu0 %v4857
        %v5110 = vpop.f32.mrb[0].mxu0
        %v5111 = vadd.f32 0.0, %v5110
        %v5112 = vpop.f32.mrb[0].mxu0
        %5113 = vmatprep.mubr.f32.mxu0 %v4861
        %5114 = vmatmul.mubr.f32.gmra.mrb[0].mxu0 %v4860
        %v5115 = vpop.f32.mrb[0].mxu0
        %v5116 = vadd.f32 0.0, %v5115
        %v5117 = vpop.f32.mrb[0].mxu0
        %5118 = vmatprep.mubr.f32.mxu0 %v4864
        %5119 = vmatmul.mubr.f32.gmra.mrb[0].mxu0 %v4863
        %v5120 = vpop.f32.mrb[0].mxu0
        %v5121 = vadd.f32 0.0, %v5120
        %v5122 = vpop.f32.mrb[0].mxu0
        %5123 = vmatprep.mubr.f32.mxu0 %v4867
        %5124 = vmatmul.mubr.f32.gmra.mrb[0].mxu0 %v4866
        %v5125 = vpop.f32.mrb[0].mxu0
        %v5126 = vadd.f32 0.0, %v5125
        %v5127 = vpop.f32.mrb[0].mxu0
        %5128 = vmatprep.mubr.f32.mxu0 %v4870
        %5129 = vmatmul.mubr.f32.gmra.mrb[0].mxu0 %v4869
        %v5130 = vpop.f32.mrb[0].mxu0
        %v5131 = vadd.f32 0.0, %v5130
        %v5132 = vpop.f32.mrb[0].mxu0
        %5133 = vmatprep.mubr.f32.mxu0 %v4873
        %5134 = vmatmul.mubr.f32.gmra.mrb[0].mxu0 %v4872
        %v5135 = vpop.f32.mrb[0].mxu0
        %v5136 = vadd.f32 0.0, %v5135
        %v5137 = vpop.f32.mrb[0].mxu0
        %5138 = vmatprep.mubr.f32.mxu0 %v4876
        %5139 = vmatmul.mubr.f32.gmra.mrb[0].mxu0 %v4875
        %v5140 = vpop.f32.mrb[0].mxu0
        %v5141 = vadd.f32 0.0, %v5140
        %v5142 = vpop.f32.mrb[0].mxu0
        %5143 = vmatprep.mubr.f32.mxu0 %v4879
        %5144 = vmatmul.mubr.f32.gmra.mrb[0].mxu0 %v4878
        %v5145 = vpop.f32.mrb[0].mxu0
        %v5146 = vadd.f32 0.0, %v5145
        %v5147 = vpop.f32.mrb[0].mxu0
        %5148 = vmatprep.mubr.f32.mxu0 %v4882
        %5149 = vmatmul.mubr.f32.gmra.mrb[0].mxu0 %v4881
        %v5150 = vpop.f32.mrb[0].mxu0
        %v5151 = vadd.f32 0.0, %v5150
        %v5152 = vpop.f32.mrb[0].mxu0
        %5153 = vmatprep.mubr.f32.mxu0 %v4885
        %5154 = vmatmul.mubr.f32.gmra.mrb[0].mxu0 %v4884
        %v5155 = vpop.f32.mrb[0].mxu0
        %v5156 = vadd.f32 0.0, %v5155
        %v5157 = vpop.f32.mrb[0].mxu0
        %5158 = vmatprep.mubr.f32.mxu0 %v4888
        %5159 = vmatmul.mubr.f32.gmra.mrb[0].mxu0 %v4887
        %v5160 = vpop.f32.mrb[0].mxu0
        %v5161 = vadd.f32 0.0, %v5160
        %v5162 = vpop.f32.mrb[0].mxu0
        %5163 = vdwg.mxu0
        %5164 = vmatprep.subr.mxu0 0.0
        %5165 = vmatpush1.msra.mxu0 %v4923
        %5166 = vmatprep.subr.mxu0 0.0
        %5167 = vmatpush1.msra.mxu0 %v4924
        %5168 = vmatprep.subr.mxu0 0.0
        %5169 = vmatpush1.msra.mxu0 %v4925
        %5170 = vmatprep.subr.mxu0 0.0
        %5171 = vmatpush1.msra.mxu0 %v4926
        %5172 = vmatprep.subr.mxu0 0.0
        %5173 = vmatpush1.msra.mxu0 %v4927
        %5174 = vmatprep.subr.mxu0 0.0
        %5175 = vmatpush1.msra.mxu0 %v4928
        %5176 = vmatprep.subr.mxu0 0.0
        %5177 = vmatpush1.msra.mxu0 %v4929
        %5178 = vmatprep.subr.mxu0 0.0
        %5179 = vmatpush1.msra.mxu0 %v4930
        %5180 = vmatprep.subr.mxu0 0.0
        %5181 = vmatpush1.msra.mxu0 %v4931
        %5182 = vmatprep.subr.mxu0 0.0
        %5183 = vmatpush1.msra.mxu0 %v4932
        %5184 = vmatprep.subr.mxu0 0.0
        %5185 = vmatpush1.msra.mxu0 %v4933
        %5186 = vmatprep.subr.mxu0 0.0
        %5187 = vmatpush1.msra.mxu0 %v4934
        %5188 = vmatprep.subr.mxu0 0.0
        %5189 = vmatpush1.msra.mxu0 %v4935
        %5190 = vmatprep.subr.mxu0 0.0
        %5191 = vmatpush1.msra.mxu0 %v4936
        %5192 = vmatprep.subr.mxu0 0.0
        %5193 = vmatpush1.msra.mxu0 %v4937
        %5194 = vmatprep.subr.mxu0 0.0
        %5195 = vmatpush1.msra.mxu0 %v4938
        %5196 = vmatprep.subr.mxu0 0.0
        %5197 = vmatpush1.msra.mxu0 0.0
        %5198 = vmatprep.subr.mxu0 0.0
        %5199 = vmatpush1.msra.mxu0 0.0
        %5200 = vmatprep.subr.mxu0 0.0
        %5201 = vmatpush1.msra.mxu0 0.0
        %5202 = vmatprep.subr.mxu0 0.0
        %5203 = vmatpush1.msra.mxu0 0.0
        %5204 = vmatprep.subr.mxu0 0.0
        %5205 = vmatpush1.msra.mxu0 0.0
        %5206 = vmatprep.subr.mxu0 0.0
        %5207 = vmatpush1.msra.mxu0 0.0
        %5208 = vmatprep.subr.mxu0 0.0
        %5209 = vmatpush1.msra.mxu0 0.0
        %5210 = vmatprep.subr.mxu0 0.0
        %5211 = vmatpush1.msra.mxu0 0.0
        %5212 = vmatprep.subr.mxu0 0.0
        %5213 = vmatpush1.msra.mxu0 0.0
        %5214 = vmatprep.subr.mxu0 0.0
        %5215 = vmatpush1.msra.mxu0 0.0
        %5216 = vmatprep.subr.mxu0 0.0
        %5217 = vmatpush1.msra.mxu0 0.0
        %5218 = vmatprep.subr.mxu0 0.0
        %5219 = vmatpush1.msra.mxu0 0.0
        %5220 = vmatprep.subr.mxu0 0.0
        %5221 = vmatpush1.msra.mxu0 0.0
        %5222 = vmatprep.subr.mxu0 0.0
        %5223 = vmatpush1.msra.mxu0 0.0
        %5224 = vmatprep.subr.mxu0 0.0
        %5225 = vmatpush1.msra.mxu0 0.0
        %5226 = vmatprep.subr.mxu0 0.0
        %5227 = vmatpush1.msra.mxu0 0.0
        %5228 = vmatprep.mubr.f32.mxu0 0.0
        %5229 = vmatmul.mubr.f32.gmra.mrb[0].mxu0 %v4796
        %v5230 = vpop.f32.mrb[0].mxu0
        %v5231 = vadd.f32 %v5006, %v5230
        %v5232 = vpop.f32.mrb[0].mxu0
        %5233 = vmatprep.mubr.f32.mxu0 0.0
        %5234 = vmatmul.mubr.f32.gmra.mrb[0].mxu0 %v4799
        %v5235 = vpop.f32.mrb[0].mxu0
        %v5236 = vadd.f32 %v5011, %v5235
        %v5237 = vpop.f32.mrb[0].mxu0
        %5238 = vmatprep.mubr.f32.mxu0 0.0
        %5239 = vmatmul.mubr.f32.gmra.mrb[0].mxu0 %v4802
        %v5240 = vpop.f32.mrb[0].mxu0
        %v5241 = vadd.f32 %v5016, %v5240
        %v5242 = vpop.f32.mrb[0].mxu0
        %5243 = vmatprep.mubr.f32.mxu0 0.0
        %5244 = vmatmul.mubr.f32.gmra.mrb[0].mxu0 %v4805
        %v5245 = vpop.f32.mrb[0].mxu0
        %v5246 = vadd.f32 %v5021, %v5245
        %v5247 = vpop.f32.mrb[0].mxu0
        %5248 = vmatprep.mubr.f32.mxu0 0.0
        %5249 = vmatmul.mubr.f32.gmra.mrb[0].mxu0 %v4808
        %v5250 = vpop.f32.mrb[0].mxu0
        %v5251 = vadd.f32 %v5026, %v5250
        %v5252 = vpop.f32.mrb[0].mxu0
        %5253 = vmatprep.mubr.f32.mxu0 0.0
        %5254 = vmatmul.mubr.f32.gmra.mrb[0].mxu0 %v4811
        %v5255 = vpop.f32.mrb[0].mxu0
        %v5256 = vadd.f32 %v5031, %v5255
        %v5257 = vpop.f32.mrb[0].mxu0
        %5258 = vmatprep.mubr.f32.mxu0 0.0
        %5259 = vmatmul.mubr.f32.gmra.mrb[0].mxu0 %v4814
        %v5260 = vpop.f32.mrb[0].mxu0
        %v5261 = vadd.f32 %v5036, %v5260
        %v5262 = vpop.f32.mrb[0].mxu0
        %5263 = vmatprep.mubr.f32.mxu0 0.0
        %5264 = vmatmul.mubr.f32.gmra.mrb[0].mxu0 %v4817
        %v5265 = vpop.f32.mrb[0].mxu0
        %v5266 = vadd.f32 %v5041, %v5265
        %v5267 = vpop.f32.mrb[0].mxu0
        %5268 = vmatprep.mubr.f32.mxu0 0.0
        %5269 = vmatmul.mubr.f32.gmra.mrb[0].mxu0 %v4820
        %v5270 = vpop.f32.mrb[0].mxu0
        %v5271 = vadd.f32 %v5046, %v5270
        %v5272 = vpop.f32.mrb[0].mxu0
        %5273 = vmatprep.mubr.f32.mxu0 0.0
        %5274 = vmatmul.mubr.f32.gmra.mrb[0].mxu0 %v4823
        %v5275 = vpop.f32.mrb[0].mxu0
        %v5276 = vadd.f32 %v5051, %v5275
        %v5277 = vpop.f32.mrb[0].mxu0
        %5278 = vmatprep.mubr.f32.mxu0 0.0
        %5279 = vmatmul.mubr.f32.gmra.mrb[0].mxu0 %v4826
        %v5280 = vpop.f32.mrb[0].mxu0
        %v5281 = vadd.f32 %v5056, %v5280
        %v5282 = vpop.f32.mrb[0].mxu0
        %5283 = vmatprep.mubr.f32.mxu0 0.0
        %5284 = vmatmul.mubr.f32.gmra.mrb[0].mxu0 %v4829
        %v5285 = vpop.f32.mrb[0].mxu0
        %v5286 = vadd.f32 %v5061, %v5285
        %v5287 = vpop.f32.mrb[0].mxu0
        %5288 = vmatprep.mubr.f32.mxu0 0.0
        %5289 = vmatmul.mubr.f32.gmra.mrb[0].mxu0 %v4832
        %v5290 = vpop.f32.mrb[0].mxu0
        %v5291 = vadd.f32 %v5066, %v5290
        %v5292 = vpop.f32.mrb[0].mxu0
        %5293 = vmatprep.mubr.f32.mxu0 0.0
        %5294 = vmatmul.mubr.f32.gmra.mrb[0].mxu0 %v4835
        %v5295 = vpop.f32.mrb[0].mxu0
        %v5296 = vadd.f32 %v5071, %v5295
        %v5297 = vpop.f32.mrb[0].mxu0
        %5298 = vmatprep.mubr.f32.mxu0 0.0
        %5299 = vmatmul.mubr.f32.gmra.mrb[0].mxu0 %v4838
        %v5300 = vpop.f32.mrb[0].mxu0
        %v5301 = vadd.f32 %v5076, %v5300
        %v5302 = vpop.f32.mrb[0].mxu0
        %5303 = vmatprep.mubr.f32.mxu0 0.0
        %5304 = vmatmul.mubr.f32.gmra.mrb[0].mxu0 %v4841
        %v5305 = vpop.f32.mrb[0].mxu0
        %v5306 = vadd.f32 %v5081, %v5305
        %v5307 = vpop.f32.mrb[0].mxu0
        %5308 = vmatprep.mubr.f32.mxu0 0.0
        %5309 = vmatmul.mubr.f32.gmra.mrb[0].mxu0 %v4844
        %v5310 = vpop.f32.mrb[0].mxu0
        %v5311 = vadd.f32 %v5086, %v5310
        %v5312 = vpop.f32.mrb[0].mxu0
        %5313 = vmatprep.mubr.f32.mxu0 0.0
        %5314 = vmatmul.mubr.f32.gmra.mrb[0].mxu0 %v4847
        %v5315 = vpop.f32.mrb[0].mxu0
        %v5316 = vadd.f32 %v5091, %v5315
        %v5317 = vpop.f32.mrb[0].mxu0
        %5318 = vmatprep.mubr.f32.mxu0 0.0
        %5319 = vmatmul.mubr.f32.gmra.mrb[0].mxu0 %v4850
        %v5320 = vpop.f32.mrb[0].mxu0
        %v5321 = vadd.f32 %v5096, %v5320
        %v5322 = vpop.f32.mrb[0].mxu0
        %5323 = vmatprep.mubr.f32.mxu0 0.0
        %5324 = vmatmul.mubr.f32.gmra.mrb[0].mxu0 %v4853
        %v5325 = vpop.f32.mrb[0].mxu0
        %v5326 = vadd.f32 %v5101, %v5325
        %v5327 = vpop.f32.mrb[0].mxu0
        %5328 = vmatprep.mubr.f32.mxu0 0.0
        %5329 = vmatmul.mubr.f32.gmra.mrb[0].mxu0 %v4856
        %v5330 = vpop.f32.mrb[0].mxu0
        %v5331 = vadd.f32 %v5106, %v5330
        %v5332 = vpop.f32.mrb[0].mxu0
        %5333 = vmatprep.mubr.f32.mxu0 0.0
        %5334 = vmatmul.mubr.f32.gmra.mrb[0].mxu0 %v4859
        %v5335 = vpop.f32.mrb[0].mxu0
        %v5336 = vadd.f32 %v5111, %v5335
        %v5337 = vpop.f32.mrb[0].mxu0
        %5338 = vmatprep.mubr.f32.mxu0 0.0
        %5339 = vmatmul.mubr.f32.gmra.mrb[0].mxu0 %v4862
        %v5340 = vpop.f32.mrb[0].mxu0
        %v5341 = vadd.f32 %v5116, %v5340
        %v5342 = vpop.f32.mrb[0].mxu0
        %5343 = vmatprep.mubr.f32.mxu0 0.0
        %5344 = vmatmul.mubr.f32.gmra.mrb[0].mxu0 %v4865
        %v5345 = vpop.f32.mrb[0].mxu0
        %v5346 = vadd.f32 %v5121, %v5345
        %v5347 = vpop.f32.mrb[0].mxu0
        %5348 = vmatprep.mubr.f32.mxu0 0.0
        %5349 = vmatmul.mubr.f32.gmra.mrb[0].mxu0 %v4868
        %v5350 = vpop.f32.mrb[0].mxu0
        %v5351 = vadd.f32 %v5126, %v5350
        %v5352 = vpop.f32.mrb[0].mxu0
        %5353 = vmatprep.mubr.f32.mxu0 0.0
        %5354 = vmatmul.mubr.f32.gmra.mrb[0].mxu0 %v4871
        %v5355 = vpop.f32.mrb[0].mxu0
        %v5356 = vadd.f32 %v5131, %v5355
        %v5357 = vpop.f32.mrb[0].mxu0
        %5358 = vmatprep.mubr.f32.mxu0 0.0
        %5359 = vmatmul.mubr.f32.gmra.mrb[0].mxu0 %v4874
        %v5360 = vpop.f32.mrb[0].mxu0
        %v5361 = vadd.f32 %v5136, %v5360
        %v5362 = vpop.f32.mrb[0].mxu0
        %5363 = vmatprep.mubr.f32.mxu0 0.0
        %5364 = vmatmul.mubr.f32.gmra.mrb[0].mxu0 %v4877
        %v5365 = vpop.f32.mrb[0].mxu0
        %v5366 = vadd.f32 %v5141, %v5365
        %v5367 = vpop.f32.mrb[0].mxu0
        %5368 = vmatprep.mubr.f32.mxu0 0.0
        %5369 = vmatmul.mubr.f32.gmra.mrb[0].mxu0 %v4880
        %v5370 = vpop.f32.mrb[0].mxu0
        %v5371 = vadd.f32 %v5146, %v5370
        %v5372 = vpop.f32.mrb[0].mxu0
        %5373 = vmatprep.mubr.f32.mxu0 0.0
        %5374 = vmatmul.mubr.f32.gmra.mrb[0].mxu0 %v4883
        %v5375 = vpop.f32.mrb[0].mxu0
        %v5376 = vadd.f32 %v5151, %v5375
        %v5377 = vpop.f32.mrb[0].mxu0
        %5378 = vmatprep.mubr.f32.mxu0 0.0
        %5379 = vmatmul.mubr.f32.gmra.mrb[0].mxu0 %v4886
        %v5380 = vpop.f32.mrb[0].mxu0
        %v5381 = vadd.f32 %v5156, %v5380
        %v5382 = vpop.f32.mrb[0].mxu0
        %5383 = vmatprep.mubr.f32.mxu0 0.0
        %5384 = vmatmul.mubr.f32.gmra.mrb[0].mxu0 %v4889
        %v5385 = vpop.f32.mrb[0].mxu0
        %v5386 = vadd.f32 %v5161, %v5385
        %v5387 = vpop.f32.mrb[0].mxu0
        %5388 = vdwg.mxu0
        %v5389 = vld [vmem:[#allocation3] sm:$0xff]
        %v5390 = vld [vmem:[#allocation3 + $0x8] sm:$0xff]
        %v5391 = vld [vmem:[#allocation3 + $0x10] sm:$0xff]
        %v5392 = vld [vmem:[#allocation3 + $0x18] sm:$0xff]
        %v5393 = vld [vmem:[#allocation3 + $0x20] sm:$0xff]
        %v5394 = vld [vmem:[#allocation3 + $0x28] sm:$0xff]
        %v5395 = vld [vmem:[#allocation3 + $0x30] sm:$0xff]
        %v5396 = vld [vmem:[#allocation3 + $0x38] sm:$0xff]
        %v5397 = vld [vmem:[#allocation3 + $0x40] sm:$0xff]
        %v5398 = vld [vmem:[#allocation3 + $0x48] sm:$0xff]
        %v5399 = vld [vmem:[#allocation3 + $0x50] sm:$0xff]
        %v5400 = vld [vmem:[#allocation3 + $0x58] sm:$0xff]
        %v5401 = vld [vmem:[#allocation3 + $0x60] sm:$0xff]
        %v5402 = vld [vmem:[#allocation3 + $0x68] sm:$0xff]
        %v5403 = vld [vmem:[#allocation3 + $0x70] sm:$0xff]
        %v5404 = vld [vmem:[#allocation3 + $0x78] sm:$0xff]
        %v5405 = vld [vmem:[#allocation3 + $0x80] sm:$0xff]
        %v5406 = vld [vmem:[#allocation3 + $0x88] sm:$0xff]
        %v5407 = vld [vmem:[#allocation3 + $0x90] sm:$0xff]
        %v5408 = vld [vmem:[#allocation3 + $0x98] sm:$0xff]
        %v5409 = vld [vmem:[#allocation3 + $0xa0] sm:$0xff]
        %v5410 = vld [vmem:[#allocation3 + $0xa8] sm:$0xff]
        %v5411 = vld [vmem:[#allocation3 + $0xb0] sm:$0xff]
        %v5412 = vld [vmem:[#allocation3 + $0xb8] sm:$0xff]
        %v5413 = vld [vmem:[#allocation3 + $0xc0] sm:$0xff]
        %v5414 = vld [vmem:[#allocation3 + $0xc8] sm:$0xff]
        %v5415 = vld [vmem:[#allocation3 + $0xd0] sm:$0xff]
        %v5416 = vld [vmem:[#allocation3 + $0xd8] sm:$0xff]
        %v5417 = vld [vmem:[#allocation3 + $0xe0] sm:$0xff]
        %v5418 = vld [vmem:[#allocation3 + $0xe8] sm:$0xff]
        %v5419 = vld [vmem:[#allocation3 + $0xf0] sm:$0xff]
        %v5420 = vld [vmem:[#allocation3 + $0xf8] sm:$0xff]
        %v5421 = vadd.f32 %v5389, %v5231
        %v5422 = vadd.f32 %v5390, %v5236
        %v5423 = vadd.f32 %v5391, %v5241
        %v5424 = vadd.f32 %v5392, %v5246
        %v5425 = vadd.f32 %v5393, %v5251
        %v5426 = vadd.f32 %v5394, %v5256
        %v5427 = vadd.f32 %v5395, %v5261
        %v5428 = vadd.f32 %v5396, %v5266
        %v5429 = vadd.f32 %v5397, %v5271
        %v5430 = vadd.f32 %v5398, %v5276
        %v5431 = vadd.f32 %v5399, %v5281
        %v5432 = vadd.f32 %v5400, %v5286
        %v5433 = vadd.f32 %v5401, %v5291
        %v5434 = vadd.f32 %v5402, %v5296
        %v5435 = vadd.f32 %v5403, %v5301
        %v5436 = vadd.f32 %v5404, %v5306
        %v5437 = vadd.f32 %v5405, %v5311
        %v5438 = vadd.f32 %v5406, %v5316
        %v5439 = vadd.f32 %v5407, %v5321
        %v5440 = vadd.f32 %v5408, %v5326
        %v5441 = vadd.f32 %v5409, %v5331
        %v5442 = vadd.f32 %v5410, %v5336
        %v5443 = vadd.f32 %v5411, %v5341
        %v5444 = vadd.f32 %v5412, %v5346
        %v5445 = vadd.f32 %v5413, %v5351
        %v5446 = vadd.f32 %v5414, %v5356
        %v5447 = vadd.f32 %v5415, %v5361
        %v5448 = vadd.f32 %v5416, %v5366
        %v5449 = vadd.f32 %v5417, %v5371
        %v5450 = vadd.f32 %v5418, %v5376
        %v5451 = vadd.f32 %v5419, %v5381
        %v5452 = vadd.f32 %v5420, %v5386
        %5453 = vst [vmem:[#allocation3] sm:$0xff] %v5421
        %5454 = vst [vmem:[#allocation3 + $0x8] sm:$0xff] %v5422
        %5455 = vst [vmem:[#allocation3 + $0x10] sm:$0xff] %v5423
        %5456 = vst [vmem:[#allocation3 + $0x18] sm:$0xff] %v5424
        %5457 = vst [vmem:[#allocation3 + $0x20] sm:$0xff] %v5425
        %5458 = vst [vmem:[#allocation3 + $0x28] sm:$0xff] %v5426
        %5459 = vst [vmem:[#allocation3 + $0x30] sm:$0xff] %v5427
        %5460 = vst [vmem:[#allocation3 + $0x38] sm:$0xff] %v5428
        %5461 = vst [vmem:[#allocation3 + $0x40] sm:$0xff] %v5429
        %5462 = vst [vmem:[#allocation3 + $0x48] sm:$0xff] %v5430
        %5463 = vst [vmem:[#allocation3 + $0x50] sm:$0xff] %v5431
        %5464 = vst [vmem:[#allocation3 + $0x58] sm:$0xff] %v5432
        %5465 = vst [vmem:[#allocation3 + $0x60] sm:$0xff] %v5433
        %5466 = vst [vmem:[#allocation3 + $0x68] sm:$0xff] %v5434
        %5467 = vst [vmem:[#allocation3 + $0x70] sm:$0xff] %v5435
        %5468 = vst [vmem:[#allocation3 + $0x78] sm:$0xff] %v5436
        %5469 = vst [vmem:[#allocation3 + $0x80] sm:$0xff] %v5437
        %5470 = vst [vmem:[#allocation3 + $0x88] sm:$0xff] %v5438
        %5471 = vst [vmem:[#allocation3 + $0x90] sm:$0xff] %v5439
        %5472 = vst [vmem:[#allocation3 + $0x98] sm:$0xff] %v5440
        %5473 = vst [vmem:[#allocation3 + $0xa0] sm:$0xff] %v5441
        %5474 = vst [vmem:[#allocation3 + $0xa8] sm:$0xff] %v5442
        %5475 = vst [vmem:[#allocation3 + $0xb0] sm:$0xff] %v5443
        %5476 = vst [vmem:[#allocation3 + $0xb8] sm:$0xff] %v5444
        %5477 = vst [vmem:[#allocation3 + $0xc0] sm:$0xff] %v5445
        %5478 = vst [vmem:[#allocation3 + $0xc8] sm:$0xff] %v5446
        %5479 = vst [vmem:[#allocation3 + $0xd0] sm:$0xff] %v5447
        %5480 = vst [vmem:[#allocation3 + $0xd8] sm:$0xff] %v5448
        %5481 = vst [vmem:[#allocation3 + $0xe0] sm:$0xff] %v5449
        %5482 = vst [vmem:[#allocation3 + $0xe8] sm:$0xff] %v5450
        %5483 = vst [vmem:[#allocation3 + $0xf0] sm:$0xff] %v5451
        %5484 = vst [vmem:[#allocation3 + $0xf8] sm:$0xff] %v5452
        %v5485 = vld [vmem:[%s5] sm:$0x1]
        %v5486 = vld [vmem:[%s6] sm:$0x1]
        %v5487 = vld [vmem:[#allocation3] sm:$0xff]
        %v5488 = vld [vmem:[#allocation3 + $0x8] sm:$0xff]
        %v5489 = vld [vmem:[#allocation3 + $0x10] sm:$0xff]
        %v5490 = vld [vmem:[#allocation3 + $0x18] sm:$0xff]
        %v5491 = vld [vmem:[#allocation3 + $0x20] sm:$0xff]
        %v5492 = vld [vmem:[#allocation3 + $0x28] sm:$0xff]
        %v5493 = vld [vmem:[#allocation3 + $0x30] sm:$0xff]
        %v5494 = vld [vmem:[#allocation3 + $0x38] sm:$0xff]
        %v5495 = vld [vmem:[#allocation3 + $0x40] sm:$0xff]
        %v5496 = vld [vmem:[#allocation3 + $0x48] sm:$0xff]
        %v5497 = vld [vmem:[#allocation3 + $0x50] sm:$0xff]
        %v5498 = vld [vmem:[#allocation3 + $0x58] sm:$0xff]
        %v5499 = vld [vmem:[#allocation3 + $0x60] sm:$0xff]
        %v5500 = vld [vmem:[#allocation3 + $0x68] sm:$0xff]
        %v5501 = vld [vmem:[#allocation3 + $0x70] sm:$0xff]
        %v5502 = vld [vmem:[#allocation3 + $0x78] sm:$0xff]
        %v5503 = vld [vmem:[#allocation3 + $0x80] sm:$0xff]
        %v5504 = vld [vmem:[#allocation3 + $0x88] sm:$0xff]
        %v5505 = vld [vmem:[#allocation3 + $0x90] sm:$0xff]
        %v5506 = vld [vmem:[#allocation3 + $0x98] sm:$0xff]
        %v5507 = vld [vmem:[#allocation3 + $0xa0] sm:$0xff]
        %v5508 = vld [vmem:[#allocation3 + $0xa8] sm:$0xff]
        %v5509 = vld [vmem:[#allocation3 + $0xb0] sm:$0xff]
        %v5510 = vld [vmem:[#allocation3 + $0xb8] sm:$0xff]
        %v5511 = vld [vmem:[#allocation3 + $0xc0] sm:$0xff]
        %v5512 = vld [vmem:[#allocation3 + $0xc8] sm:$0xff]
        %v5513 = vld [vmem:[#allocation3 + $0xd0] sm:$0xff]
        %v5514 = vld [vmem:[#allocation3 + $0xd8] sm:$0xff]
        %v5515 = vld [vmem:[#allocation3 + $0xe0] sm:$0xff]
        %v5516 = vld [vmem:[#allocation3 + $0xe8] sm:$0xff]
        %v5517 = vld [vmem:[#allocation3 + $0xf0] sm:$0xff]
        %v5518 = vld [vmem:[#allocation3 + $0xf8] sm:$0xff]
        %v5519 = vadd.f32 %v5487, %v5488
        %v5520 = vadd.f32 %v5519, %v5489
        %v5521 = vadd.f32 %v5520, %v5490
        %v5522 = vadd.f32 %v5521, %v5491
        %v5523 = vadd.f32 %v5522, %v5492
        %v5524 = vadd.f32 %v5523, %v5493
        %v5525 = vadd.f32 %v5524, %v5494
        %v5526 = vadd.f32 %v5525, %v5495
        %v5527 = vadd.f32 %v5526, %v5496
        %v5528 = vadd.f32 %v5527, %v5497
        %v5529 = vadd.f32 %v5528, %v5498
        %v5530 = vadd.f32 %v5529, %v5499
        %v5531 = vadd.f32 %v5530, %v5500
        %v5532 = vadd.f32 %v5531, %v5501
        %v5533 = vadd.f32 %v5532, %v5502
        %v5534 = vadd.f32 %v5533, %v5503
        %v5535 = vadd.f32 %v5534, %v5504
        %v5536 = vadd.f32 %v5535, %v5505
        %v5537 = vadd.f32 %v5536, %v5506
        %v5538 = vadd.f32 %v5537, %v5507
        %v5539 = vadd.f32 %v5538, %v5508
        %v5540 = vadd.f32 %v5539, %v5509
        %v5541 = vadd.f32 %v5540, %v5510
        %v5542 = vadd.f32 %v5541, %v5511
        %v5543 = vadd.f32 %v5542, %v5512
        %v5544 = vadd.f32 %v5543, %v5513
        %v5545 = vadd.f32 %v5544, %v5514
        %v5546 = vadd.f32 %v5545, %v5515
        %v5547 = vadd.f32 %v5546, %v5516
        %v5548 = vadd.f32 %v5547, %v5517
        %v5549 = vadd.f32 %v5548, %v5518
        %v5550 = vrot.slane %v5549, 4
        %v5551 = vadd.f32 %v5549, %v5550
        %v5552 = vrot.slane %v5551, 2
        %v5553 = vadd.f32 %v5551, %v5552
        %v5554 = vrot.slane %v5553, 1
        %v5555 = vadd.f32 %v5553, %v5554
        %v5556 = vadd.f32 %v5555, 0.0
        %v5557 = vmul.f32 %v5487, %v5487
        %v5558 = vmul.f32 %v5488, %v5488
        %v5559 = vmul.f32 %v5489, %v5489
        %v5560 = vmul.f32 %v5490, %v5490
        %v5561 = vmul.f32 %v5491, %v5491
        %v5562 = vmul.f32 %v5492, %v5492
        %v5563 = vmul.f32 %v5493, %v5493
        %v5564 = vmul.f32 %v5494, %v5494
        %v5565 = vmul.f32 %v5495, %v5495
        %v5566 = vmul.f32 %v5496, %v5496
        %v5567 = vmul.f32 %v5497, %v5497
        %v5568 = vmul.f32 %v5498, %v5498
        %v5569 = vmul.f32 %v5499, %v5499
        %v5570 = vmul.f32 %v5500, %v5500
        %v5571 = vmul.f32 %v5501, %v5501
        %v5572 = vmul.f32 %v5502, %v5502
        %v5573 = vmul.f32 %v5503, %v5503
        %v5574 = vmul.f32 %v5504, %v5504
        %v5575 = vmul.f32 %v5505, %v5505
        %v5576 = vmul.f32 %v5506, %v5506
        %v5577 = vmul.f32 %v5507, %v5507
        %v5578 = vmul.f32 %v5508, %v5508
        %v5579 = vmul.f32 %v5509, %v5509
        %v5580 = vmul.f32 %v5510, %v5510
        %v5581 = vmul.f32 %v5511, %v5511
        %v5582 = vmul.f32 %v5512, %v5512
        %v5583 = vmul.f32 %v5513, %v5513
        %v5584 = vmul.f32 %v5514, %v5514
        %v5585 = vmul.f32 %v5515, %v5515
        %v5586 = vmul.f32 %v5516, %v5516
        %v5587 = vmul.f32 %v5517, %v5517
        %v5588 = vmul.f32 %v5518, %v5518
        %v5589 = vadd.f32 %v5557, %v5558
        %v5590 = vadd.f32 %v5589, %v5559
        %v5591 = vadd.f32 %v5590, %v5560
        %v5592 = vadd.f32 %v5591, %v5561
        %v5593 = vadd.f32 %v5592, %v5562
        %v5594 = vadd.f32 %v5593, %v5563
        %v5595 = vadd.f32 %v5594, %v5564
        %v5596 = vadd.f32 %v5595, %v5565
        %v5597 = vadd.f32 %v5596, %v5566
        %v5598 = vadd.f32 %v5597, %v5567
        %v5599 = vadd.f32 %v5598, %v5568
        %v5600 = vadd.f32 %v5599, %v5569
        %v5601 = vadd.f32 %v5600, %v5570
        %v5602 = vadd.f32 %v5601, %v5571
        %v5603 = vadd.f32 %v5602, %v5572
        %v5604 = vadd.f32 %v5603, %v5573
        %v5605 = vadd.f32 %v5604, %v5574
        %v5606 = vadd.f32 %v5605, %v5575
        %v5607 = vadd.f32 %v5606, %v5576
        %v5608 = vadd.f32 %v5607, %v5577
        %v5609 = vadd.f32 %v5608, %v5578
        %v5610 = vadd.f32 %v5609, %v5579
        %v5611 = vadd.f32 %v5610, %v5580
        %v5612 = vadd.f32 %v5611, %v5581
        %v5613 = vadd.f32 %v5612, %v5582
        %v5614 = vadd.f32 %v5613, %v5583
        %v5615 = vadd.f32 %v5614, %v5584
        %v5616 = vadd.f32 %v5615, %v5585
        %v5617 = vadd.f32 %v5616, %v5586
        %v5618 = vadd.f32 %v5617, %v5587
        %v5619 = vadd.f32 %v5618, %v5588
        %v5620 = vrot.slane %v5619, 4
        %v5621 = vadd.f32 %v5619, %v5620
        %v5622 = vrot.slane %v5621, 2
        %v5623 = vadd.f32 %v5621, %v5622
        %v5624 = vrot.slane %v5623, 1
        %v5625 = vadd.f32 %v5623, %v5624
        %v5626 = vadd.f32 %v5625, 0.0
        %v5627 = vmul.f32 %v5556, 0.00390625
        %v5628 = vmul.f32 %v5626, 0.00390625
        %v5629 = vmul.f32 %v5627, %v5627
        %v5630 = vsub.f32 %v5628, %v5629
        %v5631 = vmax.f32 %v5630, 0.0
        %v5632 = vadd.f32 %v5631, 1e-05
        %v5633 = vrsqrt.pop %v5632
        %v5634 = vmul.f32 %v5633, %v5485
        %v5635 = vmul.f32 %v5627, %v5634
        %v5636 = vsub.f32 %v5486, %v5635
        %v5637 = vld [vmem:[%s287] sm:$0xff]
        %v5638 = vld [vmem:[%s287 + $0x8] sm:$0xff]
        %v5639 = vld [vmem:[%s287 + $0x10] sm:$0xff]
        %v5640 = vld [vmem:[%s287 + $0x18] sm:$0xff]
        %v5641 = vld [vmem:[%s287 + $0x20] sm:$0xff]
        %v5642 = vld [vmem:[%s287 + $0x28] sm:$0xff]
        %v5643 = vld [vmem:[%s287 + $0x30] sm:$0xff]
        %v5644 = vld [vmem:[%s287 + $0x38] sm:$0xff]
        %v5645 = vld [vmem:[%s287 + $0x40] sm:$0xff]
        %v5646 = vld [vmem:[%s287 + $0x48] sm:$0xff]
        %v5647 = vld [vmem:[%s287 + $0x50] sm:$0xff]
        %v5648 = vld [vmem:[%s287 + $0x58] sm:$0xff]
        %v5649 = vld [vmem:[%s287 + $0x60] sm:$0xff]
        %v5650 = vld [vmem:[%s287 + $0x68] sm:$0xff]
        %v5651 = vld [vmem:[%s287 + $0x70] sm:$0xff]
        %v5652 = vld [vmem:[%s287 + $0x78] sm:$0xff]
        %v5653 = vld [vmem:[%s287 + $0x80] sm:$0xff]
        %v5654 = vld [vmem:[%s287 + $0x88] sm:$0xff]
        %v5655 = vld [vmem:[%s287 + $0x90] sm:$0xff]
        %v5656 = vld [vmem:[%s287 + $0x98] sm:$0xff]
        %v5657 = vld [vmem:[%s287 + $0xa0] sm:$0xff]
        %v5658 = vld [vmem:[%s287 + $0xa8] sm:$0xff]
        %v5659 = vld [vmem:[%s287 + $0xb0] sm:$0xff]
        %v5660 = vld [vmem:[%s287 + $0xb8] sm:$0xff]
        %v5661 = vld [vmem:[%s287 + $0xc0] sm:$0xff]
        %v5662 = vld [vmem:[%s287 + $0xc8] sm:$0xff]
        %v5663 = vld [vmem:[%s287 + $0xd0] sm:$0xff]
        %v5664 = vld [vmem:[%s287 + $0xd8] sm:$0xff]
        %v5665 = vld [vmem:[%s287 + $0xe0] sm:$0xff]
        %v5666 = vld [vmem:[%s287 + $0xe8] sm:$0xff]
        %v5667 = vld [vmem:[%s287 + $0xf0] sm:$0xff]
        %v5668 = vld [vmem:[%s287 + $0xf8] sm:$0xff]
        %v5669 = vlaneseq
        %v5670 = vshrl.u32 %v5669, 7
        %v5671 = vsub.s32 0, %v5670
        %v5672 = vrot.slane %v5634, %v5671
        %v5673 = vmul.f32 %v5487, %v5672
        %v5674 = vmul.f32 %v5488, %v5672
        %v5675 = vmul.f32 %v5489, %v5672
        %v5676 = vmul.f32 %v5490, %v5672
        %v5677 = vmul.f32 %v5491, %v5672
        %v5678 = vmul.f32 %v5492, %v5672
        %v5679 = vmul.f32 %v5493, %v5672
        %v5680 = vmul.f32 %v5494, %v5672
        %v5681 = vmul.f32 %v5495, %v5672
        %v5682 = vmul.f32 %v5496, %v5672
        %v5683 = vmul.f32 %v5497, %v5672
        %v5684 = vmul.f32 %v5498, %v5672
        %v5685 = vmul.f32 %v5499, %v5672
        %v5686 = vmul.f32 %v5500, %v5672
        %v5687 = vmul.f32 %v5501, %v5672
        %v5688 = vmul.f32 %v5502, %v5672
        %v5689 = vmul.f32 %v5503, %v5672
        %v5690 = vmul.f32 %v5504, %v5672
        %v5691 = vmul.f32 %v5505, %v5672
        %v5692 = vmul.f32 %v5506, %v5672
        %v5693 = vmul.f32 %v5507, %v5672
        %v5694 = vmul.f32 %v5508, %v5672
        %v5695 = vmul.f32 %v5509, %v5672
        %v5696 = vmul.f32 %v5510, %v5672
        %v5697 = vmul.f32 %v5511, %v5672
        %v5698 = vmul.f32 %v5512, %v5672
        %v5699 = vmul.f32 %v5513, %v5672
        %v5700 = vmul.f32 %v5514, %v5672
        %v5701 = vmul.f32 %v5515, %v5672
        %v5702 = vmul.f32 %v5516, %v5672
        %v5703 = vmul.f32 %v5517, %v5672
        %v5704 = vmul.f32 %v5518, %v5672
        %v5706 = vlaneseq
        %v5707 = vshrl.u32 %v5706, 7
        %v5708 = vsub.s32 0, %v5707
        %v5709 = vrot.slane %v5636, %v5708
        %v5711 = vadd.f32 %v5673, %v5709
        %v5712 = vadd.f32 %v5674, %v5709
        %v5713 = vadd.f32 %v5675, %v5709
        %v5714 = vadd.f32 %v5676, %v5709
        %v5715 = vadd.f32 %v5677, %v5709
        %v5716 = vadd.f32 %v5678, %v5709
        %v5717 = vadd.f32 %v5679, %v5709
        %v5718 = vadd.f32 %v5680, %v5709
        %v5719 = vadd.f32 %v5681, %v5709
        %v5720 = vadd.f32 %v5682, %v5709
        %v5721 = vadd.f32 %v5683, %v5709
        %v5722 = vadd.f32 %v5684, %v5709
        %v5723 = vadd.f32 %v5685, %v5709
        %v5724 = vadd.f32 %v5686, %v5709
        %v5725 = vadd.f32 %v5687, %v5709
        %v5726 = vadd.f32 %v5688, %v5709
        %v5727 = vadd.f32 %v5689, %v5709
        %v5728 = vadd.f32 %v5690, %v5709
        %v5729 = vadd.f32 %v5691, %v5709
        %v5730 = vadd.f32 %v5692, %v5709
        %v5731 = vadd.f32 %v5693, %v5709
        %v5732 = vadd.f32 %v5694, %v5709
        %v5733 = vadd.f32 %v5695, %v5709
        %v5734 = vadd.f32 %v5696, %v5709
        %v5735 = vadd.f32 %v5697, %v5709
        %v5736 = vadd.f32 %v5698, %v5709
        %v5737 = vadd.f32 %v5699, %v5709
        %v5738 = vadd.f32 %v5700, %v5709
        %v5739 = vadd.f32 %v5701, %v5709
        %v5740 = vadd.f32 %v5702, %v5709
        %v5741 = vadd.f32 %v5703, %v5709
        %v5742 = vadd.f32 %v5704, %v5709
        %v5743 = vadd.f32 %v5711, %v5637
        %v5744 = vadd.f32 %v5712, %v5638
        %v5745 = vadd.f32 %v5713, %v5639
        %v5746 = vadd.f32 %v5714, %v5640
        %v5747 = vadd.f32 %v5715, %v5641
        %v5748 = vadd.f32 %v5716, %v5642
        %v5749 = vadd.f32 %v5717, %v5643
        %v5750 = vadd.f32 %v5718, %v5644
        %v5751 = vadd.f32 %v5719, %v5645
        %v5752 = vadd.f32 %v5720, %v5646
        %v5753 = vadd.f32 %v5721, %v5647
        %v5754 = vadd.f32 %v5722, %v5648
        %v5755 = vadd.f32 %v5723, %v5649
        %v5756 = vadd.f32 %v5724, %v5650
        %v5757 = vadd.f32 %v5725, %v5651
        %v5758 = vadd.f32 %v5726, %v5652
        %v5759 = vadd.f32 %v5727, %v5653
        %v5760 = vadd.f32 %v5728, %v5654
        %v5761 = vadd.f32 %v5729, %v5655
        %v5762 = vadd.f32 %v5730, %v5656
        %v5763 = vadd.f32 %v5731, %v5657
        %v5764 = vadd.f32 %v5732, %v5658
        %v5765 = vadd.f32 %v5733, %v5659
        %v5766 = vadd.f32 %v5734, %v5660
        %v5767 = vadd.f32 %v5735, %v5661
        %v5768 = vadd.f32 %v5736, %v5662
        %v5769 = vadd.f32 %v5737, %v5663
        %v5770 = vadd.f32 %v5738, %v5664
        %v5771 = vadd.f32 %v5739, %v5665
        %v5772 = vadd.f32 %v5740, %v5666
        %v5773 = vadd.f32 %v5741, %v5667
        %v5774 = vadd.f32 %v5742, %v5668
        %5775 = vst [vmem:[%s325] sm:$0xff] %v5743
        %5776 = vst [vmem:[%s325 + $0x8] sm:$0xff] %v5744
        %5777 = vst [vmem:[%s325 + $0x10] sm:$0xff] %v5745
        %5778 = vst [vmem:[%s325 + $0x18] sm:$0xff] %v5746
        %5779 = vst [vmem:[%s325 + $0x20] sm:$0xff] %v5747
        %5780 = vst [vmem:[%s325 + $0x28] sm:$0xff] %v5748
        %5781 = vst [vmem:[%s325 + $0x30] sm:$0xff] %v5749
        %5782 = vst [vmem:[%s325 + $0x38] sm:$0xff] %v5750
        %5783 = vst [vmem:[%s325 + $0x40] sm:$0xff] %v5751
        %5784 = vst [vmem:[%s325 + $0x48] sm:$0xff] %v5752
        %5785 = vst [vmem:[%s325 + $0x50] sm:$0xff] %v5753
        %5786 = vst [vmem:[%s325 + $0x58] sm:$0xff] %v5754
        %5787 = vst [vmem:[%s325 + $0x60] sm:$0xff] %v5755
        %5788 = vst [vmem:[%s325 + $0x68] sm:$0xff] %v5756
        %5789 = vst [vmem:[%s325 + $0x70] sm:$0xff] %v5757
        %5790 = vst [vmem:[%s325 + $0x78] sm:$0xff] %v5758
        %5791 = vst [vmem:[%s325 + $0x80] sm:$0xff] %v5759
        %5792 = vst [vmem:[%s325 + $0x88] sm:$0xff] %v5760
        %5793 = vst [vmem:[%s325 + $0x90] sm:$0xff] %v5761
        %5794 = vst [vmem:[%s325 + $0x98] sm:$0xff] %v5762
        %5795 = vst [vmem:[%s325 + $0xa0] sm:$0xff] %v5763
        %5796 = vst [vmem:[%s325 + $0xa8] sm:$0xff] %v5764
        %5797 = vst [vmem:[%s325 + $0xb0] sm:$0xff] %v5765
        %5798 = vst [vmem:[%s325 + $0xb8] sm:$0xff] %v5766
        %5799 = vst [vmem:[%s325 + $0xc0] sm:$0xff] %v5767
        %5800 = vst [vmem:[%s325 + $0xc8] sm:$0xff] %v5768
        %5801 = vst [vmem:[%s325 + $0xd0] sm:$0xff] %v5769
        %5802 = vst [vmem:[%s325 + $0xd8] sm:$0xff] %v5770
        %5803 = vst [vmem:[%s325 + $0xe0] sm:$0xff] %v5771
        %5804 = vst [vmem:[%s325 + $0xe8] sm:$0xff] %v5772
        %5805 = vst [vmem:[%s325 + $0xf0] sm:$0xff] %v5773
        %5806 = vst [vmem:[%s325 + $0xf8] sm:$0xff] %v5774
        %s5807 = sand.u32 %s185, 1
        %s5808 = scalar_lea.sflag [#allocation7], %s5807
        %s5809 = sand.u32 %s185, 1
        %s5810 = smul.addr %s5809, 256
        %s5811 = scalar_lea.vmem [#allocation11], %s5810
        // Predicated region
        $region61: #{tpu_custom_call.1} parent=47 // pred_check
          %p5812 = pneg %p195
        $region62: #{tpu_custom_call.1} parent=47 // pred_check_branch
          %5814 = sbr.rel (%p5812) target = $region64
        $region63: #{tpu_custom_call.1} parent=47 // pred_region
          %s5816 = ssub.s32 4096, 4096
          %5817 = vsyncadd %s5808, %s5816
          %s5818 = smul.addr %s25, 32
          %s5819 = smul.addr %s5818, 128
          %s5820 = scalar_lea.hbm %s7, %s5819
          %s5821 = sshll.u32 %s5811, 4
          %s5822 = int_to_ptr.vmem [resolvable:$true] %s5821
          %5827 = dma.vmem_to_hbm [thread:$0]  %s5822, 4096, %s5820, %s5808, 128, 128, 8
        $region64: #{tpu_custom_call.1} parent=47 // pred_fallthru
          _
      $region48: #{tpu_custom_call.1} parent=5 // pred_fallthru
        _
      %p5828 = scmp.le.s32.totalorder 2, %s20
      // Predicated region
      $region65: #{tpu_custom_call.1} parent=5 // pred_check
        %p5829 = pneg %p5828
      $region66: #{tpu_custom_call.1} parent=5 // pred_check_branch
        %5831 = sbr.rel (%p5829) target = $region68
      $region67: #{tpu_custom_call.1} parent=5 // pred_region
        %s5832 = ssub.s32 %s20, 2
        // Predicated region
        $region69: #{tpu_custom_call.1} parent=67 // pred_check
          %p5833 = pneg %p201
        $region70: #{tpu_custom_call.1} parent=67 // pred_check_branch
          %5835 = sbr.rel (%p5833) target = $region72
        $region71: #{tpu_custom_call.1} parent=67 // pred_region
          %s5836 = sand.u32 %s186, 1
          %s5837 = scalar_lea.sflag [#allocation7], %s5836
          %s5838 = sand.u32 %s186, 1
          %s5839 = smul.addr %s5838, 256
          %s5840 = scalar_lea.vmem [#allocation11], %s5839
          %5841 = dma.done %s5837, 4096
        $region72: #{tpu_custom_call.1} parent=67 // pred_fallthru
          _
      $region68: #{tpu_custom_call.1} parent=5 // pred_fallthru
        _
    $region6: #{tpu_custom_call.1} parent=1 // loop_footer
      %s24 = sadd.s32 1, %s20
    $region7: #{tpu_custom_call.1} parent=1 // loop_footer_branch
      %19 = sbr.rel target = $region3
    $region8: #{tpu_custom_call.1} parent=1 // loop_exit
      _
    %5842 = vsyncpa [#allocation6], 1
    %s5843 = scalar_lea.sflag [#allocation6], 1
    %5844 = vsyncpa %s5843, 1
    %5845 = vsyncpa [#allocation9], 1
    %5846 = vsyncpa [#allocation7], 1
    %s5847 = scalar_lea.sflag [#allocation7], 1
    %5848 = vsyncpa %s5847, 1

</llo_original>
